<compile_context>
chip_gen: v7x
topology: tpu7x:2x2x1
jax: 0.10.0
libtpu: 0.0.40
codegen_flags: <defaults>
</compile_context>

<pallas_src>
import functools
import math

import jax
import jax.numpy as jnp
from jax.experimental import pallas as pl
from jax.experimental.pallas import tpu as pltpu

FEAT_DIM = 2048
PROJ_DIMS = [1024, 512, 256]
TN1 = 512                 # column-tile of projector layer 1 (streams W1)
BN_EPS = 1e-5
NORM_EPS = 1e-12          # F.normalize default eps
PATCH = 4

assert PROJ_DIMS[0] % TN1 == 0


def _nbytes(shape, dtype):
    return math.prod(shape) * jnp.dtype(dtype).itemsize


# --------------------------------------------------------------------------
# Fused kernel (grid = (branch, W1-column-tile)):
#   backbone: im2col patches -> matmul -> bias -> ReLU -> global avg pool
#   projector: 3x (Linear + BatchNorm1d(train, batch stats) + ReLU)
# Backbone features / layer-1 activations persist in VMEM scratch across the
# W1-tile axis; emb is written once per branch at the last tile.
# --------------------------------------------------------------------------
def _fused_kernel(p_ref, bbw, bbb,
                  w1, b1, g1, be1,
                  w2, b2, g2, be2,
                  w3, b3, g3, be3,
                  emb_ref,
                  feat_sc, h1_sc,
                  *, batch, n_patches, tn1):
    j = pl.program_id(1)
    nt = pl.num_programs(1)

    def bn_relu(z, g_row, be_row):
        mu = jnp.mean(z, axis=0, keepdims=True)
        var = jnp.mean((z - mu) * (z - mu), axis=0, keepdims=True)  # biased var (train BN)
        z = (z - mu) * jax.lax.rsqrt(var + BN_EPS) * g_row + be_row
        return jnp.maximum(z, 0.0)

    # ---- backbone: run once per branch (first W1 tile), keep features in VMEM
    @pl.when(j == 0)
    def _():
        h = jnp.dot(p_ref[...], bbw[0], preferred_element_type=jnp.float32)  # (B*P, 2048) f32
        h = jnp.maximum(h + bbb[0], 0.0)                                     # bias + ReLU
        h = h.reshape(batch, n_patches, FEAT_DIM)
        feat_sc[...] = jnp.mean(h, axis=1).astype(jnp.bfloat16)              # (B, 2048) bf16

    # ---- projector layer 1, column tile j (BN is per-feature -> tiles exact)
    z1 = jnp.dot(feat_sc[...], w1[0], preferred_element_type=jnp.float32) + b1[0]
    col0 = pl.multiple_of(j * tn1, tn1)
    h1_sc[:, pl.ds(col0, tn1)] = bn_relu(z1, g1[0], be1[0])                  # f32 tile

    # ---- projector layers 2 & 3: once per branch, after the last W1 tile
    @pl.when(j == nt - 1)
    def _():
        h1 = h1_sc[...].astype(jnp.bfloat16)                                 # (B, 1024)
        z2 = jnp.dot(h1, w2[0], preferred_element_type=jnp.float32) + b2[0]
        h2 = bn_relu(z2, g2[0], be2[0]).astype(jnp.bfloat16)                 # (B, 512)
        z3 = jnp.dot(h2, w3[0], preferred_element_type=jnp.float32) + b3[0]
        emb_ref[0] = bn_relu(z3, g3[0], be3[0])                              # (B, 256), UN-normalized


def fused_forward(patches, bb_w, bb_b, proj_params, *, batch, n_patches, tn1=TN1):
    """patches: (B*P, K) bf16 shared by both branches; bb_w: (2, K, 2048) bf16;
    bb_b: (2, 1, 2048) f32; proj_params: 12 stacked (2, ...) projector params.
    Returns UN-normalized embeddings (2, B, 256) f32 (branch 0 online, 1 momentum)."""
    n_branches, kp, _ = bb_w.shape
    bp = batch * n_patches
    n1, n2, n3 = PROJ_DIMS
    nt1 = n1 // tn1
    w1, b1, g1, be1, w2, b2, g2, be2, w3, b3, g3, be3 = proj_params

    in_arrays_blocks = [
        (patches, (bp, kp),            lambda i, j: (0, 0)),      # shared patches
        (bb_w,    (1, kp, FEAT_DIM),   lambda i, j: (i, 0, 0)),   # per-branch conv weight
        (bb_b,    (1, 1, FEAT_DIM),    lambda i, j: (i, 0, 0)),
        (w1,      (1, FEAT_DIM, tn1),  lambda i, j: (i, 0, j)),   # W1 streamed in column tiles
        (b1,      (1, 1, tn1),         lambda i, j: (i, 0, j)),
        (g1,      (1, 1, tn1),         lambda i, j: (i, 0, j)),
        (be1,     (1, 1, tn1),         lambda i, j: (i, 0, j)),
        (w2,      (1, n1, n2),         lambda i, j: (i, 0, 0)),
        (b2,      (1, 1, n2),          lambda i, j: (i, 0, 0)),
        (g2,      (1, 1, n2),          lambda i, j: (i, 0, 0)),
        (be2,     (1, 1, n2),          lambda i, j: (i, 0, 0)),
        (w3,      (1, n2, n3),         lambda i, j: (i, 0, 0)),
        (b3,      (1, 1, n3),          lambda i, j: (i, 0, 0)),
        (g3,      (1, 1, n3),          lambda i, j: (i, 0, 0)),
        (be3,     (1, 1, n3),          lambda i, j: (i, 0, 0)),
    ]
    in_specs = [pl.BlockSpec(blk, imap) for _, blk, imap in in_arrays_blocks]
    in_arrays = [a for a, _, _ in in_arrays_blocks]
    out_block = (1, batch, n3)

    # Scoped-VMEM limit derived from the double-buffered block footprint
    # (+ scratch + intermediate/compiler headroom), instead of a fixed 40 MiB.
    block_bytes = sum(_nbytes(blk, a.dtype) for a, blk, _ in in_arrays_blocks)
    block_bytes += _nbytes(out_block, jnp.float32)
    pad_b = max(8, batch)
    scratch_bytes = (_nbytes((pad_b, FEAT_DIM), jnp.bfloat16)
                     + _nbytes((pad_b, n1), jnp.float32))
    headroom = 2 * _nbytes((bp, FEAT_DIM), jnp.float32) + (8 << 20)  # pre-pool temps etc.
    vmem_limit = int(min(max(2 * block_bytes + scratch_bytes + headroom, 16 << 20), 48 << 20))

    return pl.pallas_call(
        functools.partial(_fused_kernel, batch=batch, n_patches=n_patches, tn1=tn1),
        out_shape=jax.ShapeDtypeStruct((n_branches, batch, n3), jnp.float32),
        grid=(n_branches, nt1),
        in_specs=in_specs,
        out_specs=pl.BlockSpec(out_block, lambda i, j: (i, 0, 0)),
        scratch_shapes=[
            pltpu.VMEM((batch, FEAT_DIM), jnp.bfloat16),   # backbone features (bf16 inter-stage)
            pltpu.VMEM((batch, n1), jnp.float32),          # projector layer-1 activations
        ],
        compiler_params=pltpu.CompilerParams(
            dimension_semantics=("parallel", "arbitrary"),
            vmem_limit_bytes=vmem_limit,
        ),
    )(*in_arrays)


# --------------------------------------------------------------------------
# Glue: im2col (computed once, shared by both branches) + parameter fusion
# --------------------------------------------------------------------------
def im2col_patches(x_nchw, *, patch=PATCH):
    """(B, C, H, W) f32 -> ((B*P, K) bf16 patches, P).  No K zero-pad: the
    blocks equal the full array dims, and K=48 is a valid bf16 sublane multiple."""
    bsz, c, h, w = x_nchw.shape
    x = jnp.transpose(x_nchw, (0, 2, 3, 1))                            # NHWC
    x = x.reshape(bsz, h // patch, patch, w // patch, patch, c)
    x = jnp.transpose(x, (0, 1, 3, 2, 4, 5))                           # (B, Hp, Wp, ph, pw, C)
    n_patches = (h // patch) * (w // patch)
    k = patch * patch * c
    patches = x.reshape(bsz * n_patches, k)
    return patches.astype(jnp.bfloat16), n_patches


def init_params(key, *, patch=PATCH, in_ch=3):
    """Single-branch parameters (f32, un-stacked)."""
    ks = jax.random.split(key, 10)
    k = patch * patch * in_ch
    scale = 0.02
    bb_w = scale * jax.random.normal(ks[0], (k, FEAT_DIM), jnp.float32)
    bb_b = scale * jax.random.normal(ks[1], (1, FEAT_DIM), jnp.float32)

    proj = []
    in_dim = FEAT_DIM
    for li, h_dim in enumerate(PROJ_DIMS):
        w = scale * jax.random.normal(ks[2 + 2 * li], (in_dim, h_dim), jnp.float32)
        b = scale * jax.random.normal(ks[3 + 2 * li], (1, h_dim), jnp.float32)
        gamma = jnp.ones((1, h_dim), jnp.float32)    # BatchNorm1d default init
        beta = jnp.zeros((1, h_dim), jnp.float32)
        proj += [w, b, gamma, beta]
        in_dim = h_dim
    wt = scale * jax.random.normal(ks[8], (1, PROJ_DIMS[-1]), jnp.float32)  # row vector
    bt = scale * jax.random.normal(ks[9], (1, 1), jnp.float32)
    return (bb_w, bb_b), tuple(proj), (wt, bt)


def prepare_fused_params(bb_on, proj_on, temp_on, bb_mom, proj_mom, temp_mom):
    """Stack online/momentum parameters along a leading branch axis; cast the
    matmul weights (conv W, W1-W3) to bf16.  Temperature-head params stay f32
    (applied in the JAX wrapper)."""
    def stack2(a, b):
        return jnp.stack([a, b])

    bb_w = stack2(bb_on[0], bb_mom[0]).astype(jnp.bfloat16)   # (2, K, 2048)
    bb_b = stack2(bb_on[1], bb_mom[1])                        # (2, 1, 2048) f32

    proj = []
    for idx, (po, pm) in enumerate(zip(proj_on, proj_mom)):
        s = stack2(po, pm)
        if idx % 4 == 0:                                      # W1, W2, W3
            s = s.astype(jnp.bfloat16)
        proj.append(s)

    wt = stack2(temp_on[0], temp_mom[0])                      # (2, 1, 256) f32
    bt = stack2(temp_on[1], temp_mom[1])                      # (2, 1, 1) f32
    return (bb_w, bb_b), tuple(proj), (wt, bt)


def _l2_normalize(v, eps=NORM_EPS):
    n = jnp.sqrt(jnp.sum(v * v, axis=1, keepdims=True))
    return v / jnp.maximum(n, eps)


# --------------------------------------------------------------------------
# Full forward (backbone + DynamicProjection fused in one pallas_call per step;
# both online and momentum branches run inside that single call).
# --------------------------------------------------------------------------
@jax.jit
def advanced_contrastive_forward(x, bb_fused, proj_fused, temp_fused):
    patches, n_patches = im2col_patches(x)                    # shared by both branches
    bsz = x.shape[0]
    emb_all = fused_forward(patches, bb_fused[0], bb_fused[1], proj_fused,
                            batch=bsz, n_patches=n_patches)   # (2, B, 256) UN-normalized

    # Temperature head (Linear 256 -> 1 + sigmoid) on the UN-normalized
    # embeddings, computed in the wrapper to avoid a last-dim-1 kernel store.
    wt_all, bt_all = temp_fused
    t_logit = jnp.einsum('bnd,bod->bno', emb_all, wt_all) + bt_all
    temp_all = 0.05 + 0.15 * jax.nn.sigmoid(t_logit)          # (2, B, 1), in (0.05, 0.2)

    online_emb = _l2_normalize(emb_all[0])
    mom_emb = jax.lax.stop_gradient(_l2_normalize(emb_all[1]))  # mirrors torch.no_grad()
    temp = temp_all[0]
    return online_emb, mom_emb, temp


if __name__ == "__main__":
    key = jax.random.PRNGKey(0)
    k_x, k_p = jax.random.split(key)

    # small deterministic input: B=2, C=3 (RGB), 16x16 spatial
    x = jax.random.normal(k_x, (2, 3, 16, 16), jnp.float32)

    bb_params, proj_params, temp_params = init_params(k_p)
    # momentum encoder is a deepcopy of the online encoder at init -> same values
    bb_mom, proj_mom, temp_mom = bb_params, proj_params, temp_params

    bb_fused, proj_fused, temp_fused = prepare_fused_params(
        bb_params, proj_params, temp_params, bb_mom, proj_mom, temp_mom)

    online_emb, mom_emb, temp = advanced_contrastive_forward(
        x, bb_fused, proj_fused, temp_fused)
    jax.block_until_ready((online_emb, mom_emb, temp))

    assert online_emb.shape == (2, 256)
    assert mom_emb.shape == (2, 256)
    assert temp.shape == (2, 1)
    # embeddings are L2-normalized rows; temperature in (0.05, 0.2)
    assert jnp.allclose(jnp.linalg.norm(online_emb, axis=1), 1.0, atol=1e-4)
    assert bool(jnp.all((temp > 0.05) & (temp < 0.2)))

    print("KERNEL_OK")
</pallas_src>

<mosaic_0001>
module attributes {stable_mosaic.version = 11 : i64} {
  func.func @_fused_kernel(%arg0: i32, %arg1: i32, %arg2: memref<32x48xbf16, #tpu.memory_space<vmem>>, %arg3: memref<1x48x2048xbf16, #tpu.memory_space<vmem>>, %arg4: memref<1x1x2048xf32, #tpu.memory_space<vmem>>, %arg5: memref<1x2048x512xbf16, #tpu.memory_space<vmem>>, %arg6: memref<1x1x512xf32, #tpu.memory_space<vmem>>, %arg7: memref<1x1x512xf32, #tpu.memory_space<vmem>>, %arg8: memref<1x1x512xf32, #tpu.memory_space<vmem>>, %arg9: memref<1x1024x512xbf16, #tpu.memory_space<vmem>>, %arg10: memref<1x1x512xf32, #tpu.memory_space<vmem>>, %arg11: memref<1x1x512xf32, #tpu.memory_space<vmem>>, %arg12: memref<1x1x512xf32, #tpu.memory_space<vmem>>, %arg13: memref<1x512x256xbf16, #tpu.memory_space<vmem>>, %arg14: memref<1x1x256xf32, #tpu.memory_space<vmem>>, %arg15: memref<1x1x256xf32, #tpu.memory_space<vmem>>, %arg16: memref<1x1x256xf32, #tpu.memory_space<vmem>>, %arg17: memref<1x2x256xf32, #tpu.memory_space<vmem>>, %arg18: memref<2x2048xbf16, #tpu.memory_space<vmem>>, %arg19: memref<2x1024xf32, #tpu.memory_space<vmem>>) attributes {dimension_semantics = [#tpu.dimension_semantics<parallel>, #tpu.dimension_semantics<arbitrary>], iteration_bounds = array<i64: 2, 2>, scalar_prefetch = 0 : i64, scratch_operands = 2 : i64, tpu.core_type = #tpu.core_type<tc>, window_params = [{pipeline_mode = #tpu.pipeline_mode<synchronous>, transform_indices = @transform_0, window_bounds = array<i64: 32, 48>}, {transform_indices = @transform_1, window_bounds = array<i64: 1, 48, 2048>}, {transform_indices = @transform_2, window_bounds = array<i64: 1, 1, 2048>}, {transform_indices = @transform_3, window_bounds = array<i64: 1, 2048, 512>}, {transform_indices = @transform_4, window_bounds = array<i64: 1, 1, 512>}, {transform_indices = @transform_5, window_bounds = array<i64: 1, 1, 512>}, {transform_indices = @transform_6, window_bounds = array<i64: 1, 1, 512>}, {transform_indices = @transform_7, window_bounds = array<i64: 1, 1024, 512>}, {transform_indices = @transform_8, window_bounds = array<i64: 1, 1, 512>}, {transform_indices = @transform_9, window_bounds = array<i64: 1, 1, 512>}, {transform_indices = @transform_10, window_bounds = array<i64: 1, 1, 512>}, {transform_indices = @transform_11, window_bounds = array<i64: 1, 512, 256>}, {transform_indices = @transform_12, window_bounds = array<i64: 1, 1, 256>}, {transform_indices = @transform_13, window_bounds = array<i64: 1, 1, 256>}, {transform_indices = @transform_14, window_bounds = array<i64: 1, 1, 256>}, {transform_indices = @transform_15, window_bounds = array<i64: 1, 2, 256>}]} {
    %c0_i32 = arith.constant 0 : i32
    %0 = arith.cmpi eq, %arg1, %c0_i32 : i32
    %1 = arith.extui %0 : i1 to i32
    %c0_i32_0 = arith.constant 0 : i32
    %2 = arith.cmpi ne, %1, %c0_i32_0 : i32
    scf.if %2 {
      %c0_22 = arith.constant 0 : index
      %c0_23 = arith.constant 0 : index
      %48 = vector.load %arg2[%c0_22, %c0_23] : memref<32x48xbf16, #tpu.memory_space<vmem>>, vector<32x48xbf16>
      %c0_24 = arith.constant 0 : index
      %c0_25 = arith.constant 0 : index
      %c0_26 = arith.constant 0 : index
      %49 = vector.load %arg3[%c0_24, %c0_25, %c0_26] : memref<1x48x2048xbf16, #tpu.memory_space<vmem>>, vector<1x48x2048xbf16>
      %50 = vector.shape_cast %49 : vector<1x48x2048xbf16> to vector<48x2048xbf16>
      %cst_27 = arith.constant dense<0.000000e+00> : vector<32x2048xf32>
      %51 = tpu.matmul %48, %50, %cst_27 {dimension_numbers = #tpu.dot_dimension_numbers<[1], [0], [0], [1], [0, 0, 1, 1], [], []>} : vector<32x48xbf16>, vector<48x2048xbf16>, vector<32x2048xf32> -> vector<32x2048xf32>
      %c0_28 = arith.constant 0 : index
      %c0_29 = arith.constant 0 : index
      %c0_30 = arith.constant 0 : index
      %52 = vector.load %arg4[%c0_28, %c0_29, %c0_30] : memref<1x1x2048xf32, #tpu.memory_space<vmem>>, vector<1x1x2048xf32>
      %53 = vector.shape_cast %52 : vector<1x1x2048xf32> to vector<1x2048xf32>
      %54 = vector.broadcast %53 : vector<1x2048xf32> to vector<32x2048xf32>
      %55 = arith.addf %51, %54 : vector<32x2048xf32>
      %cst_31 = arith.constant 0.000000e+00 : f32
      %56 = vector.broadcast %cst_31 : f32 to vector<32x2048xf32>
      %57 = arith.maximumf %55, %56 : vector<32x2048xf32>
      %58 = vector.shape_cast %57 : vector<32x2048xf32> to vector<2x16x2048xf32>
      %cst_32 = arith.constant dense<0.000000e+00> : vector<2x2048xf32>
      %59 = vector.multi_reduction <add>, %58, %cst_32 [1] : vector<2x16x2048xf32> to vector<2x2048xf32>
      %cst_33 = arith.constant 1.600000e+01 : f32
      %60 = vector.broadcast %cst_33 : f32 to vector<2x2048xf32>
      %61 = arith.divf %59, %60 : vector<2x2048xf32>
      %62 = arith.truncf %61 : vector<2x2048xf32> to vector<2x2048xbf16>
      %c0_34 = arith.constant 0 : index
      %c0_35 = arith.constant 0 : index
      %63 = vector.load %arg18[%c0_34, %c0_35] : memref<2x2048xbf16, #tpu.memory_space<vmem>>, vector<2x2048xbf16>
      tpu.vector_store %arg18[%c0_34, %c0_35], %62 {strides = array<i32>} : memref<2x2048xbf16, #tpu.memory_space<vmem>>, vector<2x2048xbf16>,
    } else {
    }
    %c0 = arith.constant 0 : index
    %c0_1 = arith.constant 0 : index
    %3 = vector.load %arg18[%c0, %c0_1] : memref<2x2048xbf16, #tpu.memory_space<vmem>>, vector<2x2048xbf16>
    %c0_2 = arith.constant 0 : index
    %c0_3 = arith.constant 0 : index
    %c0_4 = arith.constant 0 : index
    %4 = vector.load %arg5[%c0_2, %c0_3, %c0_4] : memref<1x2048x512xbf16, #tpu.memory_space<vmem>>, vector<1x2048x512xbf16>
    %5 = vector.shape_cast %4 : vector<1x2048x512xbf16> to vector<2048x512xbf16>
    %cst = arith.constant dense<0.000000e+00> : vector<2x512xf32>
    %6 = tpu.matmul %3, %5, %cst {dimension_numbers = #tpu.dot_dimension_numbers<[1], [0], [0], [1], [0, 0, 1, 1], [], []>} : vector<2x2048xbf16>, vector<2048x512xbf16>, vector<2x512xf32> -> vector<2x512xf32>
    %c0_5 = arith.constant 0 : index
    %c0_6 = arith.constant 0 : index
    %c0_7 = arith.constant 0 : index
    %7 = vector.load %arg6[%c0_5, %c0_6, %c0_7] : memref<1x1x512xf32, #tpu.memory_space<vmem>>, vector<1x1x512xf32>
    %8 = vector.shape_cast %7 : vector<1x1x512xf32> to vector<1x512xf32>
    %9 = vector.broadcast %8 : vector<1x512xf32> to vector<2x512xf32>
    %10 = arith.addf %6, %9 : vector<2x512xf32>
    %c512_i32 = arith.constant 512 : i32
    %11 = arith.muli %arg1, %c512_i32 : i32
    %12 = tpu.assume_multiple %11, 512 : i32
    %c0_8 = arith.constant 0 : index
    %c0_9 = arith.constant 0 : index
    %c0_10 = arith.constant 0 : index
    %13 = vector.load %arg7[%c0_8, %c0_9, %c0_10] : memref<1x1x512xf32, #tpu.memory_space<vmem>>, vector<1x1x512xf32>
    %14 = vector.shape_cast %13 : vector<1x1x512xf32> to vector<1x512xf32>
    %c0_11 = arith.constant 0 : index
    %c0_12 = arith.constant 0 : index
    %c0_13 = arith.constant 0 : index
    %15 = vector.load %arg8[%c0_11, %c0_12, %c0_13] : memref<1x1x512xf32, #tpu.memory_space<vmem>>, vector<1x1x512xf32>
    %16 = vector.shape_cast %15 : vector<1x1x512xf32> to vector<1x512xf32>
    %cst_14 = arith.constant dense<0.000000e+00> : vector<512xf32>
    %17 = vector.multi_reduction <add>, %10, %cst_14 [0] : vector<2x512xf32> to vector<512xf32>
    %18 = vector.shape_cast %17 : vector<512xf32> to vector<1x512xf32>
    %cst_15 = arith.constant 2.000000e+00 : f32
    %19 = vector.broadcast %cst_15 : f32 to vector<1x512xf32>
    %20 = arith.divf %18, %19 : vector<1x512xf32>
    %21 = vector.broadcast %20 : vector<1x512xf32> to vector<2x512xf32>
    %22 = arith.subf %10, %21 : vector<2x512xf32>
    %23 = vector.broadcast %20 : vector<1x512xf32> to vector<2x512xf32>
    %24 = arith.subf %10, %23 : vector<2x512xf32>
    %25 = arith.mulf %22, %24 : vector<2x512xf32>
    %cst_16 = arith.constant dense<0.000000e+00> : vector<512xf32>
    %26 = vector.multi_reduction <add>, %25, %cst_16 [0] : vector<2x512xf32> to vector<512xf32>
    %27 = vector.shape_cast %26 : vector<512xf32> to vector<1x512xf32>
    %cst_17 = arith.constant 2.000000e+00 : f32
    %28 = vector.broadcast %cst_17 : f32 to vector<1x512xf32>
    %29 = arith.divf %27, %28 : vector<1x512xf32>
    %30 = vector.broadcast %20 : vector<1x512xf32> to vector<2x512xf32>
    %31 = arith.subf %10, %30 : vector<2x512xf32>
    %cst_18 = arith.constant 9.99999974E-6 : f32
    %32 = vector.broadcast %cst_18 : f32 to vector<1x512xf32>
    %33 = arith.addf %29, %32 : vector<1x512xf32>
    %34 = math.rsqrt %33 : vector<1x512xf32>
    %35 = vector.broadcast %34 : vector<1x512xf32> to vector<2x512xf32>
    %36 = arith.mulf %31, %35 : vector<2x512xf32>
    %37 = vector.broadcast %14 : vector<1x512xf32> to vector<2x512xf32>
    %38 = arith.mulf %36, %37 : vector<2x512xf32>
    %39 = vector.broadcast %16 : vector<1x512xf32> to vector<2x512xf32>
    %40 = arith.addf %38, %39 : vector<2x512xf32>
    %cst_19 = arith.constant 0.000000e+00 : f32
    %41 = vector.broadcast %cst_19 : f32 to vector<2x512xf32>
    %42 = arith.maximumf %40, %41 : vector<2x512xf32>
    %c0_20 = arith.constant 0 : index
    %43 = arith.index_cast %12 : i32 to index
    %44 = vector.load %arg19[%c0_20, %43] : memref<2x1024xf32, #tpu.memory_space<vmem>>, vector<2x512xf32>
    tpu.vector_store %arg19[%c0_20, %43], %42 {strides = array<i32>} : memref<2x1024xf32, #tpu.memory_space<vmem>>, vector<2x512xf32>,
    %c1_i32 = arith.constant 1 : i32
    %45 = arith.cmpi eq, %arg1, %c1_i32 : i32
    %46 = arith.extui %45 : i1 to i32
    %c0_i32_21 = arith.constant 0 : i32
    %47 = arith.cmpi ne, %46, %c0_i32_21 : i32
    scf.if %47 {
      %c0_22 = arith.constant 0 : index
      %c0_23 = arith.constant 0 : index
      %48 = vector.load %arg19[%c0_22, %c0_23] : memref<2x1024xf32, #tpu.memory_space<vmem>>, vector<2x1024xf32>
      %49 = arith.truncf %48 : vector<2x1024xf32> to vector<2x1024xbf16>
      %c0_24 = arith.constant 0 : index
      %c0_25 = arith.constant 0 : index
      %c0_26 = arith.constant 0 : index
      %50 = vector.load %arg9[%c0_24, %c0_25, %c0_26] : memref<1x1024x512xbf16, #tpu.memory_space<vmem>>, vector<1x1024x512xbf16>
      %51 = vector.shape_cast %50 : vector<1x1024x512xbf16> to vector<1024x512xbf16>
      %cst_27 = arith.constant dense<0.000000e+00> : vector<2x512xf32>
      %52 = tpu.matmul %49, %51, %cst_27 {dimension_numbers = #tpu.dot_dimension_numbers<[1], [0], [0], [1], [0, 0, 1, 1], [], []>} : vector<2x1024xbf16>, vector<1024x512xbf16>, vector<2x512xf32> -> vector<2x512xf32>
      %c0_28 = arith.constant 0 : index
      %c0_29 = arith.constant 0 : index
      %c0_30 = arith.constant 0 : index
      %53 = vector.load %arg10[%c0_28, %c0_29, %c0_30] : memref<1x1x512xf32, #tpu.memory_space<vmem>>, vector<1x1x512xf32>
      %54 = vector.shape_cast %53 : vector<1x1x512xf32> to vector<1x512xf32>
      %55 = vector.broadcast %54 : vector<1x512xf32> to vector<2x512xf32>
      %56 = arith.addf %52, %55 : vector<2x512xf32>
      %c0_31 = arith.constant 0 : index
      %c0_32 = arith.constant 0 : index
      %c0_33 = arith.constant 0 : index
      %57 = vector.load %arg11[%c0_31, %c0_32, %c0_33] : memref<1x1x512xf32, #tpu.memory_space<vmem>>, vector<1x1x512xf32>
      %58 = vector.shape_cast %57 : vector<1x1x512xf32> to vector<1x512xf32>
      %c0_34 = arith.constant 0 : index
      %c0_35 = arith.constant 0 : index
      %c0_36 = arith.constant 0 : index
      %59 = vector.load %arg12[%c0_34, %c0_35, %c0_36] : memref<1x1x512xf32, #tpu.memory_space<vmem>>, vector<1x1x512xf32>
      %60 = vector.shape_cast %59 : vector<1x1x512xf32> to vector<1x512xf32>
      %cst_37 = arith.constant dense<0.000000e+00> : vector<512xf32>
      %61 = vector.multi_reduction <add>, %56, %cst_37 [0] : vector<2x512xf32> to vector<512xf32>
      %62 = vector.shape_cast %61 : vector<512xf32> to vector<1x512xf32>
      %cst_38 = arith.constant 2.000000e+00 : f32
      %63 = vector.broadcast %cst_38 : f32 to vector<1x512xf32>
      %64 = arith.divf %62, %63 : vector<1x512xf32>
      %65 = vector.broadcast %64 : vector<1x512xf32> to vector<2x512xf32>
      %66 = arith.subf %56, %65 : vector<2x512xf32>
      %67 = vector.broadcast %64 : vector<1x512xf32> to vector<2x512xf32>
      %68 = arith.subf %56, %67 : vector<2x512xf32>
      %69 = arith.mulf %66, %68 : vector<2x512xf32>
      %cst_39 = arith.constant dense<0.000000e+00> : vector<512xf32>
      %70 = vector.multi_reduction <add>, %69, %cst_39 [0] : vector<2x512xf32> to vector<512xf32>
      %71 = vector.shape_cast %70 : vector<512xf32> to vector<1x512xf32>
      %cst_40 = arith.constant 2.000000e+00 : f32
      %72 = vector.broadcast %cst_40 : f32 to vector<1x512xf32>
      %73 = arith.divf %71, %72 : vector<1x512xf32>
      %74 = vector.broadcast %64 : vector<1x512xf32> to vector<2x512xf32>
      %75 = arith.subf %56, %74 : vector<2x512xf32>
      %cst_41 = arith.constant 9.99999974E-6 : f32
      %76 = vector.broadcast %cst_41 : f32 to vector<1x512xf32>
      %77 = arith.addf %73, %76 : vector<1x512xf32>
      %78 = math.rsqrt %77 : vector<1x512xf32>
      %79 = vector.broadcast %78 : vector<1x512xf32> to vector<2x512xf32>
      %80 = arith.mulf %75, %79 : vector<2x512xf32>
      %81 = vector.broadcast %58 : vector<1x512xf32> to vector<2x512xf32>
      %82 = arith.mulf %80, %81 : vector<2x512xf32>
      %83 = vector.broadcast %60 : vector<1x512xf32> to vector<2x512xf32>
      %84 = arith.addf %82, %83 : vector<2x512xf32>
      %cst_42 = arith.constant 0.000000e+00 : f32
      %85 = vector.broadcast %cst_42 : f32 to vector<2x512xf32>
      %86 = arith.maximumf %84, %85 : vector<2x512xf32>
      %87 = arith.truncf %86 : vector<2x512xf32> to vector<2x512xbf16>
      %c0_43 = arith.constant 0 : index
      %c0_44 = arith.constant 0 : index
      %c0_45 = arith.constant 0 : index
      %88 = vector.load %arg13[%c0_43, %c0_44, %c0_45] : memref<1x512x256xbf16, #tpu.memory_space<vmem>>, vector<1x512x256xbf16>
      %89 = vector.shape_cast %88 : vector<1x512x256xbf16> to vector<512x256xbf16>
      %cst_46 = arith.constant dense<0.000000e+00> : vector<2x256xf32>
      %90 = tpu.matmul %87, %89, %cst_46 {dimension_numbers = #tpu.dot_dimension_numbers<[1], [0], [0], [1], [0, 0, 1, 1], [], []>} : vector<2x512xbf16>, vector<512x256xbf16>, vector<2x256xf32> -> vector<2x256xf32>
      %c0_47 = arith.constant 0 : index
      %c0_48 = arith.constant 0 : index
      %c0_49 = arith.constant 0 : index
      %91 = vector.load %arg14[%c0_47, %c0_48, %c0_49] : memref<1x1x256xf32, #tpu.memory_space<vmem>>, vector<1x1x256xf32>
      %92 = vector.shape_cast %91 : vector<1x1x256xf32> to vector<1x256xf32>
      %93 = vector.broadcast %92 : vector<1x256xf32> to vector<2x256xf32>
      %94 = arith.addf %90, %93 : vector<2x256xf32>
      %c0_50 = arith.constant 0 : index
      %c0_51 = arith.constant 0 : index
      %c0_52 = arith.constant 0 : index
      %95 = vector.load %arg15[%c0_50, %c0_51, %c0_52] : memref<1x1x256xf32, #tpu.memory_space<vmem>>, vector<1x1x256xf32>
      %96 = vector.shape_cast %95 : vector<1x1x256xf32> to vector<1x256xf32>
      %c0_53 = arith.constant 0 : index
      %c0_54 = arith.constant 0 : index
      %c0_55 = arith.constant 0 : index
      %97 = vector.load %arg16[%c0_53, %c0_54, %c0_55] : memref<1x1x256xf32, #tpu.memory_space<vmem>>, vector<1x1x256xf32>
      %98 = vector.shape_cast %97 : vector<1x1x256xf32> to vector<1x256xf32>
      %cst_56 = arith.constant dense<0.000000e+00> : vector<256xf32>
      %99 = vector.multi_reduction <add>, %94, %cst_56 [0] : vector<2x256xf32> to vector<256xf32>
      %100 = vector.shape_cast %99 : vector<256xf32> to vector<1x256xf32>
      %cst_57 = arith.constant 2.000000e+00 : f32
      %101 = vector.broadcast %cst_57 : f32 to vector<1x256xf32>
      %102 = arith.divf %100, %101 : vector<1x256xf32>
      %103 = vector.broadcast %102 : vector<1x256xf32> to vector<2x256xf32>
      %104 = arith.subf %94, %103 : vector<2x256xf32>
      %105 = vector.broadcast %102 : vector<1x256xf32> to vector<2x256xf32>
      %106 = arith.subf %94, %105 : vector<2x256xf32>
      %107 = arith.mulf %104, %106 : vector<2x256xf32>
      %cst_58 = arith.constant dense<0.000000e+00> : vector<256xf32>
      %108 = vector.multi_reduction <add>, %107, %cst_58 [0] : vector<2x256xf32> to vector<256xf32>
      %109 = vector.shape_cast %108 : vector<256xf32> to vector<1x256xf32>
      %cst_59 = arith.constant 2.000000e+00 : f32
      %110 = vector.broadcast %cst_59 : f32 to vector<1x256xf32>
      %111 = arith.divf %109, %110 : vector<1x256xf32>
      %112 = vector.broadcast %102 : vector<1x256xf32> to vector<2x256xf32>
      %113 = arith.subf %94, %112 : vector<2x256xf32>
      %cst_60 = arith.constant 9.99999974E-6 : f32
      %114 = vector.broadcast %cst_60 : f32 to vector<1x256xf32>
      %115 = arith.addf %111, %114 : vector<1x256xf32>
      %116 = math.rsqrt %115 : vector<1x256xf32>
      %117 = vector.broadcast %116 : vector<1x256xf32> to vector<2x256xf32>
      %118 = arith.mulf %113, %117 : vector<2x256xf32>
      %119 = vector.broadcast %96 : vector<1x256xf32> to vector<2x256xf32>
      %120 = arith.mulf %118, %119 : vector<2x256xf32>
      %121 = vector.broadcast %98 : vector<1x256xf32> to vector<2x256xf32>
      %122 = arith.addf %120, %121 : vector<2x256xf32>
      %cst_61 = arith.constant 0.000000e+00 : f32
      %123 = vector.broadcast %cst_61 : f32 to vector<2x256xf32>
      %124 = arith.maximumf %122, %123 : vector<2x256xf32>
      %c0_62 = arith.constant 0 : index
      %c0_63 = arith.constant 0 : index
      %c0_64 = arith.constant 0 : index
      %125 = vector.load %arg17[%c0_62, %c0_63, %c0_64] : memref<1x2x256xf32, #tpu.memory_space<vmem>>, vector<1x2x256xf32>
      %126 = vector.shape_cast %125 : vector<1x2x256xf32> to vector<2x256xf32>
      %127 = vector.shape_cast %124 : vector<2x256xf32> to vector<1x2x256xf32>
      tpu.vector_store %arg17[%c0_62, %c0_63, %c0_64], %127 {strides = array<i32>} : memref<1x2x256xf32, #tpu.memory_space<vmem>>, vector<1x2x256xf32>,
    } else {
    }
    return
  }
  func.func @transform_0(%arg0: i32, %arg1: i32) -> (i32, i32) {
    %c0_i32 = arith.constant 0 : i32
    %c0_i32_0 = arith.constant 0 : i32
    %c0_i32_1 = arith.constant 0 : i32
    return %c0_i32, %c0_i32_0 : i32, i32
  }
  func.func @transform_1(%arg0: i32, %arg1: i32) -> (i32, i32, i32) {
    %c0_i32 = arith.constant 0 : i32
    %c0_i32_0 = arith.constant 0 : i32
    %c0_i32_1 = arith.constant 0 : i32
    return %arg0, %c0_i32, %c0_i32_0 : i32, i32, i32
  }
  func.func @transform_2(%arg0: i32, %arg1: i32) -> (i32, i32, i32) {
    %c0_i32 = arith.constant 0 : i32
    %c0_i32_0 = arith.constant 0 : i32
    %c0_i32_1 = arith.constant 0 : i32
    return %arg0, %c0_i32, %c0_i32_0 : i32, i32, i32
  }
  func.func @transform_3(%arg0: i32, %arg1: i32) -> (i32, i32, i32) {
    %c0_i32 = arith.constant 0 : i32
    %c0_i32_0 = arith.constant 0 : i32
    return %arg0, %c0_i32, %arg1 : i32, i32, i32
  }
  func.func @transform_4(%arg0: i32, %arg1: i32) -> (i32, i32, i32) {
    %c0_i32 = arith.constant 0 : i32
    %c0_i32_0 = arith.constant 0 : i32
    return %arg0, %c0_i32, %arg1 : i32, i32, i32
  }
  func.func @transform_5(%arg0: i32, %arg1: i32) -> (i32, i32, i32) {
    %c0_i32 = arith.constant 0 : i32
    %c0_i32_0 = arith.constant 0 : i32
    return %arg0, %c0_i32, %arg1 : i32, i32, i32
  }
  func.func @transform_6(%arg0: i32, %arg1: i32) -> (i32, i32, i32) {
    %c0_i32 = arith.constant 0 : i32
    %c0_i32_0 = arith.constant 0 : i32
    return %arg0, %c0_i32, %arg1 : i32, i32, i32
  }
  func.func @transform_7(%arg0: i32, %arg1: i32) -> (i32, i32, i32) {
    %c0_i32 = arith.constant 0 : i32
    %c0_i32_0 = arith.constant 0 : i32
    %c0_i32_1 = arith.constant 0 : i32
    return %arg0, %c0_i32, %c0_i32_0 : i32, i32, i32
  }
  func.func @transform_8(%arg0: i32, %arg1: i32) -> (i32, i32, i32) {
    %c0_i32 = arith.constant 0 : i32
    %c0_i32_0 = arith.constant 0 : i32
    %c0_i32_1 = arith.constant 0 : i32
    return %arg0, %c0_i32, %c0_i32_0 : i32, i32, i32
  }
  func.func @transform_9(%arg0: i32, %arg1: i32) -> (i32, i32, i32) {
    %c0_i32 = arith.constant 0 : i32
    %c0_i32_0 = arith.constant 0 : i32
    %c0_i32_1 = arith.constant 0 : i32
    return %arg0, %c0_i32, %c0_i32_0 : i32, i32, i32
  }
  func.func @transform_10(%arg0: i32, %arg1: i32) -> (i32, i32, i32) {
    %c0_i32 = arith.constant 0 : i32
    %c0_i32_0 = arith.constant 0 : i32
    %c0_i32_1 = arith.constant 0 : i32
    return %arg0, %c0_i32, %c0_i32_0 : i32, i32, i32
  }
  func.func @transform_11(%arg0: i32, %arg1: i32) -> (i32, i32, i32) {
    %c0_i32 = arith.constant 0 : i32
    %c0_i32_0 = arith.constant 0 : i32
    %c0_i32_1 = arith.constant 0 : i32
    return %arg0, %c0_i32, %c0_i32_0 : i32, i32, i32
  }
  func.func @transform_12(%arg0: i32, %arg1: i32) -> (i32, i32, i32) {
    %c0_i32 = arith.constant 0 : i32
    %c0_i32_0 = arith.constant 0 : i32
    %c0_i32_1 = arith.constant 0 : i32
    return %arg0, %c0_i32, %c0_i32_0 : i32, i32, i32
  }
  func.func @transform_13(%arg0: i32, %arg1: i32) -> (i32, i32, i32) {
    %c0_i32 = arith.constant 0 : i32
    %c0_i32_0 = arith.constant 0 : i32
    %c0_i32_1 = arith.constant 0 : i32
    return %arg0, %c0_i32, %c0_i32_0 : i32, i32, i32
  }
  func.func @transform_14(%arg0: i32, %arg1: i32) -> (i32, i32, i32) {
    %c0_i32 = arith.constant 0 : i32
    %c0_i32_0 = arith.constant 0 : i32
    %c0_i32_1 = arith.constant 0 : i32
    return %arg0, %c0_i32, %c0_i32_0 : i32, i32, i32
  }
  func.func @transform_15(%arg0: i32, %arg1: i32) -> (i32, i32, i32) {
    %c0_i32 = arith.constant 0 : i32
    %c0_i32_0 = arith.constant 0 : i32
    %c0_i32_1 = arith.constant 0 : i32
    return %arg0, %c0_i32, %c0_i32_0 : i32, i32, i32
  }
}

</mosaic_0001>

<llo_original>
// kernel: advanced_contrastive_forward.1
$region0: #{advanced_contrastive_forward.1}
  #allocation0 [shape = 'u32[]', space=smem, size = 0x4, offset = 0x4, fixed_abs, tag = 'smem constant byte address 0x4 - core index']
  #allocation1 [shape = 'u32[144,128]{1,0:T(1,128)}', space=vmem, size = 0x12000, scoped, tag = 'internal scratch']
  #allocation2 [shape = 'bf16[2,2048]{1,0:T(2,128)(2,1)}', space=vmem, size = 0x2000, scoped, tag = 'scratch operand']
  #allocation3 [shape = 'f32[2,1024]{1,0:T(2,128)}', space=vmem, size = 0x2000, scoped, tag = 'scratch operand']
  %s0 = inlined_call_operand.vmem [shape: bf16[32,48], index: 0, kind: input, shape index: {}]
  %s1 = inlined_call_operand.hbm [shape: bf16[2,48,2048], index: 1, kind: input, shape index: {}]
  %s2 = inlined_call_operand.hbm [shape: f32[2,1,2048], index: 2, kind: input, shape index: {}]
  %s3 = inlined_call_operand.hbm [shape: bf16[2,2048,1024], index: 3, kind: input, shape index: {}]
  %s4 = inlined_call_operand.hbm [shape: f32[2,1,1024], index: 4, kind: input, shape index: {}]
  %s5 = inlined_call_operand.hbm [shape: f32[2,1,1024], index: 5, kind: input, shape index: {}]
  %s6 = inlined_call_operand.hbm [shape: f32[2,1,1024], index: 6, kind: input, shape index: {}]
  %s7 = inlined_call_operand.hbm [shape: bf16[2,1024,512], index: 7, kind: input, shape index: {}]
  %s8 = inlined_call_operand.hbm [shape: f32[2,1,512], index: 8, kind: input, shape index: {}]
  %s9 = inlined_call_operand.hbm [shape: f32[2,1,512], index: 9, kind: input, shape index: {}]
  %s10 = inlined_call_operand.hbm [shape: f32[2,1,512], index: 10, kind: input, shape index: {}]
  %s11 = inlined_call_operand.hbm [shape: bf16[2,512,256], index: 11, kind: input, shape index: {}]
  %s12 = inlined_call_operand.hbm [shape: f32[2,1,256], index: 12, kind: input, shape index: {}]
  %s13 = inlined_call_operand.hbm [shape: f32[2,1,256], index: 13, kind: input, shape index: {}]
  %s14 = inlined_call_operand.hbm [shape: f32[2,1,256], index: 14, kind: input, shape index: {}]
  %s15 = inlined_call_operand.vmem [shape: f32[2,2,256], index: 15, kind: output, shape index: {}]
  %s16 = sld [smem:[#allocation0]]
  $region157: #{advanced_contrastive_forward.1} parent=0
    _
  %s18 = ssub.s32 1, %s16
  %s19 = scalar_select 0, %s18, %s16
  $region1: #{advanced_contrastive_forward.1} parent=0
    #allocation4 [shape = 'u8[393216]{0}', space=vmem, size = 0x60000, scoped, tag = 'input window, operand 1']
    #allocation5 [shape = 's32[2]{0}', space=sflag, size = 0x8, scoped, tag = 'scoped memory for advanced_contrastive_forward.1']
    #allocation6 [shape = 'u8[16384]{0}', space=vmem, size = 0x4000, scoped, tag = 'input window, operand 2']
    #allocation7 [shape = 's32[2]{0}', space=sflag, size = 0x8, scoped, tag = 'scoped memory for advanced_contrastive_forward.1']
    #allocation8 [shape = 'u8[4194304]{0}', space=vmem, size = 0x400000, scoped, tag = 'input window, operand 3']
    #allocation9 [shape = 'u8[4096]{0}', space=vmem, size = 0x1000, scoped, tag = 'input window, operand 4']
    #allocation10 [shape = 's32[2]{0}', space=sflag, size = 0x8, scoped, tag = 'scoped memory for advanced_contrastive_forward.1']
    #allocation11 [shape = 'u8[4096]{0}', space=vmem, size = 0x1000, scoped, tag = 'input window, operand 5']
    #allocation12 [shape = 'u8[4096]{0}', space=vmem, size = 0x1000, scoped, tag = 'input window, operand 6']
    #allocation13 [shape = 's32[2]{0}', space=sflag, size = 0x8, scoped, tag = 'scoped memory for advanced_contrastive_forward.1']
    #allocation14 [shape = 'u8[2097152]{0}', space=vmem, size = 0x200000, scoped, tag = 'input window, operand 7']
    #allocation15 [shape = 'u8[4096]{0}', space=vmem, size = 0x1000, scoped, tag = 'input window, operand 8']
    #allocation16 [shape = 's32[2]{0}', space=sflag, size = 0x8, scoped, tag = 'scoped memory for advanced_contrastive_forward.1']
    #allocation17 [shape = 'u8[4096]{0}', space=vmem, size = 0x1000, scoped, tag = 'input window, operand 9']
    #allocation18 [shape = 'u8[4096]{0}', space=vmem, size = 0x1000, scoped, tag = 'input window, operand 10']
    #allocation19 [shape = 's32[2]{0}', space=sflag, size = 0x8, scoped, tag = 'scoped memory for advanced_contrastive_forward.1']
    #allocation20 [shape = 'u8[524288]{0}', space=vmem, size = 0x80000, scoped, tag = 'input window, operand 11']
    #allocation21 [shape = 'u8[2048]{0}', space=vmem, size = 0x800, scoped, tag = 'input window, operand 12']
    #allocation22 [shape = 's32[2]{0}', space=sflag, size = 0x8, scoped, tag = 'scoped memory for advanced_contrastive_forward.1']
    #allocation23 [shape = 'u8[2048]{0}', space=vmem, size = 0x800, scoped, tag = 'input window, operand 13']
    #allocation24 [shape = 'u8[2048]{0}', space=vmem, size = 0x800, scoped, tag = 'input window, operand 14']
    #allocation25 [shape = 's32[2]{0}', space=sflag, size = 0x8, scoped, tag = 'scoped memory for advanced_contrastive_forward.1']
    %20 = vsyncpa [#allocation5], 0
    %s21 = scalar_lea.sflag [#allocation5], 1
    %22 = vsyncpa %s21, 0
    %23 = vsyncpa [#allocation7], 0
    %s24 = scalar_lea.sflag [#allocation7], 1
    %25 = vsyncpa %s24, 0
    %26 = vsyncpa [#allocation10], 0
    %s27 = scalar_lea.sflag [#allocation10], 1
    %28 = vsyncpa %s27, 0
    %29 = vsyncpa [#allocation13], 0
    %s30 = scalar_lea.sflag [#allocation13], 1
    %31 = vsyncpa %s30, 0
    %32 = vsyncpa [#allocation16], 0
    %s33 = scalar_lea.sflag [#allocation16], 1
    %34 = vsyncpa %s33, 0
    %35 = vsyncpa [#allocation19], 0
    %s36 = scalar_lea.sflag [#allocation19], 1
    %37 = vsyncpa %s36, 0
    %38 = vsyncpa [#allocation22], 0
    %s39 = scalar_lea.sflag [#allocation22], 1
    %40 = vsyncpa %s39, 0
    %41 = vsyncpa [#allocation25], 0
    %s42 = scalar_lea.sflag [#allocation25], 1
    %43 = vsyncpa %s42, 0
    loop: start=0, step=1, limit=6
    $region2: #{advanced_contrastive_forward.1} parent=1 // loop_pre_header
      _
    $region3: #{advanced_contrastive_forward.1} parent=1 // loop_header
      %s45 = sphi 0, %s49
      %p46 = scmp.ge.s32.totalorder %s45, 6
      %s52 = sphi 0, %s64
      %s53 = sphi 0, %s60
      %s54 = sphi 0, %s52
      %s55 = sphi 0, %s53
      %s56 = sphi 0, %s54
      %s57 = sphi 0, %s55
      %s65 = sphi 0, %s65
      %s67 = sphi 0, %s65
      %s68 = sphi 0, %s67
      %s82 = sphi 0, %s68
      %s88 = sphi 0, %s90
      %s91 = sphi 0, %s88
      %s92 = sphi 0, %s91
      %s108 = sphi 0, %s92
      %s114 = sphi 0, %s116
      %s117 = sphi 0, %s114
      %s118 = sphi 0, %s117
      %s134 = sphi 0, %s118
      %s142 = sphi 0, %s144
      %s145 = sphi 0, %s142
      %s146 = sphi 0, %s145
      %s162 = sphi 0, %s146
      %s170 = sphi 0, %s172
      %s173 = sphi 0, %s170
      %s174 = sphi 0, %s173
      %s190 = sphi 0, %s174
      %s198 = sphi 0, %s200
      %s201 = sphi 0, %s198
      %s202 = sphi 0, %s201
      %s218 = sphi 0, %s202
      %s226 = sphi 0, %s228
      %s229 = sphi 0, %s226
      %s230 = sphi 0, %s229
      %s246 = sphi 0, %s230
      %s252 = sphi 0, %s254
      %s255 = sphi 0, %s252
      %s256 = sphi 0, %s255
      %s272 = sphi 0, %s256
      %s278 = sphi 0, %s280
      %s281 = sphi 0, %s278
      %s282 = sphi 0, %s281
      %s298 = sphi 0, %s282
      %s304 = sphi 0, %s306
      %s307 = sphi 0, %s304
      %s308 = sphi 0, %s307
      %s324 = sphi 0, %s308
      %s330 = sphi 0, %s332
      %s333 = sphi 0, %s330
      %s334 = sphi 0, %s333
      %s350 = sphi 0, %s334
      %s356 = sphi 0, %s358
      %s359 = sphi 0, %s356
      %s360 = sphi 0, %s359
      %s376 = sphi 0, %s360
      %s382 = sphi 0, %s384
      %s385 = sphi 0, %s382
      %s386 = sphi 0, %s385
      %s402 = sphi 0, %s386
      %s408 = sphi 0, %s410
      %s411 = sphi 0, %s408
      %s412 = sphi 0, %s411
      %s428 = sphi 0, %s412
      %s434 = sphi 0, %s436
      %s437 = sphi 0, %s434
      %s438 = sphi 0, %s437
      %s454 = sphi 0, %s438
      %s460 = sphi 0, %s462
      %s463 = sphi 0, %s460
      %s464 = sphi 0, %s463
      %s480 = sphi 0, %s464
    $region4: #{advanced_contrastive_forward.1} parent=1 // loop_header_branch
      %48 = sbr.rel (%p46) target = $region8
    $region5: #{advanced_contrastive_forward.1} parent=1 // loop_body
      %s50 = ssub.s32 %s45, 1
      %s51 = ssub.s32 %s45, 2
      %s58 = sadd.s32 1, %s53
      %p59 = scmp.ge.s32.totalorder %s58, 2
      %s60 = scalar_select %p59, 0, %s58
      %s61 = sadd.s32 1, %s52
      %s62 = scalar_select %p59, %s61, %s52
      %p63 = scmp.ge.s32.totalorder %s62, 2
      %s64 = scalar_select %p63, 0, %s62
      %s66 = sadd.s32 %s65, 1
      %p69 = scmp.eq.s32.totalorder %s45, 3
      %p70 = scmp.ne.s32.totalorder %s65, %s67
      %p71 = scmp.eq.s32.totalorder %s45, 0
      %p72 = por %p70, %p71
      %p73 = scmp.ne.s32.totalorder %s65, %s67
      %p74 = scmp.eq.s32.totalorder %s50, 3
      %p75 = por %p73, %p74
      %p76 = scmp.ne.s32.totalorder %s67, %s68
      %p77 = scmp.eq.s32.totalorder %s50, 0
      %p78 = por %p76, %p77
      %p79 = scmp.ne.s32.totalorder %s67, %s68
      %p80 = scmp.eq.s32.totalorder %s51, 3
      %p81 = por %p79, %p80
      %p83 = scmp.ne.s32.totalorder %s68, %s82
      %p84 = scmp.eq.s32.totalorder %s51, 0
      %p85 = por %p83, %p84
      %s86 = ssub.s32 %s52, %s64
      %p87 = scmp.eq.s32.totalorder %s86, 0
      %s89 = sadd.s32 %s88, 1
      %s90 = scalar_select %p87, %s88, %s89
      %p93 = pneg %p87
      %p94 = scmp.eq.s32.totalorder %s45, 3
      %p95 = por %p93, %p94
      %p96 = scmp.ne.s32.totalorder %s88, %s91
      %p97 = scmp.eq.s32.totalorder %s45, 0
      %p98 = por %p96, %p97
      %p99 = scmp.ne.s32.totalorder %s88, %s91
      %p100 = scmp.eq.s32.totalorder %s50, 3
      %p101 = por %p99, %p100
      %p102 = scmp.ne.s32.totalorder %s91, %s92
      %p103 = scmp.eq.s32.totalorder %s50, 0
      %p104 = por %p102, %p103
      %p105 = scmp.ne.s32.totalorder %s91, %s92
      %p106 = scmp.eq.s32.totalorder %s51, 3
      %p107 = por %p105, %p106
      %p109 = scmp.ne.s32.totalorder %s92, %s108
      %p110 = scmp.eq.s32.totalorder %s51, 0
      %p111 = por %p109, %p110
      %s112 = ssub.s32 %s52, %s64
      %p113 = scmp.eq.s32.totalorder %s112, 0
      %s115 = sadd.s32 %s114, 1
      %s116 = scalar_select %p113, %s114, %s115
      %p119 = pneg %p113
      %p120 = scmp.eq.s32.totalorder %s45, 3
      %p121 = por %p119, %p120
      %p122 = scmp.ne.s32.totalorder %s114, %s117
      %p123 = scmp.eq.s32.totalorder %s45, 0
      %p124 = por %p122, %p123
      %p125 = scmp.ne.s32.totalorder %s114, %s117
      %p126 = scmp.eq.s32.totalorder %s50, 3
      %p127 = por %p125, %p126
      %p128 = scmp.ne.s32.totalorder %s117, %s118
      %p129 = scmp.eq.s32.totalorder %s50, 0
      %p130 = por %p128, %p129
      %p131 = scmp.ne.s32.totalorder %s117, %s118
      %p132 = scmp.eq.s32.totalorder %s51, 3
      %p133 = por %p131, %p132
      %p135 = scmp.ne.s32.totalorder %s118, %s134
      %p136 = scmp.eq.s32.totalorder %s51, 0
      %p137 = por %p135, %p136
      %s138 = ssub.s32 %s52, %s64
      %s139 = ssub.s32 %s53, %s60
      %s140 = sor.u32 %s138, %s139
      %p141 = scmp.eq.s32.totalorder %s140, 0
      %s143 = sadd.s32 %s142, 1
      %s144 = scalar_select %p141, %s142, %s143
      %p147 = pneg %p141
      %p148 = scmp.eq.s32.totalorder %s45, 3
      %p149 = por %p147, %p148
      %p150 = scmp.ne.s32.totalorder %s142, %s145
      %p151 = scmp.eq.s32.totalorder %s45, 0
      %p152 = por %p150, %p151
      %p153 = scmp.ne.s32.totalorder %s142, %s145
      %p154 = scmp.eq.s32.totalorder %s50, 3
      %p155 = por %p153, %p154
      %p156 = scmp.ne.s32.totalorder %s145, %s146
      %p157 = scmp.eq.s32.totalorder %s50, 0
      %p158 = por %p156, %p157
      %p159 = scmp.ne.s32.totalorder %s145, %s146
      %p160 = scmp.eq.s32.totalorder %s51, 3
      %p161 = por %p159, %p160
      %p163 = scmp.ne.s32.totalorder %s146, %s162
      %p164 = scmp.eq.s32.totalorder %s51, 0
      %p165 = por %p163, %p164
      %s166 = ssub.s32 %s52, %s64
      %s167 = ssub.s32 %s53, %s60
      %s168 = sor.u32 %s166, %s167
      %p169 = scmp.eq.s32.totalorder %s168, 0
      %s171 = sadd.s32 %s170, 1
      %s172 = scalar_select %p169, %s170, %s171
      %p175 = pneg %p169
      %p176 = scmp.eq.s32.totalorder %s45, 3
      %p177 = por %p175, %p176
      %p178 = scmp.ne.s32.totalorder %s170, %s173
      %p179 = scmp.eq.s32.totalorder %s45, 0
      %p180 = por %p178, %p179
      %p181 = scmp.ne.s32.totalorder %s170, %s173
      %p182 = scmp.eq.s32.totalorder %s50, 3
      %p183 = por %p181, %p182
      %p184 = scmp.ne.s32.totalorder %s173, %s174
      %p185 = scmp.eq.s32.totalorder %s50, 0
      %p186 = por %p184, %p185
      %p187 = scmp.ne.s32.totalorder %s173, %s174
      %p188 = scmp.eq.s32.totalorder %s51, 3
      %p189 = por %p187, %p188
      %p191 = scmp.ne.s32.totalorder %s174, %s190
      %p192 = scmp.eq.s32.totalorder %s51, 0
      %p193 = por %p191, %p192
      %s194 = ssub.s32 %s52, %s64
      %s195 = ssub.s32 %s53, %s60
      %s196 = sor.u32 %s194, %s195
      %p197 = scmp.eq.s32.totalorder %s196, 0
      %s199 = sadd.s32 %s198, 1
      %s200 = scalar_select %p197, %s198, %s199
      %p203 = pneg %p197
      %p204 = scmp.eq.s32.totalorder %s45, 3
      %p205 = por %p203, %p204
      %p206 = scmp.ne.s32.totalorder %s198, %s201
      %p207 = scmp.eq.s32.totalorder %s45, 0
      %p208 = por %p206, %p207
      %p209 = scmp.ne.s32.totalorder %s198, %s201
      %p210 = scmp.eq.s32.totalorder %s50, 3
      %p211 = por %p209, %p210
      %p212 = scmp.ne.s32.totalorder %s201, %s202
      %p213 = scmp.eq.s32.totalorder %s50, 0
      %p214 = por %p212, %p213
      %p215 = scmp.ne.s32.totalorder %s201, %s202
      %p216 = scmp.eq.s32.totalorder %s51, 3
      %p217 = por %p215, %p216
      %p219 = scmp.ne.s32.totalorder %s202, %s218
      %p220 = scmp.eq.s32.totalorder %s51, 0
      %p221 = por %p219, %p220
      %s222 = ssub.s32 %s52, %s64
      %s223 = ssub.s32 %s53, %s60
      %s224 = sor.u32 %s222, %s223
      %p225 = scmp.eq.s32.totalorder %s224, 0
      %s227 = sadd.s32 %s226, 1
      %s228 = scalar_select %p225, %s226, %s227
      %p231 = pneg %p225
      %p232 = scmp.eq.s32.totalorder %s45, 3
      %p233 = por %p231, %p232
      %p234 = scmp.ne.s32.totalorder %s226, %s229
      %p235 = scmp.eq.s32.totalorder %s45, 0
      %p236 = por %p234, %p235
      %p237 = scmp.ne.s32.totalorder %s226, %s229
      %p238 = scmp.eq.s32.totalorder %s50, 3
      %p239 = por %p237, %p238
      %p240 = scmp.ne.s32.totalorder %s229, %s230
      %p241 = scmp.eq.s32.totalorder %s50, 0
      %p242 = por %p240, %p241
      %p243 = scmp.ne.s32.totalorder %s229, %s230
      %p244 = scmp.eq.s32.totalorder %s51, 3
      %p245 = por %p243, %p244
      %p247 = scmp.ne.s32.totalorder %s230, %s246
      %p248 = scmp.eq.s32.totalorder %s51, 0
      %p249 = por %p247, %p248
      %s250 = ssub.s32 %s52, %s64
      %p251 = scmp.eq.s32.totalorder %s250, 0
      %s253 = sadd.s32 %s252, 1
      %s254 = scalar_select %p251, %s252, %s253
      %p257 = pneg %p251
      %p258 = scmp.eq.s32.totalorder %s45, 3
      %p259 = por %p257, %p258
      %p260 = scmp.ne.s32.totalorder %s252, %s255
      %p261 = scmp.eq.s32.totalorder %s45, 0
      %p262 = por %p260, %p261
      %p263 = scmp.ne.s32.totalorder %s252, %s255
      %p264 = scmp.eq.s32.totalorder %s50, 3
      %p265 = por %p263, %p264
      %p266 = scmp.ne.s32.totalorder %s255, %s256
      %p267 = scmp.eq.s32.totalorder %s50, 0
      %p268 = por %p266, %p267
      %p269 = scmp.ne.s32.totalorder %s255, %s256
      %p270 = scmp.eq.s32.totalorder %s51, 3
      %p271 = por %p269, %p270
      %p273 = scmp.ne.s32.totalorder %s256, %s272
      %p274 = scmp.eq.s32.totalorder %s51, 0
      %p275 = por %p273, %p274
      %s276 = ssub.s32 %s52, %s64
      %p277 = scmp.eq.s32.totalorder %s276, 0
      %s279 = sadd.s32 %s278, 1
      %s280 = scalar_select %p277, %s278, %s279
      %p283 = pneg %p277
      %p284 = scmp.eq.s32.totalorder %s45, 3
      %p285 = por %p283, %p284
      %p286 = scmp.ne.s32.totalorder %s278, %s281
      %p287 = scmp.eq.s32.totalorder %s45, 0
      %p288 = por %p286, %p287
      %p289 = scmp.ne.s32.totalorder %s278, %s281
      %p290 = scmp.eq.s32.totalorder %s50, 3
      %p291 = por %p289, %p290
      %p292 = scmp.ne.s32.totalorder %s281, %s282
      %p293 = scmp.eq.s32.totalorder %s50, 0
      %p294 = por %p292, %p293
      %p295 = scmp.ne.s32.totalorder %s281, %s282
      %p296 = scmp.eq.s32.totalorder %s51, 3
      %p297 = por %p295, %p296
      %p299 = scmp.ne.s32.totalorder %s282, %s298
      %p300 = scmp.eq.s32.totalorder %s51, 0
      %p301 = por %p299, %p300
      %s302 = ssub.s32 %s52, %s64
      %p303 = scmp.eq.s32.totalorder %s302, 0
      %s305 = sadd.s32 %s304, 1
      %s306 = scalar_select %p303, %s304, %s305
      %p309 = pneg %p303
      %p310 = scmp.eq.s32.totalorder %s45, 3
      %p311 = por %p309, %p310
      %p312 = scmp.ne.s32.totalorder %s304, %s307
      %p313 = scmp.eq.s32.totalorder %s45, 0
      %p314 = por %p312, %p313
      %p315 = scmp.ne.s32.totalorder %s304, %s307
      %p316 = scmp.eq.s32.totalorder %s50, 3
      %p317 = por %p315, %p316
      %p318 = scmp.ne.s32.totalorder %s307, %s308
      %p319 = scmp.eq.s32.totalorder %s50, 0
      %p320 = por %p318, %p319
      %p321 = scmp.ne.s32.totalorder %s307, %s308
      %p322 = scmp.eq.s32.totalorder %s51, 3
      %p323 = por %p321, %p322
      %p325 = scmp.ne.s32.totalorder %s308, %s324
      %p326 = scmp.eq.s32.totalorder %s51, 0
      %p327 = por %p325, %p326
      %s328 = ssub.s32 %s52, %s64
      %p329 = scmp.eq.s32.totalorder %s328, 0
      %s331 = sadd.s32 %s330, 1
      %s332 = scalar_select %p329, %s330, %s331
      %p335 = pneg %p329
      %p336 = scmp.eq.s32.totalorder %s45, 3
      %p337 = por %p335, %p336
      %p338 = scmp.ne.s32.totalorder %s330, %s333
      %p339 = scmp.eq.s32.totalorder %s45, 0
      %p340 = por %p338, %p339
      %p341 = scmp.ne.s32.totalorder %s330, %s333
      %p342 = scmp.eq.s32.totalorder %s50, 3
      %p343 = por %p341, %p342
      %p344 = scmp.ne.s32.totalorder %s333, %s334
      %p345 = scmp.eq.s32.totalorder %s50, 0
      %p346 = por %p344, %p345
      %p347 = scmp.ne.s32.totalorder %s333, %s334
      %p348 = scmp.eq.s32.totalorder %s51, 3
      %p349 = por %p347, %p348
      %p351 = scmp.ne.s32.totalorder %s334, %s350
      %p352 = scmp.eq.s32.totalorder %s51, 0
      %p353 = por %p351, %p352
      %s354 = ssub.s32 %s52, %s64
      %p355 = scmp.eq.s32.totalorder %s354, 0
      %s357 = sadd.s32 %s356, 1
      %s358 = scalar_select %p355, %s356, %s357
      %p361 = pneg %p355
      %p362 = scmp.eq.s32.totalorder %s45, 3
      %p363 = por %p361, %p362
      %p364 = scmp.ne.s32.totalorder %s356, %s359
      %p365 = scmp.eq.s32.totalorder %s45, 0
      %p366 = por %p364, %p365
      %p367 = scmp.ne.s32.totalorder %s356, %s359
      %p368 = scmp.eq.s32.totalorder %s50, 3
      %p369 = por %p367, %p368
      %p370 = scmp.ne.s32.totalorder %s359, %s360
      %p371 = scmp.eq.s32.totalorder %s50, 0
      %p372 = por %p370, %p371
      %p373 = scmp.ne.s32.totalorder %s359, %s360
      %p374 = scmp.eq.s32.totalorder %s51, 3
      %p375 = por %p373, %p374
      %p377 = scmp.ne.s32.totalorder %s360, %s376
      %p378 = scmp.eq.s32.totalorder %s51, 0
      %p379 = por %p377, %p378
      %s380 = ssub.s32 %s52, %s64
      %p381 = scmp.eq.s32.totalorder %s380, 0
      %s383 = sadd.s32 %s382, 1
      %s384 = scalar_select %p381, %s382, %s383
      %p387 = pneg %p381
      %p388 = scmp.eq.s32.totalorder %s45, 3
      %p389 = por %p387, %p388
      %p390 = scmp.ne.s32.totalorder %s382, %s385
      %p391 = scmp.eq.s32.totalorder %s45, 0
      %p392 = por %p390, %p391
      %p393 = scmp.ne.s32.totalorder %s382, %s385
      %p394 = scmp.eq.s32.totalorder %s50, 3
      %p395 = por %p393, %p394
      %p396 = scmp.ne.s32.totalorder %s385, %s386
      %p397 = scmp.eq.s32.totalorder %s50, 0
      %p398 = por %p396, %p397
      %p399 = scmp.ne.s32.totalorder %s385, %s386
      %p400 = scmp.eq.s32.totalorder %s51, 3
      %p401 = por %p399, %p400
      %p403 = scmp.ne.s32.totalorder %s386, %s402
      %p404 = scmp.eq.s32.totalorder %s51, 0
      %p405 = por %p403, %p404
      %s406 = ssub.s32 %s52, %s64
      %p407 = scmp.eq.s32.totalorder %s406, 0
      %s409 = sadd.s32 %s408, 1
      %s410 = scalar_select %p407, %s408, %s409
      %p413 = pneg %p407
      %p414 = scmp.eq.s32.totalorder %s45, 3
      %p415 = por %p413, %p414
      %p416 = scmp.ne.s32.totalorder %s408, %s411
      %p417 = scmp.eq.s32.totalorder %s45, 0
      %p418 = por %p416, %p417
      %p419 = scmp.ne.s32.totalorder %s408, %s411
      %p420 = scmp.eq.s32.totalorder %s50, 3
      %p421 = por %p419, %p420
      %p422 = scmp.ne.s32.totalorder %s411, %s412
      %p423 = scmp.eq.s32.totalorder %s50, 0
      %p424 = por %p422, %p423
      %p425 = scmp.ne.s32.totalorder %s411, %s412
      %p426 = scmp.eq.s32.totalorder %s51, 3
      %p427 = por %p425, %p426
      %p429 = scmp.ne.s32.totalorder %s412, %s428
      %p430 = scmp.eq.s32.totalorder %s51, 0
      %p431 = por %p429, %p430
      %s432 = ssub.s32 %s52, %s64
      %p433 = scmp.eq.s32.totalorder %s432, 0
      %s435 = sadd.s32 %s434, 1
      %s436 = scalar_select %p433, %s434, %s435
      %p439 = pneg %p433
      %p440 = scmp.eq.s32.totalorder %s45, 3
      %p441 = por %p439, %p440
      %p442 = scmp.ne.s32.totalorder %s434, %s437
      %p443 = scmp.eq.s32.totalorder %s45, 0
      %p444 = por %p442, %p443
      %p445 = scmp.ne.s32.totalorder %s434, %s437
      %p446 = scmp.eq.s32.totalorder %s50, 3
      %p447 = por %p445, %p446
      %p448 = scmp.ne.s32.totalorder %s437, %s438
      %p449 = scmp.eq.s32.totalorder %s50, 0
      %p450 = por %p448, %p449
      %p451 = scmp.ne.s32.totalorder %s437, %s438
      %p452 = scmp.eq.s32.totalorder %s51, 3
      %p453 = por %p451, %p452
      %p455 = scmp.ne.s32.totalorder %s438, %s454
      %p456 = scmp.eq.s32.totalorder %s51, 0
      %p457 = por %p455, %p456
      %s458 = ssub.s32 %s52, %s64
      %p459 = scmp.eq.s32.totalorder %s458, 0
      %s461 = sadd.s32 %s460, 1
      %s462 = scalar_select %p459, %s460, %s461
      %p465 = pneg %p459
      %p466 = scmp.eq.s32.totalorder %s45, 3
      %p467 = por %p465, %p466
      %p468 = scmp.ne.s32.totalorder %s460, %s463
      %p469 = scmp.eq.s32.totalorder %s45, 0
      %p470 = por %p468, %p469
      %p471 = scmp.ne.s32.totalorder %s460, %s463
      %p472 = scmp.eq.s32.totalorder %s50, 3
      %p473 = por %p471, %p472
      %p474 = scmp.ne.s32.totalorder %s463, %s464
      %p475 = scmp.eq.s32.totalorder %s50, 0
      %p476 = por %p474, %p475
      %p477 = scmp.ne.s32.totalorder %s463, %s464
      %p478 = scmp.eq.s32.totalorder %s51, 3
      %p479 = por %p477, %p478
      %p481 = scmp.ne.s32.totalorder %s464, %s480
      %p482 = scmp.eq.s32.totalorder %s51, 0
      %p483 = por %p481, %p482
      %p484 = scmp.le.s32.totalorder 1, %s45
      %p485 = scmp.lt.s32.totalorder %s45, 5
      %p486 = pnand %p484, %p485
      %p487 = pneg %p486
      // Predicated region
      $region9: #{advanced_contrastive_forward.1} parent=5 // pred_check
        _
      $region10: #{advanced_contrastive_forward.1} parent=5 // pred_check_branch
        %489 = sbr.rel (%p486) target = $region12
      $region11: #{advanced_contrastive_forward.1} parent=5 // pred_region
        %s490 = ssub.s32 %s45, 1
        // Predicated region
        $region13: #{advanced_contrastive_forward.1} parent=11 // pred_check
          %p491 = pneg %p78
        $region14: #{advanced_contrastive_forward.1} parent=11 // pred_check_branch
          %493 = sbr.rel (%p491) target = $region16
        $region15: #{advanced_contrastive_forward.1} parent=11 // pred_region
          _
        $region16: #{advanced_contrastive_forward.1} parent=11 // pred_fallthru
          _
      $region12: #{advanced_contrastive_forward.1} parent=5 // pred_fallthru
        _
      %p494 = scmp.lt.s32.totalorder %s45, 4
      // Predicated region
      $region17: #{advanced_contrastive_forward.1} parent=5 // pred_check
        %p495 = pneg %p494
      $region18: #{advanced_contrastive_forward.1} parent=5 // pred_check_branch
        %497 = sbr.rel (%p495) target = $region20
      $region19: #{advanced_contrastive_forward.1} parent=5 // pred_region
        // Predicated region
        $region21: #{advanced_contrastive_forward.1} parent=19 // pred_check
          %p498 = pneg %p98
        $region22: #{advanced_contrastive_forward.1} parent=19 // pred_check_branch
          %500 = sbr.rel (%p498) target = $region24
        $region23: #{advanced_contrastive_forward.1} parent=19 // pred_region
          %s501 = sand.u32 %s88, 1
          %s502 = scalar_lea.sflag [#allocation5], %s501
          %s503 = sand.u32 %s88, 1
          %s504 = smul.addr %s503, 384
          %s505 = scalar_lea.vmem [#allocation4], %s504
          %s507 = ssub.s32 6144, 6144
          %508 = vsyncadd %s502, %s507
          %s509 = smul.addr %s52, 96
          %s510 = smul.addr %s509, 64
          %s511 = scalar_lea.hbm %s1, %s510
          %s512 = sshll.u32 %s505, 4
          %s513 = int_to_ptr.vmem [resolvable:$true] %s512
          %518 = dma.hbm_to_vmem [thread:$0]  %s511, 6144, %s513, %s502, 1024, 1024, 64
        $region24: #{advanced_contrastive_forward.1} parent=19 // pred_fallthru
          _
        // Predicated region
        $region25: #{advanced_contrastive_forward.1} parent=19 // pred_check
          %p519 = pneg %p124
        $region26: #{advanced_contrastive_forward.1} parent=19 // pred_check_branch
          %521 = sbr.rel (%p519) target = $region28
        $region27: #{advanced_contrastive_forward.1} parent=19 // pred_region
          %s522 = sand.u32 %s45, 1
          %s523 = scalar_lea.sflag [#allocation7], %s522
          %s524 = sand.u32 %s114, 1
          %s525 = smul.addr %s524, 16
          %s526 = scalar_lea.vmem [#allocation6], %s525
          %s528 = ssub.s32 256, 256
          %529 = vsyncadd %s523, %s528
          %s530 = smul.addr %s52, 16
          %s531 = smul.addr %s530, 16
          %s532 = scalar_lea.hbm %s2, %s531
          %s534 = sshll.u32 %s526, 4
          %s535 = int_to_ptr.vmem [resolvable:$true] %s534
          %537 = dma.hbm_to_vmem [thread:$0]  %s532, 256, %s535, %s523
        $region28: #{advanced_contrastive_forward.1} parent=19 // pred_fallthru
          _
        // Predicated region
        $region29: #{advanced_contrastive_forward.1} parent=19 // pred_check
          %p538 = pneg %p152
        $region30: #{advanced_contrastive_forward.1} parent=19 // pred_check_branch
          %540 = sbr.rel (%p538) target = $region32
        $region31: #{advanced_contrastive_forward.1} parent=19 // pred_region
          %s541 = sand.u32 %s45, 1
          %s542 = scalar_lea.sflag [#allocation7], %s541
          %s543 = sand.u32 %s142, 1
          %s544 = smul.addr %s543, 4096
          %s545 = scalar_lea.vmem [#allocation8], %s544
          %s546 = smul.u32 4, %s53
          %s548 = ssub.s32 65536, 65536
          %549 = vsyncadd %s542, %s548
          %s550 = smul.addr %s52, 2048
          %s551 = sadd.s32 %s546, %s550
          %s552 = smul.addr %s551, 64
          %s553 = scalar_lea.hbm %s3, %s552
          %s554 = sshll.u32 %s545, 4
          %s555 = int_to_ptr.vmem [resolvable:$true] %s554
          %560 = dma.hbm_to_vmem [thread:$0]  %s553, 65536, %s555, %s542, 512, 256, 16
        $region32: #{advanced_contrastive_forward.1} parent=19 // pred_fallthru
          _
        // Predicated region
        $region33: #{advanced_contrastive_forward.1} parent=19 // pred_check
          %p561 = pneg %p180
        $region34: #{advanced_contrastive_forward.1} parent=19 // pred_check_branch
          %563 = sbr.rel (%p561) target = $region36
        $region35: #{advanced_contrastive_forward.1} parent=19 // pred_region
          %s564 = sand.u32 %s45, 1
          %s565 = scalar_lea.sflag [#allocation10], %s564
          %s566 = sand.u32 %s170, 1
          %s567 = smul.addr %s566, 4
          %s568 = scalar_lea.vmem [#allocation9], %s567
          %s569 = smul.u32 4, %s53
          %s571 = ssub.s32 64, 64
          %572 = vsyncadd %s565, %s571
          %s573 = smul.addr %s52, 8
          %s574 = sadd.s32 %s569, %s573
          %s575 = smul.addr %s574, 16
          %s576 = scalar_lea.hbm %s4, %s575
          %s578 = sshll.u32 %s568, 4
          %s579 = int_to_ptr.vmem [resolvable:$true] %s578
          %581 = dma.hbm_to_vmem [thread:$0]  %s576, 64, %s579, %s565
        $region36: #{advanced_contrastive_forward.1} parent=19 // pred_fallthru
          _
        // Predicated region
        $region37: #{advanced_contrastive_forward.1} parent=19 // pred_check
          %p582 = pneg %p208
        $region38: #{advanced_contrastive_forward.1} parent=19 // pred_check_branch
          %584 = sbr.rel (%p582) target = $region40
        $region39: #{advanced_contrastive_forward.1} parent=19 // pred_region
          %s585 = sand.u32 %s45, 1
          %s586 = scalar_lea.sflag [#allocation10], %s585
          %s587 = sand.u32 %s198, 1
          %s588 = smul.addr %s587, 4
          %s589 = scalar_lea.vmem [#allocation11], %s588
          %s590 = smul.u32 4, %s53
          %s592 = ssub.s32 64, 64
          %593 = vsyncadd %s586, %s592
          %s594 = smul.addr %s52, 8
          %s595 = sadd.s32 %s590, %s594
          %s596 = smul.addr %s595, 16
          %s597 = scalar_lea.hbm %s5, %s596
          %s599 = sshll.u32 %s589, 4
          %s600 = int_to_ptr.vmem [resolvable:$true] %s599
          %602 = dma.hbm_to_vmem [thread:$0]  %s597, 64, %s600, %s586
        $region40: #{advanced_contrastive_forward.1} parent=19 // pred_fallthru
          _
        // Predicated region
        $region41: #{advanced_contrastive_forward.1} parent=19 // pred_check
          %p603 = pneg %p236
        $region42: #{advanced_contrastive_forward.1} parent=19 // pred_check_branch
          %605 = sbr.rel (%p603) target = $region44
        $region43: #{advanced_contrastive_forward.1} parent=19 // pred_region
          %s606 = sand.u32 %s45, 1
          %s607 = scalar_lea.sflag [#allocation13], %s606
          %s608 = sand.u32 %s226, 1
          %s609 = smul.addr %s608, 4
          %s610 = scalar_lea.vmem [#allocation12], %s609
          %s611 = smul.u32 4, %s53
          %s613 = ssub.s32 64, 64
          %614 = vsyncadd %s607, %s613
          %s615 = smul.addr %s52, 8
          %s616 = sadd.s32 %s611, %s615
          %s617 = smul.addr %s616, 16
          %s618 = scalar_lea.hbm %s6, %s617
          %s620 = sshll.u32 %s610, 4
          %s621 = int_to_ptr.vmem [resolvable:$true] %s620
          %623 = dma.hbm_to_vmem [thread:$0]  %s618, 64, %s621, %s607
        $region44: #{advanced_contrastive_forward.1} parent=19 // pred_fallthru
          _
        // Predicated region
        $region45: #{advanced_contrastive_forward.1} parent=19 // pred_check
          %p624 = pneg %p262
        $region46: #{advanced_contrastive_forward.1} parent=19 // pred_check_branch
          %626 = sbr.rel (%p624) target = $region48
        $region47: #{advanced_contrastive_forward.1} parent=19 // pred_region
          %s627 = sand.u32 %s45, 1
          %s628 = scalar_lea.sflag [#allocation13], %s627
          %s629 = sand.u32 %s252, 1
          %s630 = smul.addr %s629, 2048
          %s631 = scalar_lea.vmem [#allocation14], %s630
          %s633 = ssub.s32 32768, 32768
          %634 = vsyncadd %s628, %s633
          %s635 = smul.addr %s52, 512
          %s636 = smul.addr %s635, 64
          %s637 = scalar_lea.hbm %s7, %s636
          %s638 = sshll.u32 %s631, 4
          %s639 = int_to_ptr.vmem [resolvable:$true] %s638
          %644 = dma.hbm_to_vmem [thread:$0]  %s637, 32768, %s639, %s628, 256, 256, 16
        $region48: #{advanced_contrastive_forward.1} parent=19 // pred_fallthru
          _
        // Predicated region
        $region49: #{advanced_contrastive_forward.1} parent=19 // pred_check
          %p645 = pneg %p288
        $region50: #{advanced_contrastive_forward.1} parent=19 // pred_check_branch
          %647 = sbr.rel (%p645) target = $region52
        $region51: #{advanced_contrastive_forward.1} parent=19 // pred_region
          %s648 = sand.u32 %s45, 1
          %s649 = scalar_lea.sflag [#allocation16], %s648
          %s650 = sand.u32 %s278, 1
          %s651 = smul.addr %s650, 4
          %s652 = scalar_lea.vmem [#allocation15], %s651
          %s654 = ssub.s32 64, 64
          %655 = vsyncadd %s649, %s654
          %s656 = smul.addr %s52, 4
          %s657 = smul.addr %s656, 16
          %s658 = scalar_lea.hbm %s8, %s657
          %s660 = sshll.u32 %s652, 4
          %s661 = int_to_ptr.vmem [resolvable:$true] %s660
          %663 = dma.hbm_to_vmem [thread:$0]  %s658, 64, %s661, %s649
        $region52: #{advanced_contrastive_forward.1} parent=19 // pred_fallthru
          _
        // Predicated region
        $region53: #{advanced_contrastive_forward.1} parent=19 // pred_check
          %p664 = pneg %p314
        $region54: #{advanced_contrastive_forward.1} parent=19 // pred_check_branch
          %666 = sbr.rel (%p664) target = $region56
        $region55: #{advanced_contrastive_forward.1} parent=19 // pred_region
          %s667 = sand.u32 %s45, 1
          %s668 = scalar_lea.sflag [#allocation16], %s667
          %s669 = sand.u32 %s304, 1
          %s670 = smul.addr %s669, 4
          %s671 = scalar_lea.vmem [#allocation17], %s670
          %s673 = ssub.s32 64, 64
          %674 = vsyncadd %s668, %s673
          %s675 = smul.addr %s52, 4
          %s676 = smul.addr %s675, 16
          %s677 = scalar_lea.hbm %s9, %s676
          %s679 = sshll.u32 %s671, 4
          %s680 = int_to_ptr.vmem [resolvable:$true] %s679
          %682 = dma.hbm_to_vmem [thread:$0]  %s677, 64, %s680, %s668
        $region56: #{advanced_contrastive_forward.1} parent=19 // pred_fallthru
          _
        // Predicated region
        $region57: #{advanced_contrastive_forward.1} parent=19 // pred_check
          %p683 = pneg %p340
        $region58: #{advanced_contrastive_forward.1} parent=19 // pred_check_branch
          %685 = sbr.rel (%p683) target = $region60
        $region59: #{advanced_contrastive_forward.1} parent=19 // pred_region
          %s686 = sand.u32 %s45, 1
          %s687 = scalar_lea.sflag [#allocation19], %s686
          %s688 = sand.u32 %s330, 1
          %s689 = smul.addr %s688, 4
          %s690 = scalar_lea.vmem [#allocation18], %s689
          %s692 = ssub.s32 64, 64
          %693 = vsyncadd %s687, %s692
          %s694 = smul.addr %s52, 4
          %s695 = smul.addr %s694, 16
          %s696 = scalar_lea.hbm %s10, %s695
          %s698 = sshll.u32 %s690, 4
          %s699 = int_to_ptr.vmem [resolvable:$true] %s698
          %701 = dma.hbm_to_vmem [thread:$0]  %s696, 64, %s699, %s687
        $region60: #{advanced_contrastive_forward.1} parent=19 // pred_fallthru
          _
        // Predicated region
        $region61: #{advanced_contrastive_forward.1} parent=19 // pred_check
          %p702 = pneg %p366
        $region62: #{advanced_contrastive_forward.1} parent=19 // pred_check_branch
          %704 = sbr.rel (%p702) target = $region64
        $region63: #{advanced_contrastive_forward.1} parent=19 // pred_region
          %s705 = sand.u32 %s45, 1
          %s706 = scalar_lea.sflag [#allocation19], %s705
          %s707 = sand.u32 %s356, 1
          %s708 = smul.addr %s707, 512
          %s709 = scalar_lea.vmem [#allocation20], %s708
          %s711 = ssub.s32 8192, 8192
          %712 = vsyncadd %s706, %s711
          %s713 = smul.addr %s52, 128
          %s714 = smul.addr %s713, 64
          %s715 = scalar_lea.hbm %s11, %s714
          %s716 = sshll.u32 %s709, 4
          %s717 = int_to_ptr.vmem [resolvable:$true] %s716
          %722 = dma.hbm_to_vmem [thread:$0]  %s715, 8192, %s717, %s706, 128, 128, 8
        $region64: #{advanced_contrastive_forward.1} parent=19 // pred_fallthru
          _
        // Predicated region
        $region65: #{advanced_contrastive_forward.1} parent=19 // pred_check
          %p723 = pneg %p392
        $region66: #{advanced_contrastive_forward.1} parent=19 // pred_check_branch
          %725 = sbr.rel (%p723) target = $region68
        $region67: #{advanced_contrastive_forward.1} parent=19 // pred_region
          %s726 = sand.u32 %s45, 1
          %s727 = scalar_lea.sflag [#allocation22], %s726
          %s728 = sand.u32 %s382, 1
          %s729 = smul.addr %s728, 2
          %s730 = scalar_lea.vmem [#allocation21], %s729
          %s732 = ssub.s32 32, 32
          %733 = vsyncadd %s727, %s732
          %s734 = smul.addr %s52, 2
          %s735 = smul.addr %s734, 16
          %s736 = scalar_lea.hbm %s12, %s735
          %s738 = sshll.u32 %s730, 4
          %s739 = int_to_ptr.vmem [resolvable:$true] %s738
          %741 = dma.hbm_to_vmem [thread:$0]  %s736, 32, %s739, %s727
        $region68: #{advanced_contrastive_forward.1} parent=19 // pred_fallthru
          _
        // Predicated region
        $region69: #{advanced_contrastive_forward.1} parent=19 // pred_check
          %p742 = pneg %p418
        $region70: #{advanced_contrastive_forward.1} parent=19 // pred_check_branch
          %744 = sbr.rel (%p742) target = $region72
        $region71: #{advanced_contrastive_forward.1} parent=19 // pred_region
          %s745 = sand.u32 %s45, 1
          %s746 = scalar_lea.sflag [#allocation22], %s745
          %s747 = sand.u32 %s408, 1
          %s748 = smul.addr %s747, 2
          %s749 = scalar_lea.vmem [#allocation23], %s748
          %s751 = ssub.s32 32, 32
          %752 = vsyncadd %s746, %s751
          %s753 = smul.addr %s52, 2
          %s754 = smul.addr %s753, 16
          %s755 = scalar_lea.hbm %s13, %s754
          %s757 = sshll.u32 %s749, 4
          %s758 = int_to_ptr.vmem [resolvable:$true] %s757
          %760 = dma.hbm_to_vmem [thread:$0]  %s755, 32, %s758, %s746
        $region72: #{advanced_contrastive_forward.1} parent=19 // pred_fallthru
          _
        // Predicated region
        $region73: #{advanced_contrastive_forward.1} parent=19 // pred_check
          %p761 = pneg %p444
        $region74: #{advanced_contrastive_forward.1} parent=19 // pred_check_branch
          %763 = sbr.rel (%p761) target = $region76
        $region75: #{advanced_contrastive_forward.1} parent=19 // pred_region
          %s764 = sand.u32 %s434, 1
          %s765 = scalar_lea.sflag [#allocation25], %s764
          %s766 = sand.u32 %s434, 1
          %s767 = smul.addr %s766, 2
          %s768 = scalar_lea.vmem [#allocation24], %s767
          %s770 = ssub.s32 32, 32
          %771 = vsyncadd %s765, %s770
          %s772 = smul.addr %s52, 2
          %s773 = smul.addr %s772, 16
          %s774 = scalar_lea.hbm %s14, %s773
          %s776 = sshll.u32 %s768, 4
          %s777 = int_to_ptr.vmem [resolvable:$true] %s776
          %779 = dma.hbm_to_vmem [thread:$0]  %s774, 32, %s777, %s765
        $region76: #{advanced_contrastive_forward.1} parent=19 // pred_fallthru
          _
      $region20: #{advanced_contrastive_forward.1} parent=5 // pred_fallthru
        _
      %p780 = scmp.le.s32.totalorder 1, %s45
      %p781 = scmp.lt.s32.totalorder %s45, 5
      %p782 = pnand %p780, %p781
      %p783 = pneg %p782
      // Predicated region
      $region77: #{advanced_contrastive_forward.1} parent=5 // pred_check
        _
      $region78: #{advanced_contrastive_forward.1} parent=5 // pred_check_branch
        %785 = sbr.rel (%p782) target = $region80
      $region79: #{advanced_contrastive_forward.1} parent=5 // pred_region
        %s786 = ssub.s32 %s45, 1
        %s787 = sand.u32 %s91, 1
        %s788 = scalar_lea.sflag [#allocation5], %s787
        %s789 = sand.u32 %s91, 1
        %s790 = smul.addr %s789, 384
        %s791 = scalar_lea.vmem [#allocation4], %s790
        // Predicated region
        $region81: #{advanced_contrastive_forward.1} parent=79 // pred_check
          %p792 = pneg %p104
        $region82: #{advanced_contrastive_forward.1} parent=79 // pred_check_branch
          %794 = sbr.rel (%p792) target = $region84
        $region83: #{advanced_contrastive_forward.1} parent=79 // pred_region
          %795 = dma.done %s788, 6144
        $region84: #{advanced_contrastive_forward.1} parent=79 // pred_fallthru
          _
        %s796 = sand.u32 %s50, 1
        %s797 = scalar_lea.sflag [#allocation7], %s796
        %s798 = sand.u32 %s117, 1
        %s799 = smul.addr %s798, 16
        %s800 = scalar_lea.vmem [#allocation6], %s799
        // Predicated region
        $region85: #{advanced_contrastive_forward.1} parent=79 // pred_check
          %p801 = pneg %p130
        $region86: #{advanced_contrastive_forward.1} parent=79 // pred_check_branch
          %803 = sbr.rel (%p801) target = $region88
        $region87: #{advanced_contrastive_forward.1} parent=79 // pred_region
          %804 = dma.done %s797, 256
        $region88: #{advanced_contrastive_forward.1} parent=79 // pred_fallthru
          _
        %s805 = sand.u32 %s50, 1
        %s806 = scalar_lea.sflag [#allocation7], %s805
        %s807 = sand.u32 %s145, 1
        %s808 = smul.addr %s807, 4096
        %s809 = scalar_lea.vmem [#allocation8], %s808
        // Predicated region
        $region89: #{advanced_contrastive_forward.1} parent=79 // pred_check
          %p810 = pneg %p158
        $region90: #{advanced_contrastive_forward.1} parent=79 // pred_check_branch
          %812 = sbr.rel (%p810) target = $region92
        $region91: #{advanced_contrastive_forward.1} parent=79 // pred_region
          %813 = dma.done %s806, 65536
        $region92: #{advanced_contrastive_forward.1} parent=79 // pred_fallthru
          _
        %s814 = sand.u32 %s50, 1
        %s815 = scalar_lea.sflag [#allocation10], %s814
        %s816 = sand.u32 %s173, 1
        %s817 = smul.addr %s816, 4
        %s818 = scalar_lea.vmem [#allocation9], %s817
        // Predicated region
        $region93: #{advanced_contrastive_forward.1} parent=79 // pred_check
          %p819 = pneg %p186
        $region94: #{advanced_contrastive_forward.1} parent=79 // pred_check_branch
          %821 = sbr.rel (%p819) target = $region96
        $region95: #{advanced_contrastive_forward.1} parent=79 // pred_region
          %822 = dma.done %s815, 64
        $region96: #{advanced_contrastive_forward.1} parent=79 // pred_fallthru
          _
        %s823 = sand.u32 %s50, 1
        %s824 = scalar_lea.sflag [#allocation10], %s823
        %s825 = sand.u32 %s201, 1
        %s826 = smul.addr %s825, 4
        %s827 = scalar_lea.vmem [#allocation11], %s826
        // Predicated region
        $region97: #{advanced_contrastive_forward.1} parent=79 // pred_check
          %p828 = pneg %p214
        $region98: #{advanced_contrastive_forward.1} parent=79 // pred_check_branch
          %830 = sbr.rel (%p828) target = $region100
        $region99: #{advanced_contrastive_forward.1} parent=79 // pred_region
          %831 = dma.done %s824, 64
        $region100: #{advanced_contrastive_forward.1} parent=79 // pred_fallthru
          _
        %s832 = sand.u32 %s50, 1
        %s833 = scalar_lea.sflag [#allocation13], %s832
        %s834 = sand.u32 %s229, 1
        %s835 = smul.addr %s834, 4
        %s836 = scalar_lea.vmem [#allocation12], %s835
        // Predicated region
        $region101: #{advanced_contrastive_forward.1} parent=79 // pred_check
          %p837 = pneg %p242
        $region102: #{advanced_contrastive_forward.1} parent=79 // pred_check_branch
          %839 = sbr.rel (%p837) target = $region104
        $region103: #{advanced_contrastive_forward.1} parent=79 // pred_region
          %840 = dma.done %s833, 64
        $region104: #{advanced_contrastive_forward.1} parent=79 // pred_fallthru
          _
        %s841 = sand.u32 %s50, 1
        %s842 = scalar_lea.sflag [#allocation13], %s841
        %s843 = sand.u32 %s255, 1
        %s844 = smul.addr %s843, 2048
        %s845 = scalar_lea.vmem [#allocation14], %s844
        // Predicated region
        $region105: #{advanced_contrastive_forward.1} parent=79 // pred_check
          %p846 = pneg %p268
        $region106: #{advanced_contrastive_forward.1} parent=79 // pred_check_branch
          %848 = sbr.rel (%p846) target = $region108
        $region107: #{advanced_contrastive_forward.1} parent=79 // pred_region
          %849 = dma.done %s842, 32768
        $region108: #{advanced_contrastive_forward.1} parent=79 // pred_fallthru
          _
        %s850 = sand.u32 %s50, 1
        %s851 = scalar_lea.sflag [#allocation16], %s850
        %s852 = sand.u32 %s281, 1
        %s853 = smul.addr %s852, 4
        %s854 = scalar_lea.vmem [#allocation15], %s853
        // Predicated region
        $region109: #{advanced_contrastive_forward.1} parent=79 // pred_check
          %p855 = pneg %p294
        $region110: #{advanced_contrastive_forward.1} parent=79 // pred_check_branch
          %857 = sbr.rel (%p855) target = $region112
        $region111: #{advanced_contrastive_forward.1} parent=79 // pred_region
          %858 = dma.done %s851, 64
        $region112: #{advanced_contrastive_forward.1} parent=79 // pred_fallthru
          _
        %s859 = sand.u32 %s50, 1
        %s860 = scalar_lea.sflag [#allocation16], %s859
        %s861 = sand.u32 %s307, 1
        %s862 = smul.addr %s861, 4
        %s863 = scalar_lea.vmem [#allocation17], %s862
        // Predicated region
        $region113: #{advanced_contrastive_forward.1} parent=79 // pred_check
          %p864 = pneg %p320
        $region114: #{advanced_contrastive_forward.1} parent=79 // pred_check_branch
          %866 = sbr.rel (%p864) target = $region116
        $region115: #{advanced_contrastive_forward.1} parent=79 // pred_region
          %867 = dma.done %s860, 64
        $region116: #{advanced_contrastive_forward.1} parent=79 // pred_fallthru
          _
        %s868 = sand.u32 %s50, 1
        %s869 = scalar_lea.sflag [#allocation19], %s868
        %s870 = sand.u32 %s333, 1
        %s871 = smul.addr %s870, 4
        %s872 = scalar_lea.vmem [#allocation18], %s871
        // Predicated region
        $region117: #{advanced_contrastive_forward.1} parent=79 // pred_check
          %p873 = pneg %p346
        $region118: #{advanced_contrastive_forward.1} parent=79 // pred_check_branch
          %875 = sbr.rel (%p873) target = $region120
        $region119: #{advanced_contrastive_forward.1} parent=79 // pred_region
          %876 = dma.done %s869, 64
        $region120: #{advanced_contrastive_forward.1} parent=79 // pred_fallthru
          _
        %s877 = sand.u32 %s50, 1
        %s878 = scalar_lea.sflag [#allocation19], %s877
        %s879 = sand.u32 %s359, 1
        %s880 = smul.addr %s879, 512
        %s881 = scalar_lea.vmem [#allocation20], %s880
        // Predicated region
        $region121: #{advanced_contrastive_forward.1} parent=79 // pred_check
          %p882 = pneg %p372
        $region122: #{advanced_contrastive_forward.1} parent=79 // pred_check_branch
          %884 = sbr.rel (%p882) target = $region124
        $region123: #{advanced_contrastive_forward.1} parent=79 // pred_region
          %885 = dma.done %s878, 8192
        $region124: #{advanced_contrastive_forward.1} parent=79 // pred_fallthru
          _
        %s886 = sand.u32 %s50, 1
        %s887 = scalar_lea.sflag [#allocation22], %s886
        %s888 = sand.u32 %s385, 1
        %s889 = smul.addr %s888, 2
        %s890 = scalar_lea.vmem [#allocation21], %s889
        // Predicated region
        $region125: #{advanced_contrastive_forward.1} parent=79 // pred_check
          %p891 = pneg %p398
        $region126: #{advanced_contrastive_forward.1} parent=79 // pred_check_branch
          %893 = sbr.rel (%p891) target = $region128
        $region127: #{advanced_contrastive_forward.1} parent=79 // pred_region
          %894 = dma.done %s887, 32
        $region128: #{advanced_contrastive_forward.1} parent=79 // pred_fallthru
          _
        %s895 = sand.u32 %s50, 1
        %s896 = scalar_lea.sflag [#allocation22], %s895
        %s897 = sand.u32 %s411, 1
        %s898 = smul.addr %s897, 2
        %s899 = scalar_lea.vmem [#allocation23], %s898
        // Predicated region
        $region129: #{advanced_contrastive_forward.1} parent=79 // pred_check
          %p900 = pneg %p424
        $region130: #{advanced_contrastive_forward.1} parent=79 // pred_check_branch
          %902 = sbr.rel (%p900) target = $region132
        $region131: #{advanced_contrastive_forward.1} parent=79 // pred_region
          %903 = dma.done %s896, 32
        $region132: #{advanced_contrastive_forward.1} parent=79 // pred_fallthru
          _
        %s904 = sand.u32 %s437, 1
        %s905 = scalar_lea.sflag [#allocation25], %s904
        %s906 = sand.u32 %s437, 1
        %s907 = smul.addr %s906, 2
        %s908 = scalar_lea.vmem [#allocation24], %s907
        // Predicated region
        $region133: #{advanced_contrastive_forward.1} parent=79 // pred_check
          %p909 = pneg %p450
        $region134: #{advanced_contrastive_forward.1} parent=79 // pred_check_branch
          %911 = sbr.rel (%p909) target = $region136
        $region135: #{advanced_contrastive_forward.1} parent=79 // pred_region
          %912 = dma.done %s905, 32
        $region136: #{advanced_contrastive_forward.1} parent=79 // pred_fallthru
          _
        %p913 = pneg %p78
        %p914 = pneg %p75
        %s915 = sand.u32 %s91, 1
        %s916 = scalar_lea.sflag [#allocation5], %s915
        %s917 = sand.u32 %s91, 1
        %s918 = smul.addr %s917, 384
        %s919 = scalar_lea.vmem [#allocation4], %s918
        %p920 = pneg %p104
        %p921 = pneg %p101
        %s922 = sand.u32 %s50, 1
        %s923 = scalar_lea.sflag [#allocation7], %s922
        %s924 = sand.u32 %s117, 1
        %s925 = smul.addr %s924, 16
        %s926 = scalar_lea.vmem [#allocation6], %s925
        %p927 = pneg %p130
        %p928 = pneg %p127
        %s929 = sand.u32 %s50, 1
        %s930 = scalar_lea.sflag [#allocation7], %s929
        %s931 = sand.u32 %s145, 1
        %s932 = smul.addr %s931, 4096
        %s933 = scalar_lea.vmem [#allocation8], %s932
        %p934 = pneg %p158
        %p935 = pneg %p155
        %s936 = sand.u32 %s50, 1
        %s937 = scalar_lea.sflag [#allocation10], %s936
        %s938 = sand.u32 %s173, 1
        %s939 = smul.addr %s938, 4
        %s940 = scalar_lea.vmem [#allocation9], %s939
        %p941 = pneg %p186
        %p942 = pneg %p183
        %s943 = sand.u32 %s50, 1
        %s944 = scalar_lea.sflag [#allocation10], %s943
        %s945 = sand.u32 %s201, 1
        %s946 = smul.addr %s945, 4
        %s947 = scalar_lea.vmem [#allocation11], %s946
        %p948 = pneg %p214
        %p949 = pneg %p211
        %s950 = sand.u32 %s50, 1
        %s951 = scalar_lea.sflag [#allocation13], %s950
        %s952 = sand.u32 %s229, 1
        %s953 = smul.addr %s952, 4
        %s954 = scalar_lea.vmem [#allocation12], %s953
        %p955 = pneg %p242
        %p956 = pneg %p239
        %s957 = sand.u32 %s50, 1
        %s958 = scalar_lea.sflag [#allocation13], %s957
        %s959 = sand.u32 %s255, 1
        %s960 = smul.addr %s959, 2048
        %s961 = scalar_lea.vmem [#allocation14], %s960
        %p962 = pneg %p268
        %p963 = pneg %p265
        %s964 = sand.u32 %s50, 1
        %s965 = scalar_lea.sflag [#allocation16], %s964
        %s966 = sand.u32 %s281, 1
        %s967 = smul.addr %s966, 4
        %s968 = scalar_lea.vmem [#allocation15], %s967
        %p969 = pneg %p294
        %p970 = pneg %p291
        %s971 = sand.u32 %s50, 1
        %s972 = scalar_lea.sflag [#allocation16], %s971
        %s973 = sand.u32 %s307, 1
        %s974 = smul.addr %s973, 4
        %s975 = scalar_lea.vmem [#allocation17], %s974
        %p976 = pneg %p320
        %p977 = pneg %p317
        %s978 = sand.u32 %s50, 1
        %s979 = scalar_lea.sflag [#allocation19], %s978
        %s980 = sand.u32 %s333, 1
        %s981 = smul.addr %s980, 4
        %s982 = scalar_lea.vmem [#allocation18], %s981
        %p983 = pneg %p346
        %p984 = pneg %p343
        %s985 = sand.u32 %s50, 1
        %s986 = scalar_lea.sflag [#allocation19], %s985
        %s987 = sand.u32 %s359, 1
        %s988 = smul.addr %s987, 512
        %s989 = scalar_lea.vmem [#allocation20], %s988
        %p990 = pneg %p372
        %p991 = pneg %p369
        %s992 = sand.u32 %s50, 1
        %s993 = scalar_lea.sflag [#allocation22], %s992
        %s994 = sand.u32 %s385, 1
        %s995 = smul.addr %s994, 2
        %s996 = scalar_lea.vmem [#allocation21], %s995
        %p997 = pneg %p398
        %p998 = pneg %p395
        %s999 = sand.u32 %s50, 1
        %s1000 = scalar_lea.sflag [#allocation22], %s999
        %s1001 = sand.u32 %s411, 1
        %s1002 = smul.addr %s1001, 2
        %s1003 = scalar_lea.vmem [#allocation23], %s1002
        %p1004 = pneg %p424
        %p1005 = pneg %p421
        %s1006 = sand.u32 %s437, 1
        %s1007 = scalar_lea.sflag [#allocation25], %s1006
        %s1008 = sand.u32 %s437, 1
        %s1009 = smul.addr %s1008, 2
        %s1010 = scalar_lea.vmem [#allocation24], %s1009
        %p1011 = pneg %p450
        %p1012 = pneg %p447
        %p1013 = pneg %p476
        %p1014 = pneg %p473
        %p1015 = scmp.lt.s32.totalorder %s54, 1
        %s1016 = scalar_select %p1015, %s54, 1
        %s1017 = smul.addr %s1016, 2
        %s1018 = smul.addr %s1017, 2
        %s1019 = scalar_lea.vmem %s15, %s1018
        %s1020 = smul.u32 4, %s55
        %s1021 = smul.u32 4, %s55
        %s1022 = smul.u32 4, %s55
        %s1023 = smul.u32 4, %s55
        %p1024 = scmp.lt.s32.totalorder %s54, 1
        %s1025 = scalar_select %p1024, %s54, 1
        %s1026 = smul.addr %s1025, 2
        %s1027 = smul.addr %s1026, 2
        %s1028 = scalar_lea.vmem %s15, %s1027
        %p1030 = scmp.eq.s32.totalorder %s55, 0
        // Predicated region
        $region137: #{advanced_contrastive_forward.1} parent=79 // pred_check
          %p1031 = pneg %p1030
        $region138: #{advanced_contrastive_forward.1} parent=79 // pred_check_branch
          %1033 = sbr.rel (%p1031) target = $region140
        $region139: #{advanced_contrastive_forward.1} parent=79 // pred_region
          %v1034 = vld [vmem:[%s0] sm:$0xf]
          %v1035 = vld [vmem:[%s0 + $0x4] sm:$0xf]
          %v1036 = vld [vmem:[%s0 + $0x8] sm:$0xf]
          %v1037 = vld [vmem:[%s0 + $0xc] sm:$0xf]
          %v1038 = vld [vmem:[%s791] sm:$0xff]
          %v1039 = vld [vmem:[%s791 + $0x8] sm:$0xff]
          %v1040 = vld [vmem:[%s791 + $0x10] sm:$0xff]
          %v1041 = vld [vmem:[%s791 + $0x18] sm:$0xff]
          %v1042 = vld [vmem:[%s791 + $0x20] sm:$0xff]
          %v1043 = vld [vmem:[%s791 + $0x28] sm:$0xff]
          %v1044 = vld [vmem:[%s791 + $0x30] sm:$0xff]
          %v1045 = vld [vmem:[%s791 + $0x38] sm:$0xff]
          %v1046 = vld [vmem:[%s791 + $0x40] sm:$0xff]
          %v1047 = vld [vmem:[%s791 + $0x48] sm:$0xff]
          %v1048 = vld [vmem:[%s791 + $0x50] sm:$0xff]
          %v1049 = vld [vmem:[%s791 + $0x58] sm:$0xff]
          %v1050 = vld [vmem:[%s791 + $0x60] sm:$0xff]
          %v1051 = vld [vmem:[%s791 + $0x68] sm:$0xff]
          %v1052 = vld [vmem:[%s791 + $0x70] sm:$0xff]
          %v1053 = vld [vmem:[%s791 + $0x78] sm:$0xff]
          %v1054 = vld [vmem:[%s791 + $0x80] sm:$0xff]
          %v1055 = vld [vmem:[%s791 + $0x88] sm:$0xff]
          %v1056 = vld [vmem:[%s791 + $0x90] sm:$0xff]
          %v1057 = vld [vmem:[%s791 + $0x98] sm:$0xff]
          %v1058 = vld [vmem:[%s791 + $0xa0] sm:$0xff]
          %v1059 = vld [vmem:[%s791 + $0xa8] sm:$0xff]
          %v1060 = vld [vmem:[%s791 + $0xb0] sm:$0xff]
          %v1061 = vld [vmem:[%s791 + $0xb8] sm:$0xff]
          %v1062 = vld [vmem:[%s791 + $0xc0] sm:$0xff]
          %v1063 = vld [vmem:[%s791 + $0xc8] sm:$0xff]
          %v1064 = vld [vmem:[%s791 + $0xd0] sm:$0xff]
          %v1065 = vld [vmem:[%s791 + $0xd8] sm:$0xff]
          %v1066 = vld [vmem:[%s791 + $0xe0] sm:$0xff]
          %v1067 = vld [vmem:[%s791 + $0xe8] sm:$0xff]
          %v1068 = vld [vmem:[%s791 + $0xf0] sm:$0xff]
          %v1069 = vld [vmem:[%s791 + $0xf8] sm:$0xff]
          %v1070 = vld [vmem:[%s791 + $0x100] sm:$0xff]
          %v1071 = vld [vmem:[%s791 + $0x108] sm:$0xff]
          %v1072 = vld [vmem:[%s791 + $0x110] sm:$0xff]
          %v1073 = vld [vmem:[%s791 + $0x118] sm:$0xff]
          %v1074 = vld [vmem:[%s791 + $0x120] sm:$0xff]
          %v1075 = vld [vmem:[%s791 + $0x128] sm:$0xff]
          %v1076 = vld [vmem:[%s791 + $0x130] sm:$0xff]
          %v1077 = vld [vmem:[%s791 + $0x138] sm:$0xff]
          %v1078 = vld [vmem:[%s791 + $0x140] sm:$0xff]
          %v1079 = vld [vmem:[%s791 + $0x148] sm:$0xff]
          %v1080 = vld [vmem:[%s791 + $0x150] sm:$0xff]
          %v1081 = vld [vmem:[%s791 + $0x158] sm:$0xff]
          %v1082 = vld [vmem:[%s791 + $0x160] sm:$0xff]
          %v1083 = vld [vmem:[%s791 + $0x168] sm:$0xff]
          %v1084 = vld [vmem:[%s791 + $0x170] sm:$0xff]
          %v1085 = vld [vmem:[%s791 + $0x178] sm:$0xff]
          %v1086 = vld [vmem:[%s800] sm:$0xff]
          %v1087 = vld [vmem:[%s800 + $0x8] sm:$0xff]
          %v1090 = vlaneseq
          %v1091 = vshrl.u32 %v1090, 7
          %v1092 = vsub.s32 0, %v1091
          %v1093 = vrot.slane %v1086, %v1092
          %v1094 = vlaneseq
          %v1095 = vshrl.u32 %v1094, 7
          %v1096 = vsub.s32 1, %v1095
          %v1097 = vrot.slane %v1086, %v1096
          %v1098 = vlaneseq
          %v1099 = vshrl.u32 %v1098, 7
          %v1100 = vsub.s32 2, %v1099
          %v1101 = vrot.slane %v1086, %v1100
          %v1102 = vlaneseq
          %v1103 = vshrl.u32 %v1102, 7
          %v1104 = vsub.s32 3, %v1103
          %v1105 = vrot.slane %v1086, %v1104
          %v1106 = vlaneseq
          %v1107 = vshrl.u32 %v1106, 7
          %v1108 = vsub.s32 4, %v1107
          %v1109 = vrot.slane %v1086, %v1108
          %v1110 = vlaneseq
          %v1111 = vshrl.u32 %v1110, 7
          %v1112 = vsub.s32 5, %v1111
          %v1113 = vrot.slane %v1086, %v1112
          %v1114 = vlaneseq
          %v1115 = vshrl.u32 %v1114, 7
          %v1116 = vsub.s32 6, %v1115
          %v1117 = vrot.slane %v1086, %v1116
          %v1118 = vlaneseq
          %v1119 = vshrl.u32 %v1118, 7
          %v1120 = vsub.s32 7, %v1119
          %v1121 = vrot.slane %v1086, %v1120
          %v1122 = vlaneseq
          %v1123 = vshrl.u32 %v1122, 7
          %v1124 = vsub.s32 0, %v1123
          %v1125 = vrot.slane %v1087, %v1124
          %v1126 = vlaneseq
          %v1127 = vshrl.u32 %v1126, 7
          %v1128 = vsub.s32 1, %v1127
          %v1129 = vrot.slane %v1087, %v1128
          %v1130 = vlaneseq
          %v1131 = vshrl.u32 %v1130, 7
          %v1132 = vsub.s32 2, %v1131
          %v1133 = vrot.slane %v1087, %v1132
          %v1134 = vlaneseq
          %v1135 = vshrl.u32 %v1134, 7
          %v1136 = vsub.s32 3, %v1135
          %v1137 = vrot.slane %v1087, %v1136
          %v1138 = vlaneseq
          %v1139 = vshrl.u32 %v1138, 7
          %v1140 = vsub.s32 4, %v1139
          %v1141 = vrot.slane %v1087, %v1140
          %v1142 = vlaneseq
          %v1143 = vshrl.u32 %v1142, 7
          %v1144 = vsub.s32 5, %v1143
          %v1145 = vrot.slane %v1087, %v1144
          %v1146 = vlaneseq
          %v1147 = vshrl.u32 %v1146, 7
          %v1148 = vsub.s32 6, %v1147
          %v1149 = vrot.slane %v1087, %v1148
          %v1150 = vlaneseq
          %v1151 = vshrl.u32 %v1150, 7
          %v1152 = vsub.s32 7, %v1151
          %v1153 = vrot.slane %v1087, %v1152
          %v1174 = vunpack.c.l.b16 %v1034
          %v1175 = vunpack.c.l.b16 %v1035
          %v1176 = vunpack.c.l.b16 %v1036
          %v1177 = vunpack.c.l.b16 %v1037
          %v1178 = vpack.c.b16 %v1175, %v1174
          %v1179 = vpack.c.b16 %v1177, %v1176
          %v1228 = vunpack.c.l.b16 %v1038
          %v1229 = vunpack.c.h.b16 %v1038
          %v1230 = vunpack.c.l.b16 %v1039
          %v1231 = vunpack.c.h.b16 %v1039
          %v1232 = vunpack.c.l.b16 %v1040
          %v1233 = vunpack.c.h.b16 %v1040
          %v1234 = vunpack.c.l.b16 %v1041
          %v1235 = vunpack.c.h.b16 %v1041
          %v1236 = vunpack.c.l.b16 %v1042
          %v1237 = vunpack.c.h.b16 %v1042
          %v1238 = vunpack.c.l.b16 %v1043
          %v1239 = vunpack.c.h.b16 %v1043
          %v1240 = vunpack.c.l.b16 %v1044
          %v1241 = vunpack.c.h.b16 %v1044
          %v1242 = vunpack.c.l.b16 %v1045
          %v1243 = vunpack.c.h.b16 %v1045
          %v1244 = vunpack.c.l.b16 %v1046
          %v1245 = vunpack.c.h.b16 %v1046
          %v1246 = vunpack.c.l.b16 %v1047
          %v1247 = vunpack.c.h.b16 %v1047
          %v1248 = vunpack.c.l.b16 %v1048
          %v1249 = vunpack.c.h.b16 %v1048
          %v1250 = vunpack.c.l.b16 %v1049
          %v1251 = vunpack.c.h.b16 %v1049
          %v1252 = vunpack.c.l.b16 %v1050
          %v1253 = vunpack.c.h.b16 %v1050
          %v1254 = vunpack.c.l.b16 %v1051
          %v1255 = vunpack.c.h.b16 %v1051
          %v1256 = vunpack.c.l.b16 %v1052
          %v1257 = vunpack.c.h.b16 %v1052
          %v1258 = vunpack.c.l.b16 %v1053
          %v1259 = vunpack.c.h.b16 %v1053
          %v1260 = vunpack.c.l.b16 %v1054
          %v1261 = vunpack.c.h.b16 %v1054
          %v1262 = vunpack.c.l.b16 %v1055
          %v1263 = vunpack.c.h.b16 %v1055
          %v1264 = vunpack.c.l.b16 %v1056
          %v1265 = vunpack.c.h.b16 %v1056
          %v1266 = vunpack.c.l.b16 %v1057
          %v1267 = vunpack.c.h.b16 %v1057
          %v1268 = vunpack.c.l.b16 %v1058
          %v1269 = vunpack.c.h.b16 %v1058
          %v1270 = vunpack.c.l.b16 %v1059
          %v1271 = vunpack.c.h.b16 %v1059
          %v1272 = vunpack.c.l.b16 %v1060
          %v1273 = vunpack.c.h.b16 %v1060
          %v1274 = vunpack.c.l.b16 %v1061
          %v1275 = vunpack.c.h.b16 %v1061
          %v1276 = vunpack.c.l.b16 %v1062
          %v1277 = vunpack.c.h.b16 %v1062
          %v1278 = vunpack.c.l.b16 %v1063
          %v1279 = vunpack.c.h.b16 %v1063
          %v1280 = vunpack.c.l.b16 %v1064
          %v1281 = vunpack.c.h.b16 %v1064
          %v1282 = vunpack.c.l.b16 %v1065
          %v1283 = vunpack.c.h.b16 %v1065
          %v1284 = vunpack.c.l.b16 %v1066
          %v1285 = vunpack.c.h.b16 %v1066
          %v1286 = vunpack.c.l.b16 %v1067
          %v1287 = vunpack.c.h.b16 %v1067
          %v1288 = vunpack.c.l.b16 %v1068
          %v1289 = vunpack.c.h.b16 %v1068
          %v1290 = vunpack.c.l.b16 %v1069
          %v1291 = vunpack.c.h.b16 %v1069
          %v1292 = vunpack.c.l.b16 %v1070
          %v1293 = vunpack.c.h.b16 %v1070
          %v1294 = vunpack.c.l.b16 %v1071
          %v1295 = vunpack.c.h.b16 %v1071
          %v1296 = vunpack.c.l.b16 %v1072
          %v1297 = vunpack.c.h.b16 %v1072
          %v1298 = vunpack.c.l.b16 %v1073
          %v1299 = vunpack.c.h.b16 %v1073
          %v1300 = vunpack.c.l.b16 %v1074
          %v1301 = vunpack.c.h.b16 %v1074
          %v1302 = vunpack.c.l.b16 %v1075
          %v1303 = vunpack.c.h.b16 %v1075
          %v1304 = vunpack.c.l.b16 %v1076
          %v1305 = vunpack.c.h.b16 %v1076
          %v1306 = vunpack.c.l.b16 %v1077
          %v1307 = vunpack.c.h.b16 %v1077
          %v1308 = vunpack.c.l.b16 %v1078
          %v1309 = vunpack.c.h.b16 %v1078
          %v1310 = vunpack.c.l.b16 %v1079
          %v1311 = vunpack.c.h.b16 %v1079
          %v1312 = vunpack.c.l.b16 %v1080
          %v1313 = vunpack.c.h.b16 %v1080
          %v1314 = vunpack.c.l.b16 %v1081
          %v1315 = vunpack.c.h.b16 %v1081
          %v1316 = vunpack.c.l.b16 %v1082
          %v1317 = vunpack.c.h.b16 %v1082
          %v1318 = vunpack.c.l.b16 %v1083
          %v1319 = vunpack.c.h.b16 %v1083
          %v1320 = vunpack.c.l.b16 %v1084
          %v1321 = vunpack.c.h.b16 %v1084
          %v1322 = vunpack.c.l.b16 %v1085
          %v1323 = vunpack.c.h.b16 %v1085
          %v1324 = vpack.c.b16 %v1244, %v1228
          %v1325 = vpack.c.b16 %v1245, %v1229
          %v1326 = vpack.c.b16 %v1246, %v1230
          %v1327 = vpack.c.b16 %v1247, %v1231
          %v1328 = vpack.c.b16 %v1248, %v1232
          %v1329 = vpack.c.b16 %v1249, %v1233
          %v1330 = vpack.c.b16 %v1250, %v1234
          %v1331 = vpack.c.b16 %v1251, %v1235
          %v1332 = vpack.c.b16 %v1252, %v1236
          %v1333 = vpack.c.b16 %v1253, %v1237
          %v1334 = vpack.c.b16 %v1254, %v1238
          %v1335 = vpack.c.b16 %v1255, %v1239
          %v1336 = vpack.c.b16 %v1256, %v1240
          %v1337 = vpack.c.b16 %v1257, %v1241
          %v1338 = vpack.c.b16 %v1258, %v1242
          %v1339 = vpack.c.b16 %v1259, %v1243
          %v1340 = vpack.c.b16 %v1276, %v1260
          %v1341 = vpack.c.b16 %v1277, %v1261
          %v1342 = vpack.c.b16 %v1278, %v1262
          %v1343 = vpack.c.b16 %v1279, %v1263
          %v1344 = vpack.c.b16 %v1280, %v1264
          %v1345 = vpack.c.b16 %v1281, %v1265
          %v1346 = vpack.c.b16 %v1282, %v1266
          %v1347 = vpack.c.b16 %v1283, %v1267
          %v1348 = vpack.c.b16 %v1284, %v1268
          %v1349 = vpack.c.b16 %v1285, %v1269
          %v1350 = vpack.c.b16 %v1286, %v1270
          %v1351 = vpack.c.b16 %v1287, %v1271
          %v1352 = vpack.c.b16 %v1288, %v1272
          %v1353 = vpack.c.b16 %v1289, %v1273
          %v1354 = vpack.c.b16 %v1290, %v1274
          %v1355 = vpack.c.b16 %v1291, %v1275
          %v1356 = vpack.c.b16 %v1308, %v1292
          %v1357 = vpack.c.b16 %v1309, %v1293
          %v1358 = vpack.c.b16 %v1310, %v1294
          %v1359 = vpack.c.b16 %v1311, %v1295
          %v1360 = vpack.c.b16 %v1312, %v1296
          %v1361 = vpack.c.b16 %v1313, %v1297
          %v1362 = vpack.c.b16 %v1314, %v1298
          %v1363 = vpack.c.b16 %v1315, %v1299
          %v1364 = vpack.c.b16 %v1316, %v1300
          %v1365 = vpack.c.b16 %v1317, %v1301
          %v1366 = vpack.c.b16 %v1318, %v1302
          %v1367 = vpack.c.b16 %v1319, %v1303
          %v1368 = vpack.c.b16 %v1320, %v1304
          %v1369 = vpack.c.b16 %v1321, %v1305
          %v1370 = vpack.c.b16 %v1322, %v1306
          %v1371 = vpack.c.b16 %v1323, %v1307
          %vm1420 = vcmask 392192
          %v1422 = vsel %vm1420, %v1178, 0
          %v1425 = vsel %vm1420, %v1179, 0
          %1427 = vmatprep.subr.bf16.mxu0 %v1325
          %1428 = vmatpush1.bf16.msra.mxu0 %v1324
          %1429 = vmatprep.subr.bf16.mxu0 %v1341
          %1430 = vmatpush1.bf16.msra.mxu0 %v1340
          %1431 = vmatprep.subr.bf16.mxu0 %v1357
          %1432 = vmatpush1.bf16.msra.mxu0 %v1356
          %1433 = vmatprep.subr.bf16.mxu0 0
          %1434 = vmatpush1.bf16.msra.mxu0 0
          %1435 = vmatprep.subr.bf16.mxu0 0
          %1436 = vmatpush1.bf16.msra.mxu0 0
          %1437 = vmatprep.subr.bf16.mxu0 0
          %1438 = vmatpush1.bf16.msra.mxu0 0
          %1439 = vmatprep.subr.bf16.mxu0 0
          %1440 = vmatpush1.bf16.msra.mxu0 0
          %1441 = vmatprep.subr.bf16.mxu0 0
          %1442 = vmatpush1.bf16.msra.mxu0 0
          %1443 = vmatprep.subr.bf16.mxu0 0
          %1444 = vmatpush1.bf16.msra.mxu0 0
          %1445 = vmatprep.subr.bf16.mxu0 0
          %1446 = vmatpush1.bf16.msra.mxu0 0
          %1447 = vmatprep.subr.bf16.mxu0 0
          %1448 = vmatpush1.bf16.msra.mxu0 0
          %1449 = vmatprep.subr.bf16.mxu0 0
          %1450 = vmatpush1.bf16.msra.mxu0 0
          %1451 = vmatprep.subr.bf16.mxu0 0
          %1452 = vmatpush1.bf16.msra.mxu0 0
          %1453 = vmatprep.subr.bf16.mxu0 0
          %1454 = vmatpush1.bf16.msra.mxu0 0
          %1455 = vmatprep.subr.bf16.mxu0 0
          %1456 = vmatpush1.bf16.msra.mxu0 0
          %1457 = vmatprep.subr.bf16.mxu0 0
          %1458 = vmatpush1.bf16.msra.mxu0 0
          %1459 = vmatprep.mubr.bf16.mxu0 0
          %1460 = vmatmul.mubr.bf16.gmra.mrb[0].mxu0 %v1422
          %v1461 = vpop.f32.mrb[0].mxu0
          %v1462 = vadd.f32 %v1093, %v1461
          %v1463 = vpop.f32.mrb[0].mxu0
          %v1464 = vadd.f32 %v1097, %v1463
          %v1465 = vpop.f32.mrb[0].mxu0
          %v1466 = vadd.f32 %v1093, %v1465
          %v1467 = vpop.f32.mrb[0].mxu0
          %v1468 = vadd.f32 %v1097, %v1467
          %1469 = vmatprep.mubr.bf16.mxu0 0
          %1470 = vmatmul.mubr.bf16.gmra.mrb[0].mxu0 %v1425
          %v1471 = vpop.f32.mrb[0].mxu0
          %v1472 = vadd.f32 %v1093, %v1471
          %v1473 = vpop.f32.mrb[0].mxu0
          %v1474 = vadd.f32 %v1097, %v1473
          %v1475 = vpop.f32.mrb[0].mxu0
          %v1476 = vadd.f32 %v1093, %v1475
          %v1477 = vpop.f32.mrb[0].mxu0
          %v1478 = vadd.f32 %v1097, %v1477
          %1479 = vdwg.mxu0
          %1480 = vmatprep.subr.bf16.mxu0 %v1327
          %1481 = vmatpush1.bf16.msra.mxu0 %v1326
          %1482 = vmatprep.subr.bf16.mxu0 %v1343
          %1483 = vmatpush1.bf16.msra.mxu0 %v1342
          %1484 = vmatprep.subr.bf16.mxu0 %v1359
          %1485 = vmatpush1.bf16.msra.mxu0 %v1358
          %1486 = vmatprep.subr.bf16.mxu0 0
          %1487 = vmatpush1.bf16.msra.mxu0 0
          %1488 = vmatprep.subr.bf16.mxu0 0
          %1489 = vmatpush1.bf16.msra.mxu0 0
          %1490 = vmatprep.subr.bf16.mxu0 0
          %1491 = vmatpush1.bf16.msra.mxu0 0
          %1492 = vmatprep.subr.bf16.mxu0 0
          %1493 = vmatpush1.bf16.msra.mxu0 0
          %1494 = vmatprep.subr.bf16.mxu0 0
          %1495 = vmatpush1.bf16.msra.mxu0 0
          %1496 = vmatprep.subr.bf16.mxu0 0
          %1497 = vmatpush1.bf16.msra.mxu0 0
          %1498 = vmatprep.subr.bf16.mxu0 0
          %1499 = vmatpush1.bf16.msra.mxu0 0
          %1500 = vmatprep.subr.bf16.mxu0 0
          %1501 = vmatpush1.bf16.msra.mxu0 0
          %1502 = vmatprep.subr.bf16.mxu0 0
          %1503 = vmatpush1.bf16.msra.mxu0 0
          %1504 = vmatprep.subr.bf16.mxu0 0
          %1505 = vmatpush1.bf16.msra.mxu0 0
          %1506 = vmatprep.subr.bf16.mxu0 0
          %1507 = vmatpush1.bf16.msra.mxu0 0
          %1508 = vmatprep.subr.bf16.mxu0 0
          %1509 = vmatpush1.bf16.msra.mxu0 0
          %1510 = vmatprep.subr.bf16.mxu0 0
          %1511 = vmatpush1.bf16.msra.mxu0 0
          %1512 = vmatprep.mubr.bf16.mxu0 0
          %1513 = vmatmul.mubr.bf16.gmra.mrb[0].mxu0 %v1422
          %v1514 = vpop.f32.mrb[0].mxu0
          %v1515 = vadd.f32 %v1101, %v1514
          %v1516 = vpop.f32.mrb[0].mxu0
          %v1517 = vadd.f32 %v1105, %v1516
          %v1518 = vpop.f32.mrb[0].mxu0
          %v1519 = vadd.f32 %v1101, %v1518
          %v1520 = vpop.f32.mrb[0].mxu0
          %v1521 = vadd.f32 %v1105, %v1520
          %1522 = vmatprep.mubr.bf16.mxu0 0
          %1523 = vmatmul.mubr.bf16.gmra.mrb[0].mxu0 %v1425
          %v1524 = vpop.f32.mrb[0].mxu0
          %v1525 = vadd.f32 %v1101, %v1524
          %v1526 = vpop.f32.mrb[0].mxu0
          %v1527 = vadd.f32 %v1105, %v1526
          %v1528 = vpop.f32.mrb[0].mxu0
          %v1529 = vadd.f32 %v1101, %v1528
          %v1530 = vpop.f32.mrb[0].mxu0
          %v1531 = vadd.f32 %v1105, %v1530
          %1532 = vdwg.mxu0
          %1533 = vmatprep.subr.bf16.mxu0 %v1329
          %1534 = vmatpush1.bf16.msra.mxu0 %v1328
          %1535 = vmatprep.subr.bf16.mxu0 %v1345
          %1536 = vmatpush1.bf16.msra.mxu0 %v1344
          %1537 = vmatprep.subr.bf16.mxu0 %v1361
          %1538 = vmatpush1.bf16.msra.mxu0 %v1360
          %1539 = vmatprep.subr.bf16.mxu0 0
          %1540 = vmatpush1.bf16.msra.mxu0 0
          %1541 = vmatprep.subr.bf16.mxu0 0
          %1542 = vmatpush1.bf16.msra.mxu0 0
          %1543 = vmatprep.subr.bf16.mxu0 0
          %1544 = vmatpush1.bf16.msra.mxu0 0
          %1545 = vmatprep.subr.bf16.mxu0 0
          %1546 = vmatpush1.bf16.msra.mxu0 0
          %1547 = vmatprep.subr.bf16.mxu0 0
          %1548 = vmatpush1.bf16.msra.mxu0 0
          %1549 = vmatprep.subr.bf16.mxu0 0
          %1550 = vmatpush1.bf16.msra.mxu0 0
          %1551 = vmatprep.subr.bf16.mxu0 0
          %1552 = vmatpush1.bf16.msra.mxu0 0
          %1553 = vmatprep.subr.bf16.mxu0 0
          %1554 = vmatpush1.bf16.msra.mxu0 0
          %1555 = vmatprep.subr.bf16.mxu0 0
          %1556 = vmatpush1.bf16.msra.mxu0 0
          %1557 = vmatprep.subr.bf16.mxu0 0
          %1558 = vmatpush1.bf16.msra.mxu0 0
          %1559 = vmatprep.subr.bf16.mxu0 0
          %1560 = vmatpush1.bf16.msra.mxu0 0
          %1561 = vmatprep.subr.bf16.mxu0 0
          %1562 = vmatpush1.bf16.msra.mxu0 0
          %1563 = vmatprep.subr.bf16.mxu0 0
          %1564 = vmatpush1.bf16.msra.mxu0 0
          %1565 = vmatprep.mubr.bf16.mxu0 0
          %1566 = vmatmul.mubr.bf16.gmra.mrb[0].mxu0 %v1422
          %v1567 = vpop.f32.mrb[0].mxu0
          %v1568 = vadd.f32 %v1109, %v1567
          %v1569 = vpop.f32.mrb[0].mxu0
          %v1570 = vadd.f32 %v1113, %v1569
          %v1571 = vpop.f32.mrb[0].mxu0
          %v1572 = vadd.f32 %v1109, %v1571
          %v1573 = vpop.f32.mrb[0].mxu0
          %v1574 = vadd.f32 %v1113, %v1573
          %1575 = vmatprep.mubr.bf16.mxu0 0
          %1576 = vmatmul.mubr.bf16.gmra.mrb[0].mxu0 %v1425
          %v1577 = vpop.f32.mrb[0].mxu0
          %v1578 = vadd.f32 %v1109, %v1577
          %v1579 = vpop.f32.mrb[0].mxu0
          %v1580 = vadd.f32 %v1113, %v1579
          %v1581 = vpop.f32.mrb[0].mxu0
          %v1582 = vadd.f32 %v1109, %v1581
          %v1583 = vpop.f32.mrb[0].mxu0
          %v1584 = vadd.f32 %v1113, %v1583
          %1585 = vdwg.mxu0
          %1586 = vmatprep.subr.bf16.mxu0 %v1331
          %1587 = vmatpush1.bf16.msra.mxu0 %v1330
          %1588 = vmatprep.subr.bf16.mxu0 %v1347
          %1589 = vmatpush1.bf16.msra.mxu0 %v1346
          %1590 = vmatprep.subr.bf16.mxu0 %v1363
          %1591 = vmatpush1.bf16.msra.mxu0 %v1362
          %1592 = vmatprep.subr.bf16.mxu0 0
          %1593 = vmatpush1.bf16.msra.mxu0 0
          %1594 = vmatprep.subr.bf16.mxu0 0
          %1595 = vmatpush1.bf16.msra.mxu0 0
          %1596 = vmatprep.subr.bf16.mxu0 0
          %1597 = vmatpush1.bf16.msra.mxu0 0
          %1598 = vmatprep.subr.bf16.mxu0 0
          %1599 = vmatpush1.bf16.msra.mxu0 0
          %1600 = vmatprep.subr.bf16.mxu0 0
          %1601 = vmatpush1.bf16.msra.mxu0 0
          %1602 = vmatprep.subr.bf16.mxu0 0
          %1603 = vmatpush1.bf16.msra.mxu0 0
          %1604 = vmatprep.subr.bf16.mxu0 0
          %1605 = vmatpush1.bf16.msra.mxu0 0
          %1606 = vmatprep.subr.bf16.mxu0 0
          %1607 = vmatpush1.bf16.msra.mxu0 0
          %1608 = vmatprep.subr.bf16.mxu0 0
          %1609 = vmatpush1.bf16.msra.mxu0 0
          %1610 = vmatprep.subr.bf16.mxu0 0
          %1611 = vmatpush1.bf16.msra.mxu0 0
          %1612 = vmatprep.subr.bf16.mxu0 0
          %1613 = vmatpush1.bf16.msra.mxu0 0
          %1614 = vmatprep.subr.bf16.mxu0 0
          %1615 = vmatpush1.bf16.msra.mxu0 0
          %1616 = vmatprep.subr.bf16.mxu0 0
          %1617 = vmatpush1.bf16.msra.mxu0 0
          %1618 = vmatprep.mubr.bf16.mxu0 0
          %1619 = vmatmul.mubr.bf16.gmra.mrb[0].mxu0 %v1422
          %v1620 = vpop.f32.mrb[0].mxu0
          %v1621 = vadd.f32 %v1117, %v1620
          %v1622 = vpop.f32.mrb[0].mxu0
          %v1623 = vadd.f32 %v1121, %v1622
          %v1624 = vpop.f32.mrb[0].mxu0
          %v1625 = vadd.f32 %v1117, %v1624
          %v1626 = vpop.f32.mrb[0].mxu0
          %v1627 = vadd.f32 %v1121, %v1626
          %1628 = vmatprep.mubr.bf16.mxu0 0
          %1629 = vmatmul.mubr.bf16.gmra.mrb[0].mxu0 %v1425
          %v1630 = vpop.f32.mrb[0].mxu0
          %v1631 = vadd.f32 %v1117, %v1630
          %v1632 = vpop.f32.mrb[0].mxu0
          %v1633 = vadd.f32 %v1121, %v1632
          %v1634 = vpop.f32.mrb[0].mxu0
          %v1635 = vadd.f32 %v1117, %v1634
          %v1636 = vpop.f32.mrb[0].mxu0
          %v1637 = vadd.f32 %v1121, %v1636
          %1638 = vdwg.mxu0
          %1639 = vmatprep.subr.bf16.mxu0 %v1333
          %1640 = vmatpush1.bf16.msra.mxu0 %v1332
          %1641 = vmatprep.subr.bf16.mxu0 %v1349
          %1642 = vmatpush1.bf16.msra.mxu0 %v1348
          %1643 = vmatprep.subr.bf16.mxu0 %v1365
          %1644 = vmatpush1.bf16.msra.mxu0 %v1364
          %1645 = vmatprep.subr.bf16.mxu0 0
          %1646 = vmatpush1.bf16.msra.mxu0 0
          %1647 = vmatprep.subr.bf16.mxu0 0
          %1648 = vmatpush1.bf16.msra.mxu0 0
          %1649 = vmatprep.subr.bf16.mxu0 0
          %1650 = vmatpush1.bf16.msra.mxu0 0
          %1651 = vmatprep.subr.bf16.mxu0 0
          %1652 = vmatpush1.bf16.msra.mxu0 0
          %1653 = vmatprep.subr.bf16.mxu0 0
          %1654 = vmatpush1.bf16.msra.mxu0 0
          %1655 = vmatprep.subr.bf16.mxu0 0
          %1656 = vmatpush1.bf16.msra.mxu0 0
          %1657 = vmatprep.subr.bf16.mxu0 0
          %1658 = vmatpush1.bf16.msra.mxu0 0
          %1659 = vmatprep.subr.bf16.mxu0 0
          %1660 = vmatpush1.bf16.msra.mxu0 0
          %1661 = vmatprep.subr.bf16.mxu0 0
          %1662 = vmatpush1.bf16.msra.mxu0 0
          %1663 = vmatprep.subr.bf16.mxu0 0
          %1664 = vmatpush1.bf16.msra.mxu0 0
          %1665 = vmatprep.subr.bf16.mxu0 0
          %1666 = vmatpush1.bf16.msra.mxu0 0
          %1667 = vmatprep.subr.bf16.mxu0 0
          %1668 = vmatpush1.bf16.msra.mxu0 0
          %1669 = vmatprep.subr.bf16.mxu0 0
          %1670 = vmatpush1.bf16.msra.mxu0 0
          %1671 = vmatprep.mubr.bf16.mxu0 0
          %1672 = vmatmul.mubr.bf16.gmra.mrb[0].mxu0 %v1422
          %v1673 = vpop.f32.mrb[0].mxu0
          %v1674 = vadd.f32 %v1125, %v1673
          %v1675 = vpop.f32.mrb[0].mxu0
          %v1676 = vadd.f32 %v1129, %v1675
          %v1677 = vpop.f32.mrb[0].mxu0
          %v1678 = vadd.f32 %v1125, %v1677
          %v1679 = vpop.f32.mrb[0].mxu0
          %v1680 = vadd.f32 %v1129, %v1679
          %1681 = vmatprep.mubr.bf16.mxu0 0
          %1682 = vmatmul.mubr.bf16.gmra.mrb[0].mxu0 %v1425
          %v1683 = vpop.f32.mrb[0].mxu0
          %v1684 = vadd.f32 %v1125, %v1683
          %v1685 = vpop.f32.mrb[0].mxu0
          %v1686 = vadd.f32 %v1129, %v1685
          %v1687 = vpop.f32.mrb[0].mxu0
          %v1688 = vadd.f32 %v1125, %v1687
          %v1689 = vpop.f32.mrb[0].mxu0
          %v1690 = vadd.f32 %v1129, %v1689
          %1691 = vdwg.mxu0
          %1692 = vmatprep.subr.bf16.mxu0 %v1335
          %1693 = vmatpush1.bf16.msra.mxu0 %v1334
          %1694 = vmatprep.subr.bf16.mxu0 %v1351
          %1695 = vmatpush1.bf16.msra.mxu0 %v1350
          %1696 = vmatprep.subr.bf16.mxu0 %v1367
          %1697 = vmatpush1.bf16.msra.mxu0 %v1366
          %1698 = vmatprep.subr.bf16.mxu0 0
          %1699 = vmatpush1.bf16.msra.mxu0 0
          %1700 = vmatprep.subr.bf16.mxu0 0
          %1701 = vmatpush1.bf16.msra.mxu0 0
          %1702 = vmatprep.subr.bf16.mxu0 0
          %1703 = vmatpush1.bf16.msra.mxu0 0
          %1704 = vmatprep.subr.bf16.mxu0 0
          %1705 = vmatpush1.bf16.msra.mxu0 0
          %1706 = vmatprep.subr.bf16.mxu0 0
          %1707 = vmatpush1.bf16.msra.mxu0 0
          %1708 = vmatprep.subr.bf16.mxu0 0
          %1709 = vmatpush1.bf16.msra.mxu0 0
          %1710 = vmatprep.subr.bf16.mxu0 0
          %1711 = vmatpush1.bf16.msra.mxu0 0
          %1712 = vmatprep.subr.bf16.mxu0 0
          %1713 = vmatpush1.bf16.msra.mxu0 0
          %1714 = vmatprep.subr.bf16.mxu0 0
          %1715 = vmatpush1.bf16.msra.mxu0 0
          %1716 = vmatprep.subr.bf16.mxu0 0
          %1717 = vmatpush1.bf16.msra.mxu0 0
          %1718 = vmatprep.subr.bf16.mxu0 0
          %1719 = vmatpush1.bf16.msra.mxu0 0
          %1720 = vmatprep.subr.bf16.mxu0 0
          %1721 = vmatpush1.bf16.msra.mxu0 0
          %1722 = vmatprep.subr.bf16.mxu0 0
          %1723 = vmatpush1.bf16.msra.mxu0 0
          %1724 = vmatprep.mubr.bf16.mxu0 0
          %1725 = vmatmul.mubr.bf16.gmra.mrb[0].mxu0 %v1422
          %v1726 = vpop.f32.mrb[0].mxu0
          %v1727 = vadd.f32 %v1133, %v1726
          %v1728 = vpop.f32.mrb[0].mxu0
          %v1729 = vadd.f32 %v1137, %v1728
          %v1730 = vpop.f32.mrb[0].mxu0
          %v1731 = vadd.f32 %v1133, %v1730
          %v1732 = vpop.f32.mrb[0].mxu0
          %v1733 = vadd.f32 %v1137, %v1732
          %1734 = vmatprep.mubr.bf16.mxu0 0
          %1735 = vmatmul.mubr.bf16.gmra.mrb[0].mxu0 %v1425
          %v1736 = vpop.f32.mrb[0].mxu0
          %v1737 = vadd.f32 %v1133, %v1736
          %v1738 = vpop.f32.mrb[0].mxu0
          %v1739 = vadd.f32 %v1137, %v1738
          %v1740 = vpop.f32.mrb[0].mxu0
          %v1741 = vadd.f32 %v1133, %v1740
          %v1742 = vpop.f32.mrb[0].mxu0
          %v1743 = vadd.f32 %v1137, %v1742
          %1744 = vdwg.mxu0
          %1745 = vmatprep.subr.bf16.mxu0 %v1337
          %1746 = vmatpush1.bf16.msra.mxu0 %v1336
          %1747 = vmatprep.subr.bf16.mxu0 %v1353
          %1748 = vmatpush1.bf16.msra.mxu0 %v1352
          %1749 = vmatprep.subr.bf16.mxu0 %v1369
          %1750 = vmatpush1.bf16.msra.mxu0 %v1368
          %1751 = vmatprep.subr.bf16.mxu0 0
          %1752 = vmatpush1.bf16.msra.mxu0 0
          %1753 = vmatprep.subr.bf16.mxu0 0
          %1754 = vmatpush1.bf16.msra.mxu0 0
          %1755 = vmatprep.subr.bf16.mxu0 0
          %1756 = vmatpush1.bf16.msra.mxu0 0
          %1757 = vmatprep.subr.bf16.mxu0 0
          %1758 = vmatpush1.bf16.msra.mxu0 0
          %1759 = vmatprep.subr.bf16.mxu0 0
          %1760 = vmatpush1.bf16.msra.mxu0 0
          %1761 = vmatprep.subr.bf16.mxu0 0
          %1762 = vmatpush1.bf16.msra.mxu0 0
          %1763 = vmatprep.subr.bf16.mxu0 0
          %1764 = vmatpush1.bf16.msra.mxu0 0
          %1765 = vmatprep.subr.bf16.mxu0 0
          %1766 = vmatpush1.bf16.msra.mxu0 0
          %1767 = vmatprep.subr.bf16.mxu0 0
          %1768 = vmatpush1.bf16.msra.mxu0 0
          %1769 = vmatprep.subr.bf16.mxu0 0
          %1770 = vmatpush1.bf16.msra.mxu0 0
          %1771 = vmatprep.subr.bf16.mxu0 0
          %1772 = vmatpush1.bf16.msra.mxu0 0
          %1773 = vmatprep.subr.bf16.mxu0 0
          %1774 = vmatpush1.bf16.msra.mxu0 0
          %1775 = vmatprep.subr.bf16.mxu0 0
          %1776 = vmatpush1.bf16.msra.mxu0 0
          %1777 = vmatprep.mubr.bf16.mxu0 0
          %1778 = vmatmul.mubr.bf16.gmra.mrb[0].mxu0 %v1422
          %v1779 = vpop.f32.mrb[0].mxu0
          %v1780 = vadd.f32 %v1141, %v1779
          %v1781 = vpop.f32.mrb[0].mxu0
          %v1782 = vadd.f32 %v1145, %v1781
          %v1783 = vpop.f32.mrb[0].mxu0
          %v1784 = vadd.f32 %v1141, %v1783
          %v1785 = vpop.f32.mrb[0].mxu0
          %v1786 = vadd.f32 %v1145, %v1785
          %1787 = vmatprep.mubr.bf16.mxu0 0
          %1788 = vmatmul.mubr.bf16.gmra.mrb[0].mxu0 %v1425
          %v1789 = vpop.f32.mrb[0].mxu0
          %v1790 = vadd.f32 %v1141, %v1789
          %v1791 = vpop.f32.mrb[0].mxu0
          %v1792 = vadd.f32 %v1145, %v1791
          %v1793 = vpop.f32.mrb[0].mxu0
          %v1794 = vadd.f32 %v1141, %v1793
          %v1795 = vpop.f32.mrb[0].mxu0
          %v1796 = vadd.f32 %v1145, %v1795
          %1797 = vdwg.mxu0
          %1798 = vmatprep.subr.bf16.mxu0 %v1339
          %1799 = vmatpush1.bf16.msra.mxu0 %v1338
          %1800 = vmatprep.subr.bf16.mxu0 %v1355
          %1801 = vmatpush1.bf16.msra.mxu0 %v1354
          %1802 = vmatprep.subr.bf16.mxu0 %v1371
          %1803 = vmatpush1.bf16.msra.mxu0 %v1370
          %1804 = vmatprep.subr.bf16.mxu0 0
          %1805 = vmatpush1.bf16.msra.mxu0 0
          %1806 = vmatprep.subr.bf16.mxu0 0
          %1807 = vmatpush1.bf16.msra.mxu0 0
          %1808 = vmatprep.subr.bf16.mxu0 0
          %1809 = vmatpush1.bf16.msra.mxu0 0
          %1810 = vmatprep.subr.bf16.mxu0 0
          %1811 = vmatpush1.bf16.msra.mxu0 0
          %1812 = vmatprep.subr.bf16.mxu0 0
          %1813 = vmatpush1.bf16.msra.mxu0 0
          %1814 = vmatprep.subr.bf16.mxu0 0
          %1815 = vmatpush1.bf16.msra.mxu0 0
          %1816 = vmatprep.subr.bf16.mxu0 0
          %1817 = vmatpush1.bf16.msra.mxu0 0
          %1818 = vmatprep.subr.bf16.mxu0 0
          %1819 = vmatpush1.bf16.msra.mxu0 0
          %1820 = vmatprep.subr.bf16.mxu0 0
          %1821 = vmatpush1.bf16.msra.mxu0 0
          %1822 = vmatprep.subr.bf16.mxu0 0
          %1823 = vmatpush1.bf16.msra.mxu0 0
          %1824 = vmatprep.subr.bf16.mxu0 0
          %1825 = vmatpush1.bf16.msra.mxu0 0
          %1826 = vmatprep.subr.bf16.mxu0 0
          %1827 = vmatpush1.bf16.msra.mxu0 0
          %1828 = vmatprep.subr.bf16.mxu0 0
          %1829 = vmatpush1.bf16.msra.mxu0 0
          %1830 = vmatprep.mubr.bf16.mxu0 0
          %1831 = vmatmul.mubr.bf16.gmra.mrb[0].mxu0 %v1422
          %v1832 = vpop.f32.mrb[0].mxu0
          %v1833 = vadd.f32 %v1149, %v1832
          %v1834 = vpop.f32.mrb[0].mxu0
          %v1835 = vadd.f32 %v1153, %v1834
          %v1836 = vpop.f32.mrb[0].mxu0
          %v1837 = vadd.f32 %v1149, %v1836
          %v1838 = vpop.f32.mrb[0].mxu0
          %v1839 = vadd.f32 %v1153, %v1838
          %1840 = vmatprep.mubr.bf16.mxu0 0
          %1841 = vmatmul.mubr.bf16.gmra.mrb[0].mxu0 %v1425
          %v1842 = vpop.f32.mrb[0].mxu0
          %v1843 = vadd.f32 %v1149, %v1842
          %v1844 = vpop.f32.mrb[0].mxu0
          %v1845 = vadd.f32 %v1153, %v1844
          %v1846 = vpop.f32.mrb[0].mxu0
          %v1847 = vadd.f32 %v1149, %v1846
          %v1848 = vpop.f32.mrb[0].mxu0
          %v1849 = vadd.f32 %v1153, %v1848
          %1850 = vdwg.mxu0
          %v1851 = vmax.f32 %v1462, 0.0
          %v1852 = vmax.f32 %v1464, 0.0
          %v1853 = vmax.f32 %v1515, 0.0
          %v1854 = vmax.f32 %v1517, 0.0
          %v1855 = vmax.f32 %v1568, 0.0
          %v1856 = vmax.f32 %v1570, 0.0
          %v1857 = vmax.f32 %v1621, 0.0
          %v1858 = vmax.f32 %v1623, 0.0
          %v1859 = vmax.f32 %v1674, 0.0
          %v1860 = vmax.f32 %v1676, 0.0
          %v1861 = vmax.f32 %v1727, 0.0
          %v1862 = vmax.f32 %v1729, 0.0
          %v1863 = vmax.f32 %v1780, 0.0
          %v1864 = vmax.f32 %v1782, 0.0
          %v1865 = vmax.f32 %v1833, 0.0
          %v1866 = vmax.f32 %v1835, 0.0
          %v1867 = vmax.f32 %v1466, 0.0
          %v1868 = vmax.f32 %v1468, 0.0
          %v1869 = vmax.f32 %v1519, 0.0
          %v1870 = vmax.f32 %v1521, 0.0
          %v1871 = vmax.f32 %v1572, 0.0
          %v1872 = vmax.f32 %v1574, 0.0
          %v1873 = vmax.f32 %v1625, 0.0
          %v1874 = vmax.f32 %v1627, 0.0
          %v1875 = vmax.f32 %v1678, 0.0
          %v1876 = vmax.f32 %v1680, 0.0
          %v1877 = vmax.f32 %v1731, 0.0
          %v1878 = vmax.f32 %v1733, 0.0
          %v1879 = vmax.f32 %v1784, 0.0
          %v1880 = vmax.f32 %v1786, 0.0
          %v1881 = vmax.f32 %v1837, 0.0
          %v1882 = vmax.f32 %v1839, 0.0
          %v1883 = vmax.f32 %v1472, 0.0
          %v1884 = vmax.f32 %v1474, 0.0
          %v1885 = vmax.f32 %v1525, 0.0
          %v1886 = vmax.f32 %v1527, 0.0
          %v1887 = vmax.f32 %v1578, 0.0
          %v1888 = vmax.f32 %v1580, 0.0
          %v1889 = vmax.f32 %v1631, 0.0
          %v1890 = vmax.f32 %v1633, 0.0
          %v1891 = vmax.f32 %v1684, 0.0
          %v1892 = vmax.f32 %v1686, 0.0
          %v1893 = vmax.f32 %v1737, 0.0
          %v1894 = vmax.f32 %v1739, 0.0
          %v1895 = vmax.f32 %v1790, 0.0
          %v1896 = vmax.f32 %v1792, 0.0
          %v1897 = vmax.f32 %v1843, 0.0
          %v1898 = vmax.f32 %v1845, 0.0
          %v1899 = vmax.f32 %v1476, 0.0
          %v1900 = vmax.f32 %v1478, 0.0
          %v1901 = vmax.f32 %v1529, 0.0
          %v1902 = vmax.f32 %v1531, 0.0
          %v1903 = vmax.f32 %v1582, 0.0
          %v1904 = vmax.f32 %v1584, 0.0
          %v1905 = vmax.f32 %v1635, 0.0
          %v1906 = vmax.f32 %v1637, 0.0
          %v1907 = vmax.f32 %v1688, 0.0
          %v1908 = vmax.f32 %v1690, 0.0
          %v1909 = vmax.f32 %v1741, 0.0
          %v1910 = vmax.f32 %v1743, 0.0
          %v1911 = vmax.f32 %v1794, 0.0
          %v1912 = vmax.f32 %v1796, 0.0
          %v1913 = vmax.f32 %v1847, 0.0
          %v1914 = vmax.f32 %v1849, 0.0
          %v1915 = vadd.f32 %v1851, %v1867
          %v1916 = vrot.slane %v1915, 4
          %v1917 = vadd.f32 %v1915, %v1916
          %v1918 = vrot.slane %v1917, 2
          %v1919 = vadd.f32 %v1917, %v1918
          %v1920 = vrot.slane %v1919, 1
          %v1921 = vadd.f32 %v1919, %v1920
          %v1922 = vadd.f32 %v1852, %v1868
          %v1923 = vrot.slane %v1922, 4
          %v1924 = vadd.f32 %v1922, %v1923
          %v1925 = vrot.slane %v1924, 2
          %v1926 = vadd.f32 %v1924, %v1925
          %v1927 = vrot.slane %v1926, 1
          %v1928 = vadd.f32 %v1926, %v1927
          %v1929 = vadd.f32 %v1853, %v1869
          %v1930 = vrot.slane %v1929, 4
          %v1931 = vadd.f32 %v1929, %v1930
          %v1932 = vrot.slane %v1931, 2
          %v1933 = vadd.f32 %v1931, %v1932
          %v1934 = vrot.slane %v1933, 1
          %v1935 = vadd.f32 %v1933, %v1934
          %v1936 = vadd.f32 %v1854, %v1870
          %v1937 = vrot.slane %v1936, 4
          %v1938 = vadd.f32 %v1936, %v1937
          %v1939 = vrot.slane %v1938, 2
          %v1940 = vadd.f32 %v1938, %v1939
          %v1941 = vrot.slane %v1940, 1
          %v1942 = vadd.f32 %v1940, %v1941
          %v1943 = vadd.f32 %v1855, %v1871
          %v1944 = vrot.slane %v1943, 4
          %v1945 = vadd.f32 %v1943, %v1944
          %v1946 = vrot.slane %v1945, 2
          %v1947 = vadd.f32 %v1945, %v1946
          %v1948 = vrot.slane %v1947, 1
          %v1949 = vadd.f32 %v1947, %v1948
          %v1950 = vadd.f32 %v1856, %v1872
          %v1951 = vrot.slane %v1950, 4
          %v1952 = vadd.f32 %v1950, %v1951
          %v1953 = vrot.slane %v1952, 2
          %v1954 = vadd.f32 %v1952, %v1953
          %v1955 = vrot.slane %v1954, 1
          %v1956 = vadd.f32 %v1954, %v1955
          %v1957 = vadd.f32 %v1857, %v1873
          %v1958 = vrot.slane %v1957, 4
          %v1959 = vadd.f32 %v1957, %v1958
          %v1960 = vrot.slane %v1959, 2
          %v1961 = vadd.f32 %v1959, %v1960
          %v1962 = vrot.slane %v1961, 1
          %v1963 = vadd.f32 %v1961, %v1962
          %v1964 = vadd.f32 %v1858, %v1874
          %v1965 = vrot.slane %v1964, 4
          %v1966 = vadd.f32 %v1964, %v1965
          %v1967 = vrot.slane %v1966, 2
          %v1968 = vadd.f32 %v1966, %v1967
          %v1969 = vrot.slane %v1968, 1
          %v1970 = vadd.f32 %v1968, %v1969
          %v1971 = vadd.f32 %v1859, %v1875
          %v1972 = vrot.slane %v1971, 4
          %v1973 = vadd.f32 %v1971, %v1972
          %v1974 = vrot.slane %v1973, 2
          %v1975 = vadd.f32 %v1973, %v1974
          %v1976 = vrot.slane %v1975, 1
          %v1977 = vadd.f32 %v1975, %v1976
          %v1978 = vadd.f32 %v1860, %v1876
          %v1979 = vrot.slane %v1978, 4
          %v1980 = vadd.f32 %v1978, %v1979
          %v1981 = vrot.slane %v1980, 2
          %v1982 = vadd.f32 %v1980, %v1981
          %v1983 = vrot.slane %v1982, 1
          %v1984 = vadd.f32 %v1982, %v1983
          %v1985 = vadd.f32 %v1861, %v1877
          %v1986 = vrot.slane %v1985, 4
          %v1987 = vadd.f32 %v1985, %v1986
          %v1988 = vrot.slane %v1987, 2
          %v1989 = vadd.f32 %v1987, %v1988
          %v1990 = vrot.slane %v1989, 1
          %v1991 = vadd.f32 %v1989, %v1990
          %v1992 = vadd.f32 %v1862, %v1878
          %v1993 = vrot.slane %v1992, 4
          %v1994 = vadd.f32 %v1992, %v1993
          %v1995 = vrot.slane %v1994, 2
          %v1996 = vadd.f32 %v1994, %v1995
          %v1997 = vrot.slane %v1996, 1
          %v1998 = vadd.f32 %v1996, %v1997
          %v1999 = vadd.f32 %v1863, %v1879
          %v2000 = vrot.slane %v1999, 4
          %v2001 = vadd.f32 %v1999, %v2000
          %v2002 = vrot.slane %v2001, 2
          %v2003 = vadd.f32 %v2001, %v2002
          %v2004 = vrot.slane %v2003, 1
          %v2005 = vadd.f32 %v2003, %v2004
          %v2006 = vadd.f32 %v1864, %v1880
          %v2007 = vrot.slane %v2006, 4
          %v2008 = vadd.f32 %v2006, %v2007
          %v2009 = vrot.slane %v2008, 2
          %v2010 = vadd.f32 %v2008, %v2009
          %v2011 = vrot.slane %v2010, 1
          %v2012 = vadd.f32 %v2010, %v2011
          %v2013 = vadd.f32 %v1865, %v1881
          %v2014 = vrot.slane %v2013, 4
          %v2015 = vadd.f32 %v2013, %v2014
          %v2016 = vrot.slane %v2015, 2
          %v2017 = vadd.f32 %v2015, %v2016
          %v2018 = vrot.slane %v2017, 1
          %v2019 = vadd.f32 %v2017, %v2018
          %v2020 = vadd.f32 %v1866, %v1882
          %v2021 = vrot.slane %v2020, 4
          %v2022 = vadd.f32 %v2020, %v2021
          %v2023 = vrot.slane %v2022, 2
          %v2024 = vadd.f32 %v2022, %v2023
          %v2025 = vrot.slane %v2024, 1
          %v2026 = vadd.f32 %v2024, %v2025
          %v2027 = vadd.f32 %v1883, %v1899
          %v2028 = vrot.slane %v2027, 4
          %v2029 = vadd.f32 %v2027, %v2028
          %v2030 = vrot.slane %v2029, 2
          %v2031 = vadd.f32 %v2029, %v2030
          %v2032 = vrot.slane %v2031, 1
          %v2033 = vadd.f32 %v2031, %v2032
          %v2034 = vadd.f32 %v1884, %v1900
          %v2035 = vrot.slane %v2034, 4
          %v2036 = vadd.f32 %v2034, %v2035
          %v2037 = vrot.slane %v2036, 2
          %v2038 = vadd.f32 %v2036, %v2037
          %v2039 = vrot.slane %v2038, 1
          %v2040 = vadd.f32 %v2038, %v2039
          %v2041 = vadd.f32 %v1885, %v1901
          %v2042 = vrot.slane %v2041, 4
          %v2043 = vadd.f32 %v2041, %v2042
          %v2044 = vrot.slane %v2043, 2
          %v2045 = vadd.f32 %v2043, %v2044
          %v2046 = vrot.slane %v2045, 1
          %v2047 = vadd.f32 %v2045, %v2046
          %v2048 = vadd.f32 %v1886, %v1902
          %v2049 = vrot.slane %v2048, 4
          %v2050 = vadd.f32 %v2048, %v2049
          %v2051 = vrot.slane %v2050, 2
          %v2052 = vadd.f32 %v2050, %v2051
          %v2053 = vrot.slane %v2052, 1
          %v2054 = vadd.f32 %v2052, %v2053
          %v2055 = vadd.f32 %v1887, %v1903
          %v2056 = vrot.slane %v2055, 4
          %v2057 = vadd.f32 %v2055, %v2056
          %v2058 = vrot.slane %v2057, 2
          %v2059 = vadd.f32 %v2057, %v2058
          %v2060 = vrot.slane %v2059, 1
          %v2061 = vadd.f32 %v2059, %v2060
          %v2062 = vadd.f32 %v1888, %v1904
          %v2063 = vrot.slane %v2062, 4
          %v2064 = vadd.f32 %v2062, %v2063
          %v2065 = vrot.slane %v2064, 2
          %v2066 = vadd.f32 %v2064, %v2065
          %v2067 = vrot.slane %v2066, 1
          %v2068 = vadd.f32 %v2066, %v2067
          %v2069 = vadd.f32 %v1889, %v1905
          %v2070 = vrot.slane %v2069, 4
          %v2071 = vadd.f32 %v2069, %v2070
          %v2072 = vrot.slane %v2071, 2
          %v2073 = vadd.f32 %v2071, %v2072
          %v2074 = vrot.slane %v2073, 1
          %v2075 = vadd.f32 %v2073, %v2074
          %v2076 = vadd.f32 %v1890, %v1906
          %v2077 = vrot.slane %v2076, 4
          %v2078 = vadd.f32 %v2076, %v2077
          %v2079 = vrot.slane %v2078, 2
          %v2080 = vadd.f32 %v2078, %v2079
          %v2081 = vrot.slane %v2080, 1
          %v2082 = vadd.f32 %v2080, %v2081
          %v2083 = vadd.f32 %v1891, %v1907
          %v2084 = vrot.slane %v2083, 4
          %v2085 = vadd.f32 %v2083, %v2084
          %v2086 = vrot.slane %v2085, 2
          %v2087 = vadd.f32 %v2085, %v2086
          %v2088 = vrot.slane %v2087, 1
          %v2089 = vadd.f32 %v2087, %v2088
          %v2090 = vadd.f32 %v1892, %v1908
          %v2091 = vrot.slane %v2090, 4
          %v2092 = vadd.f32 %v2090, %v2091
          %v2093 = vrot.slane %v2092, 2
          %v2094 = vadd.f32 %v2092, %v2093
          %v2095 = vrot.slane %v2094, 1
          %v2096 = vadd.f32 %v2094, %v2095
          %v2097 = vadd.f32 %v1893, %v1909
          %v2098 = vrot.slane %v2097, 4
          %v2099 = vadd.f32 %v2097, %v2098
          %v2100 = vrot.slane %v2099, 2
          %v2101 = vadd.f32 %v2099, %v2100
          %v2102 = vrot.slane %v2101, 1
          %v2103 = vadd.f32 %v2101, %v2102
          %v2104 = vadd.f32 %v1894, %v1910
          %v2105 = vrot.slane %v2104, 4
          %v2106 = vadd.f32 %v2104, %v2105
          %v2107 = vrot.slane %v2106, 2
          %v2108 = vadd.f32 %v2106, %v2107
          %v2109 = vrot.slane %v2108, 1
          %v2110 = vadd.f32 %v2108, %v2109
          %v2111 = vadd.f32 %v1895, %v1911
          %v2112 = vrot.slane %v2111, 4
          %v2113 = vadd.f32 %v2111, %v2112
          %v2114 = vrot.slane %v2113, 2
          %v2115 = vadd.f32 %v2113, %v2114
          %v2116 = vrot.slane %v2115, 1
          %v2117 = vadd.f32 %v2115, %v2116
          %v2118 = vadd.f32 %v1896, %v1912
          %v2119 = vrot.slane %v2118, 4
          %v2120 = vadd.f32 %v2118, %v2119
          %v2121 = vrot.slane %v2120, 2
          %v2122 = vadd.f32 %v2120, %v2121
          %v2123 = vrot.slane %v2122, 1
          %v2124 = vadd.f32 %v2122, %v2123
          %v2125 = vadd.f32 %v1897, %v1913
          %v2126 = vrot.slane %v2125, 4
          %v2127 = vadd.f32 %v2125, %v2126
          %v2128 = vrot.slane %v2127, 2
          %v2129 = vadd.f32 %v2127, %v2128
          %v2130 = vrot.slane %v2129, 1
          %v2131 = vadd.f32 %v2129, %v2130
          %v2132 = vadd.f32 %v1898, %v1914
          %v2133 = vrot.slane %v2132, 4
          %v2134 = vadd.f32 %v2132, %v2133
          %v2135 = vrot.slane %v2134, 2
          %v2136 = vadd.f32 %v2134, %v2135
          %v2137 = vrot.slane %v2136, 1
          %v2138 = vadd.f32 %v2136, %v2137
          %v2139 = vrcp.pop 16.0
          %v2140 = vmul.f32 %v1921, %v2139
          %v2141 = vmul.f32 %v1928, %v2139
          %v2142 = vmul.f32 %v1935, %v2139
          %v2143 = vmul.f32 %v1942, %v2139
          %v2144 = vmul.f32 %v1949, %v2139
          %v2145 = vmul.f32 %v1956, %v2139
          %v2146 = vmul.f32 %v1963, %v2139
          %v2147 = vmul.f32 %v1970, %v2139
          %v2148 = vmul.f32 %v1977, %v2139
          %v2149 = vmul.f32 %v1984, %v2139
          %v2150 = vmul.f32 %v1991, %v2139
          %v2151 = vmul.f32 %v1998, %v2139
          %v2152 = vmul.f32 %v2005, %v2139
          %v2153 = vmul.f32 %v2012, %v2139
          %v2154 = vmul.f32 %v2019, %v2139
          %v2155 = vmul.f32 %v2026, %v2139
          %v2156 = vmul.f32 %v2033, %v2139
          %v2157 = vmul.f32 %v2040, %v2139
          %v2158 = vmul.f32 %v2047, %v2139
          %v2159 = vmul.f32 %v2054, %v2139
          %v2160 = vmul.f32 %v2061, %v2139
          %v2161 = vmul.f32 %v2068, %v2139
          %v2162 = vmul.f32 %v2075, %v2139
          %v2163 = vmul.f32 %v2082, %v2139
          %v2164 = vmul.f32 %v2089, %v2139
          %v2165 = vmul.f32 %v2096, %v2139
          %v2166 = vmul.f32 %v2103, %v2139
          %v2167 = vmul.f32 %v2110, %v2139
          %v2168 = vmul.f32 %v2117, %v2139
          %v2169 = vmul.f32 %v2124, %v2139
          %v2170 = vmul.f32 %v2131, %v2139
          %v2171 = vmul.f32 %v2138, %v2139
          %v2172 = vpack.c.bf16 %v2140, %v2140
          %v2173 = vpack.c.bf16 %v2141, %v2141
          %v2174 = vpack.c.bf16 %v2142, %v2142
          %v2175 = vpack.c.bf16 %v2143, %v2143
          %v2176 = vpack.c.bf16 %v2144, %v2144
          %v2177 = vpack.c.bf16 %v2145, %v2145
          %v2178 = vpack.c.bf16 %v2146, %v2146
          %v2179 = vpack.c.bf16 %v2147, %v2147
          %v2180 = vpack.c.bf16 %v2148, %v2148
          %v2181 = vpack.c.bf16 %v2149, %v2149
          %v2182 = vpack.c.bf16 %v2150, %v2150
          %v2183 = vpack.c.bf16 %v2151, %v2151
          %v2184 = vpack.c.bf16 %v2152, %v2152
          %v2185 = vpack.c.bf16 %v2153, %v2153
          %v2186 = vpack.c.bf16 %v2154, %v2154
          %v2187 = vpack.c.bf16 %v2155, %v2155
          %v2188 = vpack.c.bf16 %v2156, %v2156
          %v2189 = vpack.c.bf16 %v2157, %v2157
          %v2190 = vpack.c.bf16 %v2158, %v2158
          %v2191 = vpack.c.bf16 %v2159, %v2159
          %v2192 = vpack.c.bf16 %v2160, %v2160
          %v2193 = vpack.c.bf16 %v2161, %v2161
          %v2194 = vpack.c.bf16 %v2162, %v2162
          %v2195 = vpack.c.bf16 %v2163, %v2163
          %v2196 = vpack.c.bf16 %v2164, %v2164
          %v2197 = vpack.c.bf16 %v2165, %v2165
          %v2198 = vpack.c.bf16 %v2166, %v2166
          %v2199 = vpack.c.bf16 %v2167, %v2167
          %v2200 = vpack.c.bf16 %v2168, %v2168
          %v2201 = vpack.c.bf16 %v2169, %v2169
          %v2202 = vpack.c.bf16 %v2170, %v2170
          %v2203 = vpack.c.bf16 %v2171, %v2171
          %v2236 = vcombine.low %v2172, %v2173
          %v2237 = vcombine.low %v2174, %v2175
          %v2238 = vcombine.low %v2176, %v2177
          %v2239 = vcombine.low %v2178, %v2179
          %v2241 = vunpack.c.l.s4 1966171168
          %v2242 = vunpack.c.0.s8 %v2241
          %v2243 = vlaneseq
          %v2244 = vshrl.u32 %v2243, 7
          %v2245 = vsub.s32 %v2242, %v2244
          %v2246 = vrot.slane %v2236, %v2245
          %v2248 = vunpack.c.l.s4 1966171168
          %v2249 = vunpack.c.0.s8 %v2248
          %v2250 = vlaneseq
          %v2251 = vshrl.u32 %v2250, 7
          %v2252 = vsub.s32 %v2249, %v2251
          %v2253 = vrot.slane %v2237, %v2252
          %v2255 = vunpack.c.l.s4 1966171168
          %v2256 = vunpack.c.0.s8 %v2255
          %v2257 = vlaneseq
          %v2258 = vshrl.u32 %v2257, 7
          %v2259 = vsub.s32 %v2256, %v2258
          %v2260 = vrot.slane %v2238, %v2259
          %v2262 = vunpack.c.l.s4 1966171168
          %v2263 = vunpack.c.0.s8 %v2262
          %v2264 = vlaneseq
          %v2265 = vshrl.u32 %v2264, 7
          %v2266 = vsub.s32 %v2263, %v2265
          %v2267 = vrot.slane %v2239, %v2266
          %v2268 = vcombine.low %v2246, %v2253
          %v2269 = vcombine.low %v2260, %v2267
          %v2271 = vunpack.c.l.s4 1966171168
          %v2272 = vunpack.c.0.s8 %v2271
          %v2273 = vlaneseq
          %v2274 = vshrl.u32 %v2273, 7
          %v2275 = vsub.s32 %v2272, %v2274
          %v2276 = vrot.slane %v2268, %v2275
          %v2278 = vunpack.c.l.s4 1966171168
          %v2279 = vunpack.c.0.s8 %v2278
          %v2280 = vlaneseq
          %v2281 = vshrl.u32 %v2280, 7
          %v2282 = vsub.s32 %v2279, %v2281
          %v2283 = vrot.slane %v2269, %v2282
          %v2284 = vcombine.low %v2276, %v2283
          %v2285 = vcombine.low %v2180, %v2181
          %v2286 = vcombine.low %v2182, %v2183
          %v2287 = vcombine.low %v2184, %v2185
          %v2288 = vcombine.low %v2186, %v2187
          %v2290 = vunpack.c.l.s4 1966171168
          %v2291 = vunpack.c.0.s8 %v2290
          %v2292 = vlaneseq
          %v2293 = vshrl.u32 %v2292, 7
          %v2294 = vsub.s32 %v2291, %v2293
          %v2295 = vrot.slane %v2285, %v2294
          %v2297 = vunpack.c.l.s4 1966171168
          %v2298 = vunpack.c.0.s8 %v2297
          %v2299 = vlaneseq
          %v2300 = vshrl.u32 %v2299, 7
          %v2301 = vsub.s32 %v2298, %v2300
          %v2302 = vrot.slane %v2286, %v2301
          %v2304 = vunpack.c.l.s4 1966171168
          %v2305 = vunpack.c.0.s8 %v2304
          %v2306 = vlaneseq
          %v2307 = vshrl.u32 %v2306, 7
          %v2308 = vsub.s32 %v2305, %v2307
          %v2309 = vrot.slane %v2287, %v2308
          %v2311 = vunpack.c.l.s4 1966171168
          %v2312 = vunpack.c.0.s8 %v2311
          %v2313 = vlaneseq
          %v2314 = vshrl.u32 %v2313, 7
          %v2315 = vsub.s32 %v2312, %v2314
          %v2316 = vrot.slane %v2288, %v2315
          %v2317 = vcombine.low %v2295, %v2302
          %v2318 = vcombine.low %v2309, %v2316
          %v2320 = vunpack.c.l.s4 1966171168
          %v2321 = vunpack.c.0.s8 %v2320
          %v2322 = vlaneseq
          %v2323 = vshrl.u32 %v2322, 7
          %v2324 = vsub.s32 %v2321, %v2323
          %v2325 = vrot.slane %v2317, %v2324
          %v2327 = vunpack.c.l.s4 1966171168
          %v2328 = vunpack.c.0.s8 %v2327
          %v2329 = vlaneseq
          %v2330 = vshrl.u32 %v2329, 7
          %v2331 = vsub.s32 %v2328, %v2330
          %v2332 = vrot.slane %v2318, %v2331
          %v2333 = vcombine.low %v2325, %v2332
          %v2334 = vcombine.low %v2188, %v2189
          %v2335 = vcombine.low %v2190, %v2191
          %v2336 = vcombine.low %v2192, %v2193
          %v2337 = vcombine.low %v2194, %v2195
          %v2339 = vunpack.c.l.s4 1966171168
          %v2340 = vunpack.c.0.s8 %v2339
          %v2341 = vlaneseq
          %v2342 = vshrl.u32 %v2341, 7
          %v2343 = vsub.s32 %v2340, %v2342
          %v2344 = vrot.slane %v2334, %v2343
          %v2346 = vunpack.c.l.s4 1966171168
          %v2347 = vunpack.c.0.s8 %v2346
          %v2348 = vlaneseq
          %v2349 = vshrl.u32 %v2348, 7
          %v2350 = vsub.s32 %v2347, %v2349
          %v2351 = vrot.slane %v2335, %v2350
          %v2353 = vunpack.c.l.s4 1966171168
          %v2354 = vunpack.c.0.s8 %v2353
          %v2355 = vlaneseq
          %v2356 = vshrl.u32 %v2355, 7
          %v2357 = vsub.s32 %v2354, %v2356
          %v2358 = vrot.slane %v2336, %v2357
          %v2360 = vunpack.c.l.s4 1966171168
          %v2361 = vunpack.c.0.s8 %v2360
          %v2362 = vlaneseq
          %v2363 = vshrl.u32 %v2362, 7
          %v2364 = vsub.s32 %v2361, %v2363
          %v2365 = vrot.slane %v2337, %v2364
          %v2366 = vcombine.low %v2344, %v2351
          %v2367 = vcombine.low %v2358, %v2365
          %v2369 = vunpack.c.l.s4 1966171168
          %v2370 = vunpack.c.0.s8 %v2369
          %v2371 = vlaneseq
          %v2372 = vshrl.u32 %v2371, 7
          %v2373 = vsub.s32 %v2370, %v2372
          %v2374 = vrot.slane %v2366, %v2373
          %v2376 = vunpack.c.l.s4 1966171168
          %v2377 = vunpack.c.0.s8 %v2376
          %v2378 = vlaneseq
          %v2379 = vshrl.u32 %v2378, 7
          %v2380 = vsub.s32 %v2377, %v2379
          %v2381 = vrot.slane %v2367, %v2380
          %v2382 = vcombine.low %v2374, %v2381
          %v2383 = vcombine.low %v2196, %v2197
          %v2384 = vcombine.low %v2198, %v2199
          %v2385 = vcombine.low %v2200, %v2201
          %v2386 = vcombine.low %v2202, %v2203
          %v2388 = vunpack.c.l.s4 1966171168
          %v2389 = vunpack.c.0.s8 %v2388
          %v2390 = vlaneseq
          %v2391 = vshrl.u32 %v2390, 7
          %v2392 = vsub.s32 %v2389, %v2391
          %v2393 = vrot.slane %v2383, %v2392
          %v2395 = vunpack.c.l.s4 1966171168
          %v2396 = vunpack.c.0.s8 %v2395
          %v2397 = vlaneseq
          %v2398 = vshrl.u32 %v2397, 7
          %v2399 = vsub.s32 %v2396, %v2398
          %v2400 = vrot.slane %v2384, %v2399
          %v2402 = vunpack.c.l.s4 1966171168
          %v2403 = vunpack.c.0.s8 %v2402
          %v2404 = vlaneseq
          %v2405 = vshrl.u32 %v2404, 7
          %v2406 = vsub.s32 %v2403, %v2405
          %v2407 = vrot.slane %v2385, %v2406
          %v2409 = vunpack.c.l.s4 1966171168
          %v2410 = vunpack.c.0.s8 %v2409
          %v2411 = vlaneseq
          %v2412 = vshrl.u32 %v2411, 7
          %v2413 = vsub.s32 %v2410, %v2412
          %v2414 = vrot.slane %v2386, %v2413
          %v2415 = vcombine.low %v2393, %v2400
          %v2416 = vcombine.low %v2407, %v2414
          %v2418 = vunpack.c.l.s4 1966171168
          %v2419 = vunpack.c.0.s8 %v2418
          %v2420 = vlaneseq
          %v2421 = vshrl.u32 %v2420, 7
          %v2422 = vsub.s32 %v2419, %v2421
          %v2423 = vrot.slane %v2415, %v2422
          %v2425 = vunpack.c.l.s4 1966171168
          %v2426 = vunpack.c.0.s8 %v2425
          %v2427 = vlaneseq
          %v2428 = vshrl.u32 %v2427, 7
          %v2429 = vsub.s32 %v2426, %v2428
          %v2430 = vrot.slane %v2416, %v2429
          %v2431 = vcombine.low %v2423, %v2430
          %v2432 = vcombine.high %v2284, %v2284
          %v2434 = vunpack.c.l.s4 1935823168
          %v2435 = vunpack.c.0.s8 %v2434
          %v2436 = vlaneseq
          %v2437 = vshrl.u32 %v2436, 7
          %v2438 = vsub.s32 %v2435, %v2437
          %v2439 = vrot.slane %v2284, %v2438
          %v2441 = vunpack.c.l.s4 1935823168
          %v2442 = vunpack.c.0.s8 %v2441
          %v2443 = vlaneseq
          %v2444 = vshrl.u32 %v2443, 7
          %v2445 = vsub.s32 %v2442, %v2444
          %v2446 = vrot.slane %v2432, %v2445
          %v2447 = vcombine.high %v2439, %v2439
          %v2448 = vcombine.high %v2446, %v2446
          %v2450 = vunpack.c.l.s4 1935823168
          %v2451 = vunpack.c.0.s8 %v2450
          %v2452 = vlaneseq
          %v2453 = vshrl.u32 %v2452, 7
          %v2454 = vsub.s32 %v2451, %v2453
          %v2455 = vrot.slane %v2439, %v2454
          %v2457 = vunpack.c.l.s4 1935823168
          %v2458 = vunpack.c.0.s8 %v2457
          %v2459 = vlaneseq
          %v2460 = vshrl.u32 %v2459, 7
          %v2461 = vsub.s32 %v2458, %v2460
          %v2462 = vrot.slane %v2447, %v2461
          %v2464 = vunpack.c.l.s4 1935823168
          %v2465 = vunpack.c.0.s8 %v2464
          %v2466 = vlaneseq
          %v2467 = vshrl.u32 %v2466, 7
          %v2468 = vsub.s32 %v2465, %v2467
          %v2469 = vrot.slane %v2446, %v2468
          %v2471 = vunpack.c.l.s4 1935823168
          %v2472 = vunpack.c.0.s8 %v2471
          %v2473 = vlaneseq
          %v2474 = vshrl.u32 %v2473, 7
          %v2475 = vsub.s32 %v2472, %v2474
          %v2476 = vrot.slane %v2448, %v2475
          %v2477 = vcombine.high %v2333, %v2333
          %v2479 = vunpack.c.l.s4 1935823168
          %v2480 = vunpack.c.0.s8 %v2479
          %v2481 = vlaneseq
          %v2482 = vshrl.u32 %v2481, 7
          %v2483 = vsub.s32 %v2480, %v2482
          %v2484 = vrot.slane %v2333, %v2483
          %v2486 = vunpack.c.l.s4 1935823168
          %v2487 = vunpack.c.0.s8 %v2486
          %v2488 = vlaneseq
          %v2489 = vshrl.u32 %v2488, 7
          %v2490 = vsub.s32 %v2487, %v2489
          %v2491 = vrot.slane %v2477, %v2490
          %v2492 = vcombine.high %v2484, %v2484
          %v2493 = vcombine.high %v2491, %v2491
          %v2495 = vunpack.c.l.s4 1935823168
          %v2496 = vunpack.c.0.s8 %v2495
          %v2497 = vlaneseq
          %v2498 = vshrl.u32 %v2497, 7
          %v2499 = vsub.s32 %v2496, %v2498
          %v2500 = vrot.slane %v2484, %v2499
          %v2502 = vunpack.c.l.s4 1935823168
          %v2503 = vunpack.c.0.s8 %v2502
          %v2504 = vlaneseq
          %v2505 = vshrl.u32 %v2504, 7
          %v2506 = vsub.s32 %v2503, %v2505
          %v2507 = vrot.slane %v2492, %v2506
          %v2509 = vunpack.c.l.s4 1935823168
          %v2510 = vunpack.c.0.s8 %v2509
          %v2511 = vlaneseq
          %v2512 = vshrl.u32 %v2511, 7
          %v2513 = vsub.s32 %v2510, %v2512
          %v2514 = vrot.slane %v2491, %v2513
          %v2516 = vunpack.c.l.s4 1935823168
          %v2517 = vunpack.c.0.s8 %v2516
          %v2518 = vlaneseq
          %v2519 = vshrl.u32 %v2518, 7
          %v2520 = vsub.s32 %v2517, %v2519
          %v2521 = vrot.slane %v2493, %v2520
          %v2522 = vcombine.high %v2382, %v2382
          %v2524 = vunpack.c.l.s4 1935823168
          %v2525 = vunpack.c.0.s8 %v2524
          %v2526 = vlaneseq
          %v2527 = vshrl.u32 %v2526, 7
          %v2528 = vsub.s32 %v2525, %v2527
          %v2529 = vrot.slane %v2382, %v2528
          %v2531 = vunpack.c.l.s4 1935823168
          %v2532 = vunpack.c.0.s8 %v2531
          %v2533 = vlaneseq
          %v2534 = vshrl.u32 %v2533, 7
          %v2535 = vsub.s32 %v2532, %v2534
          %v2536 = vrot.slane %v2522, %v2535
          %v2537 = vcombine.high %v2529, %v2529
          %v2538 = vcombine.high %v2536, %v2536
          %v2540 = vunpack.c.l.s4 1935823168
          %v2541 = vunpack.c.0.s8 %v2540
          %v2542 = vlaneseq
          %v2543 = vshrl.u32 %v2542, 7
          %v2544 = vsub.s32 %v2541, %v2543
          %v2545 = vrot.slane %v2529, %v2544
          %v2547 = vunpack.c.l.s4 1935823168
          %v2548 = vunpack.c.0.s8 %v2547
          %v2549 = vlaneseq
          %v2550 = vshrl.u32 %v2549, 7
          %v2551 = vsub.s32 %v2548, %v2550
          %v2552 = vrot.slane %v2537, %v2551
          %v2554 = vunpack.c.l.s4 1935823168
          %v2555 = vunpack.c.0.s8 %v2554
          %v2556 = vlaneseq
          %v2557 = vshrl.u32 %v2556, 7
          %v2558 = vsub.s32 %v2555, %v2557
          %v2559 = vrot.slane %v2536, %v2558
          %v2561 = vunpack.c.l.s4 1935823168
          %v2562 = vunpack.c.0.s8 %v2561
          %v2563 = vlaneseq
          %v2564 = vshrl.u32 %v2563, 7
          %v2565 = vsub.s32 %v2562, %v2564
          %v2566 = vrot.slane %v2538, %v2565
          %v2567 = vcombine.high %v2431, %v2431
          %v2569 = vunpack.c.l.s4 1935823168
          %v2570 = vunpack.c.0.s8 %v2569
          %v2571 = vlaneseq
          %v2572 = vshrl.u32 %v2571, 7
          %v2573 = vsub.s32 %v2570, %v2572
          %v2574 = vrot.slane %v2431, %v2573
          %v2576 = vunpack.c.l.s4 1935823168
          %v2577 = vunpack.c.0.s8 %v2576
          %v2578 = vlaneseq
          %v2579 = vshrl.u32 %v2578, 7
          %v2580 = vsub.s32 %v2577, %v2579
          %v2581 = vrot.slane %v2567, %v2580
          %v2582 = vcombine.high %v2574, %v2574
          %v2583 = vcombine.high %v2581, %v2581
          %v2585 = vunpack.c.l.s4 1935823168
          %v2586 = vunpack.c.0.s8 %v2585
          %v2587 = vlaneseq
          %v2588 = vshrl.u32 %v2587, 7
          %v2589 = vsub.s32 %v2586, %v2588
          %v2590 = vrot.slane %v2574, %v2589
          %v2592 = vunpack.c.l.s4 1935823168
          %v2593 = vunpack.c.0.s8 %v2592
          %v2594 = vlaneseq
          %v2595 = vshrl.u32 %v2594, 7
          %v2596 = vsub.s32 %v2593, %v2595
          %v2597 = vrot.slane %v2582, %v2596
          %v2599 = vunpack.c.l.s4 1935823168
          %v2600 = vunpack.c.0.s8 %v2599
          %v2601 = vlaneseq
          %v2602 = vshrl.u32 %v2601, 7
          %v2603 = vsub.s32 %v2600, %v2602
          %v2604 = vrot.slane %v2581, %v2603
          %v2606 = vunpack.c.l.s4 1935823168
          %v2607 = vunpack.c.0.s8 %v2606
          %v2608 = vlaneseq
          %v2609 = vshrl.u32 %v2608, 7
          %v2610 = vsub.s32 %v2607, %v2609
          %v2611 = vrot.slane %v2583, %v2610
          %v2612 = vunpack.c.l.b16 %v2455
          %v2613 = vunpack.c.h.b16 %v2455
          %v2614 = vunpack.c.l.b16 %v2462
          %v2615 = vunpack.c.h.b16 %v2462
          %v2616 = vunpack.c.l.b16 %v2469
          %v2617 = vunpack.c.h.b16 %v2469
          %v2618 = vunpack.c.l.b16 %v2476
          %v2619 = vunpack.c.h.b16 %v2476
          %v2620 = vunpack.c.l.b16 %v2500
          %v2621 = vunpack.c.h.b16 %v2500
          %v2622 = vunpack.c.l.b16 %v2507
          %v2623 = vunpack.c.h.b16 %v2507
          %v2624 = vunpack.c.l.b16 %v2514
          %v2625 = vunpack.c.h.b16 %v2514
          %v2626 = vunpack.c.l.b16 %v2521
          %v2627 = vunpack.c.h.b16 %v2521
          %v2628 = vunpack.c.l.b16 %v2545
          %v2629 = vunpack.c.h.b16 %v2545
          %v2630 = vunpack.c.l.b16 %v2552
          %v2631 = vunpack.c.h.b16 %v2552
          %v2632 = vunpack.c.l.b16 %v2559
          %v2633 = vunpack.c.h.b16 %v2559
          %v2634 = vunpack.c.l.b16 %v2566
          %v2635 = vunpack.c.h.b16 %v2566
          %v2636 = vunpack.c.l.b16 %v2590
          %v2637 = vunpack.c.h.b16 %v2590
          %v2638 = vunpack.c.l.b16 %v2597
          %v2639 = vunpack.c.h.b16 %v2597
          %v2640 = vunpack.c.l.b16 %v2604
          %v2641 = vunpack.c.h.b16 %v2604
          %v2642 = vunpack.c.l.b16 %v2611
          %v2643 = vunpack.c.h.b16 %v2611
          %v2644 = vrot.slane %v2628, 7
          %vm2645 = vcmask 1041409
          %v2646 = vsel %vm2645, %v2644, %v2612
          %v2647 = vrot.slane %v2629, 7
          %v2648 = vsel %vm2645, %v2647, %v2613
          %v2649 = vrot.slane %v2630, 7
          %v2650 = vsel %vm2645, %v2649, %v2614
          %v2651 = vrot.slane %v2631, 7
          %v2652 = vsel %vm2645, %v2651, %v2615
          %v2653 = vrot.slane %v2632, 7
          %v2654 = vsel %vm2645, %v2653, %v2616
          %v2655 = vrot.slane %v2633, 7
          %v2656 = vsel %vm2645, %v2655, %v2617
          %v2657 = vrot.slane %v2634, 7
          %v2658 = vsel %vm2645, %v2657, %v2618
          %v2659 = vrot.slane %v2635, 7
          %v2660 = vsel %vm2645, %v2659, %v2619
          %v2661 = vrot.slane %v2636, 7
          %v2662 = vsel %vm2645, %v2661, %v2620
          %v2663 = vrot.slane %v2637, 7
          %v2664 = vsel %vm2645, %v2663, %v2621
          %v2665 = vrot.slane %v2638, 7
          %v2666 = vsel %vm2645, %v2665, %v2622
          %v2667 = vrot.slane %v2639, 7
          %v2668 = vsel %vm2645, %v2667, %v2623
          %v2669 = vrot.slane %v2640, 7
          %v2670 = vsel %vm2645, %v2669, %v2624
          %v2671 = vrot.slane %v2641, 7
          %v2672 = vsel %vm2645, %v2671, %v2625
          %v2673 = vrot.slane %v2642, 7
          %v2674 = vsel %vm2645, %v2673, %v2626
          %v2675 = vrot.slane %v2643, 7
          %v2676 = vsel %vm2645, %v2675, %v2627
          %v2677 = vpack.c.b16 %v2648, %v2646
          %v2678 = vpack.c.b16 %v2652, %v2650
          %v2679 = vpack.c.b16 %v2656, %v2654
          %v2680 = vpack.c.b16 %v2660, %v2658
          %v2681 = vpack.c.b16 %v2664, %v2662
          %v2682 = vpack.c.b16 %v2668, %v2666
          %v2683 = vpack.c.b16 %v2672, %v2670
          %v2684 = vpack.c.b16 %v2676, %v2674
          %v2686 = vunpack.c.l.s4 1966171168
          %v2687 = vunpack.c.0.s8 %v2686
          %v2688 = vlaneseq
          %v2689 = vshrl.u32 %v2688, 7
          %v2690 = vsub.s32 %v2687, %v2689
          %v2691 = vrot.slane %v2677, %v2690
          %v2693 = vunpack.c.l.s4 1966171168
          %v2694 = vunpack.c.0.s8 %v2693
          %v2695 = vlaneseq
          %v2696 = vshrl.u32 %v2695, 7
          %v2697 = vsub.s32 %v2694, %v2696
          %v2698 = vrot.slane %v2678, %v2697
          %v2700 = vunpack.c.l.s4 1966171168
          %v2701 = vunpack.c.0.s8 %v2700
          %v2702 = vlaneseq
          %v2703 = vshrl.u32 %v2702, 7
          %v2704 = vsub.s32 %v2701, %v2703
          %v2705 = vrot.slane %v2679, %v2704
          %v2707 = vunpack.c.l.s4 1966171168
          %v2708 = vunpack.c.0.s8 %v2707
          %v2709 = vlaneseq
          %v2710 = vshrl.u32 %v2709, 7
          %v2711 = vsub.s32 %v2708, %v2710
          %v2712 = vrot.slane %v2680, %v2711
          %v2713 = vcombine.low %v2691, %v2698
          %v2714 = vcombine.low %v2705, %v2712
          %v2716 = vunpack.c.l.s4 1966171168
          %v2717 = vunpack.c.0.s8 %v2716
          %v2718 = vlaneseq
          %v2719 = vshrl.u32 %v2718, 7
          %v2720 = vsub.s32 %v2717, %v2719
          %v2721 = vrot.slane %v2713, %v2720
          %v2723 = vunpack.c.l.s4 1966171168
          %v2724 = vunpack.c.0.s8 %v2723
          %v2725 = vlaneseq
          %v2726 = vshrl.u32 %v2725, 7
          %v2727 = vsub.s32 %v2724, %v2726
          %v2728 = vrot.slane %v2714, %v2727
          %v2729 = vcombine.low %v2721, %v2728
          %v2731 = vunpack.c.l.s4 1966171168
          %v2732 = vunpack.c.0.s8 %v2731
          %v2733 = vlaneseq
          %v2734 = vshrl.u32 %v2733, 7
          %v2735 = vsub.s32 %v2732, %v2734
          %v2736 = vrot.slane %v2681, %v2735
          %v2738 = vunpack.c.l.s4 1966171168
          %v2739 = vunpack.c.0.s8 %v2738
          %v2740 = vlaneseq
          %v2741 = vshrl.u32 %v2740, 7
          %v2742 = vsub.s32 %v2739, %v2741
          %v2743 = vrot.slane %v2682, %v2742
          %v2745 = vunpack.c.l.s4 1966171168
          %v2746 = vunpack.c.0.s8 %v2745
          %v2747 = vlaneseq
          %v2748 = vshrl.u32 %v2747, 7
          %v2749 = vsub.s32 %v2746, %v2748
          %v2750 = vrot.slane %v2683, %v2749
          %v2752 = vunpack.c.l.s4 1966171168
          %v2753 = vunpack.c.0.s8 %v2752
          %v2754 = vlaneseq
          %v2755 = vshrl.u32 %v2754, 7
          %v2756 = vsub.s32 %v2753, %v2755
          %v2757 = vrot.slane %v2684, %v2756
          %v2758 = vcombine.low %v2736, %v2743
          %v2759 = vcombine.low %v2750, %v2757
          %v2761 = vunpack.c.l.s4 1966171168
          %v2762 = vunpack.c.0.s8 %v2761
          %v2763 = vlaneseq
          %v2764 = vshrl.u32 %v2763, 7
          %v2765 = vsub.s32 %v2762, %v2764
          %v2766 = vrot.slane %v2758, %v2765
          %v2768 = vunpack.c.l.s4 1966171168
          %v2769 = vunpack.c.0.s8 %v2768
          %v2770 = vlaneseq
          %v2771 = vshrl.u32 %v2770, 7
          %v2772 = vsub.s32 %v2769, %v2771
          %v2773 = vrot.slane %v2759, %v2772
          %v2774 = vcombine.low %v2766, %v2773
          %2777 = vst [vmem:[#allocation2] sm:$0xff] %v2729
          %2778 = vst [vmem:[#allocation2 + $0x8] sm:$0xff] %v2774
        $region140: #{advanced_contrastive_forward.1} parent=79 // pred_fallthru
          _
        %v2779 = vld [vmem:[#allocation2] sm:$0xff]
        %v2780 = vld [vmem:[#allocation2 + $0x8] sm:$0xff]
        %v2781 = vld [vmem:[%s809] sm:$0xff]
        %v2782 = vld [vmem:[%s809 + $0x8] sm:$0xff]
        %v2783 = vld [vmem:[%s809 + $0x10] sm:$0xff]
        %v2784 = vld [vmem:[%s809 + $0x18] sm:$0xff]
        %v2785 = vld [vmem:[%s809 + $0x20] sm:$0xff]
        %v2786 = vld [vmem:[%s809 + $0x28] sm:$0xff]
        %v2787 = vld [vmem:[%s809 + $0x30] sm:$0xff]
        %v2788 = vld [vmem:[%s809 + $0x38] sm:$0xff]
        %v2789 = vld [vmem:[%s809 + $0x40] sm:$0xff]
        %v2790 = vld [vmem:[%s809 + $0x48] sm:$0xff]
        %v2791 = vld [vmem:[%s809 + $0x50] sm:$0xff]
        %v2792 = vld [vmem:[%s809 + $0x58] sm:$0xff]
        %v2793 = vld [vmem:[%s809 + $0x60] sm:$0xff]
        %v2794 = vld [vmem:[%s809 + $0x68] sm:$0xff]
        %v2795 = vld [vmem:[%s809 + $0x70] sm:$0xff]
        %v2796 = vld [vmem:[%s809 + $0x78] sm:$0xff]
        %v2797 = vld [vmem:[%s809 + $0x80] sm:$0xff]
        %v2798 = vld [vmem:[%s809 + $0x88] sm:$0xff]
        %v2799 = vld [vmem:[%s809 + $0x90] sm:$0xff]
        %v2800 = vld [vmem:[%s809 + $0x98] sm:$0xff]
        %v2801 = vld [vmem:[%s809 + $0xa0] sm:$0xff]
        %v2802 = vld [vmem:[%s809 + $0xa8] sm:$0xff]
        %v2803 = vld [vmem:[%s809 + $0xb0] sm:$0xff]
        %v2804 = vld [vmem:[%s809 + $0xb8] sm:$0xff]
        %v2805 = vld [vmem:[%s809 + $0xc0] sm:$0xff]
        %v2806 = vld [vmem:[%s809 + $0xc8] sm:$0xff]
        %v2807 = vld [vmem:[%s809 + $0xd0] sm:$0xff]
        %v2808 = vld [vmem:[%s809 + $0xd8] sm:$0xff]
        %v2809 = vld [vmem:[%s809 + $0xe0] sm:$0xff]
        %v2810 = vld [vmem:[%s809 + $0xe8] sm:$0xff]
        %v2811 = vld [vmem:[%s809 + $0xf0] sm:$0xff]
        %v2812 = vld [vmem:[%s809 + $0xf8] sm:$0xff]
        %v2813 = vld [vmem:[%s809 + $0x100] sm:$0xff]
        %v2814 = vld [vmem:[%s809 + $0x108] sm:$0xff]
        %v2815 = vld [vmem:[%s809 + $0x110] sm:$0xff]
        %v2816 = vld [vmem:[%s809 + $0x118] sm:$0xff]
        %v2817 = vld [vmem:[%s809 + $0x120] sm:$0xff]
        %v2818 = vld [vmem:[%s809 + $0x128] sm:$0xff]
        %v2819 = vld [vmem:[%s809 + $0x130] sm:$0xff]
        %v2820 = vld [vmem:[%s809 + $0x138] sm:$0xff]
        %v2821 = vld [vmem:[%s809 + $0x140] sm:$0xff]
        %v2822 = vld [vmem:[%s809 + $0x148] sm:$0xff]
        %v2823 = vld [vmem:[%s809 + $0x150] sm:$0xff]
        %v2824 = vld [vmem:[%s809 + $0x158] sm:$0xff]
        %v2825 = vld [vmem:[%s809 + $0x160] sm:$0xff]
        %v2826 = vld [vmem:[%s809 + $0x168] sm:$0xff]
        %v2827 = vld [vmem:[%s809 + $0x170] sm:$0xff]
        %v2828 = vld [vmem:[%s809 + $0x178] sm:$0xff]
        %v2829 = vld [vmem:[%s809 + $0x180] sm:$0xff]
        %v2830 = vld [vmem:[%s809 + $0x188] sm:$0xff]
        %v2831 = vld [vmem:[%s809 + $0x190] sm:$0xff]
        %v2832 = vld [vmem:[%s809 + $0x198] sm:$0xff]
        %v2833 = vld [vmem:[%s809 + $0x1a0] sm:$0xff]
        %v2834 = vld [vmem:[%s809 + $0x1a8] sm:$0xff]
        %v2835 = vld [vmem:[%s809 + $0x1b0] sm:$0xff]
        %v2836 = vld [vmem:[%s809 + $0x1b8] sm:$0xff]
        %v2837 = vld [vmem:[%s809 + $0x1c0] sm:$0xff]
        %v2838 = vld [vmem:[%s809 + $0x1c8] sm:$0xff]
        %v2839 = vld [vmem:[%s809 + $0x1d0] sm:$0xff]
        %v2840 = vld [vmem:[%s809 + $0x1d8] sm:$0xff]
        %v2841 = vld [vmem:[%s809 + $0x1e0] sm:$0xff]
        %v2842 = vld [vmem:[%s809 + $0x1e8] sm:$0xff]
        %v2843 = vld [vmem:[%s809 + $0x1f0] sm:$0xff]
        %v2844 = vld [vmem:[%s809 + $0x1f8] sm:$0xff]
        %v2845 = vld [vmem:[%s809 + $0x200] sm:$0xff]
        %v2846 = vld [vmem:[%s809 + $0x208] sm:$0xff]
        %v2847 = vld [vmem:[%s809 + $0x210] sm:$0xff]
        %v2848 = vld [vmem:[%s809 + $0x218] sm:$0xff]
        %v2849 = vld [vmem:[%s809 + $0x220] sm:$0xff]
        %v2850 = vld [vmem:[%s809 + $0x228] sm:$0xff]
        %v2851 = vld [vmem:[%s809 + $0x230] sm:$0xff]
        %v2852 = vld [vmem:[%s809 + $0x238] sm:$0xff]
        %v2853 = vld [vmem:[%s809 + $0x240] sm:$0xff]
        %v2854 = vld [vmem:[%s809 + $0x248] sm:$0xff]
        %v2855 = vld [vmem:[%s809 + $0x250] sm:$0xff]
        %v2856 = vld [vmem:[%s809 + $0x258] sm:$0xff]
        %v2857 = vld [vmem:[%s809 + $0x260] sm:$0xff]
        %v2858 = vld [vmem:[%s809 + $0x268] sm:$0xff]
        %v2859 = vld [vmem:[%s809 + $0x270] sm:$0xff]
        %v2860 = vld [vmem:[%s809 + $0x278] sm:$0xff]
        %v2861 = vld [vmem:[%s809 + $0x280] sm:$0xff]
        %v2862 = vld [vmem:[%s809 + $0x288] sm:$0xff]
        %v2863 = vld [vmem:[%s809 + $0x290] sm:$0xff]
        %v2864 = vld [vmem:[%s809 + $0x298] sm:$0xff]
        %v2865 = vld [vmem:[%s809 + $0x2a0] sm:$0xff]
        %v2866 = vld [vmem:[%s809 + $0x2a8] sm:$0xff]
        %v2867 = vld [vmem:[%s809 + $0x2b0] sm:$0xff]
        %v2868 = vld [vmem:[%s809 + $0x2b8] sm:$0xff]
        %v2869 = vld [vmem:[%s809 + $0x2c0] sm:$0xff]
        %v2870 = vld [vmem:[%s809 + $0x2c8] sm:$0xff]
        %v2871 = vld [vmem:[%s809 + $0x2d0] sm:$0xff]
        %v2872 = vld [vmem:[%s809 + $0x2d8] sm:$0xff]
        %v2873 = vld [vmem:[%s809 + $0x2e0] sm:$0xff]
        %v2874 = vld [vmem:[%s809 + $0x2e8] sm:$0xff]
        %v2875 = vld [vmem:[%s809 + $0x2f0] sm:$0xff]
        %v2876 = vld [vmem:[%s809 + $0x2f8] sm:$0xff]
        %v2877 = vld [vmem:[%s809 + $0x300] sm:$0xff]
        %v2878 = vld [vmem:[%s809 + $0x308] sm:$0xff]
        %v2879 = vld [vmem:[%s809 + $0x310] sm:$0xff]
        %v2880 = vld [vmem:[%s809 + $0x318] sm:$0xff]
        %v2881 = vld [vmem:[%s809 + $0x320] sm:$0xff]
        %v2882 = vld [vmem:[%s809 + $0x328] sm:$0xff]
        %v2883 = vld [vmem:[%s809 + $0x330] sm:$0xff]
        %v2884 = vld [vmem:[%s809 + $0x338] sm:$0xff]
        %v2885 = vld [vmem:[%s809 + $0x340] sm:$0xff]
        %v2886 = vld [vmem:[%s809 + $0x348] sm:$0xff]
        %v2887 = vld [vmem:[%s809 + $0x350] sm:$0xff]
        %v2888 = vld [vmem:[%s809 + $0x358] sm:$0xff]
        %v2889 = vld [vmem:[%s809 + $0x360] sm:$0xff]
        %v2890 = vld [vmem:[%s809 + $0x368] sm:$0xff]
        %v2891 = vld [vmem:[%s809 + $0x370] sm:$0xff]
        %v2892 = vld [vmem:[%s809 + $0x378] sm:$0xff]
        %v2893 = vld [vmem:[%s809 + $0x380] sm:$0xff]
        %v2894 = vld [vmem:[%s809 + $0x388] sm:$0xff]
        %v2895 = vld [vmem:[%s809 + $0x390] sm:$0xff]
        %v2896 = vld [vmem:[%s809 + $0x398] sm:$0xff]
        %v2897 = vld [vmem:[%s809 + $0x3a0] sm:$0xff]
        %v2898 = vld [vmem:[%s809 + $0x3a8] sm:$0xff]
        %v2899 = vld [vmem:[%s809 + $0x3b0] sm:$0xff]
        %v2900 = vld [vmem:[%s809 + $0x3b8] sm:$0xff]
        %v2901 = vld [vmem:[%s809 + $0x3c0] sm:$0xff]
        %v2902 = vld [vmem:[%s809 + $0x3c8] sm:$0xff]
        %v2903 = vld [vmem:[%s809 + $0x3d0] sm:$0xff]
        %v2904 = vld [vmem:[%s809 + $0x3d8] sm:$0xff]
        %v2905 = vld [vmem:[%s809 + $0x3e0] sm:$0xff]
        %v2906 = vld [vmem:[%s809 + $0x3e8] sm:$0xff]
        %v2907 = vld [vmem:[%s809 + $0x3f0] sm:$0xff]
        %v2908 = vld [vmem:[%s809 + $0x3f8] sm:$0xff]
        %v2909 = vld [vmem:[%s809 + $0x400] sm:$0xff]
        %v2910 = vld [vmem:[%s809 + $0x408] sm:$0xff]
        %v2911 = vld [vmem:[%s809 + $0x410] sm:$0xff]
        %v2912 = vld [vmem:[%s809 + $0x418] sm:$0xff]
        %v2913 = vld [vmem:[%s809 + $0x420] sm:$0xff]
        %v2914 = vld [vmem:[%s809 + $0x428] sm:$0xff]
        %v2915 = vld [vmem:[%s809 + $0x430] sm:$0xff]
        %v2916 = vld [vmem:[%s809 + $0x438] sm:$0xff]
        %v2917 = vld [vmem:[%s809 + $0x440] sm:$0xff]
        %v2918 = vld [vmem:[%s809 + $0x448] sm:$0xff]
        %v2919 = vld [vmem:[%s809 + $0x450] sm:$0xff]
        %v2920 = vld [vmem:[%s809 + $0x458] sm:$0xff]
        %v2921 = vld [vmem:[%s809 + $0x460] sm:$0xff]
        %v2922 = vld [vmem:[%s809 + $0x468] sm:$0xff]
        %v2923 = vld [vmem:[%s809 + $0x470] sm:$0xff]
        %v2924 = vld [vmem:[%s809 + $0x478] sm:$0xff]
        %v2925 = vld [vmem:[%s809 + $0x480] sm:$0xff]
        %v2926 = vld [vmem:[%s809 + $0x488] sm:$0xff]
        %v2927 = vld [vmem:[%s809 + $0x490] sm:$0xff]
        %v2928 = vld [vmem:[%s809 + $0x498] sm:$0xff]
        %v2929 = vld [vmem:[%s809 + $0x4a0] sm:$0xff]
        %v2930 = vld [vmem:[%s809 + $0x4a8] sm:$0xff]
        %v2931 = vld [vmem:[%s809 + $0x4b0] sm:$0xff]
        %v2932 = vld [vmem:[%s809 + $0x4b8] sm:$0xff]
        %v2933 = vld [vmem:[%s809 + $0x4c0] sm:$0xff]
        %v2934 = vld [vmem:[%s809 + $0x4c8] sm:$0xff]
        %v2935 = vld [vmem:[%s809 + $0x4d0] sm:$0xff]
        %v2936 = vld [vmem:[%s809 + $0x4d8] sm:$0xff]
        %v2937 = vld [vmem:[%s809 + $0x4e0] sm:$0xff]
        %v2938 = vld [vmem:[%s809 + $0x4e8] sm:$0xff]
        %v2939 = vld [vmem:[%s809 + $0x4f0] sm:$0xff]
        %v2940 = vld [vmem:[%s809 + $0x4f8] sm:$0xff]
        %v2941 = vld [vmem:[%s809 + $0x500] sm:$0xff]
        %v2942 = vld [vmem:[%s809 + $0x508] sm:$0xff]
        %v2943 = vld [vmem:[%s809 + $0x510] sm:$0xff]
        %v2944 = vld [vmem:[%s809 + $0x518] sm:$0xff]
        %v2945 = vld [vmem:[%s809 + $0x520] sm:$0xff]
        %v2946 = vld [vmem:[%s809 + $0x528] sm:$0xff]
        %v2947 = vld [vmem:[%s809 + $0x530] sm:$0xff]
        %v2948 = vld [vmem:[%s809 + $0x538] sm:$0xff]
        %v2949 = vld [vmem:[%s809 + $0x540] sm:$0xff]
        %v2950 = vld [vmem:[%s809 + $0x548] sm:$0xff]
        %v2951 = vld [vmem:[%s809 + $0x550] sm:$0xff]
        %v2952 = vld [vmem:[%s809 + $0x558] sm:$0xff]
        %v2953 = vld [vmem:[%s809 + $0x560] sm:$0xff]
        %v2954 = vld [vmem:[%s809 + $0x568] sm:$0xff]
        %v2955 = vld [vmem:[%s809 + $0x570] sm:$0xff]
        %v2956 = vld [vmem:[%s809 + $0x578] sm:$0xff]
        %v2957 = vld [vmem:[%s809 + $0x580] sm:$0xff]
        %v2958 = vld [vmem:[%s809 + $0x588] sm:$0xff]
        %v2959 = vld [vmem:[%s809 + $0x590] sm:$0xff]
        %v2960 = vld [vmem:[%s809 + $0x598] sm:$0xff]
        %v2961 = vld [vmem:[%s809 + $0x5a0] sm:$0xff]
        %v2962 = vld [vmem:[%s809 + $0x5a8] sm:$0xff]
        %v2963 = vld [vmem:[%s809 + $0x5b0] sm:$0xff]
        %v2964 = vld [vmem:[%s809 + $0x5b8] sm:$0xff]
        %v2965 = vld [vmem:[%s809 + $0x5c0] sm:$0xff]
        %v2966 = vld [vmem:[%s809 + $0x5c8] sm:$0xff]
        %v2967 = vld [vmem:[%s809 + $0x5d0] sm:$0xff]
        %v2968 = vld [vmem:[%s809 + $0x5d8] sm:$0xff]
        %v2969 = vld [vmem:[%s809 + $0x5e0] sm:$0xff]
        %v2970 = vld [vmem:[%s809 + $0x5e8] sm:$0xff]
        %v2971 = vld [vmem:[%s809 + $0x5f0] sm:$0xff]
        %v2972 = vld [vmem:[%s809 + $0x5f8] sm:$0xff]
        %v2973 = vld [vmem:[%s809 + $0x600] sm:$0xff]
        %v2974 = vld [vmem:[%s809 + $0x608] sm:$0xff]
        %v2975 = vld [vmem:[%s809 + $0x610] sm:$0xff]
        %v2976 = vld [vmem:[%s809 + $0x618] sm:$0xff]
        %v2977 = vld [vmem:[%s809 + $0x620] sm:$0xff]
        %v2978 = vld [vmem:[%s809 + $0x628] sm:$0xff]
        %v2979 = vld [vmem:[%s809 + $0x630] sm:$0xff]
        %v2980 = vld [vmem:[%s809 + $0x638] sm:$0xff]
        %v2981 = vld [vmem:[%s809 + $0x640] sm:$0xff]
        %v2982 = vld [vmem:[%s809 + $0x648] sm:$0xff]
        %v2983 = vld [vmem:[%s809 + $0x650] sm:$0xff]
        %v2984 = vld [vmem:[%s809 + $0x658] sm:$0xff]
        %v2985 = vld [vmem:[%s809 + $0x660] sm:$0xff]
        %v2986 = vld [vmem:[%s809 + $0x668] sm:$0xff]
        %v2987 = vld [vmem:[%s809 + $0x670] sm:$0xff]
        %v2988 = vld [vmem:[%s809 + $0x678] sm:$0xff]
        %v2989 = vld [vmem:[%s809 + $0x680] sm:$0xff]
        %v2990 = vld [vmem:[%s809 + $0x688] sm:$0xff]
        %v2991 = vld [vmem:[%s809 + $0x690] sm:$0xff]
        %v2992 = vld [vmem:[%s809 + $0x698] sm:$0xff]
        %v2993 = vld [vmem:[%s809 + $0x6a0] sm:$0xff]
        %v2994 = vld [vmem:[%s809 + $0x6a8] sm:$0xff]
        %v2995 = vld [vmem:[%s809 + $0x6b0] sm:$0xff]
        %v2996 = vld [vmem:[%s809 + $0x6b8] sm:$0xff]
        %v2997 = vld [vmem:[%s809 + $0x6c0] sm:$0xff]
        %v2998 = vld [vmem:[%s809 + $0x6c8] sm:$0xff]
        %v2999 = vld [vmem:[%s809 + $0x6d0] sm:$0xff]
        %v3000 = vld [vmem:[%s809 + $0x6d8] sm:$0xff]
        %v3001 = vld [vmem:[%s809 + $0x6e0] sm:$0xff]
        %v3002 = vld [vmem:[%s809 + $0x6e8] sm:$0xff]
        %v3003 = vld [vmem:[%s809 + $0x6f0] sm:$0xff]
        %v3004 = vld [vmem:[%s809 + $0x6f8] sm:$0xff]
        %v3005 = vld [vmem:[%s809 + $0x700] sm:$0xff]
        %v3006 = vld [vmem:[%s809 + $0x708] sm:$0xff]
        %v3007 = vld [vmem:[%s809 + $0x710] sm:$0xff]
        %v3008 = vld [vmem:[%s809 + $0x718] sm:$0xff]
        %v3009 = vld [vmem:[%s809 + $0x720] sm:$0xff]
        %v3010 = vld [vmem:[%s809 + $0x728] sm:$0xff]
        %v3011 = vld [vmem:[%s809 + $0x730] sm:$0xff]
        %v3012 = vld [vmem:[%s809 + $0x738] sm:$0xff]
        %v3013 = vld [vmem:[%s809 + $0x740] sm:$0xff]
        %v3014 = vld [vmem:[%s809 + $0x748] sm:$0xff]
        %v3015 = vld [vmem:[%s809 + $0x750] sm:$0xff]
        %v3016 = vld [vmem:[%s809 + $0x758] sm:$0xff]
        %v3017 = vld [vmem:[%s809 + $0x760] sm:$0xff]
        %v3018 = vld [vmem:[%s809 + $0x768] sm:$0xff]
        %v3019 = vld [vmem:[%s809 + $0x770] sm:$0xff]
        %v3020 = vld [vmem:[%s809 + $0x778] sm:$0xff]
        %v3021 = vld [vmem:[%s809 + $0x780] sm:$0xff]
        %v3022 = vld [vmem:[%s809 + $0x788] sm:$0xff]
        %v3023 = vld [vmem:[%s809 + $0x790] sm:$0xff]
        %v3024 = vld [vmem:[%s809 + $0x798] sm:$0xff]
        %v3025 = vld [vmem:[%s809 + $0x7a0] sm:$0xff]
        %v3026 = vld [vmem:[%s809 + $0x7a8] sm:$0xff]
        %v3027 = vld [vmem:[%s809 + $0x7b0] sm:$0xff]
        %v3028 = vld [vmem:[%s809 + $0x7b8] sm:$0xff]
        %v3029 = vld [vmem:[%s809 + $0x7c0] sm:$0xff]
        %v3030 = vld [vmem:[%s809 + $0x7c8] sm:$0xff]
        %v3031 = vld [vmem:[%s809 + $0x7d0] sm:$0xff]
        %v3032 = vld [vmem:[%s809 + $0x7d8] sm:$0xff]
        %v3033 = vld [vmem:[%s809 + $0x7e0] sm:$0xff]
        %v3034 = vld [vmem:[%s809 + $0x7e8] sm:$0xff]
        %v3035 = vld [vmem:[%s809 + $0x7f0] sm:$0xff]
        %v3036 = vld [vmem:[%s809 + $0x7f8] sm:$0xff]
        %v3037 = vld [vmem:[%s809 + $0x800] sm:$0xff]
        %v3038 = vld [vmem:[%s809 + $0x808] sm:$0xff]
        %v3039 = vld [vmem:[%s809 + $0x810] sm:$0xff]
        %v3040 = vld [vmem:[%s809 + $0x818] sm:$0xff]
        %v3041 = vld [vmem:[%s809 + $0x820] sm:$0xff]
        %v3042 = vld [vmem:[%s809 + $0x828] sm:$0xff]
        %v3043 = vld [vmem:[%s809 + $0x830] sm:$0xff]
        %v3044 = vld [vmem:[%s809 + $0x838] sm:$0xff]
        %v3045 = vld [vmem:[%s809 + $0x840] sm:$0xff]
        %v3046 = vld [vmem:[%s809 + $0x848] sm:$0xff]
        %v3047 = vld [vmem:[%s809 + $0x850] sm:$0xff]
        %v3048 = vld [vmem:[%s809 + $0x858] sm:$0xff]
        %v3049 = vld [vmem:[%s809 + $0x860] sm:$0xff]
        %v3050 = vld [vmem:[%s809 + $0x868] sm:$0xff]
        %v3051 = vld [vmem:[%s809 + $0x870] sm:$0xff]
        %v3052 = vld [vmem:[%s809 + $0x878] sm:$0xff]
        %v3053 = vld [vmem:[%s809 + $0x880] sm:$0xff]
        %v3054 = vld [vmem:[%s809 + $0x888] sm:$0xff]
        %v3055 = vld [vmem:[%s809 + $0x890] sm:$0xff]
        %v3056 = vld [vmem:[%s809 + $0x898] sm:$0xff]
        %v3057 = vld [vmem:[%s809 + $0x8a0] sm:$0xff]
        %v3058 = vld [vmem:[%s809 + $0x8a8] sm:$0xff]
        %v3059 = vld [vmem:[%s809 + $0x8b0] sm:$0xff]
        %v3060 = vld [vmem:[%s809 + $0x8b8] sm:$0xff]
        %v3061 = vld [vmem:[%s809 + $0x8c0] sm:$0xff]
        %v3062 = vld [vmem:[%s809 + $0x8c8] sm:$0xff]
        %v3063 = vld [vmem:[%s809 + $0x8d0] sm:$0xff]
        %v3064 = vld [vmem:[%s809 + $0x8d8] sm:$0xff]
        %v3065 = vld [vmem:[%s809 + $0x8e0] sm:$0xff]
        %v3066 = vld [vmem:[%s809 + $0x8e8] sm:$0xff]
        %v3067 = vld [vmem:[%s809 + $0x8f0] sm:$0xff]
        %v3068 = vld [vmem:[%s809 + $0x8f8] sm:$0xff]
        %v3069 = vld [vmem:[%s809 + $0x900] sm:$0xff]
        %v3070 = vld [vmem:[%s809 + $0x908] sm:$0xff]
        %v3071 = vld [vmem:[%s809 + $0x910] sm:$0xff]
        %v3072 = vld [vmem:[%s809 + $0x918] sm:$0xff]
        %v3073 = vld [vmem:[%s809 + $0x920] sm:$0xff]
        %v3074 = vld [vmem:[%s809 + $0x928] sm:$0xff]
        %v3075 = vld [vmem:[%s809 + $0x930] sm:$0xff]
        %v3076 = vld [vmem:[%s809 + $0x938] sm:$0xff]
        %v3077 = vld [vmem:[%s809 + $0x940] sm:$0xff]
        %v3078 = vld [vmem:[%s809 + $0x948] sm:$0xff]
        %v3079 = vld [vmem:[%s809 + $0x950] sm:$0xff]
        %v3080 = vld [vmem:[%s809 + $0x958] sm:$0xff]
        %v3081 = vld [vmem:[%s809 + $0x960] sm:$0xff]
        %v3082 = vld [vmem:[%s809 + $0x968] sm:$0xff]
        %v3083 = vld [vmem:[%s809 + $0x970] sm:$0xff]
        %v3084 = vld [vmem:[%s809 + $0x978] sm:$0xff]
        %v3085 = vld [vmem:[%s809 + $0x980] sm:$0xff]
        %v3086 = vld [vmem:[%s809 + $0x988] sm:$0xff]
        %v3087 = vld [vmem:[%s809 + $0x990] sm:$0xff]
        %v3088 = vld [vmem:[%s809 + $0x998] sm:$0xff]
        %v3089 = vld [vmem:[%s809 + $0x9a0] sm:$0xff]
        %v3090 = vld [vmem:[%s809 + $0x9a8] sm:$0xff]
        %v3091 = vld [vmem:[%s809 + $0x9b0] sm:$0xff]
        %v3092 = vld [vmem:[%s809 + $0x9b8] sm:$0xff]
        %v3093 = vld [vmem:[%s809 + $0x9c0] sm:$0xff]
        %v3094 = vld [vmem:[%s809 + $0x9c8] sm:$0xff]
        %v3095 = vld [vmem:[%s809 + $0x9d0] sm:$0xff]
        %v3096 = vld [vmem:[%s809 + $0x9d8] sm:$0xff]
        %v3097 = vld [vmem:[%s809 + $0x9e0] sm:$0xff]
        %v3098 = vld [vmem:[%s809 + $0x9e8] sm:$0xff]
        %v3099 = vld [vmem:[%s809 + $0x9f0] sm:$0xff]
        %v3100 = vld [vmem:[%s809 + $0x9f8] sm:$0xff]
        %v3101 = vld [vmem:[%s809 + $0xa00] sm:$0xff]
        %v3102 = vld [vmem:[%s809 + $0xa08] sm:$0xff]
        %v3103 = vld [vmem:[%s809 + $0xa10] sm:$0xff]
        %v3104 = vld [vmem:[%s809 + $0xa18] sm:$0xff]
        %v3105 = vld [vmem:[%s809 + $0xa20] sm:$0xff]
        %v3106 = vld [vmem:[%s809 + $0xa28] sm:$0xff]
        %v3107 = vld [vmem:[%s809 + $0xa30] sm:$0xff]
        %v3108 = vld [vmem:[%s809 + $0xa38] sm:$0xff]
        %v3109 = vld [vmem:[%s809 + $0xa40] sm:$0xff]
        %v3110 = vld [vmem:[%s809 + $0xa48] sm:$0xff]
        %v3111 = vld [vmem:[%s809 + $0xa50] sm:$0xff]
        %v3112 = vld [vmem:[%s809 + $0xa58] sm:$0xff]
        %v3113 = vld [vmem:[%s809 + $0xa60] sm:$0xff]
        %v3114 = vld [vmem:[%s809 + $0xa68] sm:$0xff]
        %v3115 = vld [vmem:[%s809 + $0xa70] sm:$0xff]
        %v3116 = vld [vmem:[%s809 + $0xa78] sm:$0xff]
        %v3117 = vld [vmem:[%s809 + $0xa80] sm:$0xff]
        %v3118 = vld [vmem:[%s809 + $0xa88] sm:$0xff]
        %v3119 = vld [vmem:[%s809 + $0xa90] sm:$0xff]
        %v3120 = vld [vmem:[%s809 + $0xa98] sm:$0xff]
        %v3121 = vld [vmem:[%s809 + $0xaa0] sm:$0xff]
        %v3122 = vld [vmem:[%s809 + $0xaa8] sm:$0xff]
        %v3123 = vld [vmem:[%s809 + $0xab0] sm:$0xff]
        %v3124 = vld [vmem:[%s809 + $0xab8] sm:$0xff]
        %v3125 = vld [vmem:[%s809 + $0xac0] sm:$0xff]
        %v3126 = vld [vmem:[%s809 + $0xac8] sm:$0xff]
        %v3127 = vld [vmem:[%s809 + $0xad0] sm:$0xff]
        %v3128 = vld [vmem:[%s809 + $0xad8] sm:$0xff]
        %v3129 = vld [vmem:[%s809 + $0xae0] sm:$0xff]
        %v3130 = vld [vmem:[%s809 + $0xae8] sm:$0xff]
        %v3131 = vld [vmem:[%s809 + $0xaf0] sm:$0xff]
        %v3132 = vld [vmem:[%s809 + $0xaf8] sm:$0xff]
        %v3133 = vld [vmem:[%s809 + $0xb00] sm:$0xff]
        %v3134 = vld [vmem:[%s809 + $0xb08] sm:$0xff]
        %v3135 = vld [vmem:[%s809 + $0xb10] sm:$0xff]
        %v3136 = vld [vmem:[%s809 + $0xb18] sm:$0xff]
        %v3137 = vld [vmem:[%s809 + $0xb20] sm:$0xff]
        %v3138 = vld [vmem:[%s809 + $0xb28] sm:$0xff]
        %v3139 = vld [vmem:[%s809 + $0xb30] sm:$0xff]
        %v3140 = vld [vmem:[%s809 + $0xb38] sm:$0xff]
        %v3141 = vld [vmem:[%s809 + $0xb40] sm:$0xff]
        %v3142 = vld [vmem:[%s809 + $0xb48] sm:$0xff]
        %v3143 = vld [vmem:[%s809 + $0xb50] sm:$0xff]
        %v3144 = vld [vmem:[%s809 + $0xb58] sm:$0xff]
        %v3145 = vld [vmem:[%s809 + $0xb60] sm:$0xff]
        %v3146 = vld [vmem:[%s809 + $0xb68] sm:$0xff]
        %v3147 = vld [vmem:[%s809 + $0xb70] sm:$0xff]
        %v3148 = vld [vmem:[%s809 + $0xb78] sm:$0xff]
        %v3149 = vld [vmem:[%s809 + $0xb80] sm:$0xff]
        %v3150 = vld [vmem:[%s809 + $0xb88] sm:$0xff]
        %v3151 = vld [vmem:[%s809 + $0xb90] sm:$0xff]
        %v3152 = vld [vmem:[%s809 + $0xb98] sm:$0xff]
        %v3153 = vld [vmem:[%s809 + $0xba0] sm:$0xff]
        %v3154 = vld [vmem:[%s809 + $0xba8] sm:$0xff]
        %v3155 = vld [vmem:[%s809 + $0xbb0] sm:$0xff]
        %v3156 = vld [vmem:[%s809 + $0xbb8] sm:$0xff]
        %v3157 = vld [vmem:[%s809 + $0xbc0] sm:$0xff]
        %v3158 = vld [vmem:[%s809 + $0xbc8] sm:$0xff]
        %v3159 = vld [vmem:[%s809 + $0xbd0] sm:$0xff]
        %v3160 = vld [vmem:[%s809 + $0xbd8] sm:$0xff]
        %v3161 = vld [vmem:[%s809 + $0xbe0] sm:$0xff]
        %v3162 = vld [vmem:[%s809 + $0xbe8] sm:$0xff]
        %v3163 = vld [vmem:[%s809 + $0xbf0] sm:$0xff]
        %v3164 = vld [vmem:[%s809 + $0xbf8] sm:$0xff]
        %v3165 = vld [vmem:[%s809 + $0xc00] sm:$0xff]
        %v3166 = vld [vmem:[%s809 + $0xc08] sm:$0xff]
        %v3167 = vld [vmem:[%s809 + $0xc10] sm:$0xff]
        %v3168 = vld [vmem:[%s809 + $0xc18] sm:$0xff]
        %v3169 = vld [vmem:[%s809 + $0xc20] sm:$0xff]
        %v3170 = vld [vmem:[%s809 + $0xc28] sm:$0xff]
        %v3171 = vld [vmem:[%s809 + $0xc30] sm:$0xff]
        %v3172 = vld [vmem:[%s809 + $0xc38] sm:$0xff]
        %v3173 = vld [vmem:[%s809 + $0xc40] sm:$0xff]
        %v3174 = vld [vmem:[%s809 + $0xc48] sm:$0xff]
        %v3175 = vld [vmem:[%s809 + $0xc50] sm:$0xff]
        %v3176 = vld [vmem:[%s809 + $0xc58] sm:$0xff]
        %v3177 = vld [vmem:[%s809 + $0xc60] sm:$0xff]
        %v3178 = vld [vmem:[%s809 + $0xc68] sm:$0xff]
        %v3179 = vld [vmem:[%s809 + $0xc70] sm:$0xff]
        %v3180 = vld [vmem:[%s809 + $0xc78] sm:$0xff]
        %v3181 = vld [vmem:[%s809 + $0xc80] sm:$0xff]
        %v3182 = vld [vmem:[%s809 + $0xc88] sm:$0xff]
        %v3183 = vld [vmem:[%s809 + $0xc90] sm:$0xff]
        %v3184 = vld [vmem:[%s809 + $0xc98] sm:$0xff]
        %v3185 = vld [vmem:[%s809 + $0xca0] sm:$0xff]
        %v3186 = vld [vmem:[%s809 + $0xca8] sm:$0xff]
        %v3187 = vld [vmem:[%s809 + $0xcb0] sm:$0xff]
        %v3188 = vld [vmem:[%s809 + $0xcb8] sm:$0xff]
        %v3189 = vld [vmem:[%s809 + $0xcc0] sm:$0xff]
        %v3190 = vld [vmem:[%s809 + $0xcc8] sm:$0xff]
        %v3191 = vld [vmem:[%s809 + $0xcd0] sm:$0xff]
        %v3192 = vld [vmem:[%s809 + $0xcd8] sm:$0xff]
        %v3193 = vld [vmem:[%s809 + $0xce0] sm:$0xff]
        %v3194 = vld [vmem:[%s809 + $0xce8] sm:$0xff]
        %v3195 = vld [vmem:[%s809 + $0xcf0] sm:$0xff]
        %v3196 = vld [vmem:[%s809 + $0xcf8] sm:$0xff]
        %v3197 = vld [vmem:[%s809 + $0xd00] sm:$0xff]
        %v3198 = vld [vmem:[%s809 + $0xd08] sm:$0xff]
        %v3199 = vld [vmem:[%s809 + $0xd10] sm:$0xff]
        %v3200 = vld [vmem:[%s809 + $0xd18] sm:$0xff]
        %v3201 = vld [vmem:[%s809 + $0xd20] sm:$0xff]
        %v3202 = vld [vmem:[%s809 + $0xd28] sm:$0xff]
        %v3203 = vld [vmem:[%s809 + $0xd30] sm:$0xff]
        %v3204 = vld [vmem:[%s809 + $0xd38] sm:$0xff]
        %v3205 = vld [vmem:[%s809 + $0xd40] sm:$0xff]
        %v3206 = vld [vmem:[%s809 + $0xd48] sm:$0xff]
        %v3207 = vld [vmem:[%s809 + $0xd50] sm:$0xff]
        %v3208 = vld [vmem:[%s809 + $0xd58] sm:$0xff]
        %v3209 = vld [vmem:[%s809 + $0xd60] sm:$0xff]
        %v3210 = vld [vmem:[%s809 + $0xd68] sm:$0xff]
        %v3211 = vld [vmem:[%s809 + $0xd70] sm:$0xff]
        %v3212 = vld [vmem:[%s809 + $0xd78] sm:$0xff]
        %v3213 = vld [vmem:[%s809 + $0xd80] sm:$0xff]
        %v3214 = vld [vmem:[%s809 + $0xd88] sm:$0xff]
        %v3215 = vld [vmem:[%s809 + $0xd90] sm:$0xff]
        %v3216 = vld [vmem:[%s809 + $0xd98] sm:$0xff]
        %v3217 = vld [vmem:[%s809 + $0xda0] sm:$0xff]
        %v3218 = vld [vmem:[%s809 + $0xda8] sm:$0xff]
        %v3219 = vld [vmem:[%s809 + $0xdb0] sm:$0xff]
        %v3220 = vld [vmem:[%s809 + $0xdb8] sm:$0xff]
        %v3221 = vld [vmem:[%s809 + $0xdc0] sm:$0xff]
        %v3222 = vld [vmem:[%s809 + $0xdc8] sm:$0xff]
        %v3223 = vld [vmem:[%s809 + $0xdd0] sm:$0xff]
        %v3224 = vld [vmem:[%s809 + $0xdd8] sm:$0xff]
        %v3225 = vld [vmem:[%s809 + $0xde0] sm:$0xff]
        %v3226 = vld [vmem:[%s809 + $0xde8] sm:$0xff]
        %v3227 = vld [vmem:[%s809 + $0xdf0] sm:$0xff]
        %v3228 = vld [vmem:[%s809 + $0xdf8] sm:$0xff]
        %v3229 = vld [vmem:[%s809 + $0xe00] sm:$0xff]
        %v3230 = vld [vmem:[%s809 + $0xe08] sm:$0xff]
        %v3231 = vld [vmem:[%s809 + $0xe10] sm:$0xff]
        %v3232 = vld [vmem:[%s809 + $0xe18] sm:$0xff]
        %v3233 = vld [vmem:[%s809 + $0xe20] sm:$0xff]
        %v3234 = vld [vmem:[%s809 + $0xe28] sm:$0xff]
        %v3235 = vld [vmem:[%s809 + $0xe30] sm:$0xff]
        %v3236 = vld [vmem:[%s809 + $0xe38] sm:$0xff]
        %v3237 = vld [vmem:[%s809 + $0xe40] sm:$0xff]
        %v3238 = vld [vmem:[%s809 + $0xe48] sm:$0xff]
        %v3239 = vld [vmem:[%s809 + $0xe50] sm:$0xff]
        %v3240 = vld [vmem:[%s809 + $0xe58] sm:$0xff]
        %v3241 = vld [vmem:[%s809 + $0xe60] sm:$0xff]
        %v3242 = vld [vmem:[%s809 + $0xe68] sm:$0xff]
        %v3243 = vld [vmem:[%s809 + $0xe70] sm:$0xff]
        %v3244 = vld [vmem:[%s809 + $0xe78] sm:$0xff]
        %v3245 = vld [vmem:[%s809 + $0xe80] sm:$0xff]
        %v3246 = vld [vmem:[%s809 + $0xe88] sm:$0xff]
        %v3247 = vld [vmem:[%s809 + $0xe90] sm:$0xff]
        %v3248 = vld [vmem:[%s809 + $0xe98] sm:$0xff]
        %v3249 = vld [vmem:[%s809 + $0xea0] sm:$0xff]
        %v3250 = vld [vmem:[%s809 + $0xea8] sm:$0xff]
        %v3251 = vld [vmem:[%s809 + $0xeb0] sm:$0xff]
        %v3252 = vld [vmem:[%s809 + $0xeb8] sm:$0xff]
        %v3253 = vld [vmem:[%s809 + $0xec0] sm:$0xff]
        %v3254 = vld [vmem:[%s809 + $0xec8] sm:$0xff]
        %v3255 = vld [vmem:[%s809 + $0xed0] sm:$0xff]
        %v3256 = vld [vmem:[%s809 + $0xed8] sm:$0xff]
        %v3257 = vld [vmem:[%s809 + $0xee0] sm:$0xff]
        %v3258 = vld [vmem:[%s809 + $0xee8] sm:$0xff]
        %v3259 = vld [vmem:[%s809 + $0xef0] sm:$0xff]
        %v3260 = vld [vmem:[%s809 + $0xef8] sm:$0xff]
        %v3261 = vld [vmem:[%s809 + $0xf00] sm:$0xff]
        %v3262 = vld [vmem:[%s809 + $0xf08] sm:$0xff]
        %v3263 = vld [vmem:[%s809 + $0xf10] sm:$0xff]
        %v3264 = vld [vmem:[%s809 + $0xf18] sm:$0xff]
        %v3265 = vld [vmem:[%s809 + $0xf20] sm:$0xff]
        %v3266 = vld [vmem:[%s809 + $0xf28] sm:$0xff]
        %v3267 = vld [vmem:[%s809 + $0xf30] sm:$0xff]
        %v3268 = vld [vmem:[%s809 + $0xf38] sm:$0xff]
        %v3269 = vld [vmem:[%s809 + $0xf40] sm:$0xff]
        %v3270 = vld [vmem:[%s809 + $0xf48] sm:$0xff]
        %v3271 = vld [vmem:[%s809 + $0xf50] sm:$0xff]
        %v3272 = vld [vmem:[%s809 + $0xf58] sm:$0xff]
        %v3273 = vld [vmem:[%s809 + $0xf60] sm:$0xff]
        %v3274 = vld [vmem:[%s809 + $0xf68] sm:$0xff]
        %v3275 = vld [vmem:[%s809 + $0xf70] sm:$0xff]
        %v3276 = vld [vmem:[%s809 + $0xf78] sm:$0xff]
        %v3277 = vld [vmem:[%s809 + $0xf80] sm:$0xff]
        %v3278 = vld [vmem:[%s809 + $0xf88] sm:$0xff]
        %v3279 = vld [vmem:[%s809 + $0xf90] sm:$0xff]
        %v3280 = vld [vmem:[%s809 + $0xf98] sm:$0xff]
        %v3281 = vld [vmem:[%s809 + $0xfa0] sm:$0xff]
        %v3282 = vld [vmem:[%s809 + $0xfa8] sm:$0xff]
        %v3283 = vld [vmem:[%s809 + $0xfb0] sm:$0xff]
        %v3284 = vld [vmem:[%s809 + $0xfb8] sm:$0xff]
        %v3285 = vld [vmem:[%s809 + $0xfc0] sm:$0xff]
        %v3286 = vld [vmem:[%s809 + $0xfc8] sm:$0xff]
        %v3287 = vld [vmem:[%s809 + $0xfd0] sm:$0xff]
        %v3288 = vld [vmem:[%s809 + $0xfd8] sm:$0xff]
        %v3289 = vld [vmem:[%s809 + $0xfe0] sm:$0xff]
        %v3290 = vld [vmem:[%s809 + $0xfe8] sm:$0xff]
        %v3291 = vld [vmem:[%s809 + $0xff0] sm:$0xff]
        %v3292 = vld [vmem:[%s809 + $0xff8] sm:$0xff]
        %v3293 = vld [vmem:[%s818] sm:$0xf]
        %v3295 = vlaneseq
        %v3296 = vshrl.u32 %v3295, 7
        %v3297 = vsub.s32 0, %v3296
        %v3298 = vrot.slane %v3293, %v3297
        %v3299 = vlaneseq
        %v3300 = vshrl.u32 %v3299, 7
        %v3301 = vsub.s32 1, %v3300
        %v3302 = vrot.slane %v3293, %v3301
        %v3303 = vlaneseq
        %v3304 = vshrl.u32 %v3303, 7
        %v3305 = vsub.s32 2, %v3304
        %v3306 = vrot.slane %v3293, %v3305
        %v3307 = vlaneseq
        %v3308 = vshrl.u32 %v3307, 7
        %v3309 = vsub.s32 3, %v3308
        %v3310 = vrot.slane %v3293, %v3309
        %v3317 = vcombine.high %v2779, %v2779
        %v3319 = vunpack.c.l.s4 1966171168
        %v3320 = vunpack.c.0.s8 %v3319
        %v3321 = vlaneseq
        %v3322 = vshrl.u32 %v3321, 7
        %v3323 = vsub.s32 %v3320, %v3322
        %v3324 = vrot.slane %v2779, %v3323
        %v3326 = vunpack.c.l.s4 1966171168
        %v3327 = vunpack.c.0.s8 %v3326
        %v3328 = vlaneseq
        %v3329 = vshrl.u32 %v3328, 7
        %v3330 = vsub.s32 %v3327, %v3329
        %v3331 = vrot.slane %v3317, %v3330
        %v3332 = vcombine.high %v3324, %v3324
        %v3333 = vcombine.high %v3331, %v3331
        %v3335 = vunpack.c.l.s4 1966171168
        %v3336 = vunpack.c.0.s8 %v3335
        %v3337 = vlaneseq
        %v3338 = vshrl.u32 %v3337, 7
        %v3339 = vsub.s32 %v3336, %v3338
        %v3340 = vrot.slane %v3324, %v3339
        %v3342 = vunpack.c.l.s4 1966171168
        %v3343 = vunpack.c.0.s8 %v3342
        %v3344 = vlaneseq
        %v3345 = vshrl.u32 %v3344, 7
        %v3346 = vsub.s32 %v3343, %v3345
        %v3347 = vrot.slane %v3331, %v3346
        %v3349 = vunpack.c.l.s4 1966171168
        %v3350 = vunpack.c.0.s8 %v3349
        %v3351 = vlaneseq
        %v3352 = vshrl.u32 %v3351, 7
        %v3353 = vsub.s32 %v3350, %v3352
        %v3354 = vrot.slane %v3332, %v3353
        %v3356 = vunpack.c.l.s4 1966171168
        %v3357 = vunpack.c.0.s8 %v3356
        %v3358 = vlaneseq
        %v3359 = vshrl.u32 %v3358, 7
        %v3360 = vsub.s32 %v3357, %v3359
        %v3361 = vrot.slane %v3333, %v3360
        %v3362 = vcombine.high %v3340, %v3340
        %v3363 = vcombine.high %v3347, %v3347
        %v3364 = vcombine.high %v3354, %v3354
        %v3365 = vcombine.high %v3361, %v3361
        %v3366 = vcombine.high %v2780, %v2780
        %v3368 = vunpack.c.l.s4 1966171168
        %v3369 = vunpack.c.0.s8 %v3368
        %v3370 = vlaneseq
        %v3371 = vshrl.u32 %v3370, 7
        %v3372 = vsub.s32 %v3369, %v3371
        %v3373 = vrot.slane %v2780, %v3372
        %v3375 = vunpack.c.l.s4 1966171168
        %v3376 = vunpack.c.0.s8 %v3375
        %v3377 = vlaneseq
        %v3378 = vshrl.u32 %v3377, 7
        %v3379 = vsub.s32 %v3376, %v3378
        %v3380 = vrot.slane %v3366, %v3379
        %v3381 = vcombine.high %v3373, %v3373
        %v3382 = vcombine.high %v3380, %v3380
        %v3384 = vunpack.c.l.s4 1966171168
        %v3385 = vunpack.c.0.s8 %v3384
        %v3386 = vlaneseq
        %v3387 = vshrl.u32 %v3386, 7
        %v3388 = vsub.s32 %v3385, %v3387
        %v3389 = vrot.slane %v3373, %v3388
        %v3391 = vunpack.c.l.s4 1966171168
        %v3392 = vunpack.c.0.s8 %v3391
        %v3393 = vlaneseq
        %v3394 = vshrl.u32 %v3393, 7
        %v3395 = vsub.s32 %v3392, %v3394
        %v3396 = vrot.slane %v3380, %v3395
        %v3398 = vunpack.c.l.s4 1966171168
        %v3399 = vunpack.c.0.s8 %v3398
        %v3400 = vlaneseq
        %v3401 = vshrl.u32 %v3400, 7
        %v3402 = vsub.s32 %v3399, %v3401
        %v3403 = vrot.slane %v3381, %v3402
        %v3405 = vunpack.c.l.s4 1966171168
        %v3406 = vunpack.c.0.s8 %v3405
        %v3407 = vlaneseq
        %v3408 = vshrl.u32 %v3407, 7
        %v3409 = vsub.s32 %v3406, %v3408
        %v3410 = vrot.slane %v3382, %v3409
        %v3411 = vcombine.high %v3389, %v3389
        %v3412 = vcombine.high %v3396, %v3396
        %v3413 = vcombine.high %v3403, %v3403
        %v3414 = vcombine.high %v3410, %v3410
        %v3943 = vunpack.c.l.b16 %v2781
        %v3944 = vunpack.c.h.b16 %v2781
        %v3945 = vunpack.c.l.b16 %v2782
        %v3946 = vunpack.c.h.b16 %v2782
        %v3947 = vunpack.c.l.b16 %v2783
        %v3948 = vunpack.c.h.b16 %v2783
        %v3949 = vunpack.c.l.b16 %v2784
        %v3950 = vunpack.c.h.b16 %v2784
        %v3951 = vunpack.c.l.b16 %v2785
        %v3952 = vunpack.c.h.b16 %v2785
        %v3953 = vunpack.c.l.b16 %v2786
        %v3954 = vunpack.c.h.b16 %v2786
        %v3955 = vunpack.c.l.b16 %v2787
        %v3956 = vunpack.c.h.b16 %v2787
        %v3957 = vunpack.c.l.b16 %v2788
        %v3958 = vunpack.c.h.b16 %v2788
        %v3959 = vunpack.c.l.b16 %v2789
        %v3960 = vunpack.c.h.b16 %v2789
        %v3961 = vunpack.c.l.b16 %v2790
        %v3962 = vunpack.c.h.b16 %v2790
        %v3963 = vunpack.c.l.b16 %v2791
        %v3964 = vunpack.c.h.b16 %v2791
        %v3965 = vunpack.c.l.b16 %v2792
        %v3966 = vunpack.c.h.b16 %v2792
        %v3967 = vunpack.c.l.b16 %v2793
        %v3968 = vunpack.c.h.b16 %v2793
        %v3969 = vunpack.c.l.b16 %v2794
        %v3970 = vunpack.c.h.b16 %v2794
        %v3971 = vunpack.c.l.b16 %v2795
        %v3972 = vunpack.c.h.b16 %v2795
        %v3973 = vunpack.c.l.b16 %v2796
        %v3974 = vunpack.c.h.b16 %v2796
        %v3975 = vunpack.c.l.b16 %v2797
        %v3976 = vunpack.c.h.b16 %v2797
        %v3977 = vunpack.c.l.b16 %v2798
        %v3978 = vunpack.c.h.b16 %v2798
        %v3979 = vunpack.c.l.b16 %v2799
        %v3980 = vunpack.c.h.b16 %v2799
        %v3981 = vunpack.c.l.b16 %v2800
        %v3982 = vunpack.c.h.b16 %v2800
        %v3983 = vunpack.c.l.b16 %v2801
        %v3984 = vunpack.c.h.b16 %v2801
        %v3985 = vunpack.c.l.b16 %v2802
        %v3986 = vunpack.c.h.b16 %v2802
        %v3987 = vunpack.c.l.b16 %v2803
        %v3988 = vunpack.c.h.b16 %v2803
        %v3989 = vunpack.c.l.b16 %v2804
        %v3990 = vunpack.c.h.b16 %v2804
        %v3991 = vunpack.c.l.b16 %v2805
        %v3992 = vunpack.c.h.b16 %v2805
        %v3993 = vunpack.c.l.b16 %v2806
        %v3994 = vunpack.c.h.b16 %v2806
        %v3995 = vunpack.c.l.b16 %v2807
        %v3996 = vunpack.c.h.b16 %v2807
        %v3997 = vunpack.c.l.b16 %v2808
        %v3998 = vunpack.c.h.b16 %v2808
        %v3999 = vunpack.c.l.b16 %v2809
        %v4000 = vunpack.c.h.b16 %v2809
        %v4001 = vunpack.c.l.b16 %v2810
        %v4002 = vunpack.c.h.b16 %v2810
        %v4003 = vunpack.c.l.b16 %v2811
        %v4004 = vunpack.c.h.b16 %v2811
        %v4005 = vunpack.c.l.b16 %v2812
        %v4006 = vunpack.c.h.b16 %v2812
        %v4007 = vunpack.c.l.b16 %v2813
        %v4008 = vunpack.c.h.b16 %v2813
        %v4009 = vunpack.c.l.b16 %v2814
        %v4010 = vunpack.c.h.b16 %v2814
        %v4011 = vunpack.c.l.b16 %v2815
        %v4012 = vunpack.c.h.b16 %v2815
        %v4013 = vunpack.c.l.b16 %v2816
        %v4014 = vunpack.c.h.b16 %v2816
        %v4015 = vunpack.c.l.b16 %v2817
        %v4016 = vunpack.c.h.b16 %v2817
        %v4017 = vunpack.c.l.b16 %v2818
        %v4018 = vunpack.c.h.b16 %v2818
        %v4019 = vunpack.c.l.b16 %v2819
        %v4020 = vunpack.c.h.b16 %v2819
        %v4021 = vunpack.c.l.b16 %v2820
        %v4022 = vunpack.c.h.b16 %v2820
        %v4023 = vunpack.c.l.b16 %v2821
        %v4024 = vunpack.c.h.b16 %v2821
        %v4025 = vunpack.c.l.b16 %v2822
        %v4026 = vunpack.c.h.b16 %v2822
        %v4027 = vunpack.c.l.b16 %v2823
        %v4028 = vunpack.c.h.b16 %v2823
        %v4029 = vunpack.c.l.b16 %v2824
        %v4030 = vunpack.c.h.b16 %v2824
        %v4031 = vunpack.c.l.b16 %v2825
        %v4032 = vunpack.c.h.b16 %v2825
        %v4033 = vunpack.c.l.b16 %v2826
        %v4034 = vunpack.c.h.b16 %v2826
        %v4035 = vunpack.c.l.b16 %v2827
        %v4036 = vunpack.c.h.b16 %v2827
        %v4037 = vunpack.c.l.b16 %v2828
        %v4038 = vunpack.c.h.b16 %v2828
        %v4039 = vunpack.c.l.b16 %v2829
        %v4040 = vunpack.c.h.b16 %v2829
        %v4041 = vunpack.c.l.b16 %v2830
        %v4042 = vunpack.c.h.b16 %v2830
        %v4043 = vunpack.c.l.b16 %v2831
        %v4044 = vunpack.c.h.b16 %v2831
        %v4045 = vunpack.c.l.b16 %v2832
        %v4046 = vunpack.c.h.b16 %v2832
        %v4047 = vunpack.c.l.b16 %v2833
        %v4048 = vunpack.c.h.b16 %v2833
        %v4049 = vunpack.c.l.b16 %v2834
        %v4050 = vunpack.c.h.b16 %v2834
        %v4051 = vunpack.c.l.b16 %v2835
        %v4052 = vunpack.c.h.b16 %v2835
        %v4053 = vunpack.c.l.b16 %v2836
        %v4054 = vunpack.c.h.b16 %v2836
        %v4055 = vunpack.c.l.b16 %v2837
        %v4056 = vunpack.c.h.b16 %v2837
        %v4057 = vunpack.c.l.b16 %v2838
        %v4058 = vunpack.c.h.b16 %v2838
        %v4059 = vunpack.c.l.b16 %v2839
        %v4060 = vunpack.c.h.b16 %v2839
        %v4061 = vunpack.c.l.b16 %v2840
        %v4062 = vunpack.c.h.b16 %v2840
        %v4063 = vunpack.c.l.b16 %v2841
        %v4064 = vunpack.c.h.b16 %v2841
        %v4065 = vunpack.c.l.b16 %v2842
        %v4066 = vunpack.c.h.b16 %v2842
        %v4067 = vunpack.c.l.b16 %v2843
        %v4068 = vunpack.c.h.b16 %v2843
        %v4069 = vunpack.c.l.b16 %v2844
        %v4070 = vunpack.c.h.b16 %v2844
        %v4071 = vunpack.c.l.b16 %v2845
        %v4072 = vunpack.c.h.b16 %v2845
        %v4073 = vunpack.c.l.b16 %v2846
        %v4074 = vunpack.c.h.b16 %v2846
        %v4075 = vunpack.c.l.b16 %v2847
        %v4076 = vunpack.c.h.b16 %v2847
        %v4077 = vunpack.c.l.b16 %v2848
        %v4078 = vunpack.c.h.b16 %v2848
        %v4079 = vunpack.c.l.b16 %v2849
        %v4080 = vunpack.c.h.b16 %v2849
        %v4081 = vunpack.c.l.b16 %v2850
        %v4082 = vunpack.c.h.b16 %v2850
        %v4083 = vunpack.c.l.b16 %v2851
        %v4084 = vunpack.c.h.b16 %v2851
        %v4085 = vunpack.c.l.b16 %v2852
        %v4086 = vunpack.c.h.b16 %v2852
        %v4087 = vunpack.c.l.b16 %v2853
        %v4088 = vunpack.c.h.b16 %v2853
        %v4089 = vunpack.c.l.b16 %v2854
        %v4090 = vunpack.c.h.b16 %v2854
        %v4091 = vunpack.c.l.b16 %v2855
        %v4092 = vunpack.c.h.b16 %v2855
        %v4093 = vunpack.c.l.b16 %v2856
        %v4094 = vunpack.c.h.b16 %v2856
        %v4095 = vunpack.c.l.b16 %v2857
        %v4096 = vunpack.c.h.b16 %v2857
        %v4097 = vunpack.c.l.b16 %v2858
        %v4098 = vunpack.c.h.b16 %v2858
        %v4099 = vunpack.c.l.b16 %v2859
        %v4100 = vunpack.c.h.b16 %v2859
        %v4101 = vunpack.c.l.b16 %v2860
        %v4102 = vunpack.c.h.b16 %v2860
        %v4103 = vunpack.c.l.b16 %v2861
        %v4104 = vunpack.c.h.b16 %v2861
        %v4105 = vunpack.c.l.b16 %v2862
        %v4106 = vunpack.c.h.b16 %v2862
        %v4107 = vunpack.c.l.b16 %v2863
        %v4108 = vunpack.c.h.b16 %v2863
        %v4109 = vunpack.c.l.b16 %v2864
        %v4110 = vunpack.c.h.b16 %v2864
        %v4111 = vunpack.c.l.b16 %v2865
        %v4112 = vunpack.c.h.b16 %v2865
        %v4113 = vunpack.c.l.b16 %v2866
        %v4114 = vunpack.c.h.b16 %v2866
        %v4115 = vunpack.c.l.b16 %v2867
        %v4116 = vunpack.c.h.b16 %v2867
        %v4117 = vunpack.c.l.b16 %v2868
        %v4118 = vunpack.c.h.b16 %v2868
        %v4119 = vunpack.c.l.b16 %v2869
        %v4120 = vunpack.c.h.b16 %v2869
        %v4121 = vunpack.c.l.b16 %v2870
        %v4122 = vunpack.c.h.b16 %v2870
        %v4123 = vunpack.c.l.b16 %v2871
        %v4124 = vunpack.c.h.b16 %v2871
        %v4125 = vunpack.c.l.b16 %v2872
        %v4126 = vunpack.c.h.b16 %v2872
        %v4127 = vunpack.c.l.b16 %v2873
        %v4128 = vunpack.c.h.b16 %v2873
        %v4129 = vunpack.c.l.b16 %v2874
        %v4130 = vunpack.c.h.b16 %v2874
        %v4131 = vunpack.c.l.b16 %v2875
        %v4132 = vunpack.c.h.b16 %v2875
        %v4133 = vunpack.c.l.b16 %v2876
        %v4134 = vunpack.c.h.b16 %v2876
        %v4135 = vunpack.c.l.b16 %v2877
        %v4136 = vunpack.c.h.b16 %v2877
        %v4137 = vunpack.c.l.b16 %v2878
        %v4138 = vunpack.c.h.b16 %v2878
        %v4139 = vunpack.c.l.b16 %v2879
        %v4140 = vunpack.c.h.b16 %v2879
        %v4141 = vunpack.c.l.b16 %v2880
        %v4142 = vunpack.c.h.b16 %v2880
        %v4143 = vunpack.c.l.b16 %v2881
        %v4144 = vunpack.c.h.b16 %v2881
        %v4145 = vunpack.c.l.b16 %v2882
        %v4146 = vunpack.c.h.b16 %v2882
        %v4147 = vunpack.c.l.b16 %v2883
        %v4148 = vunpack.c.h.b16 %v2883
        %v4149 = vunpack.c.l.b16 %v2884
        %v4150 = vunpack.c.h.b16 %v2884
        %v4151 = vunpack.c.l.b16 %v2885
        %v4152 = vunpack.c.h.b16 %v2885
        %v4153 = vunpack.c.l.b16 %v2886
        %v4154 = vunpack.c.h.b16 %v2886
        %v4155 = vunpack.c.l.b16 %v2887
        %v4156 = vunpack.c.h.b16 %v2887
        %v4157 = vunpack.c.l.b16 %v2888
        %v4158 = vunpack.c.h.b16 %v2888
        %v4159 = vunpack.c.l.b16 %v2889
        %v4160 = vunpack.c.h.b16 %v2889
        %v4161 = vunpack.c.l.b16 %v2890
        %v4162 = vunpack.c.h.b16 %v2890
        %v4163 = vunpack.c.l.b16 %v2891
        %v4164 = vunpack.c.h.b16 %v2891
        %v4165 = vunpack.c.l.b16 %v2892
        %v4166 = vunpack.c.h.b16 %v2892
        %v4167 = vunpack.c.l.b16 %v2893
        %v4168 = vunpack.c.h.b16 %v2893
        %v4169 = vunpack.c.l.b16 %v2894
        %v4170 = vunpack.c.h.b16 %v2894
        %v4171 = vunpack.c.l.b16 %v2895
        %v4172 = vunpack.c.h.b16 %v2895
        %v4173 = vunpack.c.l.b16 %v2896
        %v4174 = vunpack.c.h.b16 %v2896
        %v4175 = vunpack.c.l.b16 %v2897
        %v4176 = vunpack.c.h.b16 %v2897
        %v4177 = vunpack.c.l.b16 %v2898
        %v4178 = vunpack.c.h.b16 %v2898
        %v4179 = vunpack.c.l.b16 %v2899
        %v4180 = vunpack.c.h.b16 %v2899
        %v4181 = vunpack.c.l.b16 %v2900
        %v4182 = vunpack.c.h.b16 %v2900
        %v4183 = vunpack.c.l.b16 %v2901
        %v4184 = vunpack.c.h.b16 %v2901
        %v4185 = vunpack.c.l.b16 %v2902
        %v4186 = vunpack.c.h.b16 %v2902
        %v4187 = vunpack.c.l.b16 %v2903
        %v4188 = vunpack.c.h.b16 %v2903
        %v4189 = vunpack.c.l.b16 %v2904
        %v4190 = vunpack.c.h.b16 %v2904
        %v4191 = vunpack.c.l.b16 %v2905
        %v4192 = vunpack.c.h.b16 %v2905
        %v4193 = vunpack.c.l.b16 %v2906
        %v4194 = vunpack.c.h.b16 %v2906
        %v4195 = vunpack.c.l.b16 %v2907
        %v4196 = vunpack.c.h.b16 %v2907
        %v4197 = vunpack.c.l.b16 %v2908
        %v4198 = vunpack.c.h.b16 %v2908
        %v4199 = vunpack.c.l.b16 %v2909
        %v4200 = vunpack.c.h.b16 %v2909
        %v4201 = vunpack.c.l.b16 %v2910
        %v4202 = vunpack.c.h.b16 %v2910
        %v4203 = vunpack.c.l.b16 %v2911
        %v4204 = vunpack.c.h.b16 %v2911
        %v4205 = vunpack.c.l.b16 %v2912
        %v4206 = vunpack.c.h.b16 %v2912
        %v4207 = vunpack.c.l.b16 %v2913
        %v4208 = vunpack.c.h.b16 %v2913
        %v4209 = vunpack.c.l.b16 %v2914
        %v4210 = vunpack.c.h.b16 %v2914
        %v4211 = vunpack.c.l.b16 %v2915
        %v4212 = vunpack.c.h.b16 %v2915
        %v4213 = vunpack.c.l.b16 %v2916
        %v4214 = vunpack.c.h.b16 %v2916
        %v4215 = vunpack.c.l.b16 %v2917
        %v4216 = vunpack.c.h.b16 %v2917
        %v4217 = vunpack.c.l.b16 %v2918
        %v4218 = vunpack.c.h.b16 %v2918
        %v4219 = vunpack.c.l.b16 %v2919
        %v4220 = vunpack.c.h.b16 %v2919
        %v4221 = vunpack.c.l.b16 %v2920
        %v4222 = vunpack.c.h.b16 %v2920
        %v4223 = vunpack.c.l.b16 %v2921
        %v4224 = vunpack.c.h.b16 %v2921
        %v4225 = vunpack.c.l.b16 %v2922
        %v4226 = vunpack.c.h.b16 %v2922
        %v4227 = vunpack.c.l.b16 %v2923
        %v4228 = vunpack.c.h.b16 %v2923
        %v4229 = vunpack.c.l.b16 %v2924
        %v4230 = vunpack.c.h.b16 %v2924
        %v4231 = vunpack.c.l.b16 %v2925
        %v4232 = vunpack.c.h.b16 %v2925
        %v4233 = vunpack.c.l.b16 %v2926
        %v4234 = vunpack.c.h.b16 %v2926
        %v4235 = vunpack.c.l.b16 %v2927
        %v4236 = vunpack.c.h.b16 %v2927
        %v4237 = vunpack.c.l.b16 %v2928
        %v4238 = vunpack.c.h.b16 %v2928
        %v4239 = vunpack.c.l.b16 %v2929
        %v4240 = vunpack.c.h.b16 %v2929
        %v4241 = vunpack.c.l.b16 %v2930
        %v4242 = vunpack.c.h.b16 %v2930
        %v4243 = vunpack.c.l.b16 %v2931
        %v4244 = vunpack.c.h.b16 %v2931
        %v4245 = vunpack.c.l.b16 %v2932
        %v4246 = vunpack.c.h.b16 %v2932
        %v4247 = vunpack.c.l.b16 %v2933
        %v4248 = vunpack.c.h.b16 %v2933
        %v4249 = vunpack.c.l.b16 %v2934
        %v4250 = vunpack.c.h.b16 %v2934
        %v4251 = vunpack.c.l.b16 %v2935
        %v4252 = vunpack.c.h.b16 %v2935
        %v4253 = vunpack.c.l.b16 %v2936
        %v4254 = vunpack.c.h.b16 %v2936
        %v4255 = vunpack.c.l.b16 %v2937
        %v4256 = vunpack.c.h.b16 %v2937
        %v4257 = vunpack.c.l.b16 %v2938
        %v4258 = vunpack.c.h.b16 %v2938
        %v4259 = vunpack.c.l.b16 %v2939
        %v4260 = vunpack.c.h.b16 %v2939
        %v4261 = vunpack.c.l.b16 %v2940
        %v4262 = vunpack.c.h.b16 %v2940
        %v4263 = vunpack.c.l.b16 %v2941
        %v4264 = vunpack.c.h.b16 %v2941
        %v4265 = vunpack.c.l.b16 %v2942
        %v4266 = vunpack.c.h.b16 %v2942
        %v4267 = vunpack.c.l.b16 %v2943
        %v4268 = vunpack.c.h.b16 %v2943
        %v4269 = vunpack.c.l.b16 %v2944
        %v4270 = vunpack.c.h.b16 %v2944
        %v4271 = vunpack.c.l.b16 %v2945
        %v4272 = vunpack.c.h.b16 %v2945
        %v4273 = vunpack.c.l.b16 %v2946
        %v4274 = vunpack.c.h.b16 %v2946
        %v4275 = vunpack.c.l.b16 %v2947
        %v4276 = vunpack.c.h.b16 %v2947
        %v4277 = vunpack.c.l.b16 %v2948
        %v4278 = vunpack.c.h.b16 %v2948
        %v4279 = vunpack.c.l.b16 %v2949
        %v4280 = vunpack.c.h.b16 %v2949
        %v4281 = vunpack.c.l.b16 %v2950
        %v4282 = vunpack.c.h.b16 %v2950
        %v4283 = vunpack.c.l.b16 %v2951
        %v4284 = vunpack.c.h.b16 %v2951
        %v4285 = vunpack.c.l.b16 %v2952
        %v4286 = vunpack.c.h.b16 %v2952
        %v4287 = vunpack.c.l.b16 %v2953
        %v4288 = vunpack.c.h.b16 %v2953
        %v4289 = vunpack.c.l.b16 %v2954
        %v4290 = vunpack.c.h.b16 %v2954
        %v4291 = vunpack.c.l.b16 %v2955
        %v4292 = vunpack.c.h.b16 %v2955
        %v4293 = vunpack.c.l.b16 %v2956
        %v4294 = vunpack.c.h.b16 %v2956
        %v4295 = vunpack.c.l.b16 %v2957
        %v4296 = vunpack.c.h.b16 %v2957
        %v4297 = vunpack.c.l.b16 %v2958
        %v4298 = vunpack.c.h.b16 %v2958
        %v4299 = vunpack.c.l.b16 %v2959
        %v4300 = vunpack.c.h.b16 %v2959
        %v4301 = vunpack.c.l.b16 %v2960
        %v4302 = vunpack.c.h.b16 %v2960
        %v4303 = vunpack.c.l.b16 %v2961
        %v4304 = vunpack.c.h.b16 %v2961
        %v4305 = vunpack.c.l.b16 %v2962
        %v4306 = vunpack.c.h.b16 %v2962
        %v4307 = vunpack.c.l.b16 %v2963
        %v4308 = vunpack.c.h.b16 %v2963
        %v4309 = vunpack.c.l.b16 %v2964
        %v4310 = vunpack.c.h.b16 %v2964
        %v4311 = vunpack.c.l.b16 %v2965
        %v4312 = vunpack.c.h.b16 %v2965
        %v4313 = vunpack.c.l.b16 %v2966
        %v4314 = vunpack.c.h.b16 %v2966
        %v4315 = vunpack.c.l.b16 %v2967
        %v4316 = vunpack.c.h.b16 %v2967
        %v4317 = vunpack.c.l.b16 %v2968
        %v4318 = vunpack.c.h.b16 %v2968
        %v4319 = vunpack.c.l.b16 %v2969
        %v4320 = vunpack.c.h.b16 %v2969
        %v4321 = vunpack.c.l.b16 %v2970
        %v4322 = vunpack.c.h.b16 %v2970
        %v4323 = vunpack.c.l.b16 %v2971
        %v4324 = vunpack.c.h.b16 %v2971
        %v4325 = vunpack.c.l.b16 %v2972
        %v4326 = vunpack.c.h.b16 %v2972
        %v4327 = vunpack.c.l.b16 %v2973
        %v4328 = vunpack.c.h.b16 %v2973
        %v4329 = vunpack.c.l.b16 %v2974
        %v4330 = vunpack.c.h.b16 %v2974
        %v4331 = vunpack.c.l.b16 %v2975
        %v4332 = vunpack.c.h.b16 %v2975
        %v4333 = vunpack.c.l.b16 %v2976
        %v4334 = vunpack.c.h.b16 %v2976
        %v4335 = vunpack.c.l.b16 %v2977
        %v4336 = vunpack.c.h.b16 %v2977
        %v4337 = vunpack.c.l.b16 %v2978
        %v4338 = vunpack.c.h.b16 %v2978
        %v4339 = vunpack.c.l.b16 %v2979
        %v4340 = vunpack.c.h.b16 %v2979
        %v4341 = vunpack.c.l.b16 %v2980
        %v4342 = vunpack.c.h.b16 %v2980
        %v4343 = vunpack.c.l.b16 %v2981
        %v4344 = vunpack.c.h.b16 %v2981
        %v4345 = vunpack.c.l.b16 %v2982
        %v4346 = vunpack.c.h.b16 %v2982
        %v4347 = vunpack.c.l.b16 %v2983
        %v4348 = vunpack.c.h.b16 %v2983
        %v4349 = vunpack.c.l.b16 %v2984
        %v4350 = vunpack.c.h.b16 %v2984
        %v4351 = vunpack.c.l.b16 %v2985
        %v4352 = vunpack.c.h.b16 %v2985
        %v4353 = vunpack.c.l.b16 %v2986
        %v4354 = vunpack.c.h.b16 %v2986
        %v4355 = vunpack.c.l.b16 %v2987
        %v4356 = vunpack.c.h.b16 %v2987
        %v4357 = vunpack.c.l.b16 %v2988
        %v4358 = vunpack.c.h.b16 %v2988
        %v4359 = vunpack.c.l.b16 %v2989
        %v4360 = vunpack.c.h.b16 %v2989
        %v4361 = vunpack.c.l.b16 %v2990
        %v4362 = vunpack.c.h.b16 %v2990
        %v4363 = vunpack.c.l.b16 %v2991
        %v4364 = vunpack.c.h.b16 %v2991
        %v4365 = vunpack.c.l.b16 %v2992
        %v4366 = vunpack.c.h.b16 %v2992
        %v4367 = vunpack.c.l.b16 %v2993
        %v4368 = vunpack.c.h.b16 %v2993
        %v4369 = vunpack.c.l.b16 %v2994
        %v4370 = vunpack.c.h.b16 %v2994
        %v4371 = vunpack.c.l.b16 %v2995
        %v4372 = vunpack.c.h.b16 %v2995
        %v4373 = vunpack.c.l.b16 %v2996
        %v4374 = vunpack.c.h.b16 %v2996
        %v4375 = vunpack.c.l.b16 %v2997
        %v4376 = vunpack.c.h.b16 %v2997
        %v4377 = vunpack.c.l.b16 %v2998
        %v4378 = vunpack.c.h.b16 %v2998
        %v4379 = vunpack.c.l.b16 %v2999
        %v4380 = vunpack.c.h.b16 %v2999
        %v4381 = vunpack.c.l.b16 %v3000
        %v4382 = vunpack.c.h.b16 %v3000
        %v4383 = vunpack.c.l.b16 %v3001
        %v4384 = vunpack.c.h.b16 %v3001
        %v4385 = vunpack.c.l.b16 %v3002
        %v4386 = vunpack.c.h.b16 %v3002
        %v4387 = vunpack.c.l.b16 %v3003
        %v4388 = vunpack.c.h.b16 %v3003
        %v4389 = vunpack.c.l.b16 %v3004
        %v4390 = vunpack.c.h.b16 %v3004
        %v4391 = vunpack.c.l.b16 %v3005
        %v4392 = vunpack.c.h.b16 %v3005
        %v4393 = vunpack.c.l.b16 %v3006
        %v4394 = vunpack.c.h.b16 %v3006
        %v4395 = vunpack.c.l.b16 %v3007
        %v4396 = vunpack.c.h.b16 %v3007
        %v4397 = vunpack.c.l.b16 %v3008
        %v4398 = vunpack.c.h.b16 %v3008
        %v4399 = vunpack.c.l.b16 %v3009
        %v4400 = vunpack.c.h.b16 %v3009
        %v4401 = vunpack.c.l.b16 %v3010
        %v4402 = vunpack.c.h.b16 %v3010
        %v4403 = vunpack.c.l.b16 %v3011
        %v4404 = vunpack.c.h.b16 %v3011
        %v4405 = vunpack.c.l.b16 %v3012
        %v4406 = vunpack.c.h.b16 %v3012
        %v4407 = vunpack.c.l.b16 %v3013
        %v4408 = vunpack.c.h.b16 %v3013
        %v4409 = vunpack.c.l.b16 %v3014
        %v4410 = vunpack.c.h.b16 %v3014
        %v4411 = vunpack.c.l.b16 %v3015
        %v4412 = vunpack.c.h.b16 %v3015
        %v4413 = vunpack.c.l.b16 %v3016
        %v4414 = vunpack.c.h.b16 %v3016
        %v4415 = vunpack.c.l.b16 %v3017
        %v4416 = vunpack.c.h.b16 %v3017
        %v4417 = vunpack.c.l.b16 %v3018
        %v4418 = vunpack.c.h.b16 %v3018
        %v4419 = vunpack.c.l.b16 %v3019
        %v4420 = vunpack.c.h.b16 %v3019
        %v4421 = vunpack.c.l.b16 %v3020
        %v4422 = vunpack.c.h.b16 %v3020
        %v4423 = vunpack.c.l.b16 %v3021
        %v4424 = vunpack.c.h.b16 %v3021
        %v4425 = vunpack.c.l.b16 %v3022
        %v4426 = vunpack.c.h.b16 %v3022
        %v4427 = vunpack.c.l.b16 %v3023
        %v4428 = vunpack.c.h.b16 %v3023
        %v4429 = vunpack.c.l.b16 %v3024
        %v4430 = vunpack.c.h.b16 %v3024
        %v4431 = vunpack.c.l.b16 %v3025
        %v4432 = vunpack.c.h.b16 %v3025
        %v4433 = vunpack.c.l.b16 %v3026
        %v4434 = vunpack.c.h.b16 %v3026
        %v4435 = vunpack.c.l.b16 %v3027
        %v4436 = vunpack.c.h.b16 %v3027
        %v4437 = vunpack.c.l.b16 %v3028
        %v4438 = vunpack.c.h.b16 %v3028
        %v4439 = vunpack.c.l.b16 %v3029
        %v4440 = vunpack.c.h.b16 %v3029
        %v4441 = vunpack.c.l.b16 %v3030
        %v4442 = vunpack.c.h.b16 %v3030
        %v4443 = vunpack.c.l.b16 %v3031
        %v4444 = vunpack.c.h.b16 %v3031
        %v4445 = vunpack.c.l.b16 %v3032
        %v4446 = vunpack.c.h.b16 %v3032
        %v4447 = vunpack.c.l.b16 %v3033
        %v4448 = vunpack.c.h.b16 %v3033
        %v4449 = vunpack.c.l.b16 %v3034
        %v4450 = vunpack.c.h.b16 %v3034
        %v4451 = vunpack.c.l.b16 %v3035
        %v4452 = vunpack.c.h.b16 %v3035
        %v4453 = vunpack.c.l.b16 %v3036
        %v4454 = vunpack.c.h.b16 %v3036
        %v4455 = vunpack.c.l.b16 %v3037
        %v4456 = vunpack.c.h.b16 %v3037
        %v4457 = vunpack.c.l.b16 %v3038
        %v4458 = vunpack.c.h.b16 %v3038
        %v4459 = vunpack.c.l.b16 %v3039
        %v4460 = vunpack.c.h.b16 %v3039
        %v4461 = vunpack.c.l.b16 %v3040
        %v4462 = vunpack.c.h.b16 %v3040
        %v4463 = vunpack.c.l.b16 %v3041
        %v4464 = vunpack.c.h.b16 %v3041
        %v4465 = vunpack.c.l.b16 %v3042
        %v4466 = vunpack.c.h.b16 %v3042
        %v4467 = vunpack.c.l.b16 %v3043
        %v4468 = vunpack.c.h.b16 %v3043
        %v4469 = vunpack.c.l.b16 %v3044
        %v4470 = vunpack.c.h.b16 %v3044
        %v4471 = vunpack.c.l.b16 %v3045
        %v4472 = vunpack.c.h.b16 %v3045
        %v4473 = vunpack.c.l.b16 %v3046
        %v4474 = vunpack.c.h.b16 %v3046
        %v4475 = vunpack.c.l.b16 %v3047
        %v4476 = vunpack.c.h.b16 %v3047
        %v4477 = vunpack.c.l.b16 %v3048
        %v4478 = vunpack.c.h.b16 %v3048
        %v4479 = vunpack.c.l.b16 %v3049
        %v4480 = vunpack.c.h.b16 %v3049
        %v4481 = vunpack.c.l.b16 %v3050
        %v4482 = vunpack.c.h.b16 %v3050
        %v4483 = vunpack.c.l.b16 %v3051
        %v4484 = vunpack.c.h.b16 %v3051
        %v4485 = vunpack.c.l.b16 %v3052
        %v4486 = vunpack.c.h.b16 %v3052
        %v4487 = vunpack.c.l.b16 %v3053
        %v4488 = vunpack.c.h.b16 %v3053
        %v4489 = vunpack.c.l.b16 %v3054
        %v4490 = vunpack.c.h.b16 %v3054
        %v4491 = vunpack.c.l.b16 %v3055
        %v4492 = vunpack.c.h.b16 %v3055
        %v4493 = vunpack.c.l.b16 %v3056
        %v4494 = vunpack.c.h.b16 %v3056
        %v4495 = vunpack.c.l.b16 %v3057
        %v4496 = vunpack.c.h.b16 %v3057
        %v4497 = vunpack.c.l.b16 %v3058
        %v4498 = vunpack.c.h.b16 %v3058
        %v4499 = vunpack.c.l.b16 %v3059
        %v4500 = vunpack.c.h.b16 %v3059
        %v4501 = vunpack.c.l.b16 %v3060
        %v4502 = vunpack.c.h.b16 %v3060
        %v4503 = vunpack.c.l.b16 %v3061
        %v4504 = vunpack.c.h.b16 %v3061
        %v4505 = vunpack.c.l.b16 %v3062
        %v4506 = vunpack.c.h.b16 %v3062
        %v4507 = vunpack.c.l.b16 %v3063
        %v4508 = vunpack.c.h.b16 %v3063
        %v4509 = vunpack.c.l.b16 %v3064
        %v4510 = vunpack.c.h.b16 %v3064
        %v4511 = vunpack.c.l.b16 %v3065
        %v4512 = vunpack.c.h.b16 %v3065
        %v4513 = vunpack.c.l.b16 %v3066
        %v4514 = vunpack.c.h.b16 %v3066
        %v4515 = vunpack.c.l.b16 %v3067
        %v4516 = vunpack.c.h.b16 %v3067
        %v4517 = vunpack.c.l.b16 %v3068
        %v4518 = vunpack.c.h.b16 %v3068
        %v4519 = vunpack.c.l.b16 %v3069
        %v4520 = vunpack.c.h.b16 %v3069
        %v4521 = vunpack.c.l.b16 %v3070
        %v4522 = vunpack.c.h.b16 %v3070
        %v4523 = vunpack.c.l.b16 %v3071
        %v4524 = vunpack.c.h.b16 %v3071
        %v4525 = vunpack.c.l.b16 %v3072
        %v4526 = vunpack.c.h.b16 %v3072
        %v4527 = vunpack.c.l.b16 %v3073
        %v4528 = vunpack.c.h.b16 %v3073
        %v4529 = vunpack.c.l.b16 %v3074
        %v4530 = vunpack.c.h.b16 %v3074
        %v4531 = vunpack.c.l.b16 %v3075
        %v4532 = vunpack.c.h.b16 %v3075
        %v4533 = vunpack.c.l.b16 %v3076
        %v4534 = vunpack.c.h.b16 %v3076
        %v4535 = vunpack.c.l.b16 %v3077
        %v4536 = vunpack.c.h.b16 %v3077
        %v4537 = vunpack.c.l.b16 %v3078
        %v4538 = vunpack.c.h.b16 %v3078
        %v4539 = vunpack.c.l.b16 %v3079
        %v4540 = vunpack.c.h.b16 %v3079
        %v4541 = vunpack.c.l.b16 %v3080
        %v4542 = vunpack.c.h.b16 %v3080
        %v4543 = vunpack.c.l.b16 %v3081
        %v4544 = vunpack.c.h.b16 %v3081
        %v4545 = vunpack.c.l.b16 %v3082
        %v4546 = vunpack.c.h.b16 %v3082
        %v4547 = vunpack.c.l.b16 %v3083
        %v4548 = vunpack.c.h.b16 %v3083
        %v4549 = vunpack.c.l.b16 %v3084
        %v4550 = vunpack.c.h.b16 %v3084
        %v4551 = vunpack.c.l.b16 %v3085
        %v4552 = vunpack.c.h.b16 %v3085
        %v4553 = vunpack.c.l.b16 %v3086
        %v4554 = vunpack.c.h.b16 %v3086
        %v4555 = vunpack.c.l.b16 %v3087
        %v4556 = vunpack.c.h.b16 %v3087
        %v4557 = vunpack.c.l.b16 %v3088
        %v4558 = vunpack.c.h.b16 %v3088
        %v4559 = vunpack.c.l.b16 %v3089
        %v4560 = vunpack.c.h.b16 %v3089
        %v4561 = vunpack.c.l.b16 %v3090
        %v4562 = vunpack.c.h.b16 %v3090
        %v4563 = vunpack.c.l.b16 %v3091
        %v4564 = vunpack.c.h.b16 %v3091
        %v4565 = vunpack.c.l.b16 %v3092
        %v4566 = vunpack.c.h.b16 %v3092
        %v4567 = vunpack.c.l.b16 %v3093
        %v4568 = vunpack.c.h.b16 %v3093
        %v4569 = vunpack.c.l.b16 %v3094
        %v4570 = vunpack.c.h.b16 %v3094
        %v4571 = vunpack.c.l.b16 %v3095
        %v4572 = vunpack.c.h.b16 %v3095
        %v4573 = vunpack.c.l.b16 %v3096
        %v4574 = vunpack.c.h.b16 %v3096
        %v4575 = vunpack.c.l.b16 %v3097
        %v4576 = vunpack.c.h.b16 %v3097
        %v4577 = vunpack.c.l.b16 %v3098
        %v4578 = vunpack.c.h.b16 %v3098
        %v4579 = vunpack.c.l.b16 %v3099
        %v4580 = vunpack.c.h.b16 %v3099
        %v4581 = vunpack.c.l.b16 %v3100
        %v4582 = vunpack.c.h.b16 %v3100
        %v4583 = vunpack.c.l.b16 %v3101
        %v4584 = vunpack.c.h.b16 %v3101
        %v4585 = vunpack.c.l.b16 %v3102
        %v4586 = vunpack.c.h.b16 %v3102
        %v4587 = vunpack.c.l.b16 %v3103
        %v4588 = vunpack.c.h.b16 %v3103
        %v4589 = vunpack.c.l.b16 %v3104
        %v4590 = vunpack.c.h.b16 %v3104
        %v4591 = vunpack.c.l.b16 %v3105
        %v4592 = vunpack.c.h.b16 %v3105
        %v4593 = vunpack.c.l.b16 %v3106
        %v4594 = vunpack.c.h.b16 %v3106
        %v4595 = vunpack.c.l.b16 %v3107
        %v4596 = vunpack.c.h.b16 %v3107
        %v4597 = vunpack.c.l.b16 %v3108
        %v4598 = vunpack.c.h.b16 %v3108
        %v4599 = vunpack.c.l.b16 %v3109
        %v4600 = vunpack.c.h.b16 %v3109
        %v4601 = vunpack.c.l.b16 %v3110
        %v4602 = vunpack.c.h.b16 %v3110
        %v4603 = vunpack.c.l.b16 %v3111
        %v4604 = vunpack.c.h.b16 %v3111
        %v4605 = vunpack.c.l.b16 %v3112
        %v4606 = vunpack.c.h.b16 %v3112
        %v4607 = vunpack.c.l.b16 %v3113
        %v4608 = vunpack.c.h.b16 %v3113
        %v4609 = vunpack.c.l.b16 %v3114
        %v4610 = vunpack.c.h.b16 %v3114
        %v4611 = vunpack.c.l.b16 %v3115
        %v4612 = vunpack.c.h.b16 %v3115
        %v4613 = vunpack.c.l.b16 %v3116
        %v4614 = vunpack.c.h.b16 %v3116
        %v4615 = vunpack.c.l.b16 %v3117
        %v4616 = vunpack.c.h.b16 %v3117
        %v4617 = vunpack.c.l.b16 %v3118
        %v4618 = vunpack.c.h.b16 %v3118
        %v4619 = vunpack.c.l.b16 %v3119
        %v4620 = vunpack.c.h.b16 %v3119
        %v4621 = vunpack.c.l.b16 %v3120
        %v4622 = vunpack.c.h.b16 %v3120
        %v4623 = vunpack.c.l.b16 %v3121
        %v4624 = vunpack.c.h.b16 %v3121
        %v4625 = vunpack.c.l.b16 %v3122
        %v4626 = vunpack.c.h.b16 %v3122
        %v4627 = vunpack.c.l.b16 %v3123
        %v4628 = vunpack.c.h.b16 %v3123
        %v4629 = vunpack.c.l.b16 %v3124
        %v4630 = vunpack.c.h.b16 %v3124
        %v4631 = vunpack.c.l.b16 %v3125
        %v4632 = vunpack.c.h.b16 %v3125
        %v4633 = vunpack.c.l.b16 %v3126
        %v4634 = vunpack.c.h.b16 %v3126
        %v4635 = vunpack.c.l.b16 %v3127
        %v4636 = vunpack.c.h.b16 %v3127
        %v4637 = vunpack.c.l.b16 %v3128
        %v4638 = vunpack.c.h.b16 %v3128
        %v4639 = vunpack.c.l.b16 %v3129
        %v4640 = vunpack.c.h.b16 %v3129
        %v4641 = vunpack.c.l.b16 %v3130
        %v4642 = vunpack.c.h.b16 %v3130
        %v4643 = vunpack.c.l.b16 %v3131
        %v4644 = vunpack.c.h.b16 %v3131
        %v4645 = vunpack.c.l.b16 %v3132
        %v4646 = vunpack.c.h.b16 %v3132
        %v4647 = vunpack.c.l.b16 %v3133
        %v4648 = vunpack.c.h.b16 %v3133
        %v4649 = vunpack.c.l.b16 %v3134
        %v4650 = vunpack.c.h.b16 %v3134
        %v4651 = vunpack.c.l.b16 %v3135
        %v4652 = vunpack.c.h.b16 %v3135
        %v4653 = vunpack.c.l.b16 %v3136
        %v4654 = vunpack.c.h.b16 %v3136
        %v4655 = vunpack.c.l.b16 %v3137
        %v4656 = vunpack.c.h.b16 %v3137
        %v4657 = vunpack.c.l.b16 %v3138
        %v4658 = vunpack.c.h.b16 %v3138
        %v4659 = vunpack.c.l.b16 %v3139
        %v4660 = vunpack.c.h.b16 %v3139
        %v4661 = vunpack.c.l.b16 %v3140
        %v4662 = vunpack.c.h.b16 %v3140
        %v4663 = vunpack.c.l.b16 %v3141
        %v4664 = vunpack.c.h.b16 %v3141
        %v4665 = vunpack.c.l.b16 %v3142
        %v4666 = vunpack.c.h.b16 %v3142
        %v4667 = vunpack.c.l.b16 %v3143
        %v4668 = vunpack.c.h.b16 %v3143
        %v4669 = vunpack.c.l.b16 %v3144
        %v4670 = vunpack.c.h.b16 %v3144
        %v4671 = vunpack.c.l.b16 %v3145
        %v4672 = vunpack.c.h.b16 %v3145
        %v4673 = vunpack.c.l.b16 %v3146
        %v4674 = vunpack.c.h.b16 %v3146
        %v4675 = vunpack.c.l.b16 %v3147
        %v4676 = vunpack.c.h.b16 %v3147
        %v4677 = vunpack.c.l.b16 %v3148
        %v4678 = vunpack.c.h.b16 %v3148
        %v4679 = vunpack.c.l.b16 %v3149
        %v4680 = vunpack.c.h.b16 %v3149
        %v4681 = vunpack.c.l.b16 %v3150
        %v4682 = vunpack.c.h.b16 %v3150
        %v4683 = vunpack.c.l.b16 %v3151
        %v4684 = vunpack.c.h.b16 %v3151
        %v4685 = vunpack.c.l.b16 %v3152
        %v4686 = vunpack.c.h.b16 %v3152
        %v4687 = vunpack.c.l.b16 %v3153
        %v4688 = vunpack.c.h.b16 %v3153
        %v4689 = vunpack.c.l.b16 %v3154
        %v4690 = vunpack.c.h.b16 %v3154
        %v4691 = vunpack.c.l.b16 %v3155
        %v4692 = vunpack.c.h.b16 %v3155
        %v4693 = vunpack.c.l.b16 %v3156
        %v4694 = vunpack.c.h.b16 %v3156
        %v4695 = vunpack.c.l.b16 %v3157
        %v4696 = vunpack.c.h.b16 %v3157
        %v4697 = vunpack.c.l.b16 %v3158
        %v4698 = vunpack.c.h.b16 %v3158
        %v4699 = vunpack.c.l.b16 %v3159
        %v4700 = vunpack.c.h.b16 %v3159
        %v4701 = vunpack.c.l.b16 %v3160
        %v4702 = vunpack.c.h.b16 %v3160
        %v4703 = vunpack.c.l.b16 %v3161
        %v4704 = vunpack.c.h.b16 %v3161
        %v4705 = vunpack.c.l.b16 %v3162
        %v4706 = vunpack.c.h.b16 %v3162
        %v4707 = vunpack.c.l.b16 %v3163
        %v4708 = vunpack.c.h.b16 %v3163
        %v4709 = vunpack.c.l.b16 %v3164
        %v4710 = vunpack.c.h.b16 %v3164
        %v4711 = vunpack.c.l.b16 %v3165
        %v4712 = vunpack.c.h.b16 %v3165
        %v4713 = vunpack.c.l.b16 %v3166
        %v4714 = vunpack.c.h.b16 %v3166
        %v4715 = vunpack.c.l.b16 %v3167
        %v4716 = vunpack.c.h.b16 %v3167
        %v4717 = vunpack.c.l.b16 %v3168
        %v4718 = vunpack.c.h.b16 %v3168
        %v4719 = vunpack.c.l.b16 %v3169
        %v4720 = vunpack.c.h.b16 %v3169
        %v4721 = vunpack.c.l.b16 %v3170
        %v4722 = vunpack.c.h.b16 %v3170
        %v4723 = vunpack.c.l.b16 %v3171
        %v4724 = vunpack.c.h.b16 %v3171
        %v4725 = vunpack.c.l.b16 %v3172
        %v4726 = vunpack.c.h.b16 %v3172
        %v4727 = vunpack.c.l.b16 %v3173
        %v4728 = vunpack.c.h.b16 %v3173
        %v4729 = vunpack.c.l.b16 %v3174
        %v4730 = vunpack.c.h.b16 %v3174
        %v4731 = vunpack.c.l.b16 %v3175
        %v4732 = vunpack.c.h.b16 %v3175
        %v4733 = vunpack.c.l.b16 %v3176
        %v4734 = vunpack.c.h.b16 %v3176
        %v4735 = vunpack.c.l.b16 %v3177
        %v4736 = vunpack.c.h.b16 %v3177
        %v4737 = vunpack.c.l.b16 %v3178
        %v4738 = vunpack.c.h.b16 %v3178
        %v4739 = vunpack.c.l.b16 %v3179
        %v4740 = vunpack.c.h.b16 %v3179
        %v4741 = vunpack.c.l.b16 %v3180
        %v4742 = vunpack.c.h.b16 %v3180
        %v4743 = vunpack.c.l.b16 %v3181
        %v4744 = vunpack.c.h.b16 %v3181
        %v4745 = vunpack.c.l.b16 %v3182
        %v4746 = vunpack.c.h.b16 %v3182
        %v4747 = vunpack.c.l.b16 %v3183
        %v4748 = vunpack.c.h.b16 %v3183
        %v4749 = vunpack.c.l.b16 %v3184
        %v4750 = vunpack.c.h.b16 %v3184
        %v4751 = vunpack.c.l.b16 %v3185
        %v4752 = vunpack.c.h.b16 %v3185
        %v4753 = vunpack.c.l.b16 %v3186
        %v4754 = vunpack.c.h.b16 %v3186
        %v4755 = vunpack.c.l.b16 %v3187
        %v4756 = vunpack.c.h.b16 %v3187
        %v4757 = vunpack.c.l.b16 %v3188
        %v4758 = vunpack.c.h.b16 %v3188
        %v4759 = vunpack.c.l.b16 %v3189
        %v4760 = vunpack.c.h.b16 %v3189
        %v4761 = vunpack.c.l.b16 %v3190
        %v4762 = vunpack.c.h.b16 %v3190
        %v4763 = vunpack.c.l.b16 %v3191
        %v4764 = vunpack.c.h.b16 %v3191
        %v4765 = vunpack.c.l.b16 %v3192
        %v4766 = vunpack.c.h.b16 %v3192
        %v4767 = vunpack.c.l.b16 %v3193
        %v4768 = vunpack.c.h.b16 %v3193
        %v4769 = vunpack.c.l.b16 %v3194
        %v4770 = vunpack.c.h.b16 %v3194
        %v4771 = vunpack.c.l.b16 %v3195
        %v4772 = vunpack.c.h.b16 %v3195
        %v4773 = vunpack.c.l.b16 %v3196
        %v4774 = vunpack.c.h.b16 %v3196
        %v4775 = vunpack.c.l.b16 %v3197
        %v4776 = vunpack.c.h.b16 %v3197
        %v4777 = vunpack.c.l.b16 %v3198
        %v4778 = vunpack.c.h.b16 %v3198
        %v4779 = vunpack.c.l.b16 %v3199
        %v4780 = vunpack.c.h.b16 %v3199
        %v4781 = vunpack.c.l.b16 %v3200
        %v4782 = vunpack.c.h.b16 %v3200
        %v4783 = vunpack.c.l.b16 %v3201
        %v4784 = vunpack.c.h.b16 %v3201
        %v4785 = vunpack.c.l.b16 %v3202
        %v4786 = vunpack.c.h.b16 %v3202
        %v4787 = vunpack.c.l.b16 %v3203
        %v4788 = vunpack.c.h.b16 %v3203
        %v4789 = vunpack.c.l.b16 %v3204
        %v4790 = vunpack.c.h.b16 %v3204
        %v4791 = vunpack.c.l.b16 %v3205
        %v4792 = vunpack.c.h.b16 %v3205
        %v4793 = vunpack.c.l.b16 %v3206
        %v4794 = vunpack.c.h.b16 %v3206
        %v4795 = vunpack.c.l.b16 %v3207
        %v4796 = vunpack.c.h.b16 %v3207
        %v4797 = vunpack.c.l.b16 %v3208
        %v4798 = vunpack.c.h.b16 %v3208
        %v4799 = vunpack.c.l.b16 %v3209
        %v4800 = vunpack.c.h.b16 %v3209
        %v4801 = vunpack.c.l.b16 %v3210
        %v4802 = vunpack.c.h.b16 %v3210
        %v4803 = vunpack.c.l.b16 %v3211
        %v4804 = vunpack.c.h.b16 %v3211
        %v4805 = vunpack.c.l.b16 %v3212
        %v4806 = vunpack.c.h.b16 %v3212
        %v4807 = vunpack.c.l.b16 %v3213
        %v4808 = vunpack.c.h.b16 %v3213
        %v4809 = vunpack.c.l.b16 %v3214
        %v4810 = vunpack.c.h.b16 %v3214
        %v4811 = vunpack.c.l.b16 %v3215
        %v4812 = vunpack.c.h.b16 %v3215
        %v4813 = vunpack.c.l.b16 %v3216
        %v4814 = vunpack.c.h.b16 %v3216
        %v4815 = vunpack.c.l.b16 %v3217
        %v4816 = vunpack.c.h.b16 %v3217
        %v4817 = vunpack.c.l.b16 %v3218
        %v4818 = vunpack.c.h.b16 %v3218
        %v4819 = vunpack.c.l.b16 %v3219
        %v4820 = vunpack.c.h.b16 %v3219
        %v4821 = vunpack.c.l.b16 %v3220
        %v4822 = vunpack.c.h.b16 %v3220
        %v4823 = vunpack.c.l.b16 %v3221
        %v4824 = vunpack.c.h.b16 %v3221
        %v4825 = vunpack.c.l.b16 %v3222
        %v4826 = vunpack.c.h.b16 %v3222
        %v4827 = vunpack.c.l.b16 %v3223
        %v4828 = vunpack.c.h.b16 %v3223
        %v4829 = vunpack.c.l.b16 %v3224
        %v4830 = vunpack.c.h.b16 %v3224
        %v4831 = vunpack.c.l.b16 %v3225
        %v4832 = vunpack.c.h.b16 %v3225
        %v4833 = vunpack.c.l.b16 %v3226
        %v4834 = vunpack.c.h.b16 %v3226
        %v4835 = vunpack.c.l.b16 %v3227
        %v4836 = vunpack.c.h.b16 %v3227
        %v4837 = vunpack.c.l.b16 %v3228
        %v4838 = vunpack.c.h.b16 %v3228
        %v4839 = vunpack.c.l.b16 %v3229
        %v4840 = vunpack.c.h.b16 %v3229
        %v4841 = vunpack.c.l.b16 %v3230
        %v4842 = vunpack.c.h.b16 %v3230
        %v4843 = vunpack.c.l.b16 %v3231
        %v4844 = vunpack.c.h.b16 %v3231
        %v4845 = vunpack.c.l.b16 %v3232
        %v4846 = vunpack.c.h.b16 %v3232
        %v4847 = vunpack.c.l.b16 %v3233
        %v4848 = vunpack.c.h.b16 %v3233
        %v4849 = vunpack.c.l.b16 %v3234
        %v4850 = vunpack.c.h.b16 %v3234
        %v4851 = vunpack.c.l.b16 %v3235
        %v4852 = vunpack.c.h.b16 %v3235
        %v4853 = vunpack.c.l.b16 %v3236
        %v4854 = vunpack.c.h.b16 %v3236
        %v4855 = vunpack.c.l.b16 %v3237
        %v4856 = vunpack.c.h.b16 %v3237
        %v4857 = vunpack.c.l.b16 %v3238
        %v4858 = vunpack.c.h.b16 %v3238
        %v4859 = vunpack.c.l.b16 %v3239
        %v4860 = vunpack.c.h.b16 %v3239
        %v4861 = vunpack.c.l.b16 %v3240
        %v4862 = vunpack.c.h.b16 %v3240
        %v4863 = vunpack.c.l.b16 %v3241
        %v4864 = vunpack.c.h.b16 %v3241
        %v4865 = vunpack.c.l.b16 %v3242
        %v4866 = vunpack.c.h.b16 %v3242
        %v4867 = vunpack.c.l.b16 %v3243
        %v4868 = vunpack.c.h.b16 %v3243
        %v4869 = vunpack.c.l.b16 %v3244
        %v4870 = vunpack.c.h.b16 %v3244
        %v4871 = vunpack.c.l.b16 %v3245
        %v4872 = vunpack.c.h.b16 %v3245
        %v4873 = vunpack.c.l.b16 %v3246
        %v4874 = vunpack.c.h.b16 %v3246
        %v4875 = vunpack.c.l.b16 %v3247
        %v4876 = vunpack.c.h.b16 %v3247
        %v4877 = vunpack.c.l.b16 %v3248
        %v4878 = vunpack.c.h.b16 %v3248
        %v4879 = vunpack.c.l.b16 %v3249
        %v4880 = vunpack.c.h.b16 %v3249
        %v4881 = vunpack.c.l.b16 %v3250
        %v4882 = vunpack.c.h.b16 %v3250
        %v4883 = vunpack.c.l.b16 %v3251
        %v4884 = vunpack.c.h.b16 %v3251
        %v4885 = vunpack.c.l.b16 %v3252
        %v4886 = vunpack.c.h.b16 %v3252
        %v4887 = vunpack.c.l.b16 %v3253
        %v4888 = vunpack.c.h.b16 %v3253
        %v4889 = vunpack.c.l.b16 %v3254
        %v4890 = vunpack.c.h.b16 %v3254
        %v4891 = vunpack.c.l.b16 %v3255
        %v4892 = vunpack.c.h.b16 %v3255
        %v4893 = vunpack.c.l.b16 %v3256
        %v4894 = vunpack.c.h.b16 %v3256
        %v4895 = vunpack.c.l.b16 %v3257
        %v4896 = vunpack.c.h.b16 %v3257
        %v4897 = vunpack.c.l.b16 %v3258
        %v4898 = vunpack.c.h.b16 %v3258
        %v4899 = vunpack.c.l.b16 %v3259
        %v4900 = vunpack.c.h.b16 %v3259
        %v4901 = vunpack.c.l.b16 %v3260
        %v4902 = vunpack.c.h.b16 %v3260
        %v4903 = vunpack.c.l.b16 %v3261
        %v4904 = vunpack.c.h.b16 %v3261
        %v4905 = vunpack.c.l.b16 %v3262
        %v4906 = vunpack.c.h.b16 %v3262
        %v4907 = vunpack.c.l.b16 %v3263
        %v4908 = vunpack.c.h.b16 %v3263
        %v4909 = vunpack.c.l.b16 %v3264
        %v4910 = vunpack.c.h.b16 %v3264
        %v4911 = vunpack.c.l.b16 %v3265
        %v4912 = vunpack.c.h.b16 %v3265
        %v4913 = vunpack.c.l.b16 %v3266
        %v4914 = vunpack.c.h.b16 %v3266
        %v4915 = vunpack.c.l.b16 %v3267
        %v4916 = vunpack.c.h.b16 %v3267
        %v4917 = vunpack.c.l.b16 %v3268
        %v4918 = vunpack.c.h.b16 %v3268
        %v4919 = vunpack.c.l.b16 %v3269
        %v4920 = vunpack.c.h.b16 %v3269
        %v4921 = vunpack.c.l.b16 %v3270
        %v4922 = vunpack.c.h.b16 %v3270
        %v4923 = vunpack.c.l.b16 %v3271
        %v4924 = vunpack.c.h.b16 %v3271
        %v4925 = vunpack.c.l.b16 %v3272
        %v4926 = vunpack.c.h.b16 %v3272
        %v4927 = vunpack.c.l.b16 %v3273
        %v4928 = vunpack.c.h.b16 %v3273
        %v4929 = vunpack.c.l.b16 %v3274
        %v4930 = vunpack.c.h.b16 %v3274
        %v4931 = vunpack.c.l.b16 %v3275
        %v4932 = vunpack.c.h.b16 %v3275
        %v4933 = vunpack.c.l.b16 %v3276
        %v4934 = vunpack.c.h.b16 %v3276
        %v4935 = vunpack.c.l.b16 %v3277
        %v4936 = vunpack.c.h.b16 %v3277
        %v4937 = vunpack.c.l.b16 %v3278
        %v4938 = vunpack.c.h.b16 %v3278
        %v4939 = vunpack.c.l.b16 %v3279
        %v4940 = vunpack.c.h.b16 %v3279
        %v4941 = vunpack.c.l.b16 %v3280
        %v4942 = vunpack.c.h.b16 %v3280
        %v4943 = vunpack.c.l.b16 %v3281
        %v4944 = vunpack.c.h.b16 %v3281
        %v4945 = vunpack.c.l.b16 %v3282
        %v4946 = vunpack.c.h.b16 %v3282
        %v4947 = vunpack.c.l.b16 %v3283
        %v4948 = vunpack.c.h.b16 %v3283
        %v4949 = vunpack.c.l.b16 %v3284
        %v4950 = vunpack.c.h.b16 %v3284
        %v4951 = vunpack.c.l.b16 %v3285
        %v4952 = vunpack.c.h.b16 %v3285
        %v4953 = vunpack.c.l.b16 %v3286
        %v4954 = vunpack.c.h.b16 %v3286
        %v4955 = vunpack.c.l.b16 %v3287
        %v4956 = vunpack.c.h.b16 %v3287
        %v4957 = vunpack.c.l.b16 %v3288
        %v4958 = vunpack.c.h.b16 %v3288
        %v4959 = vunpack.c.l.b16 %v3289
        %v4960 = vunpack.c.h.b16 %v3289
        %v4961 = vunpack.c.l.b16 %v3290
        %v4962 = vunpack.c.h.b16 %v3290
        %v4963 = vunpack.c.l.b16 %v3291
        %v4964 = vunpack.c.h.b16 %v3291
        %v4965 = vunpack.c.l.b16 %v3292
        %v4966 = vunpack.c.h.b16 %v3292
        %v4967 = vpack.c.b16 %v3947, %v3943
        %v4968 = vpack.c.b16 %v3948, %v3944
        %v4969 = vpack.c.b16 %v3949, %v3945
        %v4970 = vpack.c.b16 %v3950, %v3946
        %v4971 = vpack.c.b16 %v3955, %v3951
        %v4972 = vpack.c.b16 %v3956, %v3952
        %v4973 = vpack.c.b16 %v3957, %v3953
        %v4974 = vpack.c.b16 %v3958, %v3954
        %v4975 = vpack.c.b16 %v3963, %v3959
        %v4976 = vpack.c.b16 %v3964, %v3960
        %v4977 = vpack.c.b16 %v3965, %v3961
        %v4978 = vpack.c.b16 %v3966, %v3962
        %v4979 = vpack.c.b16 %v3971, %v3967
        %v4980 = vpack.c.b16 %v3972, %v3968
        %v4981 = vpack.c.b16 %v3973, %v3969
        %v4982 = vpack.c.b16 %v3974, %v3970
        %v4983 = vpack.c.b16 %v3979, %v3975
        %v4984 = vpack.c.b16 %v3980, %v3976
        %v4985 = vpack.c.b16 %v3981, %v3977
        %v4986 = vpack.c.b16 %v3982, %v3978
        %v4987 = vpack.c.b16 %v3987, %v3983
        %v4988 = vpack.c.b16 %v3988, %v3984
        %v4989 = vpack.c.b16 %v3989, %v3985
        %v4990 = vpack.c.b16 %v3990, %v3986
        %v4991 = vpack.c.b16 %v3995, %v3991
        %v4992 = vpack.c.b16 %v3996, %v3992
        %v4993 = vpack.c.b16 %v3997, %v3993
        %v4994 = vpack.c.b16 %v3998, %v3994
        %v4995 = vpack.c.b16 %v4003, %v3999
        %v4996 = vpack.c.b16 %v4004, %v4000
        %v4997 = vpack.c.b16 %v4005, %v4001
        %v4998 = vpack.c.b16 %v4006, %v4002
        %v4999 = vpack.c.b16 %v4011, %v4007
        %v5000 = vpack.c.b16 %v4012, %v4008
        %v5001 = vpack.c.b16 %v4013, %v4009
        %v5002 = vpack.c.b16 %v4014, %v4010
        %v5003 = vpack.c.b16 %v4019, %v4015
        %v5004 = vpack.c.b16 %v4020, %v4016
        %v5005 = vpack.c.b16 %v4021, %v4017
        %v5006 = vpack.c.b16 %v4022, %v4018
        %v5007 = vpack.c.b16 %v4027, %v4023
        %v5008 = vpack.c.b16 %v4028, %v4024
        %v5009 = vpack.c.b16 %v4029, %v4025
        %v5010 = vpack.c.b16 %v4030, %v4026
        %v5011 = vpack.c.b16 %v4035, %v4031
        %v5012 = vpack.c.b16 %v4036, %v4032
        %v5013 = vpack.c.b16 %v4037, %v4033
        %v5014 = vpack.c.b16 %v4038, %v4034
        %v5015 = vpack.c.b16 %v4043, %v4039
        %v5016 = vpack.c.b16 %v4044, %v4040
        %v5017 = vpack.c.b16 %v4045, %v4041
        %v5018 = vpack.c.b16 %v4046, %v4042
        %v5019 = vpack.c.b16 %v4051, %v4047
        %v5020 = vpack.c.b16 %v4052, %v4048
        %v5021 = vpack.c.b16 %v4053, %v4049
        %v5022 = vpack.c.b16 %v4054, %v4050
        %v5023 = vpack.c.b16 %v4059, %v4055
        %v5024 = vpack.c.b16 %v4060, %v4056
        %v5025 = vpack.c.b16 %v4061, %v4057
        %v5026 = vpack.c.b16 %v4062, %v4058
        %v5027 = vpack.c.b16 %v4067, %v4063
        %v5028 = vpack.c.b16 %v4068, %v4064
        %v5029 = vpack.c.b16 %v4069, %v4065
        %v5030 = vpack.c.b16 %v4070, %v4066
        %v5031 = vpack.c.b16 %v4075, %v4071
        %v5032 = vpack.c.b16 %v4076, %v4072
        %v5033 = vpack.c.b16 %v4077, %v4073
        %v5034 = vpack.c.b16 %v4078, %v4074
        %v5035 = vpack.c.b16 %v4083, %v4079
        %v5036 = vpack.c.b16 %v4084, %v4080
        %v5037 = vpack.c.b16 %v4085, %v4081
        %v5038 = vpack.c.b16 %v4086, %v4082
        %v5039 = vpack.c.b16 %v4091, %v4087
        %v5040 = vpack.c.b16 %v4092, %v4088
        %v5041 = vpack.c.b16 %v4093, %v4089
        %v5042 = vpack.c.b16 %v4094, %v4090
        %v5043 = vpack.c.b16 %v4099, %v4095
        %v5044 = vpack.c.b16 %v4100, %v4096
        %v5045 = vpack.c.b16 %v4101, %v4097
        %v5046 = vpack.c.b16 %v4102, %v4098
        %v5047 = vpack.c.b16 %v4107, %v4103
        %v5048 = vpack.c.b16 %v4108, %v4104
        %v5049 = vpack.c.b16 %v4109, %v4105
        %v5050 = vpack.c.b16 %v4110, %v4106
        %v5051 = vpack.c.b16 %v4115, %v4111
        %v5052 = vpack.c.b16 %v4116, %v4112
        %v5053 = vpack.c.b16 %v4117, %v4113
        %v5054 = vpack.c.b16 %v4118, %v4114
        %v5055 = vpack.c.b16 %v4123, %v4119
        %v5056 = vpack.c.b16 %v4124, %v4120
        %v5057 = vpack.c.b16 %v4125, %v4121
        %v5058 = vpack.c.b16 %v4126, %v4122
        %v5059 = vpack.c.b16 %v4131, %v4127
        %v5060 = vpack.c.b16 %v4132, %v4128
        %v5061 = vpack.c.b16 %v4133, %v4129
        %v5062 = vpack.c.b16 %v4134, %v4130
        %v5063 = vpack.c.b16 %v4139, %v4135
        %v5064 = vpack.c.b16 %v4140, %v4136
        %v5065 = vpack.c.b16 %v4141, %v4137
        %v5066 = vpack.c.b16 %v4142, %v4138
        %v5067 = vpack.c.b16 %v4147, %v4143
        %v5068 = vpack.c.b16 %v4148, %v4144
        %v5069 = vpack.c.b16 %v4149, %v4145
        %v5070 = vpack.c.b16 %v4150, %v4146
        %v5071 = vpack.c.b16 %v4155, %v4151
        %v5072 = vpack.c.b16 %v4156, %v4152
        %v5073 = vpack.c.b16 %v4157, %v4153
        %v5074 = vpack.c.b16 %v4158, %v4154
        %v5075 = vpack.c.b16 %v4163, %v4159
        %v5076 = vpack.c.b16 %v4164, %v4160
        %v5077 = vpack.c.b16 %v4165, %v4161
        %v5078 = vpack.c.b16 %v4166, %v4162
        %v5079 = vpack.c.b16 %v4171, %v4167
        %v5080 = vpack.c.b16 %v4172, %v4168
        %v5081 = vpack.c.b16 %v4173, %v4169
        %v5082 = vpack.c.b16 %v4174, %v4170
        %v5083 = vpack.c.b16 %v4179, %v4175
        %v5084 = vpack.c.b16 %v4180, %v4176
        %v5085 = vpack.c.b16 %v4181, %v4177
        %v5086 = vpack.c.b16 %v4182, %v4178
        %v5087 = vpack.c.b16 %v4187, %v4183
        %v5088 = vpack.c.b16 %v4188, %v4184
        %v5089 = vpack.c.b16 %v4189, %v4185
        %v5090 = vpack.c.b16 %v4190, %v4186
        %v5091 = vpack.c.b16 %v4195, %v4191
        %v5092 = vpack.c.b16 %v4196, %v4192
        %v5093 = vpack.c.b16 %v4197, %v4193
        %v5094 = vpack.c.b16 %v4198, %v4194
        %v5095 = vpack.c.b16 %v4203, %v4199
        %v5096 = vpack.c.b16 %v4204, %v4200
        %v5097 = vpack.c.b16 %v4205, %v4201
        %v5098 = vpack.c.b16 %v4206, %v4202
        %v5099 = vpack.c.b16 %v4211, %v4207
        %v5100 = vpack.c.b16 %v4212, %v4208
        %v5101 = vpack.c.b16 %v4213, %v4209
        %v5102 = vpack.c.b16 %v4214, %v4210
        %v5103 = vpack.c.b16 %v4219, %v4215
        %v5104 = vpack.c.b16 %v4220, %v4216
        %v5105 = vpack.c.b16 %v4221, %v4217
        %v5106 = vpack.c.b16 %v4222, %v4218
        %v5107 = vpack.c.b16 %v4227, %v4223
        %v5108 = vpack.c.b16 %v4228, %v4224
        %v5109 = vpack.c.b16 %v4229, %v4225
        %v5110 = vpack.c.b16 %v4230, %v4226
        %v5111 = vpack.c.b16 %v4235, %v4231
        %v5112 = vpack.c.b16 %v4236, %v4232
        %v5113 = vpack.c.b16 %v4237, %v4233
        %v5114 = vpack.c.b16 %v4238, %v4234
        %v5115 = vpack.c.b16 %v4243, %v4239
        %v5116 = vpack.c.b16 %v4244, %v4240
        %v5117 = vpack.c.b16 %v4245, %v4241
        %v5118 = vpack.c.b16 %v4246, %v4242
        %v5119 = vpack.c.b16 %v4251, %v4247
        %v5120 = vpack.c.b16 %v4252, %v4248
        %v5121 = vpack.c.b16 %v4253, %v4249
        %v5122 = vpack.c.b16 %v4254, %v4250
        %v5123 = vpack.c.b16 %v4259, %v4255
        %v5124 = vpack.c.b16 %v4260, %v4256
        %v5125 = vpack.c.b16 %v4261, %v4257
        %v5126 = vpack.c.b16 %v4262, %v4258
        %v5127 = vpack.c.b16 %v4267, %v4263
        %v5128 = vpack.c.b16 %v4268, %v4264
        %v5129 = vpack.c.b16 %v4269, %v4265
        %v5130 = vpack.c.b16 %v4270, %v4266
        %v5131 = vpack.c.b16 %v4275, %v4271
        %v5132 = vpack.c.b16 %v4276, %v4272
        %v5133 = vpack.c.b16 %v4277, %v4273
        %v5134 = vpack.c.b16 %v4278, %v4274
        %v5135 = vpack.c.b16 %v4283, %v4279
        %v5136 = vpack.c.b16 %v4284, %v4280
        %v5137 = vpack.c.b16 %v4285, %v4281
        %v5138 = vpack.c.b16 %v4286, %v4282
        %v5139 = vpack.c.b16 %v4291, %v4287
        %v5140 = vpack.c.b16 %v4292, %v4288
        %v5141 = vpack.c.b16 %v4293, %v4289
        %v5142 = vpack.c.b16 %v4294, %v4290
        %v5143 = vpack.c.b16 %v4299, %v4295
        %v5144 = vpack.c.b16 %v4300, %v4296
        %v5145 = vpack.c.b16 %v4301, %v4297
        %v5146 = vpack.c.b16 %v4302, %v4298
        %v5147 = vpack.c.b16 %v4307, %v4303
        %v5148 = vpack.c.b16 %v4308, %v4304
        %v5149 = vpack.c.b16 %v4309, %v4305
        %v5150 = vpack.c.b16 %v4310, %v4306
        %v5151 = vpack.c.b16 %v4315, %v4311
        %v5152 = vpack.c.b16 %v4316, %v4312
        %v5153 = vpack.c.b16 %v4317, %v4313
        %v5154 = vpack.c.b16 %v4318, %v4314
        %v5155 = vpack.c.b16 %v4323, %v4319
        %v5156 = vpack.c.b16 %v4324, %v4320
        %v5157 = vpack.c.b16 %v4325, %v4321
        %v5158 = vpack.c.b16 %v4326, %v4322
        %v5159 = vpack.c.b16 %v4331, %v4327
        %v5160 = vpack.c.b16 %v4332, %v4328
        %v5161 = vpack.c.b16 %v4333, %v4329
        %v5162 = vpack.c.b16 %v4334, %v4330
        %v5163 = vpack.c.b16 %v4339, %v4335
        %v5164 = vpack.c.b16 %v4340, %v4336
        %v5165 = vpack.c.b16 %v4341, %v4337
        %v5166 = vpack.c.b16 %v4342, %v4338
        %v5167 = vpack.c.b16 %v4347, %v4343
        %v5168 = vpack.c.b16 %v4348, %v4344
        %v5169 = vpack.c.b16 %v4349, %v4345
        %v5170 = vpack.c.b16 %v4350, %v4346
        %v5171 = vpack.c.b16 %v4355, %v4351
        %v5172 = vpack.c.b16 %v4356, %v4352
        %v5173 = vpack.c.b16 %v4357, %v4353
        %v5174 = vpack.c.b16 %v4358, %v4354
        %v5175 = vpack.c.b16 %v4363, %v4359
        %v5176 = vpack.c.b16 %v4364, %v4360
        %v5177 = vpack.c.b16 %v4365, %v4361
        %v5178 = vpack.c.b16 %v4366, %v4362
        %v5179 = vpack.c.b16 %v4371, %v4367
        %v5180 = vpack.c.b16 %v4372, %v4368
        %v5181 = vpack.c.b16 %v4373, %v4369
        %v5182 = vpack.c.b16 %v4374, %v4370
        %v5183 = vpack.c.b16 %v4379, %v4375
        %v5184 = vpack.c.b16 %v4380, %v4376
        %v5185 = vpack.c.b16 %v4381, %v4377
        %v5186 = vpack.c.b16 %v4382, %v4378
        %v5187 = vpack.c.b16 %v4387, %v4383
        %v5188 = vpack.c.b16 %v4388, %v4384
        %v5189 = vpack.c.b16 %v4389, %v4385
        %v5190 = vpack.c.b16 %v4390, %v4386
        %v5191 = vpack.c.b16 %v4395, %v4391
        %v5192 = vpack.c.b16 %v4396, %v4392
        %v5193 = vpack.c.b16 %v4397, %v4393
        %v5194 = vpack.c.b16 %v4398, %v4394
        %v5195 = vpack.c.b16 %v4403, %v4399
        %v5196 = vpack.c.b16 %v4404, %v4400
        %v5197 = vpack.c.b16 %v4405, %v4401
        %v5198 = vpack.c.b16 %v4406, %v4402
        %v5199 = vpack.c.b16 %v4411, %v4407
        %v5200 = vpack.c.b16 %v4412, %v4408
        %v5201 = vpack.c.b16 %v4413, %v4409
        %v5202 = vpack.c.b16 %v4414, %v4410
        %v5203 = vpack.c.b16 %v4419, %v4415
        %v5204 = vpack.c.b16 %v4420, %v4416
        %v5205 = vpack.c.b16 %v4421, %v4417
        %v5206 = vpack.c.b16 %v4422, %v4418
        %v5207 = vpack.c.b16 %v4427, %v4423
        %v5208 = vpack.c.b16 %v4428, %v4424
        %v5209 = vpack.c.b16 %v4429, %v4425
        %v5210 = vpack.c.b16 %v4430, %v4426
        %v5211 = vpack.c.b16 %v4435, %v4431
        %v5212 = vpack.c.b16 %v4436, %v4432
        %v5213 = vpack.c.b16 %v4437, %v4433
        %v5214 = vpack.c.b16 %v4438, %v4434
        %v5215 = vpack.c.b16 %v4443, %v4439
        %v5216 = vpack.c.b16 %v4444, %v4440
        %v5217 = vpack.c.b16 %v4445, %v4441
        %v5218 = vpack.c.b16 %v4446, %v4442
        %v5219 = vpack.c.b16 %v4451, %v4447
        %v5220 = vpack.c.b16 %v4452, %v4448
        %v5221 = vpack.c.b16 %v4453, %v4449
        %v5222 = vpack.c.b16 %v4454, %v4450
        %v5223 = vpack.c.b16 %v4459, %v4455
        %v5224 = vpack.c.b16 %v4460, %v4456
        %v5225 = vpack.c.b16 %v4461, %v4457
        %v5226 = vpack.c.b16 %v4462, %v4458
        %v5227 = vpack.c.b16 %v4467, %v4463
        %v5228 = vpack.c.b16 %v4468, %v4464
        %v5229 = vpack.c.b16 %v4469, %v4465
        %v5230 = vpack.c.b16 %v4470, %v4466
        %v5231 = vpack.c.b16 %v4475, %v4471
        %v5232 = vpack.c.b16 %v4476, %v4472
        %v5233 = vpack.c.b16 %v4477, %v4473
        %v5234 = vpack.c.b16 %v4478, %v4474
        %v5235 = vpack.c.b16 %v4483, %v4479
        %v5236 = vpack.c.b16 %v4484, %v4480
        %v5237 = vpack.c.b16 %v4485, %v4481
        %v5238 = vpack.c.b16 %v4486, %v4482
        %v5239 = vpack.c.b16 %v4491, %v4487
        %v5240 = vpack.c.b16 %v4492, %v4488
        %v5241 = vpack.c.b16 %v4493, %v4489
        %v5242 = vpack.c.b16 %v4494, %v4490
        %v5243 = vpack.c.b16 %v4499, %v4495
        %v5244 = vpack.c.b16 %v4500, %v4496
        %v5245 = vpack.c.b16 %v4501, %v4497
        %v5246 = vpack.c.b16 %v4502, %v4498
        %v5247 = vpack.c.b16 %v4507, %v4503
        %v5248 = vpack.c.b16 %v4508, %v4504
        %v5249 = vpack.c.b16 %v4509, %v4505
        %v5250 = vpack.c.b16 %v4510, %v4506
        %v5251 = vpack.c.b16 %v4515, %v4511
        %v5252 = vpack.c.b16 %v4516, %v4512
        %v5253 = vpack.c.b16 %v4517, %v4513
        %v5254 = vpack.c.b16 %v4518, %v4514
        %v5255 = vpack.c.b16 %v4523, %v4519
        %v5256 = vpack.c.b16 %v4524, %v4520
        %v5257 = vpack.c.b16 %v4525, %v4521
        %v5258 = vpack.c.b16 %v4526, %v4522
        %v5259 = vpack.c.b16 %v4531, %v4527
        %v5260 = vpack.c.b16 %v4532, %v4528
        %v5261 = vpack.c.b16 %v4533, %v4529
        %v5262 = vpack.c.b16 %v4534, %v4530
        %v5263 = vpack.c.b16 %v4539, %v4535
        %v5264 = vpack.c.b16 %v4540, %v4536
        %v5265 = vpack.c.b16 %v4541, %v4537
        %v5266 = vpack.c.b16 %v4542, %v4538
        %v5267 = vpack.c.b16 %v4547, %v4543
        %v5268 = vpack.c.b16 %v4548, %v4544
        %v5269 = vpack.c.b16 %v4549, %v4545
        %v5270 = vpack.c.b16 %v4550, %v4546
        %v5271 = vpack.c.b16 %v4555, %v4551
        %v5272 = vpack.c.b16 %v4556, %v4552
        %v5273 = vpack.c.b16 %v4557, %v4553
        %v5274 = vpack.c.b16 %v4558, %v4554
        %v5275 = vpack.c.b16 %v4563, %v4559
        %v5276 = vpack.c.b16 %v4564, %v4560
        %v5277 = vpack.c.b16 %v4565, %v4561
        %v5278 = vpack.c.b16 %v4566, %v4562
        %v5279 = vpack.c.b16 %v4571, %v4567
        %v5280 = vpack.c.b16 %v4572, %v4568
        %v5281 = vpack.c.b16 %v4573, %v4569
        %v5282 = vpack.c.b16 %v4574, %v4570
        %v5283 = vpack.c.b16 %v4579, %v4575
        %v5284 = vpack.c.b16 %v4580, %v4576
        %v5285 = vpack.c.b16 %v4581, %v4577
        %v5286 = vpack.c.b16 %v4582, %v4578
        %v5287 = vpack.c.b16 %v4587, %v4583
        %v5288 = vpack.c.b16 %v4588, %v4584
        %v5289 = vpack.c.b16 %v4589, %v4585
        %v5290 = vpack.c.b16 %v4590, %v4586
        %v5291 = vpack.c.b16 %v4595, %v4591
        %v5292 = vpack.c.b16 %v4596, %v4592
        %v5293 = vpack.c.b16 %v4597, %v4593
        %v5294 = vpack.c.b16 %v4598, %v4594
        %v5295 = vpack.c.b16 %v4603, %v4599
        %v5296 = vpack.c.b16 %v4604, %v4600
        %v5297 = vpack.c.b16 %v4605, %v4601
        %v5298 = vpack.c.b16 %v4606, %v4602
        %v5299 = vpack.c.b16 %v4611, %v4607
        %v5300 = vpack.c.b16 %v4612, %v4608
        %v5301 = vpack.c.b16 %v4613, %v4609
        %v5302 = vpack.c.b16 %v4614, %v4610
        %v5303 = vpack.c.b16 %v4619, %v4615
        %v5304 = vpack.c.b16 %v4620, %v4616
        %v5305 = vpack.c.b16 %v4621, %v4617
        %v5306 = vpack.c.b16 %v4622, %v4618
        %v5307 = vpack.c.b16 %v4627, %v4623
        %v5308 = vpack.c.b16 %v4628, %v4624
        %v5309 = vpack.c.b16 %v4629, %v4625
        %v5310 = vpack.c.b16 %v4630, %v4626
        %v5311 = vpack.c.b16 %v4635, %v4631
        %v5312 = vpack.c.b16 %v4636, %v4632
        %v5313 = vpack.c.b16 %v4637, %v4633
        %v5314 = vpack.c.b16 %v4638, %v4634
        %v5315 = vpack.c.b16 %v4643, %v4639
        %v5316 = vpack.c.b16 %v4644, %v4640
        %v5317 = vpack.c.b16 %v4645, %v4641
        %v5318 = vpack.c.b16 %v4646, %v4642
        %v5319 = vpack.c.b16 %v4651, %v4647
        %v5320 = vpack.c.b16 %v4652, %v4648
        %v5321 = vpack.c.b16 %v4653, %v4649
        %v5322 = vpack.c.b16 %v4654, %v4650
        %v5323 = vpack.c.b16 %v4659, %v4655
        %v5324 = vpack.c.b16 %v4660, %v4656
        %v5325 = vpack.c.b16 %v4661, %v4657
        %v5326 = vpack.c.b16 %v4662, %v4658
        %v5327 = vpack.c.b16 %v4667, %v4663
        %v5328 = vpack.c.b16 %v4668, %v4664
        %v5329 = vpack.c.b16 %v4669, %v4665
        %v5330 = vpack.c.b16 %v4670, %v4666
        %v5331 = vpack.c.b16 %v4675, %v4671
        %v5332 = vpack.c.b16 %v4676, %v4672
        %v5333 = vpack.c.b16 %v4677, %v4673
        %v5334 = vpack.c.b16 %v4678, %v4674
        %v5335 = vpack.c.b16 %v4683, %v4679
        %v5336 = vpack.c.b16 %v4684, %v4680
        %v5337 = vpack.c.b16 %v4685, %v4681
        %v5338 = vpack.c.b16 %v4686, %v4682
        %v5339 = vpack.c.b16 %v4691, %v4687
        %v5340 = vpack.c.b16 %v4692, %v4688
        %v5341 = vpack.c.b16 %v4693, %v4689
        %v5342 = vpack.c.b16 %v4694, %v4690
        %v5343 = vpack.c.b16 %v4699, %v4695
        %v5344 = vpack.c.b16 %v4700, %v4696
        %v5345 = vpack.c.b16 %v4701, %v4697
        %v5346 = vpack.c.b16 %v4702, %v4698
        %v5347 = vpack.c.b16 %v4707, %v4703
        %v5348 = vpack.c.b16 %v4708, %v4704
        %v5349 = vpack.c.b16 %v4709, %v4705
        %v5350 = vpack.c.b16 %v4710, %v4706
        %v5351 = vpack.c.b16 %v4715, %v4711
        %v5352 = vpack.c.b16 %v4716, %v4712
        %v5353 = vpack.c.b16 %v4717, %v4713
        %v5354 = vpack.c.b16 %v4718, %v4714
        %v5355 = vpack.c.b16 %v4723, %v4719
        %v5356 = vpack.c.b16 %v4724, %v4720
        %v5357 = vpack.c.b16 %v4725, %v4721
        %v5358 = vpack.c.b16 %v4726, %v4722
        %v5359 = vpack.c.b16 %v4731, %v4727
        %v5360 = vpack.c.b16 %v4732, %v4728
        %v5361 = vpack.c.b16 %v4733, %v4729
        %v5362 = vpack.c.b16 %v4734, %v4730
        %v5363 = vpack.c.b16 %v4739, %v4735
        %v5364 = vpack.c.b16 %v4740, %v4736
        %v5365 = vpack.c.b16 %v4741, %v4737
        %v5366 = vpack.c.b16 %v4742, %v4738
        %v5367 = vpack.c.b16 %v4747, %v4743
        %v5368 = vpack.c.b16 %v4748, %v4744
        %v5369 = vpack.c.b16 %v4749, %v4745
        %v5370 = vpack.c.b16 %v4750, %v4746
        %v5371 = vpack.c.b16 %v4755, %v4751
        %v5372 = vpack.c.b16 %v4756, %v4752
        %v5373 = vpack.c.b16 %v4757, %v4753
        %v5374 = vpack.c.b16 %v4758, %v4754
        %v5375 = vpack.c.b16 %v4763, %v4759
        %v5376 = vpack.c.b16 %v4764, %v4760
        %v5377 = vpack.c.b16 %v4765, %v4761
        %v5378 = vpack.c.b16 %v4766, %v4762
        %v5379 = vpack.c.b16 %v4771, %v4767
        %v5380 = vpack.c.b16 %v4772, %v4768
        %v5381 = vpack.c.b16 %v4773, %v4769
        %v5382 = vpack.c.b16 %v4774, %v4770
        %v5383 = vpack.c.b16 %v4779, %v4775
        %v5384 = vpack.c.b16 %v4780, %v4776
        %v5385 = vpack.c.b16 %v4781, %v4777
        %v5386 = vpack.c.b16 %v4782, %v4778
        %v5387 = vpack.c.b16 %v4787, %v4783
        %v5388 = vpack.c.b16 %v4788, %v4784
        %v5389 = vpack.c.b16 %v4789, %v4785
        %v5390 = vpack.c.b16 %v4790, %v4786
        %v5391 = vpack.c.b16 %v4795, %v4791
        %v5392 = vpack.c.b16 %v4796, %v4792
        %v5393 = vpack.c.b16 %v4797, %v4793
        %v5394 = vpack.c.b16 %v4798, %v4794
        %v5395 = vpack.c.b16 %v4803, %v4799
        %v5396 = vpack.c.b16 %v4804, %v4800
        %v5397 = vpack.c.b16 %v4805, %v4801
        %v5398 = vpack.c.b16 %v4806, %v4802
        %v5399 = vpack.c.b16 %v4811, %v4807
        %v5400 = vpack.c.b16 %v4812, %v4808
        %v5401 = vpack.c.b16 %v4813, %v4809
        %v5402 = vpack.c.b16 %v4814, %v4810
        %v5403 = vpack.c.b16 %v4819, %v4815
        %v5404 = vpack.c.b16 %v4820, %v4816
        %v5405 = vpack.c.b16 %v4821, %v4817
        %v5406 = vpack.c.b16 %v4822, %v4818
        %v5407 = vpack.c.b16 %v4827, %v4823
        %v5408 = vpack.c.b16 %v4828, %v4824
        %v5409 = vpack.c.b16 %v4829, %v4825
        %v5410 = vpack.c.b16 %v4830, %v4826
        %v5411 = vpack.c.b16 %v4835, %v4831
        %v5412 = vpack.c.b16 %v4836, %v4832
        %v5413 = vpack.c.b16 %v4837, %v4833
        %v5414 = vpack.c.b16 %v4838, %v4834
        %v5415 = vpack.c.b16 %v4843, %v4839
        %v5416 = vpack.c.b16 %v4844, %v4840
        %v5417 = vpack.c.b16 %v4845, %v4841
        %v5418 = vpack.c.b16 %v4846, %v4842
        %v5419 = vpack.c.b16 %v4851, %v4847
        %v5420 = vpack.c.b16 %v4852, %v4848
        %v5421 = vpack.c.b16 %v4853, %v4849
        %v5422 = vpack.c.b16 %v4854, %v4850
        %v5423 = vpack.c.b16 %v4859, %v4855
        %v5424 = vpack.c.b16 %v4860, %v4856
        %v5425 = vpack.c.b16 %v4861, %v4857
        %v5426 = vpack.c.b16 %v4862, %v4858
        %v5427 = vpack.c.b16 %v4867, %v4863
        %v5428 = vpack.c.b16 %v4868, %v4864
        %v5429 = vpack.c.b16 %v4869, %v4865
        %v5430 = vpack.c.b16 %v4870, %v4866
        %v5431 = vpack.c.b16 %v4875, %v4871
        %v5432 = vpack.c.b16 %v4876, %v4872
        %v5433 = vpack.c.b16 %v4877, %v4873
        %v5434 = vpack.c.b16 %v4878, %v4874
        %v5435 = vpack.c.b16 %v4883, %v4879
        %v5436 = vpack.c.b16 %v4884, %v4880
        %v5437 = vpack.c.b16 %v4885, %v4881
        %v5438 = vpack.c.b16 %v4886, %v4882
        %v5439 = vpack.c.b16 %v4891, %v4887
        %v5440 = vpack.c.b16 %v4892, %v4888
        %v5441 = vpack.c.b16 %v4893, %v4889
        %v5442 = vpack.c.b16 %v4894, %v4890
        %v5443 = vpack.c.b16 %v4899, %v4895
        %v5444 = vpack.c.b16 %v4900, %v4896
        %v5445 = vpack.c.b16 %v4901, %v4897
        %v5446 = vpack.c.b16 %v4902, %v4898
        %v5447 = vpack.c.b16 %v4907, %v4903
        %v5448 = vpack.c.b16 %v4908, %v4904
        %v5449 = vpack.c.b16 %v4909, %v4905
        %v5450 = vpack.c.b16 %v4910, %v4906
        %v5451 = vpack.c.b16 %v4915, %v4911
        %v5452 = vpack.c.b16 %v4916, %v4912
        %v5453 = vpack.c.b16 %v4917, %v4913
        %v5454 = vpack.c.b16 %v4918, %v4914
        %v5455 = vpack.c.b16 %v4923, %v4919
        %v5456 = vpack.c.b16 %v4924, %v4920
        %v5457 = vpack.c.b16 %v4925, %v4921
        %v5458 = vpack.c.b16 %v4926, %v4922
        %v5459 = vpack.c.b16 %v4931, %v4927
        %v5460 = vpack.c.b16 %v4932, %v4928
        %v5461 = vpack.c.b16 %v4933, %v4929
        %v5462 = vpack.c.b16 %v4934, %v4930
        %v5463 = vpack.c.b16 %v4939, %v4935
        %v5464 = vpack.c.b16 %v4940, %v4936
        %v5465 = vpack.c.b16 %v4941, %v4937
        %v5466 = vpack.c.b16 %v4942, %v4938
        %v5467 = vpack.c.b16 %v4947, %v4943
        %v5468 = vpack.c.b16 %v4948, %v4944
        %v5469 = vpack.c.b16 %v4949, %v4945
        %v5470 = vpack.c.b16 %v4950, %v4946
        %v5471 = vpack.c.b16 %v4955, %v4951
        %v5472 = vpack.c.b16 %v4956, %v4952
        %v5473 = vpack.c.b16 %v4957, %v4953
        %v5474 = vpack.c.b16 %v4958, %v4954
        %v5475 = vpack.c.b16 %v4963, %v4959
        %v5476 = vpack.c.b16 %v4964, %v4960
        %v5477 = vpack.c.b16 %v4965, %v4961
        %v5478 = vpack.c.b16 %v4966, %v4962
        %5991 = vmatprep.subr.bf16.mxu0 %v4968
        %5992 = vmatpush1.bf16.msra.mxu0 %v4967
        %5993 = vmatprep.subr.bf16.mxu0 %v4972
        %5994 = vmatpush1.bf16.msra.mxu0 %v4971
        %5995 = vmatprep.subr.bf16.mxu0 %v4976
        %5996 = vmatpush1.bf16.msra.mxu0 %v4975
        %5997 = vmatprep.subr.bf16.mxu0 %v4980
        %5998 = vmatpush1.bf16.msra.mxu0 %v4979
        %5999 = vmatprep.subr.bf16.mxu0 %v4984
        %6000 = vmatpush1.bf16.msra.mxu0 %v4983
        %6001 = vmatprep.subr.bf16.mxu0 %v4988
        %6002 = vmatpush1.bf16.msra.mxu0 %v4987
        %6003 = vmatprep.subr.bf16.mxu0 %v4992
        %6004 = vmatpush1.bf16.msra.mxu0 %v4991
        %6005 = vmatprep.subr.bf16.mxu0 %v4996
        %6006 = vmatpush1.bf16.msra.mxu0 %v4995
        %6007 = vmatprep.subr.bf16.mxu0 %v5000
        %6008 = vmatpush1.bf16.msra.mxu0 %v4999
        %6009 = vmatprep.subr.bf16.mxu0 %v5004
        %6010 = vmatpush1.bf16.msra.mxu0 %v5003
        %6011 = vmatprep.subr.bf16.mxu0 %v5008
        %6012 = vmatpush1.bf16.msra.mxu0 %v5007
        %6013 = vmatprep.subr.bf16.mxu0 %v5012
        %6014 = vmatpush1.bf16.msra.mxu0 %v5011
        %6015 = vmatprep.subr.bf16.mxu0 %v5016
        %6016 = vmatpush1.bf16.msra.mxu0 %v5015
        %6017 = vmatprep.subr.bf16.mxu0 %v5020
        %6018 = vmatpush1.bf16.msra.mxu0 %v5019
        %6019 = vmatprep.subr.bf16.mxu0 %v5024
        %6020 = vmatpush1.bf16.msra.mxu0 %v5023
        %6021 = vmatprep.subr.bf16.mxu0 %v5028
        %6022 = vmatpush1.bf16.msra.mxu0 %v5027
        %6023 = vmatprep.mubr.bf16.mxu0 %v3354
        %6024 = vmatmul.mubr.bf16.gmra.mrb[0].mxu0 %v3340
        %v6025 = vpop.f32.mrb[0].mxu0
        %v6026 = vadd.f32 %v3298, %v6025
        %v6027 = vpop.f32.mrb[0].mxu0
        %v6028 = vadd.f32 %v3302, %v6027
        %v6029 = vpop.f32.mrb[0].mxu0
        %v6030 = vpop.f32.mrb[0].mxu0
        %6031 = vdwg.mxu0
        %6032 = vmatprep.subr.bf16.mxu0 %v5032
        %6033 = vmatpush1.bf16.msra.mxu0 %v5031
        %6034 = vmatprep.subr.bf16.mxu0 %v5036
        %6035 = vmatpush1.bf16.msra.mxu0 %v5035
        %6036 = vmatprep.subr.bf16.mxu0 %v5040
        %6037 = vmatpush1.bf16.msra.mxu0 %v5039
        %6038 = vmatprep.subr.bf16.mxu0 %v5044
        %6039 = vmatpush1.bf16.msra.mxu0 %v5043
        %6040 = vmatprep.subr.bf16.mxu0 %v5048
        %6041 = vmatpush1.bf16.msra.mxu0 %v5047
        %6042 = vmatprep.subr.bf16.mxu0 %v5052
        %6043 = vmatpush1.bf16.msra.mxu0 %v5051
        %6044 = vmatprep.subr.bf16.mxu0 %v5056
        %6045 = vmatpush1.bf16.msra.mxu0 %v5055
        %6046 = vmatprep.subr.bf16.mxu0 %v5060
        %6047 = vmatpush1.bf16.msra.mxu0 %v5059
        %6048 = vmatprep.subr.bf16.mxu0 %v5064
        %6049 = vmatpush1.bf16.msra.mxu0 %v5063
        %6050 = vmatprep.subr.bf16.mxu0 %v5068
        %6051 = vmatpush1.bf16.msra.mxu0 %v5067
        %6052 = vmatprep.subr.bf16.mxu0 %v5072
        %6053 = vmatpush1.bf16.msra.mxu0 %v5071
        %6054 = vmatprep.subr.bf16.mxu0 %v5076
        %6055 = vmatpush1.bf16.msra.mxu0 %v5075
        %6056 = vmatprep.subr.bf16.mxu0 %v5080
        %6057 = vmatpush1.bf16.msra.mxu0 %v5079
        %6058 = vmatprep.subr.bf16.mxu0 %v5084
        %6059 = vmatpush1.bf16.msra.mxu0 %v5083
        %6060 = vmatprep.subr.bf16.mxu0 %v5088
        %6061 = vmatpush1.bf16.msra.mxu0 %v5087
        %6062 = vmatprep.subr.bf16.mxu0 %v5092
        %6063 = vmatpush1.bf16.msra.mxu0 %v5091
        %6064 = vmatprep.mubr.bf16.mxu0 %v3364
        %6065 = vmatmul.mubr.bf16.gmra.mrb[0].mxu0 %v3362
        %v6066 = vpop.f32.mrb[0].mxu0
        %v6067 = vadd.f32 %v6026, %v6066
        %v6068 = vpop.f32.mrb[0].mxu0
        %v6069 = vadd.f32 %v6028, %v6068
        %v6070 = vpop.f32.mrb[0].mxu0
        %v6071 = vpop.f32.mrb[0].mxu0
        %6072 = vdwg.mxu0
        %6073 = vmatprep.subr.bf16.mxu0 %v5096
        %6074 = vmatpush1.bf16.msra.mxu0 %v5095
        %6075 = vmatprep.subr.bf16.mxu0 %v5100
        %6076 = vmatpush1.bf16.msra.mxu0 %v5099
        %6077 = vmatprep.subr.bf16.mxu0 %v5104
        %6078 = vmatpush1.bf16.msra.mxu0 %v5103
        %6079 = vmatprep.subr.bf16.mxu0 %v5108
        %6080 = vmatpush1.bf16.msra.mxu0 %v5107
        %6081 = vmatprep.subr.bf16.mxu0 %v5112
        %6082 = vmatpush1.bf16.msra.mxu0 %v5111
        %6083 = vmatprep.subr.bf16.mxu0 %v5116
        %6084 = vmatpush1.bf16.msra.mxu0 %v5115
        %6085 = vmatprep.subr.bf16.mxu0 %v5120
        %6086 = vmatpush1.bf16.msra.mxu0 %v5119
        %6087 = vmatprep.subr.bf16.mxu0 %v5124
        %6088 = vmatpush1.bf16.msra.mxu0 %v5123
        %6089 = vmatprep.subr.bf16.mxu0 %v5128
        %6090 = vmatpush1.bf16.msra.mxu0 %v5127
        %6091 = vmatprep.subr.bf16.mxu0 %v5132
        %6092 = vmatpush1.bf16.msra.mxu0 %v5131
        %6093 = vmatprep.subr.bf16.mxu0 %v5136
        %6094 = vmatpush1.bf16.msra.mxu0 %v5135
        %6095 = vmatprep.subr.bf16.mxu0 %v5140
        %6096 = vmatpush1.bf16.msra.mxu0 %v5139
        %6097 = vmatprep.subr.bf16.mxu0 %v5144
        %6098 = vmatpush1.bf16.msra.mxu0 %v5143
        %6099 = vmatprep.subr.bf16.mxu0 %v5148
        %6100 = vmatpush1.bf16.msra.mxu0 %v5147
        %6101 = vmatprep.subr.bf16.mxu0 %v5152
        %6102 = vmatpush1.bf16.msra.mxu0 %v5151
        %6103 = vmatprep.subr.bf16.mxu0 %v5156
        %6104 = vmatpush1.bf16.msra.mxu0 %v5155
        %6105 = vmatprep.mubr.bf16.mxu0 %v3361
        %6106 = vmatmul.mubr.bf16.gmra.mrb[0].mxu0 %v3347
        %v6107 = vpop.f32.mrb[0].mxu0
        %v6108 = vadd.f32 %v6067, %v6107
        %v6109 = vpop.f32.mrb[0].mxu0
        %v6110 = vadd.f32 %v6069, %v6109
        %v6111 = vpop.f32.mrb[0].mxu0
        %v6112 = vpop.f32.mrb[0].mxu0
        %6113 = vdwg.mxu0
        %6114 = vmatprep.subr.bf16.mxu0 %v5160
        %6115 = vmatpush1.bf16.msra.mxu0 %v5159
        %6116 = vmatprep.subr.bf16.mxu0 %v5164
        %6117 = vmatpush1.bf16.msra.mxu0 %v5163
        %6118 = vmatprep.subr.bf16.mxu0 %v5168
        %6119 = vmatpush1.bf16.msra.mxu0 %v5167
        %6120 = vmatprep.subr.bf16.mxu0 %v5172
        %6121 = vmatpush1.bf16.msra.mxu0 %v5171
        %6122 = vmatprep.subr.bf16.mxu0 %v5176
        %6123 = vmatpush1.bf16.msra.mxu0 %v5175
        %6124 = vmatprep.subr.bf16.mxu0 %v5180
        %6125 = vmatpush1.bf16.msra.mxu0 %v5179
        %6126 = vmatprep.subr.bf16.mxu0 %v5184
        %6127 = vmatpush1.bf16.msra.mxu0 %v5183
        %6128 = vmatprep.subr.bf16.mxu0 %v5188
        %6129 = vmatpush1.bf16.msra.mxu0 %v5187
        %6130 = vmatprep.subr.bf16.mxu0 %v5192
        %6131 = vmatpush1.bf16.msra.mxu0 %v5191
        %6132 = vmatprep.subr.bf16.mxu0 %v5196
        %6133 = vmatpush1.bf16.msra.mxu0 %v5195
        %6134 = vmatprep.subr.bf16.mxu0 %v5200
        %6135 = vmatpush1.bf16.msra.mxu0 %v5199
        %6136 = vmatprep.subr.bf16.mxu0 %v5204
        %6137 = vmatpush1.bf16.msra.mxu0 %v5203
        %6138 = vmatprep.subr.bf16.mxu0 %v5208
        %6139 = vmatpush1.bf16.msra.mxu0 %v5207
        %6140 = vmatprep.subr.bf16.mxu0 %v5212
        %6141 = vmatpush1.bf16.msra.mxu0 %v5211
        %6142 = vmatprep.subr.bf16.mxu0 %v5216
        %6143 = vmatpush1.bf16.msra.mxu0 %v5215
        %6144 = vmatprep.subr.bf16.mxu0 %v5220
        %6145 = vmatpush1.bf16.msra.mxu0 %v5219
        %6146 = vmatprep.mubr.bf16.mxu0 %v3365
        %6147 = vmatmul.mubr.bf16.gmra.mrb[0].mxu0 %v3363
        %v6148 = vpop.f32.mrb[0].mxu0
        %v6149 = vadd.f32 %v6108, %v6148
        %v6150 = vpop.f32.mrb[0].mxu0
        %v6151 = vadd.f32 %v6110, %v6150
        %v6152 = vpop.f32.mrb[0].mxu0
        %v6153 = vpop.f32.mrb[0].mxu0
        %6154 = vdwg.mxu0
        %6155 = vmatprep.subr.bf16.mxu0 %v5224
        %6156 = vmatpush1.bf16.msra.mxu0 %v5223
        %6157 = vmatprep.subr.bf16.mxu0 %v5228
        %6158 = vmatpush1.bf16.msra.mxu0 %v5227
        %6159 = vmatprep.subr.bf16.mxu0 %v5232
        %6160 = vmatpush1.bf16.msra.mxu0 %v5231
        %6161 = vmatprep.subr.bf16.mxu0 %v5236
        %6162 = vmatpush1.bf16.msra.mxu0 %v5235
        %6163 = vmatprep.subr.bf16.mxu0 %v5240
        %6164 = vmatpush1.bf16.msra.mxu0 %v5239
        %6165 = vmatprep.subr.bf16.mxu0 %v5244
        %6166 = vmatpush1.bf16.msra.mxu0 %v5243
        %6167 = vmatprep.subr.bf16.mxu0 %v5248
        %6168 = vmatpush1.bf16.msra.mxu0 %v5247
        %6169 = vmatprep.subr.bf16.mxu0 %v5252
        %6170 = vmatpush1.bf16.msra.mxu0 %v5251
        %6171 = vmatprep.subr.bf16.mxu0 %v5256
        %6172 = vmatpush1.bf16.msra.mxu0 %v5255
        %6173 = vmatprep.subr.bf16.mxu0 %v5260
        %6174 = vmatpush1.bf16.msra.mxu0 %v5259
        %6175 = vmatprep.subr.bf16.mxu0 %v5264
        %6176 = vmatpush1.bf16.msra.mxu0 %v5263
        %6177 = vmatprep.subr.bf16.mxu0 %v5268
        %6178 = vmatpush1.bf16.msra.mxu0 %v5267
        %6179 = vmatprep.subr.bf16.mxu0 %v5272
        %6180 = vmatpush1.bf16.msra.mxu0 %v5271
        %6181 = vmatprep.subr.bf16.mxu0 %v5276
        %6182 = vmatpush1.bf16.msra.mxu0 %v5275
        %6183 = vmatprep.subr.bf16.mxu0 %v5280
        %6184 = vmatpush1.bf16.msra.mxu0 %v5279
        %6185 = vmatprep.subr.bf16.mxu0 %v5284
        %6186 = vmatpush1.bf16.msra.mxu0 %v5283
        %6187 = vmatprep.mubr.bf16.mxu0 %v3403
        %6188 = vmatmul.mubr.bf16.gmra.mrb[0].mxu0 %v3389
        %v6189 = vpop.f32.mrb[0].mxu0
        %v6190 = vadd.f32 %v6149, %v6189
        %v6191 = vpop.f32.mrb[0].mxu0
        %v6192 = vadd.f32 %v6151, %v6191
        %v6193 = vpop.f32.mrb[0].mxu0
        %v6194 = vpop.f32.mrb[0].mxu0
        %6195 = vdwg.mxu0
        %6196 = vmatprep.subr.bf16.mxu0 %v5288
        %6197 = vmatpush1.bf16.msra.mxu0 %v5287
        %6198 = vmatprep.subr.bf16.mxu0 %v5292
        %6199 = vmatpush1.bf16.msra.mxu0 %v5291
        %6200 = vmatprep.subr.bf16.mxu0 %v5296
        %6201 = vmatpush1.bf16.msra.mxu0 %v5295
        %6202 = vmatprep.subr.bf16.mxu0 %v5300
        %6203 = vmatpush1.bf16.msra.mxu0 %v5299
        %6204 = vmatprep.subr.bf16.mxu0 %v5304
        %6205 = vmatpush1.bf16.msra.mxu0 %v5303
        %6206 = vmatprep.subr.bf16.mxu0 %v5308
        %6207 = vmatpush1.bf16.msra.mxu0 %v5307
        %6208 = vmatprep.subr.bf16.mxu0 %v5312
        %6209 = vmatpush1.bf16.msra.mxu0 %v5311
        %6210 = vmatprep.subr.bf16.mxu0 %v5316
        %6211 = vmatpush1.bf16.msra.mxu0 %v5315
        %6212 = vmatprep.subr.bf16.mxu0 %v5320
        %6213 = vmatpush1.bf16.msra.mxu0 %v5319
        %6214 = vmatprep.subr.bf16.mxu0 %v5324
        %6215 = vmatpush1.bf16.msra.mxu0 %v5323
        %6216 = vmatprep.subr.bf16.mxu0 %v5328
        %6217 = vmatpush1.bf16.msra.mxu0 %v5327
        %6218 = vmatprep.subr.bf16.mxu0 %v5332
        %6219 = vmatpush1.bf16.msra.mxu0 %v5331
        %6220 = vmatprep.subr.bf16.mxu0 %v5336
        %6221 = vmatpush1.bf16.msra.mxu0 %v5335
        %6222 = vmatprep.subr.bf16.mxu0 %v5340
        %6223 = vmatpush1.bf16.msra.mxu0 %v5339
        %6224 = vmatprep.subr.bf16.mxu0 %v5344
        %6225 = vmatpush1.bf16.msra.mxu0 %v5343
        %6226 = vmatprep.subr.bf16.mxu0 %v5348
        %6227 = vmatpush1.bf16.msra.mxu0 %v5347
        %6228 = vmatprep.mubr.bf16.mxu0 %v3413
        %6229 = vmatmul.mubr.bf16.gmra.mrb[0].mxu0 %v3411
        %v6230 = vpop.f32.mrb[0].mxu0
        %v6231 = vadd.f32 %v6190, %v6230
        %v6232 = vpop.f32.mrb[0].mxu0
        %v6233 = vadd.f32 %v6192, %v6232
        %v6234 = vpop.f32.mrb[0].mxu0
        %v6235 = vpop.f32.mrb[0].mxu0
        %6236 = vdwg.mxu0
        %6237 = vmatprep.subr.bf16.mxu0 %v5352
        %6238 = vmatpush1.bf16.msra.mxu0 %v5351
        %6239 = vmatprep.subr.bf16.mxu0 %v5356
        %6240 = vmatpush1.bf16.msra.mxu0 %v5355
        %6241 = vmatprep.subr.bf16.mxu0 %v5360
        %6242 = vmatpush1.bf16.msra.mxu0 %v5359
        %6243 = vmatprep.subr.bf16.mxu0 %v5364
        %6244 = vmatpush1.bf16.msra.mxu0 %v5363
        %6245 = vmatprep.subr.bf16.mxu0 %v5368
        %6246 = vmatpush1.bf16.msra.mxu0 %v5367
        %6247 = vmatprep.subr.bf16.mxu0 %v5372
        %6248 = vmatpush1.bf16.msra.mxu0 %v5371
        %6249 = vmatprep.subr.bf16.mxu0 %v5376
        %6250 = vmatpush1.bf16.msra.mxu0 %v5375
        %6251 = vmatprep.subr.bf16.mxu0 %v5380
        %6252 = vmatpush1.bf16.msra.mxu0 %v5379
        %6253 = vmatprep.subr.bf16.mxu0 %v5384
        %6254 = vmatpush1.bf16.msra.mxu0 %v5383
        %6255 = vmatprep.subr.bf16.mxu0 %v5388
        %6256 = vmatpush1.bf16.msra.mxu0 %v5387
        %6257 = vmatprep.subr.bf16.mxu0 %v5392
        %6258 = vmatpush1.bf16.msra.mxu0 %v5391
        %6259 = vmatprep.subr.bf16.mxu0 %v5396
        %6260 = vmatpush1.bf16.msra.mxu0 %v5395
        %6261 = vmatprep.subr.bf16.mxu0 %v5400
        %6262 = vmatpush1.bf16.msra.mxu0 %v5399
        %6263 = vmatprep.subr.bf16.mxu0 %v5404
        %6264 = vmatpush1.bf16.msra.mxu0 %v5403
        %6265 = vmatprep.subr.bf16.mxu0 %v5408
        %6266 = vmatpush1.bf16.msra.mxu0 %v5407
        %6267 = vmatprep.subr.bf16.mxu0 %v5412
        %6268 = vmatpush1.bf16.msra.mxu0 %v5411
        %6269 = vmatprep.mubr.bf16.mxu0 %v3410
        %6270 = vmatmul.mubr.bf16.gmra.mrb[0].mxu0 %v3396
        %v6271 = vpop.f32.mrb[0].mxu0
        %v6272 = vadd.f32 %v6231, %v6271
        %v6273 = vpop.f32.mrb[0].mxu0
        %v6274 = vadd.f32 %v6233, %v6273
        %v6275 = vpop.f32.mrb[0].mxu0
        %v6276 = vpop.f32.mrb[0].mxu0
        %6277 = vdwg.mxu0
        %6278 = vmatprep.subr.bf16.mxu0 %v5416
        %6279 = vmatpush1.bf16.msra.mxu0 %v5415
        %6280 = vmatprep.subr.bf16.mxu0 %v5420
        %6281 = vmatpush1.bf16.msra.mxu0 %v5419
        %6282 = vmatprep.subr.bf16.mxu0 %v5424
        %6283 = vmatpush1.bf16.msra.mxu0 %v5423
        %6284 = vmatprep.subr.bf16.mxu0 %v5428
        %6285 = vmatpush1.bf16.msra.mxu0 %v5427
        %6286 = vmatprep.subr.bf16.mxu0 %v5432
        %6287 = vmatpush1.bf16.msra.mxu0 %v5431
        %6288 = vmatprep.subr.bf16.mxu0 %v5436
        %6289 = vmatpush1.bf16.msra.mxu0 %v5435
        %6290 = vmatprep.subr.bf16.mxu0 %v5440
        %6291 = vmatpush1.bf16.msra.mxu0 %v5439
        %6292 = vmatprep.subr.bf16.mxu0 %v5444
        %6293 = vmatpush1.bf16.msra.mxu0 %v5443
        %6294 = vmatprep.subr.bf16.mxu0 %v5448
        %6295 = vmatpush1.bf16.msra.mxu0 %v5447
        %6296 = vmatprep.subr.bf16.mxu0 %v5452
        %6297 = vmatpush1.bf16.msra.mxu0 %v5451
        %6298 = vmatprep.subr.bf16.mxu0 %v5456
        %6299 = vmatpush1.bf16.msra.mxu0 %v5455
        %6300 = vmatprep.subr.bf16.mxu0 %v5460
        %6301 = vmatpush1.bf16.msra.mxu0 %v5459
        %6302 = vmatprep.subr.bf16.mxu0 %v5464
        %6303 = vmatpush1.bf16.msra.mxu0 %v5463
        %6304 = vmatprep.subr.bf16.mxu0 %v5468
        %6305 = vmatpush1.bf16.msra.mxu0 %v5467
        %6306 = vmatprep.subr.bf16.mxu0 %v5472
        %6307 = vmatpush1.bf16.msra.mxu0 %v5471
        %6308 = vmatprep.subr.bf16.mxu0 %v5476
        %6309 = vmatpush1.bf16.msra.mxu0 %v5475
        %6310 = vmatprep.mubr.bf16.mxu0 %v3414
        %6311 = vmatmul.mubr.bf16.gmra.mrb[0].mxu0 %v3412
        %v6312 = vpop.f32.mrb[0].mxu0
        %v6313 = vadd.f32 %v6272, %v6312
        %v6314 = vpop.f32.mrb[0].mxu0
        %v6315 = vadd.f32 %v6274, %v6314
        %v6316 = vpop.f32.mrb[0].mxu0
        %v6317 = vpop.f32.mrb[0].mxu0
        %6318 = vdwg.mxu0
        %6319 = vmatprep.subr.bf16.mxu0 %v4970
        %6320 = vmatpush1.bf16.msra.mxu0 %v4969
        %6321 = vmatprep.subr.bf16.mxu0 %v4974
        %6322 = vmatpush1.bf16.msra.mxu0 %v4973
        %6323 = vmatprep.subr.bf16.mxu0 %v4978
        %6324 = vmatpush1.bf16.msra.mxu0 %v4977
        %6325 = vmatprep.subr.bf16.mxu0 %v4982
        %6326 = vmatpush1.bf16.msra.mxu0 %v4981
        %6327 = vmatprep.subr.bf16.mxu0 %v4986
        %6328 = vmatpush1.bf16.msra.mxu0 %v4985
        %6329 = vmatprep.subr.bf16.mxu0 %v4990
        %6330 = vmatpush1.bf16.msra.mxu0 %v4989
        %6331 = vmatprep.subr.bf16.mxu0 %v4994
        %6332 = vmatpush1.bf16.msra.mxu0 %v4993
        %6333 = vmatprep.subr.bf16.mxu0 %v4998
        %6334 = vmatpush1.bf16.msra.mxu0 %v4997
        %6335 = vmatprep.subr.bf16.mxu0 %v5002
        %6336 = vmatpush1.bf16.msra.mxu0 %v5001
        %6337 = vmatprep.subr.bf16.mxu0 %v5006
        %6338 = vmatpush1.bf16.msra.mxu0 %v5005
        %6339 = vmatprep.subr.bf16.mxu0 %v5010
        %6340 = vmatpush1.bf16.msra.mxu0 %v5009
        %6341 = vmatprep.subr.bf16.mxu0 %v5014
        %6342 = vmatpush1.bf16.msra.mxu0 %v5013
        %6343 = vmatprep.subr.bf16.mxu0 %v5018
        %6344 = vmatpush1.bf16.msra.mxu0 %v5017
        %6345 = vmatprep.subr.bf16.mxu0 %v5022
        %6346 = vmatpush1.bf16.msra.mxu0 %v5021
        %6347 = vmatprep.subr.bf16.mxu0 %v5026
        %6348 = vmatpush1.bf16.msra.mxu0 %v5025
        %6349 = vmatprep.subr.bf16.mxu0 %v5030
        %6350 = vmatpush1.bf16.msra.mxu0 %v5029
        %6351 = vmatprep.mubr.bf16.mxu0 %v3354
        %6352 = vmatmul.mubr.bf16.gmra.mrb[0].mxu0 %v3340
        %v6353 = vpop.f32.mrb[0].mxu0
        %v6354 = vadd.f32 %v3306, %v6353
        %v6355 = vpop.f32.mrb[0].mxu0
        %v6356 = vadd.f32 %v3310, %v6355
        %v6357 = vpop.f32.mrb[0].mxu0
        %v6358 = vpop.f32.mrb[0].mxu0
        %6359 = vdwg.mxu0
        %6360 = vmatprep.subr.bf16.mxu0 %v5034
        %6361 = vmatpush1.bf16.msra.mxu0 %v5033
        %6362 = vmatprep.subr.bf16.mxu0 %v5038
        %6363 = vmatpush1.bf16.msra.mxu0 %v5037
        %6364 = vmatprep.subr.bf16.mxu0 %v5042
        %6365 = vmatpush1.bf16.msra.mxu0 %v5041
        %6366 = vmatprep.subr.bf16.mxu0 %v5046
        %6367 = vmatpush1.bf16.msra.mxu0 %v5045
        %6368 = vmatprep.subr.bf16.mxu0 %v5050
        %6369 = vmatpush1.bf16.msra.mxu0 %v5049
        %6370 = vmatprep.subr.bf16.mxu0 %v5054
        %6371 = vmatpush1.bf16.msra.mxu0 %v5053
        %6372 = vmatprep.subr.bf16.mxu0 %v5058
        %6373 = vmatpush1.bf16.msra.mxu0 %v5057
        %6374 = vmatprep.subr.bf16.mxu0 %v5062
        %6375 = vmatpush1.bf16.msra.mxu0 %v5061
        %6376 = vmatprep.subr.bf16.mxu0 %v5066
        %6377 = vmatpush1.bf16.msra.mxu0 %v5065
        %6378 = vmatprep.subr.bf16.mxu0 %v5070
        %6379 = vmatpush1.bf16.msra.mxu0 %v5069
        %6380 = vmatprep.subr.bf16.mxu0 %v5074
        %6381 = vmatpush1.bf16.msra.mxu0 %v5073
        %6382 = vmatprep.subr.bf16.mxu0 %v5078
        %6383 = vmatpush1.bf16.msra.mxu0 %v5077
        %6384 = vmatprep.subr.bf16.mxu0 %v5082
        %6385 = vmatpush1.bf16.msra.mxu0 %v5081
        %6386 = vmatprep.subr.bf16.mxu0 %v5086
        %6387 = vmatpush1.bf16.msra.mxu0 %v5085
        %6388 = vmatprep.subr.bf16.mxu0 %v5090
        %6389 = vmatpush1.bf16.msra.mxu0 %v5089
        %6390 = vmatprep.subr.bf16.mxu0 %v5094
        %6391 = vmatpush1.bf16.msra.mxu0 %v5093
        %6392 = vmatprep.mubr.bf16.mxu0 %v3364
        %6393 = vmatmul.mubr.bf16.gmra.mrb[0].mxu0 %v3362
        %v6394 = vpop.f32.mrb[0].mxu0
        %v6395 = vadd.f32 %v6354, %v6394
        %v6396 = vpop.f32.mrb[0].mxu0
        %v6397 = vadd.f32 %v6356, %v6396
        %v6398 = vpop.f32.mrb[0].mxu0
        %v6399 = vpop.f32.mrb[0].mxu0
        %6400 = vdwg.mxu0
        %6401 = vmatprep.subr.bf16.mxu0 %v5098
        %6402 = vmatpush1.bf16.msra.mxu0 %v5097
        %6403 = vmatprep.subr.bf16.mxu0 %v5102
        %6404 = vmatpush1.bf16.msra.mxu0 %v5101
        %6405 = vmatprep.subr.bf16.mxu0 %v5106
        %6406 = vmatpush1.bf16.msra.mxu0 %v5105
        %6407 = vmatprep.subr.bf16.mxu0 %v5110
        %6408 = vmatpush1.bf16.msra.mxu0 %v5109
        %6409 = vmatprep.subr.bf16.mxu0 %v5114
        %6410 = vmatpush1.bf16.msra.mxu0 %v5113
        %6411 = vmatprep.subr.bf16.mxu0 %v5118
        %6412 = vmatpush1.bf16.msra.mxu0 %v5117
        %6413 = vmatprep.subr.bf16.mxu0 %v5122
        %6414 = vmatpush1.bf16.msra.mxu0 %v5121
        %6415 = vmatprep.subr.bf16.mxu0 %v5126
        %6416 = vmatpush1.bf16.msra.mxu0 %v5125
        %6417 = vmatprep.subr.bf16.mxu0 %v5130
        %6418 = vmatpush1.bf16.msra.mxu0 %v5129
        %6419 = vmatprep.subr.bf16.mxu0 %v5134
        %6420 = vmatpush1.bf16.msra.mxu0 %v5133
        %6421 = vmatprep.subr.bf16.mxu0 %v5138
        %6422 = vmatpush1.bf16.msra.mxu0 %v5137
        %6423 = vmatprep.subr.bf16.mxu0 %v5142
        %6424 = vmatpush1.bf16.msra.mxu0 %v5141
        %6425 = vmatprep.subr.bf16.mxu0 %v5146
        %6426 = vmatpush1.bf16.msra.mxu0 %v5145
        %6427 = vmatprep.subr.bf16.mxu0 %v5150
        %6428 = vmatpush1.bf16.msra.mxu0 %v5149
        %6429 = vmatprep.subr.bf16.mxu0 %v5154
        %6430 = vmatpush1.bf16.msra.mxu0 %v5153
        %6431 = vmatprep.subr.bf16.mxu0 %v5158
        %6432 = vmatpush1.bf16.msra.mxu0 %v5157
        %6433 = vmatprep.mubr.bf16.mxu0 %v3361
        %6434 = vmatmul.mubr.bf16.gmra.mrb[0].mxu0 %v3347
        %v6435 = vpop.f32.mrb[0].mxu0
        %v6436 = vadd.f32 %v6395, %v6435
        %v6437 = vpop.f32.mrb[0].mxu0
        %v6438 = vadd.f32 %v6397, %v6437
        %v6439 = vpop.f32.mrb[0].mxu0
        %v6440 = vpop.f32.mrb[0].mxu0
        %6441 = vdwg.mxu0
        %6442 = vmatprep.subr.bf16.mxu0 %v5162
        %6443 = vmatpush1.bf16.msra.mxu0 %v5161
        %6444 = vmatprep.subr.bf16.mxu0 %v5166
        %6445 = vmatpush1.bf16.msra.mxu0 %v5165
        %6446 = vmatprep.subr.bf16.mxu0 %v5170
        %6447 = vmatpush1.bf16.msra.mxu0 %v5169
        %6448 = vmatprep.subr.bf16.mxu0 %v5174
        %6449 = vmatpush1.bf16.msra.mxu0 %v5173
        %6450 = vmatprep.subr.bf16.mxu0 %v5178
        %6451 = vmatpush1.bf16.msra.mxu0 %v5177
        %6452 = vmatprep.subr.bf16.mxu0 %v5182
        %6453 = vmatpush1.bf16.msra.mxu0 %v5181
        %6454 = vmatprep.subr.bf16.mxu0 %v5186
        %6455 = vmatpush1.bf16.msra.mxu0 %v5185
        %6456 = vmatprep.subr.bf16.mxu0 %v5190
        %6457 = vmatpush1.bf16.msra.mxu0 %v5189
        %6458 = vmatprep.subr.bf16.mxu0 %v5194
        %6459 = vmatpush1.bf16.msra.mxu0 %v5193
        %6460 = vmatprep.subr.bf16.mxu0 %v5198
        %6461 = vmatpush1.bf16.msra.mxu0 %v5197
        %6462 = vmatprep.subr.bf16.mxu0 %v5202
        %6463 = vmatpush1.bf16.msra.mxu0 %v5201
        %6464 = vmatprep.subr.bf16.mxu0 %v5206
        %6465 = vmatpush1.bf16.msra.mxu0 %v5205
        %6466 = vmatprep.subr.bf16.mxu0 %v5210
        %6467 = vmatpush1.bf16.msra.mxu0 %v5209
        %6468 = vmatprep.subr.bf16.mxu0 %v5214
        %6469 = vmatpush1.bf16.msra.mxu0 %v5213
        %6470 = vmatprep.subr.bf16.mxu0 %v5218
        %6471 = vmatpush1.bf16.msra.mxu0 %v5217
        %6472 = vmatprep.subr.bf16.mxu0 %v5222
        %6473 = vmatpush1.bf16.msra.mxu0 %v5221
        %6474 = vmatprep.mubr.bf16.mxu0 %v3365
        %6475 = vmatmul.mubr.bf16.gmra.mrb[0].mxu0 %v3363
        %v6476 = vpop.f32.mrb[0].mxu0
        %v6477 = vadd.f32 %v6436, %v6476
        %v6478 = vpop.f32.mrb[0].mxu0
        %v6479 = vadd.f32 %v6438, %v6478
        %v6480 = vpop.f32.mrb[0].mxu0
        %v6481 = vpop.f32.mrb[0].mxu0
        %6482 = vdwg.mxu0
        %6483 = vmatprep.subr.bf16.mxu0 %v5226
        %6484 = vmatpush1.bf16.msra.mxu0 %v5225
        %6485 = vmatprep.subr.bf16.mxu0 %v5230
        %6486 = vmatpush1.bf16.msra.mxu0 %v5229
        %6487 = vmatprep.subr.bf16.mxu0 %v5234
        %6488 = vmatpush1.bf16.msra.mxu0 %v5233
        %6489 = vmatprep.subr.bf16.mxu0 %v5238
        %6490 = vmatpush1.bf16.msra.mxu0 %v5237
        %6491 = vmatprep.subr.bf16.mxu0 %v5242
        %6492 = vmatpush1.bf16.msra.mxu0 %v5241
        %6493 = vmatprep.subr.bf16.mxu0 %v5246
        %6494 = vmatpush1.bf16.msra.mxu0 %v5245
        %6495 = vmatprep.subr.bf16.mxu0 %v5250
        %6496 = vmatpush1.bf16.msra.mxu0 %v5249
        %6497 = vmatprep.subr.bf16.mxu0 %v5254
        %6498 = vmatpush1.bf16.msra.mxu0 %v5253
        %6499 = vmatprep.subr.bf16.mxu0 %v5258
        %6500 = vmatpush1.bf16.msra.mxu0 %v5257
        %6501 = vmatprep.subr.bf16.mxu0 %v5262
        %6502 = vmatpush1.bf16.msra.mxu0 %v5261
        %6503 = vmatprep.subr.bf16.mxu0 %v5266
        %6504 = vmatpush1.bf16.msra.mxu0 %v5265
        %6505 = vmatprep.subr.bf16.mxu0 %v5270
        %6506 = vmatpush1.bf16.msra.mxu0 %v5269
        %6507 = vmatprep.subr.bf16.mxu0 %v5274
        %6508 = vmatpush1.bf16.msra.mxu0 %v5273
        %6509 = vmatprep.subr.bf16.mxu0 %v5278
        %6510 = vmatpush1.bf16.msra.mxu0 %v5277
        %6511 = vmatprep.subr.bf16.mxu0 %v5282
        %6512 = vmatpush1.bf16.msra.mxu0 %v5281
        %6513 = vmatprep.subr.bf16.mxu0 %v5286
        %6514 = vmatpush1.bf16.msra.mxu0 %v5285
        %6515 = vmatprep.mubr.bf16.mxu0 %v3403
        %6516 = vmatmul.mubr.bf16.gmra.mrb[0].mxu0 %v3389
        %v6517 = vpop.f32.mrb[0].mxu0
        %v6518 = vadd.f32 %v6477, %v6517
        %v6519 = vpop.f32.mrb[0].mxu0
        %v6520 = vadd.f32 %v6479, %v6519
        %v6521 = vpop.f32.mrb[0].mxu0
        %v6522 = vpop.f32.mrb[0].mxu0
        %6523 = vdwg.mxu0
        %6524 = vmatprep.subr.bf16.mxu0 %v5290
        %6525 = vmatpush1.bf16.msra.mxu0 %v5289
        %6526 = vmatprep.subr.bf16.mxu0 %v5294
        %6527 = vmatpush1.bf16.msra.mxu0 %v5293
        %6528 = vmatprep.subr.bf16.mxu0 %v5298
        %6529 = vmatpush1.bf16.msra.mxu0 %v5297
        %6530 = vmatprep.subr.bf16.mxu0 %v5302
        %6531 = vmatpush1.bf16.msra.mxu0 %v5301
        %6532 = vmatprep.subr.bf16.mxu0 %v5306
        %6533 = vmatpush1.bf16.msra.mxu0 %v5305
        %6534 = vmatprep.subr.bf16.mxu0 %v5310
        %6535 = vmatpush1.bf16.msra.mxu0 %v5309
        %6536 = vmatprep.subr.bf16.mxu0 %v5314
        %6537 = vmatpush1.bf16.msra.mxu0 %v5313
        %6538 = vmatprep.subr.bf16.mxu0 %v5318
        %6539 = vmatpush1.bf16.msra.mxu0 %v5317
        %6540 = vmatprep.subr.bf16.mxu0 %v5322
        %6541 = vmatpush1.bf16.msra.mxu0 %v5321
        %6542 = vmatprep.subr.bf16.mxu0 %v5326
        %6543 = vmatpush1.bf16.msra.mxu0 %v5325
        %6544 = vmatprep.subr.bf16.mxu0 %v5330
        %6545 = vmatpush1.bf16.msra.mxu0 %v5329
        %6546 = vmatprep.subr.bf16.mxu0 %v5334
        %6547 = vmatpush1.bf16.msra.mxu0 %v5333
        %6548 = vmatprep.subr.bf16.mxu0 %v5338
        %6549 = vmatpush1.bf16.msra.mxu0 %v5337
        %6550 = vmatprep.subr.bf16.mxu0 %v5342
        %6551 = vmatpush1.bf16.msra.mxu0 %v5341
        %6552 = vmatprep.subr.bf16.mxu0 %v5346
        %6553 = vmatpush1.bf16.msra.mxu0 %v5345
        %6554 = vmatprep.subr.bf16.mxu0 %v5350
        %6555 = vmatpush1.bf16.msra.mxu0 %v5349
        %6556 = vmatprep.mubr.bf16.mxu0 %v3413
        %6557 = vmatmul.mubr.bf16.gmra.mrb[0].mxu0 %v3411
        %v6558 = vpop.f32.mrb[0].mxu0
        %v6559 = vadd.f32 %v6518, %v6558
        %v6560 = vpop.f32.mrb[0].mxu0
        %v6561 = vadd.f32 %v6520, %v6560
        %v6562 = vpop.f32.mrb[0].mxu0
        %v6563 = vpop.f32.mrb[0].mxu0
        %6564 = vdwg.mxu0
        %6565 = vmatprep.subr.bf16.mxu0 %v5354
        %6566 = vmatpush1.bf16.msra.mxu0 %v5353
        %6567 = vmatprep.subr.bf16.mxu0 %v5358
        %6568 = vmatpush1.bf16.msra.mxu0 %v5357
        %6569 = vmatprep.subr.bf16.mxu0 %v5362
        %6570 = vmatpush1.bf16.msra.mxu0 %v5361
        %6571 = vmatprep.subr.bf16.mxu0 %v5366
        %6572 = vmatpush1.bf16.msra.mxu0 %v5365
        %6573 = vmatprep.subr.bf16.mxu0 %v5370
        %6574 = vmatpush1.bf16.msra.mxu0 %v5369
        %6575 = vmatprep.subr.bf16.mxu0 %v5374
        %6576 = vmatpush1.bf16.msra.mxu0 %v5373
        %6577 = vmatprep.subr.bf16.mxu0 %v5378
        %6578 = vmatpush1.bf16.msra.mxu0 %v5377
        %6579 = vmatprep.subr.bf16.mxu0 %v5382
        %6580 = vmatpush1.bf16.msra.mxu0 %v5381
        %6581 = vmatprep.subr.bf16.mxu0 %v5386
        %6582 = vmatpush1.bf16.msra.mxu0 %v5385
        %6583 = vmatprep.subr.bf16.mxu0 %v5390
        %6584 = vmatpush1.bf16.msra.mxu0 %v5389
        %6585 = vmatprep.subr.bf16.mxu0 %v5394
        %6586 = vmatpush1.bf16.msra.mxu0 %v5393
        %6587 = vmatprep.subr.bf16.mxu0 %v5398
        %6588 = vmatpush1.bf16.msra.mxu0 %v5397
        %6589 = vmatprep.subr.bf16.mxu0 %v5402
        %6590 = vmatpush1.bf16.msra.mxu0 %v5401
        %6591 = vmatprep.subr.bf16.mxu0 %v5406
        %6592 = vmatpush1.bf16.msra.mxu0 %v5405
        %6593 = vmatprep.subr.bf16.mxu0 %v5410
        %6594 = vmatpush1.bf16.msra.mxu0 %v5409
        %6595 = vmatprep.subr.bf16.mxu0 %v5414
        %6596 = vmatpush1.bf16.msra.mxu0 %v5413
        %6597 = vmatprep.mubr.bf16.mxu0 %v3410
        %6598 = vmatmul.mubr.bf16.gmra.mrb[0].mxu0 %v3396
        %v6599 = vpop.f32.mrb[0].mxu0
        %v6600 = vadd.f32 %v6559, %v6599
        %v6601 = vpop.f32.mrb[0].mxu0
        %v6602 = vadd.f32 %v6561, %v6601
        %v6603 = vpop.f32.mrb[0].mxu0
        %v6604 = vpop.f32.mrb[0].mxu0
        %6605 = vdwg.mxu0
        %6606 = vmatprep.subr.bf16.mxu0 %v5418
        %6607 = vmatpush1.bf16.msra.mxu0 %v5417
        %6608 = vmatprep.subr.bf16.mxu0 %v5422
        %6609 = vmatpush1.bf16.msra.mxu0 %v5421
        %6610 = vmatprep.subr.bf16.mxu0 %v5426
        %6611 = vmatpush1.bf16.msra.mxu0 %v5425
        %6612 = vmatprep.subr.bf16.mxu0 %v5430
        %6613 = vmatpush1.bf16.msra.mxu0 %v5429
        %6614 = vmatprep.subr.bf16.mxu0 %v5434
        %6615 = vmatpush1.bf16.msra.mxu0 %v5433
        %6616 = vmatprep.subr.bf16.mxu0 %v5438
        %6617 = vmatpush1.bf16.msra.mxu0 %v5437
        %6618 = vmatprep.subr.bf16.mxu0 %v5442
        %6619 = vmatpush1.bf16.msra.mxu0 %v5441
        %6620 = vmatprep.subr.bf16.mxu0 %v5446
        %6621 = vmatpush1.bf16.msra.mxu0 %v5445
        %6622 = vmatprep.subr.bf16.mxu0 %v5450
        %6623 = vmatpush1.bf16.msra.mxu0 %v5449
        %6624 = vmatprep.subr.bf16.mxu0 %v5454
        %6625 = vmatpush1.bf16.msra.mxu0 %v5453
        %6626 = vmatprep.subr.bf16.mxu0 %v5458
        %6627 = vmatpush1.bf16.msra.mxu0 %v5457
        %6628 = vmatprep.subr.bf16.mxu0 %v5462
        %6629 = vmatpush1.bf16.msra.mxu0 %v5461
        %6630 = vmatprep.subr.bf16.mxu0 %v5466
        %6631 = vmatpush1.bf16.msra.mxu0 %v5465
        %6632 = vmatprep.subr.bf16.mxu0 %v5470
        %6633 = vmatpush1.bf16.msra.mxu0 %v5469
        %6634 = vmatprep.subr.bf16.mxu0 %v5474
        %6635 = vmatpush1.bf16.msra.mxu0 %v5473
        %6636 = vmatprep.subr.bf16.mxu0 %v5478
        %6637 = vmatpush1.bf16.msra.mxu0 %v5477
        %6638 = vmatprep.mubr.bf16.mxu0 %v3414
        %6639 = vmatmul.mubr.bf16.gmra.mrb[0].mxu0 %v3412
        %v6640 = vpop.f32.mrb[0].mxu0
        %v6641 = vadd.f32 %v6600, %v6640
        %v6642 = vpop.f32.mrb[0].mxu0
        %v6643 = vadd.f32 %v6602, %v6642
        %v6644 = vpop.f32.mrb[0].mxu0
        %v6645 = vpop.f32.mrb[0].mxu0
        %6646 = vdwg.mxu0
        %s6647 = smul.u32 %s55, 512
        %v6648 = vld [vmem:[%s827] sm:$0xf]
        %v6649 = vld [vmem:[%s836] sm:$0xf]
        %vm6650 = vcmask 1041408
        %v6651 = vsel %vm6650, %v6313, 0.0
        %v6652 = vrot.slane %v6651, 4
        %v6653 = vadd.f32 %v6651, %v6652
        %v6654 = vrot.slane %v6653, 2
        %v6655 = vadd.f32 %v6653, %v6654
        %v6656 = vrot.slane %v6655, 1
        %v6657 = vadd.f32 %v6655, %v6656
        %v6658 = vsel %vm6650, %v6315, 0.0
        %v6659 = vrot.slane %v6658, 4
        %v6660 = vadd.f32 %v6658, %v6659
        %v6661 = vrot.slane %v6660, 2
        %v6662 = vadd.f32 %v6660, %v6661
        %v6663 = vrot.slane %v6662, 1
        %v6664 = vadd.f32 %v6662, %v6663
        %v6665 = vsel %vm6650, %v6641, 0.0
        %v6666 = vrot.slane %v6665, 4
        %v6667 = vadd.f32 %v6665, %v6666
        %v6668 = vrot.slane %v6667, 2
        %v6669 = vadd.f32 %v6667, %v6668
        %v6670 = vrot.slane %v6669, 1
        %v6671 = vadd.f32 %v6669, %v6670
        %v6672 = vsel %vm6650, %v6643, 0.0
        %v6673 = vrot.slane %v6672, 4
        %v6674 = vadd.f32 %v6672, %v6673
        %v6675 = vrot.slane %v6674, 2
        %v6676 = vadd.f32 %v6674, %v6675
        %v6677 = vrot.slane %v6676, 1
        %v6678 = vadd.f32 %v6676, %v6677
        %v6679 = vrcp.pop 2.0
        %v6680 = vmul.f32 %v6657, %v6679
        %v6681 = vmul.f32 %v6664, %v6679
        %v6682 = vmul.f32 %v6671, %v6679
        %v6683 = vmul.f32 %v6678, %v6679
        %v6684 = vsub.f32 %v6313, %v6680
        %v6685 = vsub.f32 %v6315, %v6681
        %v6686 = vsub.f32 %v6641, %v6682
        %v6687 = vsub.f32 %v6643, %v6683
        %v6688 = vmul.f32 %v6684, %v6684
        %v6689 = vmul.f32 %v6685, %v6685
        %v6690 = vmul.f32 %v6686, %v6686
        %v6691 = vmul.f32 %v6687, %v6687
        %v6692 = vsel %vm6650, %v6688, 0.0
        %v6693 = vrot.slane %v6692, 4
        %v6694 = vadd.f32 %v6692, %v6693
        %v6695 = vrot.slane %v6694, 2
        %v6696 = vadd.f32 %v6694, %v6695
        %v6697 = vrot.slane %v6696, 1
        %v6698 = vadd.f32 %v6696, %v6697
        %v6699 = vsel %vm6650, %v6689, 0.0
        %v6700 = vrot.slane %v6699, 4
        %v6701 = vadd.f32 %v6699, %v6700
        %v6702 = vrot.slane %v6701, 2
        %v6703 = vadd.f32 %v6701, %v6702
        %v6704 = vrot.slane %v6703, 1
        %v6705 = vadd.f32 %v6703, %v6704
        %v6706 = vsel %vm6650, %v6690, 0.0
        %v6707 = vrot.slane %v6706, 4
        %v6708 = vadd.f32 %v6706, %v6707
        %v6709 = vrot.slane %v6708, 2
        %v6710 = vadd.f32 %v6708, %v6709
        %v6711 = vrot.slane %v6710, 1
        %v6712 = vadd.f32 %v6710, %v6711
        %v6713 = vsel %vm6650, %v6691, 0.0
        %v6714 = vrot.slane %v6713, 4
        %v6715 = vadd.f32 %v6713, %v6714
        %v6716 = vrot.slane %v6715, 2
        %v6717 = vadd.f32 %v6715, %v6716
        %v6718 = vrot.slane %v6717, 1
        %v6719 = vadd.f32 %v6717, %v6718
        %v6720 = vmul.f32 %v6698, %v6679
        %v6721 = vmul.f32 %v6705, %v6679
        %v6722 = vmul.f32 %v6712, %v6679
        %v6723 = vmul.f32 %v6719, %v6679
        %v6724 = vadd.f32 %v6720, 1e-05
        %v6725 = vadd.f32 %v6721, 1e-05
        %v6726 = vadd.f32 %v6722, 1e-05
        %v6727 = vadd.f32 %v6723, 1e-05
        %v6728 = vrsqrt.pop %v6724
        %v6729 = vrsqrt.pop %v6725
        %v6730 = vrsqrt.pop %v6726
        %v6731 = vrsqrt.pop %v6727
        %v6732 = vmul.f32 %v6684, %v6728
        %v6733 = vmul.f32 %v6685, %v6729
        %v6734 = vmul.f32 %v6686, %v6730
        %v6735 = vmul.f32 %v6687, %v6731
        %v6737 = vlaneseq
        %v6738 = vshrl.u32 %v6737, 7
        %v6739 = vsub.s32 0, %v6738
        %v6740 = vrot.slane %v6648, %v6739
        %v6741 = vlaneseq
        %v6742 = vshrl.u32 %v6741, 7
        %v6743 = vsub.s32 1, %v6742
        %v6744 = vrot.slane %v6648, %v6743
        %v6745 = vlaneseq
        %v6746 = vshrl.u32 %v6745, 7
        %v6747 = vsub.s32 2, %v6746
        %v6748 = vrot.slane %v6648, %v6747
        %v6749 = vlaneseq
        %v6750 = vshrl.u32 %v6749, 7
        %v6751 = vsub.s32 3, %v6750
        %v6752 = vrot.slane %v6648, %v6751
        %v6757 = vmul.f32 %v6732, %v6740
        %v6758 = vmul.f32 %v6733, %v6744
        %v6759 = vmul.f32 %v6734, %v6748
        %v6760 = vmul.f32 %v6735, %v6752
        %v6762 = vlaneseq
        %v6763 = vshrl.u32 %v6762, 7
        %v6764 = vsub.s32 0, %v6763
        %v6765 = vrot.slane %v6649, %v6764
        %v6766 = vlaneseq
        %v6767 = vshrl.u32 %v6766, 7
        %v6768 = vsub.s32 1, %v6767
        %v6769 = vrot.slane %v6649, %v6768
        %v6770 = vlaneseq
        %v6771 = vshrl.u32 %v6770, 7
        %v6772 = vsub.s32 2, %v6771
        %v6773 = vrot.slane %v6649, %v6772
        %v6774 = vlaneseq
        %v6775 = vshrl.u32 %v6774, 7
        %v6776 = vsub.s32 3, %v6775
        %v6777 = vrot.slane %v6649, %v6776
        %v6782 = vadd.f32 %v6757, %v6765
        %v6783 = vadd.f32 %v6758, %v6769
        %v6784 = vadd.f32 %v6759, %v6773
        %v6785 = vadd.f32 %v6760, %v6777
        %v6786 = vmax.f32 %v6782, 0.0
        %v6787 = vmax.f32 %v6783, 0.0
        %v6788 = vmax.f32 %v6784, 0.0
        %v6789 = vmax.f32 %v6785, 0.0
        %v6794 = vcombine.low %v6786, %v6787
        %v6795 = vcombine.low %v6788, %v6789
        %v6797 = vunpack.c.l.s4 1983009808
        %v6798 = vunpack.c.0.s8 %v6797
        %v6799 = vlaneseq
        %v6800 = vshrl.u32 %v6799, 7
        %v6801 = vsub.s32 %v6798, %v6800
        %v6802 = vrot.slane %v6794, %v6801
        %v6804 = vunpack.c.l.s4 1983009808
        %v6805 = vunpack.c.0.s8 %v6804
        %v6806 = vlaneseq
        %v6807 = vshrl.u32 %v6806, 7
        %v6808 = vsub.s32 %v6805, %v6807
        %v6809 = vrot.slane %v6795, %v6808
        %v6810 = vcombine.low %v6802, %v6809
        %s6812 = sshra.s32 %s6647, 7
        %s6813 = sand.u32 %s6647, 127
        %s6814 = smul.addr %s6812, 2
        %s6815 = scalar_lea.vmem [#allocation3], %s6814
        %6816 = vst [vmem:[%s6815] sm:$0xff] %v6810
        %p6817 = scmp.eq.s32.totalorder %s55, 1
        // Predicated region
        $region141: #{advanced_contrastive_forward.1} parent=79 // pred_check
          %p6818 = pneg %p6817
        $region142: #{advanced_contrastive_forward.1} parent=79 // pred_check_branch
          %6820 = sbr.rel (%p6818) target = $region144
        $region143: #{advanced_contrastive_forward.1} parent=79 // pred_region
          %v6821 = vld [vmem:[#allocation3] sm:$0xff]
          %v6822 = vld [vmem:[#allocation3 + $0x8] sm:$0xff]
          %v6825 = vcombine.high %v6821, %v6821
          %v6827 = vunpack.c.l.s4 1983009808
          %v6828 = vunpack.c.0.s8 %v6827
          %v6829 = vlaneseq
          %v6830 = vshrl.u32 %v6829, 7
          %v6831 = vsub.s32 %v6828, %v6830
          %v6832 = vrot.slane %v6821, %v6831
          %v6834 = vunpack.c.l.s4 1983009808
          %v6835 = vunpack.c.0.s8 %v6834
          %v6836 = vlaneseq
          %v6837 = vshrl.u32 %v6836, 7
          %v6838 = vsub.s32 %v6835, %v6837
          %v6839 = vrot.slane %v6825, %v6838
          %v6840 = vcombine.high %v6832, %v6832
          %v6841 = vcombine.high %v6839, %v6839
          %v6842 = vcombine.high %v6822, %v6822
          %v6844 = vunpack.c.l.s4 1983009808
          %v6845 = vunpack.c.0.s8 %v6844
          %v6846 = vlaneseq
          %v6847 = vshrl.u32 %v6846, 7
          %v6848 = vsub.s32 %v6845, %v6847
          %v6849 = vrot.slane %v6822, %v6848
          %v6851 = vunpack.c.l.s4 1983009808
          %v6852 = vunpack.c.0.s8 %v6851
          %v6853 = vlaneseq
          %v6854 = vshrl.u32 %v6853, 7
          %v6855 = vsub.s32 %v6852, %v6854
          %v6856 = vrot.slane %v6842, %v6855
          %v6857 = vcombine.high %v6849, %v6849
          %v6858 = vcombine.high %v6856, %v6856
          %v6867 = vpack.c.bf16 %v6832, %v6832
          %v6868 = vpack.c.bf16 %v6840, %v6840
          %v6869 = vpack.c.bf16 %v6839, %v6839
          %v6870 = vpack.c.bf16 %v6841, %v6841
          %v6871 = vpack.c.bf16 %v6849, %v6849
          %v6872 = vpack.c.bf16 %v6857, %v6857
          %v6873 = vpack.c.bf16 %v6856, %v6856
          %v6874 = vpack.c.bf16 %v6858, %v6858
          %v6875 = vld [vmem:[%s845] sm:$0xff]
          %v6876 = vld [vmem:[%s845 + $0x8] sm:$0xff]
          %v6877 = vld [vmem:[%s845 + $0x10] sm:$0xff]
          %v6878 = vld [vmem:[%s845 + $0x18] sm:$0xff]
          %v6879 = vld [vmem:[%s845 + $0x20] sm:$0xff]
          %v6880 = vld [vmem:[%s845 + $0x28] sm:$0xff]
          %v6881 = vld [vmem:[%s845 + $0x30] sm:$0xff]
          %v6882 = vld [vmem:[%s845 + $0x38] sm:$0xff]
          %v6883 = vld [vmem:[%s845 + $0x40] sm:$0xff]
          %v6884 = vld [vmem:[%s845 + $0x48] sm:$0xff]
          %v6885 = vld [vmem:[%s845 + $0x50] sm:$0xff]
          %v6886 = vld [vmem:[%s845 + $0x58] sm:$0xff]
          %v6887 = vld [vmem:[%s845 + $0x60] sm:$0xff]
          %v6888 = vld [vmem:[%s845 + $0x68] sm:$0xff]
          %v6889 = vld [vmem:[%s845 + $0x70] sm:$0xff]
          %v6890 = vld [vmem:[%s845 + $0x78] sm:$0xff]
          %v6891 = vld [vmem:[%s845 + $0x80] sm:$0xff]
          %v6892 = vld [vmem:[%s845 + $0x88] sm:$0xff]
          %v6893 = vld [vmem:[%s845 + $0x90] sm:$0xff]
          %v6894 = vld [vmem:[%s845 + $0x98] sm:$0xff]
          %v6895 = vld [vmem:[%s845 + $0xa0] sm:$0xff]
          %v6896 = vld [vmem:[%s845 + $0xa8] sm:$0xff]
          %v6897 = vld [vmem:[%s845 + $0xb0] sm:$0xff]
          %v6898 = vld [vmem:[%s845 + $0xb8] sm:$0xff]
          %v6899 = vld [vmem:[%s845 + $0xc0] sm:$0xff]
          %v6900 = vld [vmem:[%s845 + $0xc8] sm:$0xff]
          %v6901 = vld [vmem:[%s845 + $0xd0] sm:$0xff]
          %v6902 = vld [vmem:[%s845 + $0xd8] sm:$0xff]
          %v6903 = vld [vmem:[%s845 + $0xe0] sm:$0xff]
          %v6904 = vld [vmem:[%s845 + $0xe8] sm:$0xff]
          %v6905 = vld [vmem:[%s845 + $0xf0] sm:$0xff]
          %v6906 = vld [vmem:[%s845 + $0xf8] sm:$0xff]
          %v6907 = vld [vmem:[%s845 + $0x100] sm:$0xff]
          %v6908 = vld [vmem:[%s845 + $0x108] sm:$0xff]
          %v6909 = vld [vmem:[%s845 + $0x110] sm:$0xff]
          %v6910 = vld [vmem:[%s845 + $0x118] sm:$0xff]
          %v6911 = vld [vmem:[%s845 + $0x120] sm:$0xff]
          %v6912 = vld [vmem:[%s845 + $0x128] sm:$0xff]
          %v6913 = vld [vmem:[%s845 + $0x130] sm:$0xff]
          %v6914 = vld [vmem:[%s845 + $0x138] sm:$0xff]
          %v6915 = vld [vmem:[%s845 + $0x140] sm:$0xff]
          %v6916 = vld [vmem:[%s845 + $0x148] sm:$0xff]
          %v6917 = vld [vmem:[%s845 + $0x150] sm:$0xff]
          %v6918 = vld [vmem:[%s845 + $0x158] sm:$0xff]
          %v6919 = vld [vmem:[%s845 + $0x160] sm:$0xff]
          %v6920 = vld [vmem:[%s845 + $0x168] sm:$0xff]
          %v6921 = vld [vmem:[%s845 + $0x170] sm:$0xff]
          %v6922 = vld [vmem:[%s845 + $0x178] sm:$0xff]
          %v6923 = vld [vmem:[%s845 + $0x180] sm:$0xff]
          %v6924 = vld [vmem:[%s845 + $0x188] sm:$0xff]
          %v6925 = vld [vmem:[%s845 + $0x190] sm:$0xff]
          %v6926 = vld [vmem:[%s845 + $0x198] sm:$0xff]
          %v6927 = vld [vmem:[%s845 + $0x1a0] sm:$0xff]
          %v6928 = vld [vmem:[%s845 + $0x1a8] sm:$0xff]
          %v6929 = vld [vmem:[%s845 + $0x1b0] sm:$0xff]
          %v6930 = vld [vmem:[%s845 + $0x1b8] sm:$0xff]
          %v6931 = vld [vmem:[%s845 + $0x1c0] sm:$0xff]
          %v6932 = vld [vmem:[%s845 + $0x1c8] sm:$0xff]
          %v6933 = vld [vmem:[%s845 + $0x1d0] sm:$0xff]
          %v6934 = vld [vmem:[%s845 + $0x1d8] sm:$0xff]
          %v6935 = vld [vmem:[%s845 + $0x1e0] sm:$0xff]
          %v6936 = vld [vmem:[%s845 + $0x1e8] sm:$0xff]
          %v6937 = vld [vmem:[%s845 + $0x1f0] sm:$0xff]
          %v6938 = vld [vmem:[%s845 + $0x1f8] sm:$0xff]
          %v6939 = vld [vmem:[%s845 + $0x200] sm:$0xff]
          %v6940 = vld [vmem:[%s845 + $0x208] sm:$0xff]
          %v6941 = vld [vmem:[%s845 + $0x210] sm:$0xff]
          %v6942 = vld [vmem:[%s845 + $0x218] sm:$0xff]
          %v6943 = vld [vmem:[%s845 + $0x220] sm:$0xff]
          %v6944 = vld [vmem:[%s845 + $0x228] sm:$0xff]
          %v6945 = vld [vmem:[%s845 + $0x230] sm:$0xff]
          %v6946 = vld [vmem:[%s845 + $0x238] sm:$0xff]
          %v6947 = vld [vmem:[%s845 + $0x240] sm:$0xff]
          %v6948 = vld [vmem:[%s845 + $0x248] sm:$0xff]
          %v6949 = vld [vmem:[%s845 + $0x250] sm:$0xff]
          %v6950 = vld [vmem:[%s845 + $0x258] sm:$0xff]
          %v6951 = vld [vmem:[%s845 + $0x260] sm:$0xff]
          %v6952 = vld [vmem:[%s845 + $0x268] sm:$0xff]
          %v6953 = vld [vmem:[%s845 + $0x270] sm:$0xff]
          %v6954 = vld [vmem:[%s845 + $0x278] sm:$0xff]
          %v6955 = vld [vmem:[%s845 + $0x280] sm:$0xff]
          %v6956 = vld [vmem:[%s845 + $0x288] sm:$0xff]
          %v6957 = vld [vmem:[%s845 + $0x290] sm:$0xff]
          %v6958 = vld [vmem:[%s845 + $0x298] sm:$0xff]
          %v6959 = vld [vmem:[%s845 + $0x2a0] sm:$0xff]
          %v6960 = vld [vmem:[%s845 + $0x2a8] sm:$0xff]
          %v6961 = vld [vmem:[%s845 + $0x2b0] sm:$0xff]
          %v6962 = vld [vmem:[%s845 + $0x2b8] sm:$0xff]
          %v6963 = vld [vmem:[%s845 + $0x2c0] sm:$0xff]
          %v6964 = vld [vmem:[%s845 + $0x2c8] sm:$0xff]
          %v6965 = vld [vmem:[%s845 + $0x2d0] sm:$0xff]
          %v6966 = vld [vmem:[%s845 + $0x2d8] sm:$0xff]
          %v6967 = vld [vmem:[%s845 + $0x2e0] sm:$0xff]
          %v6968 = vld [vmem:[%s845 + $0x2e8] sm:$0xff]
          %v6969 = vld [vmem:[%s845 + $0x2f0] sm:$0xff]
          %v6970 = vld [vmem:[%s845 + $0x2f8] sm:$0xff]
          %v6971 = vld [vmem:[%s845 + $0x300] sm:$0xff]
          %v6972 = vld [vmem:[%s845 + $0x308] sm:$0xff]
          %v6973 = vld [vmem:[%s845 + $0x310] sm:$0xff]
          %v6974 = vld [vmem:[%s845 + $0x318] sm:$0xff]
          %v6975 = vld [vmem:[%s845 + $0x320] sm:$0xff]
          %v6976 = vld [vmem:[%s845 + $0x328] sm:$0xff]
          %v6977 = vld [vmem:[%s845 + $0x330] sm:$0xff]
          %v6978 = vld [vmem:[%s845 + $0x338] sm:$0xff]
          %v6979 = vld [vmem:[%s845 + $0x340] sm:$0xff]
          %v6980 = vld [vmem:[%s845 + $0x348] sm:$0xff]
          %v6981 = vld [vmem:[%s845 + $0x350] sm:$0xff]
          %v6982 = vld [vmem:[%s845 + $0x358] sm:$0xff]
          %v6983 = vld [vmem:[%s845 + $0x360] sm:$0xff]
          %v6984 = vld [vmem:[%s845 + $0x368] sm:$0xff]
          %v6985 = vld [vmem:[%s845 + $0x370] sm:$0xff]
          %v6986 = vld [vmem:[%s845 + $0x378] sm:$0xff]
          %v6987 = vld [vmem:[%s845 + $0x380] sm:$0xff]
          %v6988 = vld [vmem:[%s845 + $0x388] sm:$0xff]
          %v6989 = vld [vmem:[%s845 + $0x390] sm:$0xff]
          %v6990 = vld [vmem:[%s845 + $0x398] sm:$0xff]
          %v6991 = vld [vmem:[%s845 + $0x3a0] sm:$0xff]
          %v6992 = vld [vmem:[%s845 + $0x3a8] sm:$0xff]
          %v6993 = vld [vmem:[%s845 + $0x3b0] sm:$0xff]
          %v6994 = vld [vmem:[%s845 + $0x3b8] sm:$0xff]
          %v6995 = vld [vmem:[%s845 + $0x3c0] sm:$0xff]
          %v6996 = vld [vmem:[%s845 + $0x3c8] sm:$0xff]
          %v6997 = vld [vmem:[%s845 + $0x3d0] sm:$0xff]
          %v6998 = vld [vmem:[%s845 + $0x3d8] sm:$0xff]
          %v6999 = vld [vmem:[%s845 + $0x3e0] sm:$0xff]
          %v7000 = vld [vmem:[%s845 + $0x3e8] sm:$0xff]
          %v7001 = vld [vmem:[%s845 + $0x3f0] sm:$0xff]
          %v7002 = vld [vmem:[%s845 + $0x3f8] sm:$0xff]
          %v7003 = vld [vmem:[%s845 + $0x400] sm:$0xff]
          %v7004 = vld [vmem:[%s845 + $0x408] sm:$0xff]
          %v7005 = vld [vmem:[%s845 + $0x410] sm:$0xff]
          %v7006 = vld [vmem:[%s845 + $0x418] sm:$0xff]
          %v7007 = vld [vmem:[%s845 + $0x420] sm:$0xff]
          %v7008 = vld [vmem:[%s845 + $0x428] sm:$0xff]
          %v7009 = vld [vmem:[%s845 + $0x430] sm:$0xff]
          %v7010 = vld [vmem:[%s845 + $0x438] sm:$0xff]
          %v7011 = vld [vmem:[%s845 + $0x440] sm:$0xff]
          %v7012 = vld [vmem:[%s845 + $0x448] sm:$0xff]
          %v7013 = vld [vmem:[%s845 + $0x450] sm:$0xff]
          %v7014 = vld [vmem:[%s845 + $0x458] sm:$0xff]
          %v7015 = vld [vmem:[%s845 + $0x460] sm:$0xff]
          %v7016 = vld [vmem:[%s845 + $0x468] sm:$0xff]
          %v7017 = vld [vmem:[%s845 + $0x470] sm:$0xff]
          %v7018 = vld [vmem:[%s845 + $0x478] sm:$0xff]
          %v7019 = vld [vmem:[%s845 + $0x480] sm:$0xff]
          %v7020 = vld [vmem:[%s845 + $0x488] sm:$0xff]
          %v7021 = vld [vmem:[%s845 + $0x490] sm:$0xff]
          %v7022 = vld [vmem:[%s845 + $0x498] sm:$0xff]
          %v7023 = vld [vmem:[%s845 + $0x4a0] sm:$0xff]
          %v7024 = vld [vmem:[%s845 + $0x4a8] sm:$0xff]
          %v7025 = vld [vmem:[%s845 + $0x4b0] sm:$0xff]
          %v7026 = vld [vmem:[%s845 + $0x4b8] sm:$0xff]
          %v7027 = vld [vmem:[%s845 + $0x4c0] sm:$0xff]
          %v7028 = vld [vmem:[%s845 + $0x4c8] sm:$0xff]
          %v7029 = vld [vmem:[%s845 + $0x4d0] sm:$0xff]
          %v7030 = vld [vmem:[%s845 + $0x4d8] sm:$0xff]
          %v7031 = vld [vmem:[%s845 + $0x4e0] sm:$0xff]
          %v7032 = vld [vmem:[%s845 + $0x4e8] sm:$0xff]
          %v7033 = vld [vmem:[%s845 + $0x4f0] sm:$0xff]
          %v7034 = vld [vmem:[%s845 + $0x4f8] sm:$0xff]
          %v7035 = vld [vmem:[%s845 + $0x500] sm:$0xff]
          %v7036 = vld [vmem:[%s845 + $0x508] sm:$0xff]
          %v7037 = vld [vmem:[%s845 + $0x510] sm:$0xff]
          %v7038 = vld [vmem:[%s845 + $0x518] sm:$0xff]
          %v7039 = vld [vmem:[%s845 + $0x520] sm:$0xff]
          %v7040 = vld [vmem:[%s845 + $0x528] sm:$0xff]
          %v7041 = vld [vmem:[%s845 + $0x530] sm:$0xff]
          %v7042 = vld [vmem:[%s845 + $0x538] sm:$0xff]
          %v7043 = vld [vmem:[%s845 + $0x540] sm:$0xff]
          %v7044 = vld [vmem:[%s845 + $0x548] sm:$0xff]
          %v7045 = vld [vmem:[%s845 + $0x550] sm:$0xff]
          %v7046 = vld [vmem:[%s845 + $0x558] sm:$0xff]
          %v7047 = vld [vmem:[%s845 + $0x560] sm:$0xff]
          %v7048 = vld [vmem:[%s845 + $0x568] sm:$0xff]
          %v7049 = vld [vmem:[%s845 + $0x570] sm:$0xff]
          %v7050 = vld [vmem:[%s845 + $0x578] sm:$0xff]
          %v7051 = vld [vmem:[%s845 + $0x580] sm:$0xff]
          %v7052 = vld [vmem:[%s845 + $0x588] sm:$0xff]
          %v7053 = vld [vmem:[%s845 + $0x590] sm:$0xff]
          %v7054 = vld [vmem:[%s845 + $0x598] sm:$0xff]
          %v7055 = vld [vmem:[%s845 + $0x5a0] sm:$0xff]
          %v7056 = vld [vmem:[%s845 + $0x5a8] sm:$0xff]
          %v7057 = vld [vmem:[%s845 + $0x5b0] sm:$0xff]
          %v7058 = vld [vmem:[%s845 + $0x5b8] sm:$0xff]
          %v7059 = vld [vmem:[%s845 + $0x5c0] sm:$0xff]
          %v7060 = vld [vmem:[%s845 + $0x5c8] sm:$0xff]
          %v7061 = vld [vmem:[%s845 + $0x5d0] sm:$0xff]
          %v7062 = vld [vmem:[%s845 + $0x5d8] sm:$0xff]
          %v7063 = vld [vmem:[%s845 + $0x5e0] sm:$0xff]
          %v7064 = vld [vmem:[%s845 + $0x5e8] sm:$0xff]
          %v7065 = vld [vmem:[%s845 + $0x5f0] sm:$0xff]
          %v7066 = vld [vmem:[%s845 + $0x5f8] sm:$0xff]
          %v7067 = vld [vmem:[%s845 + $0x600] sm:$0xff]
          %v7068 = vld [vmem:[%s845 + $0x608] sm:$0xff]
          %v7069 = vld [vmem:[%s845 + $0x610] sm:$0xff]
          %v7070 = vld [vmem:[%s845 + $0x618] sm:$0xff]
          %v7071 = vld [vmem:[%s845 + $0x620] sm:$0xff]
          %v7072 = vld [vmem:[%s845 + $0x628] sm:$0xff]
          %v7073 = vld [vmem:[%s845 + $0x630] sm:$0xff]
          %v7074 = vld [vmem:[%s845 + $0x638] sm:$0xff]
          %v7075 = vld [vmem:[%s845 + $0x640] sm:$0xff]
          %v7076 = vld [vmem:[%s845 + $0x648] sm:$0xff]
          %v7077 = vld [vmem:[%s845 + $0x650] sm:$0xff]
          %v7078 = vld [vmem:[%s845 + $0x658] sm:$0xff]
          %v7079 = vld [vmem:[%s845 + $0x660] sm:$0xff]
          %v7080 = vld [vmem:[%s845 + $0x668] sm:$0xff]
          %v7081 = vld [vmem:[%s845 + $0x670] sm:$0xff]
          %v7082 = vld [vmem:[%s845 + $0x678] sm:$0xff]
          %v7083 = vld [vmem:[%s845 + $0x680] sm:$0xff]
          %v7084 = vld [vmem:[%s845 + $0x688] sm:$0xff]
          %v7085 = vld [vmem:[%s845 + $0x690] sm:$0xff]
          %v7086 = vld [vmem:[%s845 + $0x698] sm:$0xff]
          %v7087 = vld [vmem:[%s845 + $0x6a0] sm:$0xff]
          %v7088 = vld [vmem:[%s845 + $0x6a8] sm:$0xff]
          %v7089 = vld [vmem:[%s845 + $0x6b0] sm:$0xff]
          %v7090 = vld [vmem:[%s845 + $0x6b8] sm:$0xff]
          %v7091 = vld [vmem:[%s845 + $0x6c0] sm:$0xff]
          %v7092 = vld [vmem:[%s845 + $0x6c8] sm:$0xff]
          %v7093 = vld [vmem:[%s845 + $0x6d0] sm:$0xff]
          %v7094 = vld [vmem:[%s845 + $0x6d8] sm:$0xff]
          %v7095 = vld [vmem:[%s845 + $0x6e0] sm:$0xff]
          %v7096 = vld [vmem:[%s845 + $0x6e8] sm:$0xff]
          %v7097 = vld [vmem:[%s845 + $0x6f0] sm:$0xff]
          %v7098 = vld [vmem:[%s845 + $0x6f8] sm:$0xff]
          %v7099 = vld [vmem:[%s845 + $0x700] sm:$0xff]
          %v7100 = vld [vmem:[%s845 + $0x708] sm:$0xff]
          %v7101 = vld [vmem:[%s845 + $0x710] sm:$0xff]
          %v7102 = vld [vmem:[%s845 + $0x718] sm:$0xff]
          %v7103 = vld [vmem:[%s845 + $0x720] sm:$0xff]
          %v7104 = vld [vmem:[%s845 + $0x728] sm:$0xff]
          %v7105 = vld [vmem:[%s845 + $0x730] sm:$0xff]
          %v7106 = vld [vmem:[%s845 + $0x738] sm:$0xff]
          %v7107 = vld [vmem:[%s845 + $0x740] sm:$0xff]
          %v7108 = vld [vmem:[%s845 + $0x748] sm:$0xff]
          %v7109 = vld [vmem:[%s845 + $0x750] sm:$0xff]
          %v7110 = vld [vmem:[%s845 + $0x758] sm:$0xff]
          %v7111 = vld [vmem:[%s845 + $0x760] sm:$0xff]
          %v7112 = vld [vmem:[%s845 + $0x768] sm:$0xff]
          %v7113 = vld [vmem:[%s845 + $0x770] sm:$0xff]
          %v7114 = vld [vmem:[%s845 + $0x778] sm:$0xff]
          %v7115 = vld [vmem:[%s845 + $0x780] sm:$0xff]
          %v7116 = vld [vmem:[%s845 + $0x788] sm:$0xff]
          %v7117 = vld [vmem:[%s845 + $0x790] sm:$0xff]
          %v7118 = vld [vmem:[%s845 + $0x798] sm:$0xff]
          %v7119 = vld [vmem:[%s845 + $0x7a0] sm:$0xff]
          %v7120 = vld [vmem:[%s845 + $0x7a8] sm:$0xff]
          %v7121 = vld [vmem:[%s845 + $0x7b0] sm:$0xff]
          %v7122 = vld [vmem:[%s845 + $0x7b8] sm:$0xff]
          %v7123 = vld [vmem:[%s845 + $0x7c0] sm:$0xff]
          %v7124 = vld [vmem:[%s845 + $0x7c8] sm:$0xff]
          %v7125 = vld [vmem:[%s845 + $0x7d0] sm:$0xff]
          %v7126 = vld [vmem:[%s845 + $0x7d8] sm:$0xff]
          %v7127 = vld [vmem:[%s845 + $0x7e0] sm:$0xff]
          %v7128 = vld [vmem:[%s845 + $0x7e8] sm:$0xff]
          %v7129 = vld [vmem:[%s845 + $0x7f0] sm:$0xff]
          %v7130 = vld [vmem:[%s845 + $0x7f8] sm:$0xff]
          %v7131 = vld [vmem:[%s854] sm:$0xf]
          %v7133 = vlaneseq
          %v7134 = vshrl.u32 %v7133, 7
          %v7135 = vsub.s32 0, %v7134
          %v7136 = vrot.slane %v7131, %v7135
          %v7137 = vlaneseq
          %v7138 = vshrl.u32 %v7137, 7
          %v7139 = vsub.s32 1, %v7138
          %v7140 = vrot.slane %v7131, %v7139
          %v7141 = vlaneseq
          %v7142 = vshrl.u32 %v7141, 7
          %v7143 = vsub.s32 2, %v7142
          %v7144 = vrot.slane %v7131, %v7143
          %v7145 = vlaneseq
          %v7146 = vshrl.u32 %v7145, 7
          %v7147 = vsub.s32 3, %v7146
          %v7148 = vrot.slane %v7131, %v7147
          %v7409 = vunpack.c.l.b16 %v6875
          %v7410 = vunpack.c.h.b16 %v6875
          %v7411 = vunpack.c.l.b16 %v6876
          %v7412 = vunpack.c.h.b16 %v6876
          %v7413 = vunpack.c.l.b16 %v6877
          %v7414 = vunpack.c.h.b16 %v6877
          %v7415 = vunpack.c.l.b16 %v6878
          %v7416 = vunpack.c.h.b16 %v6878
          %v7417 = vunpack.c.l.b16 %v6879
          %v7418 = vunpack.c.h.b16 %v6879
          %v7419 = vunpack.c.l.b16 %v6880
          %v7420 = vunpack.c.h.b16 %v6880
          %v7421 = vunpack.c.l.b16 %v6881
          %v7422 = vunpack.c.h.b16 %v6881
          %v7423 = vunpack.c.l.b16 %v6882
          %v7424 = vunpack.c.h.b16 %v6882
          %v7425 = vunpack.c.l.b16 %v6883
          %v7426 = vunpack.c.h.b16 %v6883
          %v7427 = vunpack.c.l.b16 %v6884
          %v7428 = vunpack.c.h.b16 %v6884
          %v7429 = vunpack.c.l.b16 %v6885
          %v7430 = vunpack.c.h.b16 %v6885
          %v7431 = vunpack.c.l.b16 %v6886
          %v7432 = vunpack.c.h.b16 %v6886
          %v7433 = vunpack.c.l.b16 %v6887
          %v7434 = vunpack.c.h.b16 %v6887
          %v7435 = vunpack.c.l.b16 %v6888
          %v7436 = vunpack.c.h.b16 %v6888
          %v7437 = vunpack.c.l.b16 %v6889
          %v7438 = vunpack.c.h.b16 %v6889
          %v7439 = vunpack.c.l.b16 %v6890
          %v7440 = vunpack.c.h.b16 %v6890
          %v7441 = vunpack.c.l.b16 %v6891
          %v7442 = vunpack.c.h.b16 %v6891
          %v7443 = vunpack.c.l.b16 %v6892
          %v7444 = vunpack.c.h.b16 %v6892
          %v7445 = vunpack.c.l.b16 %v6893
          %v7446 = vunpack.c.h.b16 %v6893
          %v7447 = vunpack.c.l.b16 %v6894
          %v7448 = vunpack.c.h.b16 %v6894
          %v7449 = vunpack.c.l.b16 %v6895
          %v7450 = vunpack.c.h.b16 %v6895
          %v7451 = vunpack.c.l.b16 %v6896
          %v7452 = vunpack.c.h.b16 %v6896
          %v7453 = vunpack.c.l.b16 %v6897
          %v7454 = vunpack.c.h.b16 %v6897
          %v7455 = vunpack.c.l.b16 %v6898
          %v7456 = vunpack.c.h.b16 %v6898
          %v7457 = vunpack.c.l.b16 %v6899
          %v7458 = vunpack.c.h.b16 %v6899
          %v7459 = vunpack.c.l.b16 %v6900
          %v7460 = vunpack.c.h.b16 %v6900
          %v7461 = vunpack.c.l.b16 %v6901
          %v7462 = vunpack.c.h.b16 %v6901
          %v7463 = vunpack.c.l.b16 %v6902
          %v7464 = vunpack.c.h.b16 %v6902
          %v7465 = vunpack.c.l.b16 %v6903
          %v7466 = vunpack.c.h.b16 %v6903
          %v7467 = vunpack.c.l.b16 %v6904
          %v7468 = vunpack.c.h.b16 %v6904
          %v7469 = vunpack.c.l.b16 %v6905
          %v7470 = vunpack.c.h.b16 %v6905
          %v7471 = vunpack.c.l.b16 %v6906
          %v7472 = vunpack.c.h.b16 %v6906
          %v7473 = vunpack.c.l.b16 %v6907
          %v7474 = vunpack.c.h.b16 %v6907
          %v7475 = vunpack.c.l.b16 %v6908
          %v7476 = vunpack.c.h.b16 %v6908
          %v7477 = vunpack.c.l.b16 %v6909
          %v7478 = vunpack.c.h.b16 %v6909
          %v7479 = vunpack.c.l.b16 %v6910
          %v7480 = vunpack.c.h.b16 %v6910
          %v7481 = vunpack.c.l.b16 %v6911
          %v7482 = vunpack.c.h.b16 %v6911
          %v7483 = vunpack.c.l.b16 %v6912
          %v7484 = vunpack.c.h.b16 %v6912
          %v7485 = vunpack.c.l.b16 %v6913
          %v7486 = vunpack.c.h.b16 %v6913
          %v7487 = vunpack.c.l.b16 %v6914
          %v7488 = vunpack.c.h.b16 %v6914
          %v7489 = vunpack.c.l.b16 %v6915
          %v7490 = vunpack.c.h.b16 %v6915
          %v7491 = vunpack.c.l.b16 %v6916
          %v7492 = vunpack.c.h.b16 %v6916
          %v7493 = vunpack.c.l.b16 %v6917
          %v7494 = vunpack.c.h.b16 %v6917
          %v7495 = vunpack.c.l.b16 %v6918
          %v7496 = vunpack.c.h.b16 %v6918
          %v7497 = vunpack.c.l.b16 %v6919
          %v7498 = vunpack.c.h.b16 %v6919
          %v7499 = vunpack.c.l.b16 %v6920
          %v7500 = vunpack.c.h.b16 %v6920
          %v7501 = vunpack.c.l.b16 %v6921
          %v7502 = vunpack.c.h.b16 %v6921
          %v7503 = vunpack.c.l.b16 %v6922
          %v7504 = vunpack.c.h.b16 %v6922
          %v7505 = vunpack.c.l.b16 %v6923
          %v7506 = vunpack.c.h.b16 %v6923
          %v7507 = vunpack.c.l.b16 %v6924
          %v7508 = vunpack.c.h.b16 %v6924
          %v7509 = vunpack.c.l.b16 %v6925
          %v7510 = vunpack.c.h.b16 %v6925
          %v7511 = vunpack.c.l.b16 %v6926
          %v7512 = vunpack.c.h.b16 %v6926
          %v7513 = vunpack.c.l.b16 %v6927
          %v7514 = vunpack.c.h.b16 %v6927
          %v7515 = vunpack.c.l.b16 %v6928
          %v7516 = vunpack.c.h.b16 %v6928
          %v7517 = vunpack.c.l.b16 %v6929
          %v7518 = vunpack.c.h.b16 %v6929
          %v7519 = vunpack.c.l.b16 %v6930
          %v7520 = vunpack.c.h.b16 %v6930
          %v7521 = vunpack.c.l.b16 %v6931
          %v7522 = vunpack.c.h.b16 %v6931
          %v7523 = vunpack.c.l.b16 %v6932
          %v7524 = vunpack.c.h.b16 %v6932
          %v7525 = vunpack.c.l.b16 %v6933
          %v7526 = vunpack.c.h.b16 %v6933
          %v7527 = vunpack.c.l.b16 %v6934
          %v7528 = vunpack.c.h.b16 %v6934
          %v7529 = vunpack.c.l.b16 %v6935
          %v7530 = vunpack.c.h.b16 %v6935
          %v7531 = vunpack.c.l.b16 %v6936
          %v7532 = vunpack.c.h.b16 %v6936
          %v7533 = vunpack.c.l.b16 %v6937
          %v7534 = vunpack.c.h.b16 %v6937
          %v7535 = vunpack.c.l.b16 %v6938
          %v7536 = vunpack.c.h.b16 %v6938
          %v7537 = vunpack.c.l.b16 %v6939
          %v7538 = vunpack.c.h.b16 %v6939
          %v7539 = vunpack.c.l.b16 %v6940
          %v7540 = vunpack.c.h.b16 %v6940
          %v7541 = vunpack.c.l.b16 %v6941
          %v7542 = vunpack.c.h.b16 %v6941
          %v7543 = vunpack.c.l.b16 %v6942
          %v7544 = vunpack.c.h.b16 %v6942
          %v7545 = vunpack.c.l.b16 %v6943
          %v7546 = vunpack.c.h.b16 %v6943
          %v7547 = vunpack.c.l.b16 %v6944
          %v7548 = vunpack.c.h.b16 %v6944
          %v7549 = vunpack.c.l.b16 %v6945
          %v7550 = vunpack.c.h.b16 %v6945
          %v7551 = vunpack.c.l.b16 %v6946
          %v7552 = vunpack.c.h.b16 %v6946
          %v7553 = vunpack.c.l.b16 %v6947
          %v7554 = vunpack.c.h.b16 %v6947
          %v7555 = vunpack.c.l.b16 %v6948
          %v7556 = vunpack.c.h.b16 %v6948
          %v7557 = vunpack.c.l.b16 %v6949
          %v7558 = vunpack.c.h.b16 %v6949
          %v7559 = vunpack.c.l.b16 %v6950
          %v7560 = vunpack.c.h.b16 %v6950
          %v7561 = vunpack.c.l.b16 %v6951
          %v7562 = vunpack.c.h.b16 %v6951
          %v7563 = vunpack.c.l.b16 %v6952
          %v7564 = vunpack.c.h.b16 %v6952
          %v7565 = vunpack.c.l.b16 %v6953
          %v7566 = vunpack.c.h.b16 %v6953
          %v7567 = vunpack.c.l.b16 %v6954
          %v7568 = vunpack.c.h.b16 %v6954
          %v7569 = vunpack.c.l.b16 %v6955
          %v7570 = vunpack.c.h.b16 %v6955
          %v7571 = vunpack.c.l.b16 %v6956
          %v7572 = vunpack.c.h.b16 %v6956
          %v7573 = vunpack.c.l.b16 %v6957
          %v7574 = vunpack.c.h.b16 %v6957
          %v7575 = vunpack.c.l.b16 %v6958
          %v7576 = vunpack.c.h.b16 %v6958
          %v7577 = vunpack.c.l.b16 %v6959
          %v7578 = vunpack.c.h.b16 %v6959
          %v7579 = vunpack.c.l.b16 %v6960
          %v7580 = vunpack.c.h.b16 %v6960
          %v7581 = vunpack.c.l.b16 %v6961
          %v7582 = vunpack.c.h.b16 %v6961
          %v7583 = vunpack.c.l.b16 %v6962
          %v7584 = vunpack.c.h.b16 %v6962
          %v7585 = vunpack.c.l.b16 %v6963
          %v7586 = vunpack.c.h.b16 %v6963
          %v7587 = vunpack.c.l.b16 %v6964
          %v7588 = vunpack.c.h.b16 %v6964
          %v7589 = vunpack.c.l.b16 %v6965
          %v7590 = vunpack.c.h.b16 %v6965
          %v7591 = vunpack.c.l.b16 %v6966
          %v7592 = vunpack.c.h.b16 %v6966
          %v7593 = vunpack.c.l.b16 %v6967
          %v7594 = vunpack.c.h.b16 %v6967
          %v7595 = vunpack.c.l.b16 %v6968
          %v7596 = vunpack.c.h.b16 %v6968
          %v7597 = vunpack.c.l.b16 %v6969
          %v7598 = vunpack.c.h.b16 %v6969
          %v7599 = vunpack.c.l.b16 %v6970
          %v7600 = vunpack.c.h.b16 %v6970
          %v7601 = vunpack.c.l.b16 %v6971
          %v7602 = vunpack.c.h.b16 %v6971
          %v7603 = vunpack.c.l.b16 %v6972
          %v7604 = vunpack.c.h.b16 %v6972
          %v7605 = vunpack.c.l.b16 %v6973
          %v7606 = vunpack.c.h.b16 %v6973
          %v7607 = vunpack.c.l.b16 %v6974
          %v7608 = vunpack.c.h.b16 %v6974
          %v7609 = vunpack.c.l.b16 %v6975
          %v7610 = vunpack.c.h.b16 %v6975
          %v7611 = vunpack.c.l.b16 %v6976
          %v7612 = vunpack.c.h.b16 %v6976
          %v7613 = vunpack.c.l.b16 %v6977
          %v7614 = vunpack.c.h.b16 %v6977
          %v7615 = vunpack.c.l.b16 %v6978
          %v7616 = vunpack.c.h.b16 %v6978
          %v7617 = vunpack.c.l.b16 %v6979
          %v7618 = vunpack.c.h.b16 %v6979
          %v7619 = vunpack.c.l.b16 %v6980
          %v7620 = vunpack.c.h.b16 %v6980
          %v7621 = vunpack.c.l.b16 %v6981
          %v7622 = vunpack.c.h.b16 %v6981
          %v7623 = vunpack.c.l.b16 %v6982
          %v7624 = vunpack.c.h.b16 %v6982
          %v7625 = vunpack.c.l.b16 %v6983
          %v7626 = vunpack.c.h.b16 %v6983
          %v7627 = vunpack.c.l.b16 %v6984
          %v7628 = vunpack.c.h.b16 %v6984
          %v7629 = vunpack.c.l.b16 %v6985
          %v7630 = vunpack.c.h.b16 %v6985
          %v7631 = vunpack.c.l.b16 %v6986
          %v7632 = vunpack.c.h.b16 %v6986
          %v7633 = vunpack.c.l.b16 %v6987
          %v7634 = vunpack.c.h.b16 %v6987
          %v7635 = vunpack.c.l.b16 %v6988
          %v7636 = vunpack.c.h.b16 %v6988
          %v7637 = vunpack.c.l.b16 %v6989
          %v7638 = vunpack.c.h.b16 %v6989
          %v7639 = vunpack.c.l.b16 %v6990
          %v7640 = vunpack.c.h.b16 %v6990
          %v7641 = vunpack.c.l.b16 %v6991
          %v7642 = vunpack.c.h.b16 %v6991
          %v7643 = vunpack.c.l.b16 %v6992
          %v7644 = vunpack.c.h.b16 %v6992
          %v7645 = vunpack.c.l.b16 %v6993
          %v7646 = vunpack.c.h.b16 %v6993
          %v7647 = vunpack.c.l.b16 %v6994
          %v7648 = vunpack.c.h.b16 %v6994
          %v7649 = vunpack.c.l.b16 %v6995
          %v7650 = vunpack.c.h.b16 %v6995
          %v7651 = vunpack.c.l.b16 %v6996
          %v7652 = vunpack.c.h.b16 %v6996
          %v7653 = vunpack.c.l.b16 %v6997
          %v7654 = vunpack.c.h.b16 %v6997
          %v7655 = vunpack.c.l.b16 %v6998
          %v7656 = vunpack.c.h.b16 %v6998
          %v7657 = vunpack.c.l.b16 %v6999
          %v7658 = vunpack.c.h.b16 %v6999
          %v7659 = vunpack.c.l.b16 %v7000
          %v7660 = vunpack.c.h.b16 %v7000
          %v7661 = vunpack.c.l.b16 %v7001
          %v7662 = vunpack.c.h.b16 %v7001
          %v7663 = vunpack.c.l.b16 %v7002
          %v7664 = vunpack.c.h.b16 %v7002
          %v7665 = vunpack.c.l.b16 %v7003
          %v7666 = vunpack.c.h.b16 %v7003
          %v7667 = vunpack.c.l.b16 %v7004
          %v7668 = vunpack.c.h.b16 %v7004
          %v7669 = vunpack.c.l.b16 %v7005
          %v7670 = vunpack.c.h.b16 %v7005
          %v7671 = vunpack.c.l.b16 %v7006
          %v7672 = vunpack.c.h.b16 %v7006
          %v7673 = vunpack.c.l.b16 %v7007
          %v7674 = vunpack.c.h.b16 %v7007
          %v7675 = vunpack.c.l.b16 %v7008
          %v7676 = vunpack.c.h.b16 %v7008
          %v7677 = vunpack.c.l.b16 %v7009
          %v7678 = vunpack.c.h.b16 %v7009
          %v7679 = vunpack.c.l.b16 %v7010
          %v7680 = vunpack.c.h.b16 %v7010
          %v7681 = vunpack.c.l.b16 %v7011
          %v7682 = vunpack.c.h.b16 %v7011
          %v7683 = vunpack.c.l.b16 %v7012
          %v7684 = vunpack.c.h.b16 %v7012
          %v7685 = vunpack.c.l.b16 %v7013
          %v7686 = vunpack.c.h.b16 %v7013
          %v7687 = vunpack.c.l.b16 %v7014
          %v7688 = vunpack.c.h.b16 %v7014
          %v7689 = vunpack.c.l.b16 %v7015
          %v7690 = vunpack.c.h.b16 %v7015
          %v7691 = vunpack.c.l.b16 %v7016
          %v7692 = vunpack.c.h.b16 %v7016
          %v7693 = vunpack.c.l.b16 %v7017
          %v7694 = vunpack.c.h.b16 %v7017
          %v7695 = vunpack.c.l.b16 %v7018
          %v7696 = vunpack.c.h.b16 %v7018
          %v7697 = vunpack.c.l.b16 %v7019
          %v7698 = vunpack.c.h.b16 %v7019
          %v7699 = vunpack.c.l.b16 %v7020
          %v7700 = vunpack.c.h.b16 %v7020
          %v7701 = vunpack.c.l.b16 %v7021
          %v7702 = vunpack.c.h.b16 %v7021
          %v7703 = vunpack.c.l.b16 %v7022
          %v7704 = vunpack.c.h.b16 %v7022
          %v7705 = vunpack.c.l.b16 %v7023
          %v7706 = vunpack.c.h.b16 %v7023
          %v7707 = vunpack.c.l.b16 %v7024
          %v7708 = vunpack.c.h.b16 %v7024
          %v7709 = vunpack.c.l.b16 %v7025
          %v7710 = vunpack.c.h.b16 %v7025
          %v7711 = vunpack.c.l.b16 %v7026
          %v7712 = vunpack.c.h.b16 %v7026
          %v7713 = vunpack.c.l.b16 %v7027
          %v7714 = vunpack.c.h.b16 %v7027
          %v7715 = vunpack.c.l.b16 %v7028
          %v7716 = vunpack.c.h.b16 %v7028
          %v7717 = vunpack.c.l.b16 %v7029
          %v7718 = vunpack.c.h.b16 %v7029
          %v7719 = vunpack.c.l.b16 %v7030
          %v7720 = vunpack.c.h.b16 %v7030
          %v7721 = vunpack.c.l.b16 %v7031
          %v7722 = vunpack.c.h.b16 %v7031
          %v7723 = vunpack.c.l.b16 %v7032
          %v7724 = vunpack.c.h.b16 %v7032
          %v7725 = vunpack.c.l.b16 %v7033
          %v7726 = vunpack.c.h.b16 %v7033
          %v7727 = vunpack.c.l.b16 %v7034
          %v7728 = vunpack.c.h.b16 %v7034
          %v7729 = vunpack.c.l.b16 %v7035
          %v7730 = vunpack.c.h.b16 %v7035
          %v7731 = vunpack.c.l.b16 %v7036
          %v7732 = vunpack.c.h.b16 %v7036
          %v7733 = vunpack.c.l.b16 %v7037
          %v7734 = vunpack.c.h.b16 %v7037
          %v7735 = vunpack.c.l.b16 %v7038
          %v7736 = vunpack.c.h.b16 %v7038
          %v7737 = vunpack.c.l.b16 %v7039
          %v7738 = vunpack.c.h.b16 %v7039
          %v7739 = vunpack.c.l.b16 %v7040
          %v7740 = vunpack.c.h.b16 %v7040
          %v7741 = vunpack.c.l.b16 %v7041
          %v7742 = vunpack.c.h.b16 %v7041
          %v7743 = vunpack.c.l.b16 %v7042
          %v7744 = vunpack.c.h.b16 %v7042
          %v7745 = vunpack.c.l.b16 %v7043
          %v7746 = vunpack.c.h.b16 %v7043
          %v7747 = vunpack.c.l.b16 %v7044
          %v7748 = vunpack.c.h.b16 %v7044
          %v7749 = vunpack.c.l.b16 %v7045
          %v7750 = vunpack.c.h.b16 %v7045
          %v7751 = vunpack.c.l.b16 %v7046
          %v7752 = vunpack.c.h.b16 %v7046
          %v7753 = vunpack.c.l.b16 %v7047
          %v7754 = vunpack.c.h.b16 %v7047
          %v7755 = vunpack.c.l.b16 %v7048
          %v7756 = vunpack.c.h.b16 %v7048
          %v7757 = vunpack.c.l.b16 %v7049
          %v7758 = vunpack.c.h.b16 %v7049
          %v7759 = vunpack.c.l.b16 %v7050
          %v7760 = vunpack.c.h.b16 %v7050
          %v7761 = vunpack.c.l.b16 %v7051
          %v7762 = vunpack.c.h.b16 %v7051
          %v7763 = vunpack.c.l.b16 %v7052
          %v7764 = vunpack.c.h.b16 %v7052
          %v7765 = vunpack.c.l.b16 %v7053
          %v7766 = vunpack.c.h.b16 %v7053
          %v7767 = vunpack.c.l.b16 %v7054
          %v7768 = vunpack.c.h.b16 %v7054
          %v7769 = vunpack.c.l.b16 %v7055
          %v7770 = vunpack.c.h.b16 %v7055
          %v7771 = vunpack.c.l.b16 %v7056
          %v7772 = vunpack.c.h.b16 %v7056
          %v7773 = vunpack.c.l.b16 %v7057
          %v7774 = vunpack.c.h.b16 %v7057
          %v7775 = vunpack.c.l.b16 %v7058
          %v7776 = vunpack.c.h.b16 %v7058
          %v7777 = vunpack.c.l.b16 %v7059
          %v7778 = vunpack.c.h.b16 %v7059
          %v7779 = vunpack.c.l.b16 %v7060
          %v7780 = vunpack.c.h.b16 %v7060
          %v7781 = vunpack.c.l.b16 %v7061
          %v7782 = vunpack.c.h.b16 %v7061
          %v7783 = vunpack.c.l.b16 %v7062
          %v7784 = vunpack.c.h.b16 %v7062
          %v7785 = vunpack.c.l.b16 %v7063
          %v7786 = vunpack.c.h.b16 %v7063
          %v7787 = vunpack.c.l.b16 %v7064
          %v7788 = vunpack.c.h.b16 %v7064
          %v7789 = vunpack.c.l.b16 %v7065
          %v7790 = vunpack.c.h.b16 %v7065
          %v7791 = vunpack.c.l.b16 %v7066
          %v7792 = vunpack.c.h.b16 %v7066
          %v7793 = vunpack.c.l.b16 %v7067
          %v7794 = vunpack.c.h.b16 %v7067
          %v7795 = vunpack.c.l.b16 %v7068
          %v7796 = vunpack.c.h.b16 %v7068
          %v7797 = vunpack.c.l.b16 %v7069
          %v7798 = vunpack.c.h.b16 %v7069
          %v7799 = vunpack.c.l.b16 %v7070
          %v7800 = vunpack.c.h.b16 %v7070
          %v7801 = vunpack.c.l.b16 %v7071
          %v7802 = vunpack.c.h.b16 %v7071
          %v7803 = vunpack.c.l.b16 %v7072
          %v7804 = vunpack.c.h.b16 %v7072
          %v7805 = vunpack.c.l.b16 %v7073
          %v7806 = vunpack.c.h.b16 %v7073
          %v7807 = vunpack.c.l.b16 %v7074
          %v7808 = vunpack.c.h.b16 %v7074
          %v7809 = vunpack.c.l.b16 %v7075
          %v7810 = vunpack.c.h.b16 %v7075
          %v7811 = vunpack.c.l.b16 %v7076
          %v7812 = vunpack.c.h.b16 %v7076
          %v7813 = vunpack.c.l.b16 %v7077
          %v7814 = vunpack.c.h.b16 %v7077
          %v7815 = vunpack.c.l.b16 %v7078
          %v7816 = vunpack.c.h.b16 %v7078
          %v7817 = vunpack.c.l.b16 %v7079
          %v7818 = vunpack.c.h.b16 %v7079
          %v7819 = vunpack.c.l.b16 %v7080
          %v7820 = vunpack.c.h.b16 %v7080
          %v7821 = vunpack.c.l.b16 %v7081
          %v7822 = vunpack.c.h.b16 %v7081
          %v7823 = vunpack.c.l.b16 %v7082
          %v7824 = vunpack.c.h.b16 %v7082
          %v7825 = vunpack.c.l.b16 %v7083
          %v7826 = vunpack.c.h.b16 %v7083
          %v7827 = vunpack.c.l.b16 %v7084
          %v7828 = vunpack.c.h.b16 %v7084
          %v7829 = vunpack.c.l.b16 %v7085
          %v7830 = vunpack.c.h.b16 %v7085
          %v7831 = vunpack.c.l.b16 %v7086
          %v7832 = vunpack.c.h.b16 %v7086
          %v7833 = vunpack.c.l.b16 %v7087
          %v7834 = vunpack.c.h.b16 %v7087
          %v7835 = vunpack.c.l.b16 %v7088
          %v7836 = vunpack.c.h.b16 %v7088
          %v7837 = vunpack.c.l.b16 %v7089
          %v7838 = vunpack.c.h.b16 %v7089
          %v7839 = vunpack.c.l.b16 %v7090
          %v7840 = vunpack.c.h.b16 %v7090
          %v7841 = vunpack.c.l.b16 %v7091
          %v7842 = vunpack.c.h.b16 %v7091
          %v7843 = vunpack.c.l.b16 %v7092
          %v7844 = vunpack.c.h.b16 %v7092
          %v7845 = vunpack.c.l.b16 %v7093
          %v7846 = vunpack.c.h.b16 %v7093
          %v7847 = vunpack.c.l.b16 %v7094
          %v7848 = vunpack.c.h.b16 %v7094
          %v7849 = vunpack.c.l.b16 %v7095
          %v7850 = vunpack.c.h.b16 %v7095
          %v7851 = vunpack.c.l.b16 %v7096
          %v7852 = vunpack.c.h.b16 %v7096
          %v7853 = vunpack.c.l.b16 %v7097
          %v7854 = vunpack.c.h.b16 %v7097
          %v7855 = vunpack.c.l.b16 %v7098
          %v7856 = vunpack.c.h.b16 %v7098
          %v7857 = vunpack.c.l.b16 %v7099
          %v7858 = vunpack.c.h.b16 %v7099
          %v7859 = vunpack.c.l.b16 %v7100
          %v7860 = vunpack.c.h.b16 %v7100
          %v7861 = vunpack.c.l.b16 %v7101
          %v7862 = vunpack.c.h.b16 %v7101
          %v7863 = vunpack.c.l.b16 %v7102
          %v7864 = vunpack.c.h.b16 %v7102
          %v7865 = vunpack.c.l.b16 %v7103
          %v7866 = vunpack.c.h.b16 %v7103
          %v7867 = vunpack.c.l.b16 %v7104
          %v7868 = vunpack.c.h.b16 %v7104
          %v7869 = vunpack.c.l.b16 %v7105
          %v7870 = vunpack.c.h.b16 %v7105
          %v7871 = vunpack.c.l.b16 %v7106
          %v7872 = vunpack.c.h.b16 %v7106
          %v7873 = vunpack.c.l.b16 %v7107
          %v7874 = vunpack.c.h.b16 %v7107
          %v7875 = vunpack.c.l.b16 %v7108
          %v7876 = vunpack.c.h.b16 %v7108
          %v7877 = vunpack.c.l.b16 %v7109
          %v7878 = vunpack.c.h.b16 %v7109
          %v7879 = vunpack.c.l.b16 %v7110
          %v7880 = vunpack.c.h.b16 %v7110
          %v7881 = vunpack.c.l.b16 %v7111
          %v7882 = vunpack.c.h.b16 %v7111
          %v7883 = vunpack.c.l.b16 %v7112
          %v7884 = vunpack.c.h.b16 %v7112
          %v7885 = vunpack.c.l.b16 %v7113
          %v7886 = vunpack.c.h.b16 %v7113
          %v7887 = vunpack.c.l.b16 %v7114
          %v7888 = vunpack.c.h.b16 %v7114
          %v7889 = vunpack.c.l.b16 %v7115
          %v7890 = vunpack.c.h.b16 %v7115
          %v7891 = vunpack.c.l.b16 %v7116
          %v7892 = vunpack.c.h.b16 %v7116
          %v7893 = vunpack.c.l.b16 %v7117
          %v7894 = vunpack.c.h.b16 %v7117
          %v7895 = vunpack.c.l.b16 %v7118
          %v7896 = vunpack.c.h.b16 %v7118
          %v7897 = vunpack.c.l.b16 %v7119
          %v7898 = vunpack.c.h.b16 %v7119
          %v7899 = vunpack.c.l.b16 %v7120
          %v7900 = vunpack.c.h.b16 %v7120
          %v7901 = vunpack.c.l.b16 %v7121
          %v7902 = vunpack.c.h.b16 %v7121
          %v7903 = vunpack.c.l.b16 %v7122
          %v7904 = vunpack.c.h.b16 %v7122
          %v7905 = vunpack.c.l.b16 %v7123
          %v7906 = vunpack.c.h.b16 %v7123
          %v7907 = vunpack.c.l.b16 %v7124
          %v7908 = vunpack.c.h.b16 %v7124
          %v7909 = vunpack.c.l.b16 %v7125
          %v7910 = vunpack.c.h.b16 %v7125
          %v7911 = vunpack.c.l.b16 %v7126
          %v7912 = vunpack.c.h.b16 %v7126
          %v7913 = vunpack.c.l.b16 %v7127
          %v7914 = vunpack.c.h.b16 %v7127
          %v7915 = vunpack.c.l.b16 %v7128
          %v7916 = vunpack.c.h.b16 %v7128
          %v7917 = vunpack.c.l.b16 %v7129
          %v7918 = vunpack.c.h.b16 %v7129
          %v7919 = vunpack.c.l.b16 %v7130
          %v7920 = vunpack.c.h.b16 %v7130
          %v7921 = vpack.c.b16 %v7413, %v7409
          %v7922 = vpack.c.b16 %v7414, %v7410
          %v7923 = vpack.c.b16 %v7415, %v7411
          %v7924 = vpack.c.b16 %v7416, %v7412
          %v7925 = vpack.c.b16 %v7421, %v7417
          %v7926 = vpack.c.b16 %v7422, %v7418
          %v7927 = vpack.c.b16 %v7423, %v7419
          %v7928 = vpack.c.b16 %v7424, %v7420
          %v7929 = vpack.c.b16 %v7429, %v7425
          %v7930 = vpack.c.b16 %v7430, %v7426
          %v7931 = vpack.c.b16 %v7431, %v7427
          %v7932 = vpack.c.b16 %v7432, %v7428
          %v7933 = vpack.c.b16 %v7437, %v7433
          %v7934 = vpack.c.b16 %v7438, %v7434
          %v7935 = vpack.c.b16 %v7439, %v7435
          %v7936 = vpack.c.b16 %v7440, %v7436
          %v7937 = vpack.c.b16 %v7445, %v7441
          %v7938 = vpack.c.b16 %v7446, %v7442
          %v7939 = vpack.c.b16 %v7447, %v7443
          %v7940 = vpack.c.b16 %v7448, %v7444
          %v7941 = vpack.c.b16 %v7453, %v7449
          %v7942 = vpack.c.b16 %v7454, %v7450
          %v7943 = vpack.c.b16 %v7455, %v7451
          %v7944 = vpack.c.b16 %v7456, %v7452
          %v7945 = vpack.c.b16 %v7461, %v7457
          %v7946 = vpack.c.b16 %v7462, %v7458
          %v7947 = vpack.c.b16 %v7463, %v7459
          %v7948 = vpack.c.b16 %v7464, %v7460
          %v7949 = vpack.c.b16 %v7469, %v7465
          %v7950 = vpack.c.b16 %v7470, %v7466
          %v7951 = vpack.c.b16 %v7471, %v7467
          %v7952 = vpack.c.b16 %v7472, %v7468
          %v7953 = vpack.c.b16 %v7477, %v7473
          %v7954 = vpack.c.b16 %v7478, %v7474
          %v7955 = vpack.c.b16 %v7479, %v7475
          %v7956 = vpack.c.b16 %v7480, %v7476
          %v7957 = vpack.c.b16 %v7485, %v7481
          %v7958 = vpack.c.b16 %v7486, %v7482
          %v7959 = vpack.c.b16 %v7487, %v7483
          %v7960 = vpack.c.b16 %v7488, %v7484
          %v7961 = vpack.c.b16 %v7493, %v7489
          %v7962 = vpack.c.b16 %v7494, %v7490
          %v7963 = vpack.c.b16 %v7495, %v7491
          %v7964 = vpack.c.b16 %v7496, %v7492
          %v7965 = vpack.c.b16 %v7501, %v7497
          %v7966 = vpack.c.b16 %v7502, %v7498
          %v7967 = vpack.c.b16 %v7503, %v7499
          %v7968 = vpack.c.b16 %v7504, %v7500
          %v7969 = vpack.c.b16 %v7509, %v7505
          %v7970 = vpack.c.b16 %v7510, %v7506
          %v7971 = vpack.c.b16 %v7511, %v7507
          %v7972 = vpack.c.b16 %v7512, %v7508
          %v7973 = vpack.c.b16 %v7517, %v7513
          %v7974 = vpack.c.b16 %v7518, %v7514
          %v7975 = vpack.c.b16 %v7519, %v7515
          %v7976 = vpack.c.b16 %v7520, %v7516
          %v7977 = vpack.c.b16 %v7525, %v7521
          %v7978 = vpack.c.b16 %v7526, %v7522
          %v7979 = vpack.c.b16 %v7527, %v7523
          %v7980 = vpack.c.b16 %v7528, %v7524
          %v7981 = vpack.c.b16 %v7533, %v7529
          %v7982 = vpack.c.b16 %v7534, %v7530
          %v7983 = vpack.c.b16 %v7535, %v7531
          %v7984 = vpack.c.b16 %v7536, %v7532
          %v7985 = vpack.c.b16 %v7541, %v7537
          %v7986 = vpack.c.b16 %v7542, %v7538
          %v7987 = vpack.c.b16 %v7543, %v7539
          %v7988 = vpack.c.b16 %v7544, %v7540
          %v7989 = vpack.c.b16 %v7549, %v7545
          %v7990 = vpack.c.b16 %v7550, %v7546
          %v7991 = vpack.c.b16 %v7551, %v7547
          %v7992 = vpack.c.b16 %v7552, %v7548
          %v7993 = vpack.c.b16 %v7557, %v7553
          %v7994 = vpack.c.b16 %v7558, %v7554
          %v7995 = vpack.c.b16 %v7559, %v7555
          %v7996 = vpack.c.b16 %v7560, %v7556
          %v7997 = vpack.c.b16 %v7565, %v7561
          %v7998 = vpack.c.b16 %v7566, %v7562
          %v7999 = vpack.c.b16 %v7567, %v7563
          %v8000 = vpack.c.b16 %v7568, %v7564
          %v8001 = vpack.c.b16 %v7573, %v7569
          %v8002 = vpack.c.b16 %v7574, %v7570
          %v8003 = vpack.c.b16 %v7575, %v7571
          %v8004 = vpack.c.b16 %v7576, %v7572
          %v8005 = vpack.c.b16 %v7581, %v7577
          %v8006 = vpack.c.b16 %v7582, %v7578
          %v8007 = vpack.c.b16 %v7583, %v7579
          %v8008 = vpack.c.b16 %v7584, %v7580
          %v8009 = vpack.c.b16 %v7589, %v7585
          %v8010 = vpack.c.b16 %v7590, %v7586
          %v8011 = vpack.c.b16 %v7591, %v7587
          %v8012 = vpack.c.b16 %v7592, %v7588
          %v8013 = vpack.c.b16 %v7597, %v7593
          %v8014 = vpack.c.b16 %v7598, %v7594
          %v8015 = vpack.c.b16 %v7599, %v7595
          %v8016 = vpack.c.b16 %v7600, %v7596
          %v8017 = vpack.c.b16 %v7605, %v7601
          %v8018 = vpack.c.b16 %v7606, %v7602
          %v8019 = vpack.c.b16 %v7607, %v7603
          %v8020 = vpack.c.b16 %v7608, %v7604
          %v8021 = vpack.c.b16 %v7613, %v7609
          %v8022 = vpack.c.b16 %v7614, %v7610
          %v8023 = vpack.c.b16 %v7615, %v7611
          %v8024 = vpack.c.b16 %v7616, %v7612
          %v8025 = vpack.c.b16 %v7621, %v7617
          %v8026 = vpack.c.b16 %v7622, %v7618
          %v8027 = vpack.c.b16 %v7623, %v7619
          %v8028 = vpack.c.b16 %v7624, %v7620
          %v8029 = vpack.c.b16 %v7629, %v7625
          %v8030 = vpack.c.b16 %v7630, %v7626
          %v8031 = vpack.c.b16 %v7631, %v7627
          %v8032 = vpack.c.b16 %v7632, %v7628
          %v8033 = vpack.c.b16 %v7637, %v7633
          %v8034 = vpack.c.b16 %v7638, %v7634
          %v8035 = vpack.c.b16 %v7639, %v7635
          %v8036 = vpack.c.b16 %v7640, %v7636
          %v8037 = vpack.c.b16 %v7645, %v7641
          %v8038 = vpack.c.b16 %v7646, %v7642
          %v8039 = vpack.c.b16 %v7647, %v7643
          %v8040 = vpack.c.b16 %v7648, %v7644
          %v8041 = vpack.c.b16 %v7653, %v7649
          %v8042 = vpack.c.b16 %v7654, %v7650
          %v8043 = vpack.c.b16 %v7655, %v7651
          %v8044 = vpack.c.b16 %v7656, %v7652
          %v8045 = vpack.c.b16 %v7661, %v7657
          %v8046 = vpack.c.b16 %v7662, %v7658
          %v8047 = vpack.c.b16 %v7663, %v7659
          %v8048 = vpack.c.b16 %v7664, %v7660
          %v8049 = vpack.c.b16 %v7669, %v7665
          %v8050 = vpack.c.b16 %v7670, %v7666
          %v8051 = vpack.c.b16 %v7671, %v7667
          %v8052 = vpack.c.b16 %v7672, %v7668
          %v8053 = vpack.c.b16 %v7677, %v7673
          %v8054 = vpack.c.b16 %v7678, %v7674
          %v8055 = vpack.c.b16 %v7679, %v7675
          %v8056 = vpack.c.b16 %v7680, %v7676
          %v8057 = vpack.c.b16 %v7685, %v7681
          %v8058 = vpack.c.b16 %v7686, %v7682
          %v8059 = vpack.c.b16 %v7687, %v7683
          %v8060 = vpack.c.b16 %v7688, %v7684
          %v8061 = vpack.c.b16 %v7693, %v7689
          %v8062 = vpack.c.b16 %v7694, %v7690
          %v8063 = vpack.c.b16 %v7695, %v7691
          %v8064 = vpack.c.b16 %v7696, %v7692
          %v8065 = vpack.c.b16 %v7701, %v7697
          %v8066 = vpack.c.b16 %v7702, %v7698
          %v8067 = vpack.c.b16 %v7703, %v7699
          %v8068 = vpack.c.b16 %v7704, %v7700
          %v8069 = vpack.c.b16 %v7709, %v7705
          %v8070 = vpack.c.b16 %v7710, %v7706
          %v8071 = vpack.c.b16 %v7711, %v7707
          %v8072 = vpack.c.b16 %v7712, %v7708
          %v8073 = vpack.c.b16 %v7717, %v7713
          %v8074 = vpack.c.b16 %v7718, %v7714
          %v8075 = vpack.c.b16 %v7719, %v7715
          %v8076 = vpack.c.b16 %v7720, %v7716
          %v8077 = vpack.c.b16 %v7725, %v7721
          %v8078 = vpack.c.b16 %v7726, %v7722
          %v8079 = vpack.c.b16 %v7727, %v7723
          %v8080 = vpack.c.b16 %v7728, %v7724
          %v8081 = vpack.c.b16 %v7733, %v7729
          %v8082 = vpack.c.b16 %v7734, %v7730
          %v8083 = vpack.c.b16 %v7735, %v7731
          %v8084 = vpack.c.b16 %v7736, %v7732
          %v8085 = vpack.c.b16 %v7741, %v7737
          %v8086 = vpack.c.b16 %v7742, %v7738
          %v8087 = vpack.c.b16 %v7743, %v7739
          %v8088 = vpack.c.b16 %v7744, %v7740
          %v8089 = vpack.c.b16 %v7749, %v7745
          %v8090 = vpack.c.b16 %v7750, %v7746
          %v8091 = vpack.c.b16 %v7751, %v7747
          %v8092 = vpack.c.b16 %v7752, %v7748
          %v8093 = vpack.c.b16 %v7757, %v7753
          %v8094 = vpack.c.b16 %v7758, %v7754
          %v8095 = vpack.c.b16 %v7759, %v7755
          %v8096 = vpack.c.b16 %v7760, %v7756
          %v8097 = vpack.c.b16 %v7765, %v7761
          %v8098 = vpack.c.b16 %v7766, %v7762
          %v8099 = vpack.c.b16 %v7767, %v7763
          %v8100 = vpack.c.b16 %v7768, %v7764
          %v8101 = vpack.c.b16 %v7773, %v7769
          %v8102 = vpack.c.b16 %v7774, %v7770
          %v8103 = vpack.c.b16 %v7775, %v7771
          %v8104 = vpack.c.b16 %v7776, %v7772
          %v8105 = vpack.c.b16 %v7781, %v7777
          %v8106 = vpack.c.b16 %v7782, %v7778
          %v8107 = vpack.c.b16 %v7783, %v7779
          %v8108 = vpack.c.b16 %v7784, %v7780
          %v8109 = vpack.c.b16 %v7789, %v7785
          %v8110 = vpack.c.b16 %v7790, %v7786
          %v8111 = vpack.c.b16 %v7791, %v7787
          %v8112 = vpack.c.b16 %v7792, %v7788
          %v8113 = vpack.c.b16 %v7797, %v7793
          %v8114 = vpack.c.b16 %v7798, %v7794
          %v8115 = vpack.c.b16 %v7799, %v7795
          %v8116 = vpack.c.b16 %v7800, %v7796
          %v8117 = vpack.c.b16 %v7805, %v7801
          %v8118 = vpack.c.b16 %v7806, %v7802
          %v8119 = vpack.c.b16 %v7807, %v7803
          %v8120 = vpack.c.b16 %v7808, %v7804
          %v8121 = vpack.c.b16 %v7813, %v7809
          %v8122 = vpack.c.b16 %v7814, %v7810
          %v8123 = vpack.c.b16 %v7815, %v7811
          %v8124 = vpack.c.b16 %v7816, %v7812
          %v8125 = vpack.c.b16 %v7821, %v7817
          %v8126 = vpack.c.b16 %v7822, %v7818
          %v8127 = vpack.c.b16 %v7823, %v7819
          %v8128 = vpack.c.b16 %v7824, %v7820
          %v8129 = vpack.c.b16 %v7829, %v7825
          %v8130 = vpack.c.b16 %v7830, %v7826
          %v8131 = vpack.c.b16 %v7831, %v7827
          %v8132 = vpack.c.b16 %v7832, %v7828
          %v8133 = vpack.c.b16 %v7837, %v7833
          %v8134 = vpack.c.b16 %v7838, %v7834
          %v8135 = vpack.c.b16 %v7839, %v7835
          %v8136 = vpack.c.b16 %v7840, %v7836
          %v8137 = vpack.c.b16 %v7845, %v7841
          %v8138 = vpack.c.b16 %v7846, %v7842
          %v8139 = vpack.c.b16 %v7847, %v7843
          %v8140 = vpack.c.b16 %v7848, %v7844
          %v8141 = vpack.c.b16 %v7853, %v7849
          %v8142 = vpack.c.b16 %v7854, %v7850
          %v8143 = vpack.c.b16 %v7855, %v7851
          %v8144 = vpack.c.b16 %v7856, %v7852
          %v8145 = vpack.c.b16 %v7861, %v7857
          %v8146 = vpack.c.b16 %v7862, %v7858
          %v8147 = vpack.c.b16 %v7863, %v7859
          %v8148 = vpack.c.b16 %v7864, %v7860
          %v8149 = vpack.c.b16 %v7869, %v7865
          %v8150 = vpack.c.b16 %v7870, %v7866
          %v8151 = vpack.c.b16 %v7871, %v7867
          %v8152 = vpack.c.b16 %v7872, %v7868
          %v8153 = vpack.c.b16 %v7877, %v7873
          %v8154 = vpack.c.b16 %v7878, %v7874
          %v8155 = vpack.c.b16 %v7879, %v7875
          %v8156 = vpack.c.b16 %v7880, %v7876
          %v8157 = vpack.c.b16 %v7885, %v7881
          %v8158 = vpack.c.b16 %v7886, %v7882
          %v8159 = vpack.c.b16 %v7887, %v7883
          %v8160 = vpack.c.b16 %v7888, %v7884
          %v8161 = vpack.c.b16 %v7893, %v7889
          %v8162 = vpack.c.b16 %v7894, %v7890
          %v8163 = vpack.c.b16 %v7895, %v7891
          %v8164 = vpack.c.b16 %v7896, %v7892
          %v8165 = vpack.c.b16 %v7901, %v7897
          %v8166 = vpack.c.b16 %v7902, %v7898
          %v8167 = vpack.c.b16 %v7903, %v7899
          %v8168 = vpack.c.b16 %v7904, %v7900
          %v8169 = vpack.c.b16 %v7909, %v7905
          %v8170 = vpack.c.b16 %v7910, %v7906
          %v8171 = vpack.c.b16 %v7911, %v7907
          %v8172 = vpack.c.b16 %v7912, %v7908
          %v8173 = vpack.c.b16 %v7917, %v7913
          %v8174 = vpack.c.b16 %v7918, %v7914
          %v8175 = vpack.c.b16 %v7919, %v7915
          %v8176 = vpack.c.b16 %v7920, %v7916
          %8433 = vmatprep.subr.bf16.mxu0 %v7922
          %8434 = vmatpush1.bf16.msra.mxu0 %v7921
          %8435 = vmatprep.subr.bf16.mxu0 %v7926
          %8436 = vmatpush1.bf16.msra.mxu0 %v7925
          %8437 = vmatprep.subr.bf16.mxu0 %v7930
          %8438 = vmatpush1.bf16.msra.mxu0 %v7929
          %8439 = vmatprep.subr.bf16.mxu0 %v7934
          %8440 = vmatpush1.bf16.msra.mxu0 %v7933
          %8441 = vmatprep.subr.bf16.mxu0 %v7938
          %8442 = vmatpush1.bf16.msra.mxu0 %v7937
          %8443 = vmatprep.subr.bf16.mxu0 %v7942
          %8444 = vmatpush1.bf16.msra.mxu0 %v7941
          %8445 = vmatprep.subr.bf16.mxu0 %v7946
          %8446 = vmatpush1.bf16.msra.mxu0 %v7945
          %8447 = vmatprep.subr.bf16.mxu0 %v7950
          %8448 = vmatpush1.bf16.msra.mxu0 %v7949
          %8449 = vmatprep.subr.bf16.mxu0 %v7954
          %8450 = vmatpush1.bf16.msra.mxu0 %v7953
          %8451 = vmatprep.subr.bf16.mxu0 %v7958
          %8452 = vmatpush1.bf16.msra.mxu0 %v7957
          %8453 = vmatprep.subr.bf16.mxu0 %v7962
          %8454 = vmatpush1.bf16.msra.mxu0 %v7961
          %8455 = vmatprep.subr.bf16.mxu0 %v7966
          %8456 = vmatpush1.bf16.msra.mxu0 %v7965
          %8457 = vmatprep.subr.bf16.mxu0 %v7970
          %8458 = vmatpush1.bf16.msra.mxu0 %v7969
          %8459 = vmatprep.subr.bf16.mxu0 %v7974
          %8460 = vmatpush1.bf16.msra.mxu0 %v7973
          %8461 = vmatprep.subr.bf16.mxu0 %v7978
          %8462 = vmatpush1.bf16.msra.mxu0 %v7977
          %8463 = vmatprep.subr.bf16.mxu0 %v7982
          %8464 = vmatpush1.bf16.msra.mxu0 %v7981
          %8465 = vmatprep.mubr.bf16.mxu0 %v6868
          %8466 = vmatmul.mubr.bf16.gmra.mrb[0].mxu0 %v6867
          %v8467 = vpop.f32.mrb[0].mxu0
          %v8468 = vadd.f32 %v7136, %v8467
          %v8469 = vpop.f32.mrb[0].mxu0
          %v8470 = vadd.f32 %v7140, %v8469
          %v8471 = vpop.f32.mrb[0].mxu0
          %v8472 = vpop.f32.mrb[0].mxu0
          %8473 = vdwg.mxu0
          %8474 = vmatprep.subr.bf16.mxu0 %v7986
          %8475 = vmatpush1.bf16.msra.mxu0 %v7985
          %8476 = vmatprep.subr.bf16.mxu0 %v7990
          %8477 = vmatpush1.bf16.msra.mxu0 %v7989
          %8478 = vmatprep.subr.bf16.mxu0 %v7994
          %8479 = vmatpush1.bf16.msra.mxu0 %v7993
          %8480 = vmatprep.subr.bf16.mxu0 %v7998
          %8481 = vmatpush1.bf16.msra.mxu0 %v7997
          %8482 = vmatprep.subr.bf16.mxu0 %v8002
          %8483 = vmatpush1.bf16.msra.mxu0 %v8001
          %8484 = vmatprep.subr.bf16.mxu0 %v8006
          %8485 = vmatpush1.bf16.msra.mxu0 %v8005
          %8486 = vmatprep.subr.bf16.mxu0 %v8010
          %8487 = vmatpush1.bf16.msra.mxu0 %v8009
          %8488 = vmatprep.subr.bf16.mxu0 %v8014
          %8489 = vmatpush1.bf16.msra.mxu0 %v8013
          %8490 = vmatprep.subr.bf16.mxu0 %v8018
          %8491 = vmatpush1.bf16.msra.mxu0 %v8017
          %8492 = vmatprep.subr.bf16.mxu0 %v8022
          %8493 = vmatpush1.bf16.msra.mxu0 %v8021
          %8494 = vmatprep.subr.bf16.mxu0 %v8026
          %8495 = vmatpush1.bf16.msra.mxu0 %v8025
          %8496 = vmatprep.subr.bf16.mxu0 %v8030
          %8497 = vmatpush1.bf16.msra.mxu0 %v8029
          %8498 = vmatprep.subr.bf16.mxu0 %v8034
          %8499 = vmatpush1.bf16.msra.mxu0 %v8033
          %8500 = vmatprep.subr.bf16.mxu0 %v8038
          %8501 = vmatpush1.bf16.msra.mxu0 %v8037
          %8502 = vmatprep.subr.bf16.mxu0 %v8042
          %8503 = vmatpush1.bf16.msra.mxu0 %v8041
          %8504 = vmatprep.subr.bf16.mxu0 %v8046
          %8505 = vmatpush1.bf16.msra.mxu0 %v8045
          %8506 = vmatprep.mubr.bf16.mxu0 %v6870
          %8507 = vmatmul.mubr.bf16.gmra.mrb[0].mxu0 %v6869
          %v8508 = vpop.f32.mrb[0].mxu0
          %v8509 = vadd.f32 %v8468, %v8508
          %v8510 = vpop.f32.mrb[0].mxu0
          %v8511 = vadd.f32 %v8470, %v8510
          %v8512 = vpop.f32.mrb[0].mxu0
          %v8513 = vpop.f32.mrb[0].mxu0
          %8514 = vdwg.mxu0
          %8515 = vmatprep.subr.bf16.mxu0 %v8050
          %8516 = vmatpush1.bf16.msra.mxu0 %v8049
          %8517 = vmatprep.subr.bf16.mxu0 %v8054
          %8518 = vmatpush1.bf16.msra.mxu0 %v8053
          %8519 = vmatprep.subr.bf16.mxu0 %v8058
          %8520 = vmatpush1.bf16.msra.mxu0 %v8057
          %8521 = vmatprep.subr.bf16.mxu0 %v8062
          %8522 = vmatpush1.bf16.msra.mxu0 %v8061
          %8523 = vmatprep.subr.bf16.mxu0 %v8066
          %8524 = vmatpush1.bf16.msra.mxu0 %v8065
          %8525 = vmatprep.subr.bf16.mxu0 %v8070
          %8526 = vmatpush1.bf16.msra.mxu0 %v8069
          %8527 = vmatprep.subr.bf16.mxu0 %v8074
          %8528 = vmatpush1.bf16.msra.mxu0 %v8073
          %8529 = vmatprep.subr.bf16.mxu0 %v8078
          %8530 = vmatpush1.bf16.msra.mxu0 %v8077
          %8531 = vmatprep.subr.bf16.mxu0 %v8082
          %8532 = vmatpush1.bf16.msra.mxu0 %v8081
          %8533 = vmatprep.subr.bf16.mxu0 %v8086
          %8534 = vmatpush1.bf16.msra.mxu0 %v8085
          %8535 = vmatprep.subr.bf16.mxu0 %v8090
          %8536 = vmatpush1.bf16.msra.mxu0 %v8089
          %8537 = vmatprep.subr.bf16.mxu0 %v8094
          %8538 = vmatpush1.bf16.msra.mxu0 %v8093
          %8539 = vmatprep.subr.bf16.mxu0 %v8098
          %8540 = vmatpush1.bf16.msra.mxu0 %v8097
          %8541 = vmatprep.subr.bf16.mxu0 %v8102
          %8542 = vmatpush1.bf16.msra.mxu0 %v8101
          %8543 = vmatprep.subr.bf16.mxu0 %v8106
          %8544 = vmatpush1.bf16.msra.mxu0 %v8105
          %8545 = vmatprep.subr.bf16.mxu0 %v8110
          %8546 = vmatpush1.bf16.msra.mxu0 %v8109
          %8547 = vmatprep.mubr.bf16.mxu0 %v6872
          %8548 = vmatmul.mubr.bf16.gmra.mrb[0].mxu0 %v6871
          %v8549 = vpop.f32.mrb[0].mxu0
          %v8550 = vadd.f32 %v8509, %v8549
          %v8551 = vpop.f32.mrb[0].mxu0
          %v8552 = vadd.f32 %v8511, %v8551
          %v8553 = vpop.f32.mrb[0].mxu0
          %v8554 = vpop.f32.mrb[0].mxu0
          %8555 = vdwg.mxu0
          %8556 = vmatprep.subr.bf16.mxu0 %v8114
          %8557 = vmatpush1.bf16.msra.mxu0 %v8113
          %8558 = vmatprep.subr.bf16.mxu0 %v8118
          %8559 = vmatpush1.bf16.msra.mxu0 %v8117
          %8560 = vmatprep.subr.bf16.mxu0 %v8122
          %8561 = vmatpush1.bf16.msra.mxu0 %v8121
          %8562 = vmatprep.subr.bf16.mxu0 %v8126
          %8563 = vmatpush1.bf16.msra.mxu0 %v8125
          %8564 = vmatprep.subr.bf16.mxu0 %v8130
          %8565 = vmatpush1.bf16.msra.mxu0 %v8129
          %8566 = vmatprep.subr.bf16.mxu0 %v8134
          %8567 = vmatpush1.bf16.msra.mxu0 %v8133
          %8568 = vmatprep.subr.bf16.mxu0 %v8138
          %8569 = vmatpush1.bf16.msra.mxu0 %v8137
          %8570 = vmatprep.subr.bf16.mxu0 %v8142
          %8571 = vmatpush1.bf16.msra.mxu0 %v8141
          %8572 = vmatprep.subr.bf16.mxu0 %v8146
          %8573 = vmatpush1.bf16.msra.mxu0 %v8145
          %8574 = vmatprep.subr.bf16.mxu0 %v8150
          %8575 = vmatpush1.bf16.msra.mxu0 %v8149
          %8576 = vmatprep.subr.bf16.mxu0 %v8154
          %8577 = vmatpush1.bf16.msra.mxu0 %v8153
          %8578 = vmatprep.subr.bf16.mxu0 %v8158
          %8579 = vmatpush1.bf16.msra.mxu0 %v8157
          %8580 = vmatprep.subr.bf16.mxu0 %v8162
          %8581 = vmatpush1.bf16.msra.mxu0 %v8161
          %8582 = vmatprep.subr.bf16.mxu0 %v8166
          %8583 = vmatpush1.bf16.msra.mxu0 %v8165
          %8584 = vmatprep.subr.bf16.mxu0 %v8170
          %8585 = vmatpush1.bf16.msra.mxu0 %v8169
          %8586 = vmatprep.subr.bf16.mxu0 %v8174
          %8587 = vmatpush1.bf16.msra.mxu0 %v8173
          %8588 = vmatprep.mubr.bf16.mxu0 %v6874
          %8589 = vmatmul.mubr.bf16.gmra.mrb[0].mxu0 %v6873
          %v8590 = vpop.f32.mrb[0].mxu0
          %v8591 = vadd.f32 %v8550, %v8590
          %v8592 = vpop.f32.mrb[0].mxu0
          %v8593 = vadd.f32 %v8552, %v8592
          %v8594 = vpop.f32.mrb[0].mxu0
          %v8595 = vpop.f32.mrb[0].mxu0
          %8596 = vdwg.mxu0
          %8597 = vmatprep.subr.bf16.mxu0 %v7924
          %8598 = vmatpush1.bf16.msra.mxu0 %v7923
          %8599 = vmatprep.subr.bf16.mxu0 %v7928
          %8600 = vmatpush1.bf16.msra.mxu0 %v7927
          %8601 = vmatprep.subr.bf16.mxu0 %v7932
          %8602 = vmatpush1.bf16.msra.mxu0 %v7931
          %8603 = vmatprep.subr.bf16.mxu0 %v7936
          %8604 = vmatpush1.bf16.msra.mxu0 %v7935
          %8605 = vmatprep.subr.bf16.mxu0 %v7940
          %8606 = vmatpush1.bf16.msra.mxu0 %v7939
          %8607 = vmatprep.subr.bf16.mxu0 %v7944
          %8608 = vmatpush1.bf16.msra.mxu0 %v7943
          %8609 = vmatprep.subr.bf16.mxu0 %v7948
          %8610 = vmatpush1.bf16.msra.mxu0 %v7947
          %8611 = vmatprep.subr.bf16.mxu0 %v7952
          %8612 = vmatpush1.bf16.msra.mxu0 %v7951
          %8613 = vmatprep.subr.bf16.mxu0 %v7956
          %8614 = vmatpush1.bf16.msra.mxu0 %v7955
          %8615 = vmatprep.subr.bf16.mxu0 %v7960
          %8616 = vmatpush1.bf16.msra.mxu0 %v7959
          %8617 = vmatprep.subr.bf16.mxu0 %v7964
          %8618 = vmatpush1.bf16.msra.mxu0 %v7963
          %8619 = vmatprep.subr.bf16.mxu0 %v7968
          %8620 = vmatpush1.bf16.msra.mxu0 %v7967
          %8621 = vmatprep.subr.bf16.mxu0 %v7972
          %8622 = vmatpush1.bf16.msra.mxu0 %v7971
          %8623 = vmatprep.subr.bf16.mxu0 %v7976
          %8624 = vmatpush1.bf16.msra.mxu0 %v7975
          %8625 = vmatprep.subr.bf16.mxu0 %v7980
          %8626 = vmatpush1.bf16.msra.mxu0 %v7979
          %8627 = vmatprep.subr.bf16.mxu0 %v7984
          %8628 = vmatpush1.bf16.msra.mxu0 %v7983
          %8629 = vmatprep.mubr.bf16.mxu0 %v6868
          %8630 = vmatmul.mubr.bf16.gmra.mrb[0].mxu0 %v6867
          %v8631 = vpop.f32.mrb[0].mxu0
          %v8632 = vadd.f32 %v7144, %v8631
          %v8633 = vpop.f32.mrb[0].mxu0
          %v8634 = vadd.f32 %v7148, %v8633
          %v8635 = vpop.f32.mrb[0].mxu0
          %v8636 = vpop.f32.mrb[0].mxu0
          %8637 = vdwg.mxu0
          %8638 = vmatprep.subr.bf16.mxu0 %v7988
          %8639 = vmatpush1.bf16.msra.mxu0 %v7987
          %8640 = vmatprep.subr.bf16.mxu0 %v7992
          %8641 = vmatpush1.bf16.msra.mxu0 %v7991
          %8642 = vmatprep.subr.bf16.mxu0 %v7996
          %8643 = vmatpush1.bf16.msra.mxu0 %v7995
          %8644 = vmatprep.subr.bf16.mxu0 %v8000
          %8645 = vmatpush1.bf16.msra.mxu0 %v7999
          %8646 = vmatprep.subr.bf16.mxu0 %v8004
          %8647 = vmatpush1.bf16.msra.mxu0 %v8003
          %8648 = vmatprep.subr.bf16.mxu0 %v8008
          %8649 = vmatpush1.bf16.msra.mxu0 %v8007
          %8650 = vmatprep.subr.bf16.mxu0 %v8012
          %8651 = vmatpush1.bf16.msra.mxu0 %v8011
          %8652 = vmatprep.subr.bf16.mxu0 %v8016
          %8653 = vmatpush1.bf16.msra.mxu0 %v8015
          %8654 = vmatprep.subr.bf16.mxu0 %v8020
          %8655 = vmatpush1.bf16.msra.mxu0 %v8019
          %8656 = vmatprep.subr.bf16.mxu0 %v8024
          %8657 = vmatpush1.bf16.msra.mxu0 %v8023
          %8658 = vmatprep.subr.bf16.mxu0 %v8028
          %8659 = vmatpush1.bf16.msra.mxu0 %v8027
          %8660 = vmatprep.subr.bf16.mxu0 %v8032
          %8661 = vmatpush1.bf16.msra.mxu0 %v8031
          %8662 = vmatprep.subr.bf16.mxu0 %v8036
          %8663 = vmatpush1.bf16.msra.mxu0 %v8035
          %8664 = vmatprep.subr.bf16.mxu0 %v8040
          %8665 = vmatpush1.bf16.msra.mxu0 %v8039
          %8666 = vmatprep.subr.bf16.mxu0 %v8044
          %8667 = vmatpush1.bf16.msra.mxu0 %v8043
          %8668 = vmatprep.subr.bf16.mxu0 %v8048
          %8669 = vmatpush1.bf16.msra.mxu0 %v8047
          %8670 = vmatprep.mubr.bf16.mxu0 %v6870
          %8671 = vmatmul.mubr.bf16.gmra.mrb[0].mxu0 %v6869
          %v8672 = vpop.f32.mrb[0].mxu0
          %v8673 = vadd.f32 %v8632, %v8672
          %v8674 = vpop.f32.mrb[0].mxu0
          %v8675 = vadd.f32 %v8634, %v8674
          %v8676 = vpop.f32.mrb[0].mxu0
          %v8677 = vpop.f32.mrb[0].mxu0
          %8678 = vdwg.mxu0
          %8679 = vmatprep.subr.bf16.mxu0 %v8052
          %8680 = vmatpush1.bf16.msra.mxu0 %v8051
          %8681 = vmatprep.subr.bf16.mxu0 %v8056
          %8682 = vmatpush1.bf16.msra.mxu0 %v8055
          %8683 = vmatprep.subr.bf16.mxu0 %v8060
          %8684 = vmatpush1.bf16.msra.mxu0 %v8059
          %8685 = vmatprep.subr.bf16.mxu0 %v8064
          %8686 = vmatpush1.bf16.msra.mxu0 %v8063
          %8687 = vmatprep.subr.bf16.mxu0 %v8068
          %8688 = vmatpush1.bf16.msra.mxu0 %v8067
          %8689 = vmatprep.subr.bf16.mxu0 %v8072
          %8690 = vmatpush1.bf16.msra.mxu0 %v8071
          %8691 = vmatprep.subr.bf16.mxu0 %v8076
          %8692 = vmatpush1.bf16.msra.mxu0 %v8075
          %8693 = vmatprep.subr.bf16.mxu0 %v8080
          %8694 = vmatpush1.bf16.msra.mxu0 %v8079
          %8695 = vmatprep.subr.bf16.mxu0 %v8084
          %8696 = vmatpush1.bf16.msra.mxu0 %v8083
          %8697 = vmatprep.subr.bf16.mxu0 %v8088
          %8698 = vmatpush1.bf16.msra.mxu0 %v8087
          %8699 = vmatprep.subr.bf16.mxu0 %v8092
          %8700 = vmatpush1.bf16.msra.mxu0 %v8091
          %8701 = vmatprep.subr.bf16.mxu0 %v8096
          %8702 = vmatpush1.bf16.msra.mxu0 %v8095
          %8703 = vmatprep.subr.bf16.mxu0 %v8100
          %8704 = vmatpush1.bf16.msra.mxu0 %v8099
          %8705 = vmatprep.subr.bf16.mxu0 %v8104
          %8706 = vmatpush1.bf16.msra.mxu0 %v8103
          %8707 = vmatprep.subr.bf16.mxu0 %v8108
          %8708 = vmatpush1.bf16.msra.mxu0 %v8107
          %8709 = vmatprep.subr.bf16.mxu0 %v8112
          %8710 = vmatpush1.bf16.msra.mxu0 %v8111
          %8711 = vmatprep.mubr.bf16.mxu0 %v6872
          %8712 = vmatmul.mubr.bf16.gmra.mrb[0].mxu0 %v6871
          %v8713 = vpop.f32.mrb[0].mxu0
          %v8714 = vadd.f32 %v8673, %v8713
          %v8715 = vpop.f32.mrb[0].mxu0
          %v8716 = vadd.f32 %v8675, %v8715
          %v8717 = vpop.f32.mrb[0].mxu0
          %v8718 = vpop.f32.mrb[0].mxu0
          %8719 = vdwg.mxu0
          %8720 = vmatprep.subr.bf16.mxu0 %v8116
          %8721 = vmatpush1.bf16.msra.mxu0 %v8115
          %8722 = vmatprep.subr.bf16.mxu0 %v8120
          %8723 = vmatpush1.bf16.msra.mxu0 %v8119
          %8724 = vmatprep.subr.bf16.mxu0 %v8124
          %8725 = vmatpush1.bf16.msra.mxu0 %v8123
          %8726 = vmatprep.subr.bf16.mxu0 %v8128
          %8727 = vmatpush1.bf16.msra.mxu0 %v8127
          %8728 = vmatprep.subr.bf16.mxu0 %v8132
          %8729 = vmatpush1.bf16.msra.mxu0 %v8131
          %8730 = vmatprep.subr.bf16.mxu0 %v8136
          %8731 = vmatpush1.bf16.msra.mxu0 %v8135
          %8732 = vmatprep.subr.bf16.mxu0 %v8140
          %8733 = vmatpush1.bf16.msra.mxu0 %v8139
          %8734 = vmatprep.subr.bf16.mxu0 %v8144
          %8735 = vmatpush1.bf16.msra.mxu0 %v8143
          %8736 = vmatprep.subr.bf16.mxu0 %v8148
          %8737 = vmatpush1.bf16.msra.mxu0 %v8147
          %8738 = vmatprep.subr.bf16.mxu0 %v8152
          %8739 = vmatpush1.bf16.msra.mxu0 %v8151
          %8740 = vmatprep.subr.bf16.mxu0 %v8156
          %8741 = vmatpush1.bf16.msra.mxu0 %v8155
          %8742 = vmatprep.subr.bf16.mxu0 %v8160
          %8743 = vmatpush1.bf16.msra.mxu0 %v8159
          %8744 = vmatprep.subr.bf16.mxu0 %v8164
          %8745 = vmatpush1.bf16.msra.mxu0 %v8163
          %8746 = vmatprep.subr.bf16.mxu0 %v8168
          %8747 = vmatpush1.bf16.msra.mxu0 %v8167
          %8748 = vmatprep.subr.bf16.mxu0 %v8172
          %8749 = vmatpush1.bf16.msra.mxu0 %v8171
          %8750 = vmatprep.subr.bf16.mxu0 %v8176
          %8751 = vmatpush1.bf16.msra.mxu0 %v8175
          %8752 = vmatprep.mubr.bf16.mxu0 %v6874
          %8753 = vmatmul.mubr.bf16.gmra.mrb[0].mxu0 %v6873
          %v8754 = vpop.f32.mrb[0].mxu0
          %v8755 = vadd.f32 %v8714, %v8754
          %v8756 = vpop.f32.mrb[0].mxu0
          %v8757 = vadd.f32 %v8716, %v8756
          %v8758 = vpop.f32.mrb[0].mxu0
          %v8759 = vpop.f32.mrb[0].mxu0
          %8760 = vdwg.mxu0
          %v8761 = vld [vmem:[%s863] sm:$0xf]
          %v8762 = vld [vmem:[%s872] sm:$0xf]
          %v8763 = vsel %vm6650, %v8591, 0.0
          %v8764 = vrot.slane %v8763, 4
          %v8765 = vadd.f32 %v8763, %v8764
          %v8766 = vrot.slane %v8765, 2
          %v8767 = vadd.f32 %v8765, %v8766
          %v8768 = vrot.slane %v8767, 1
          %v8769 = vadd.f32 %v8767, %v8768
          %v8770 = vsel %vm6650, %v8593, 0.0
          %v8771 = vrot.slane %v8770, 4
          %v8772 = vadd.f32 %v8770, %v8771
          %v8773 = vrot.slane %v8772, 2
          %v8774 = vadd.f32 %v8772, %v8773
          %v8775 = vrot.slane %v8774, 1
          %v8776 = vadd.f32 %v8774, %v8775
          %v8777 = vsel %vm6650, %v8755, 0.0
          %v8778 = vrot.slane %v8777, 4
          %v8779 = vadd.f32 %v8777, %v8778
          %v8780 = vrot.slane %v8779, 2
          %v8781 = vadd.f32 %v8779, %v8780
          %v8782 = vrot.slane %v8781, 1
          %v8783 = vadd.f32 %v8781, %v8782
          %v8784 = vsel %vm6650, %v8757, 0.0
          %v8785 = vrot.slane %v8784, 4
          %v8786 = vadd.f32 %v8784, %v8785
          %v8787 = vrot.slane %v8786, 2
          %v8788 = vadd.f32 %v8786, %v8787
          %v8789 = vrot.slane %v8788, 1
          %v8790 = vadd.f32 %v8788, %v8789
          %v8791 = vmul.f32 %v8769, %v6679
          %v8792 = vmul.f32 %v8776, %v6679
          %v8793 = vmul.f32 %v8783, %v6679
          %v8794 = vmul.f32 %v8790, %v6679
          %v8795 = vsub.f32 %v8591, %v8791
          %v8796 = vsub.f32 %v8593, %v8792
          %v8797 = vsub.f32 %v8755, %v8793
          %v8798 = vsub.f32 %v8757, %v8794
          %v8799 = vmul.f32 %v8795, %v8795
          %v8800 = vmul.f32 %v8796, %v8796
          %v8801 = vmul.f32 %v8797, %v8797
          %v8802 = vmul.f32 %v8798, %v8798
          %v8803 = vsel %vm6650, %v8799, 0.0
          %v8804 = vrot.slane %v8803, 4
          %v8805 = vadd.f32 %v8803, %v8804
          %v8806 = vrot.slane %v8805, 2
          %v8807 = vadd.f32 %v8805, %v8806
          %v8808 = vrot.slane %v8807, 1
          %v8809 = vadd.f32 %v8807, %v8808
          %v8810 = vsel %vm6650, %v8800, 0.0
          %v8811 = vrot.slane %v8810, 4
          %v8812 = vadd.f32 %v8810, %v8811
          %v8813 = vrot.slane %v8812, 2
          %v8814 = vadd.f32 %v8812, %v8813
          %v8815 = vrot.slane %v8814, 1
          %v8816 = vadd.f32 %v8814, %v8815
          %v8817 = vsel %vm6650, %v8801, 0.0
          %v8818 = vrot.slane %v8817, 4
          %v8819 = vadd.f32 %v8817, %v8818
          %v8820 = vrot.slane %v8819, 2
          %v8821 = vadd.f32 %v8819, %v8820
          %v8822 = vrot.slane %v8821, 1
          %v8823 = vadd.f32 %v8821, %v8822
          %v8824 = vsel %vm6650, %v8802, 0.0
          %v8825 = vrot.slane %v8824, 4
          %v8826 = vadd.f32 %v8824, %v8825
          %v8827 = vrot.slane %v8826, 2
          %v8828 = vadd.f32 %v8826, %v8827
          %v8829 = vrot.slane %v8828, 1
          %v8830 = vadd.f32 %v8828, %v8829
          %v8831 = vmul.f32 %v8809, %v6679
          %v8832 = vmul.f32 %v8816, %v6679
          %v8833 = vmul.f32 %v8823, %v6679
          %v8834 = vmul.f32 %v8830, %v6679
          %v8835 = vadd.f32 %v8831, 1e-05
          %v8836 = vadd.f32 %v8832, 1e-05
          %v8837 = vadd.f32 %v8833, 1e-05
          %v8838 = vadd.f32 %v8834, 1e-05
          %v8839 = vrsqrt.pop %v8835
          %v8840 = vrsqrt.pop %v8836
          %v8841 = vrsqrt.pop %v8837
          %v8842 = vrsqrt.pop %v8838
          %v8843 = vmul.f32 %v8795, %v8839
          %v8844 = vmul.f32 %v8796, %v8840
          %v8845 = vmul.f32 %v8797, %v8841
          %v8846 = vmul.f32 %v8798, %v8842
          %v8848 = vlaneseq
          %v8849 = vshrl.u32 %v8848, 7
          %v8850 = vsub.s32 0, %v8849
          %v8851 = vrot.slane %v8761, %v8850
          %v8852 = vlaneseq
          %v8853 = vshrl.u32 %v8852, 7
          %v8854 = vsub.s32 1, %v8853
          %v8855 = vrot.slane %v8761, %v8854
          %v8856 = vlaneseq
          %v8857 = vshrl.u32 %v8856, 7
          %v8858 = vsub.s32 2, %v8857
          %v8859 = vrot.slane %v8761, %v8858
          %v8860 = vlaneseq
          %v8861 = vshrl.u32 %v8860, 7
          %v8862 = vsub.s32 3, %v8861
          %v8863 = vrot.slane %v8761, %v8862
          %v8868 = vmul.f32 %v8843, %v8851
          %v8869 = vmul.f32 %v8844, %v8855
          %v8870 = vmul.f32 %v8845, %v8859
          %v8871 = vmul.f32 %v8846, %v8863
          %v8873 = vlaneseq
          %v8874 = vshrl.u32 %v8873, 7
          %v8875 = vsub.s32 0, %v8874
          %v8876 = vrot.slane %v8762, %v8875
          %v8877 = vlaneseq
          %v8878 = vshrl.u32 %v8877, 7
          %v8879 = vsub.s32 1, %v8878
          %v8880 = vrot.slane %v8762, %v8879
          %v8881 = vlaneseq
          %v8882 = vshrl.u32 %v8881, 7
          %v8883 = vsub.s32 2, %v8882
          %v8884 = vrot.slane %v8762, %v8883
          %v8885 = vlaneseq
          %v8886 = vshrl.u32 %v8885, 7
          %v8887 = vsub.s32 3, %v8886
          %v8888 = vrot.slane %v8762, %v8887
          %v8893 = vadd.f32 %v8868, %v8876
          %v8894 = vadd.f32 %v8869, %v8880
          %v8895 = vadd.f32 %v8870, %v8884
          %v8896 = vadd.f32 %v8871, %v8888
          %v8897 = vmax.f32 %v8893, 0.0
          %v8898 = vmax.f32 %v8894, 0.0
          %v8899 = vmax.f32 %v8895, 0.0
          %v8900 = vmax.f32 %v8896, 0.0
          %v8901 = vpack.c.bf16 %v8897, %v8897
          %v8902 = vpack.c.bf16 %v8898, %v8898
          %v8903 = vpack.c.bf16 %v8899, %v8899
          %v8904 = vpack.c.bf16 %v8900, %v8900
          %v8905 = vld [vmem:[%s881] sm:$0xff]
          %v8906 = vld [vmem:[%s881 + $0x8] sm:$0xff]
          %v8907 = vld [vmem:[%s881 + $0x10] sm:$0xff]
          %v8908 = vld [vmem:[%s881 + $0x18] sm:$0xff]
          %v8909 = vld [vmem:[%s881 + $0x20] sm:$0xff]
          %v8910 = vld [vmem:[%s881 + $0x28] sm:$0xff]
          %v8911 = vld [vmem:[%s881 + $0x30] sm:$0xff]
          %v8912 = vld [vmem:[%s881 + $0x38] sm:$0xff]
          %v8913 = vld [vmem:[%s881 + $0x40] sm:$0xff]
          %v8914 = vld [vmem:[%s881 + $0x48] sm:$0xff]
          %v8915 = vld [vmem:[%s881 + $0x50] sm:$0xff]
          %v8916 = vld [vmem:[%s881 + $0x58] sm:$0xff]
          %v8917 = vld [vmem:[%s881 + $0x60] sm:$0xff]
          %v8918 = vld [vmem:[%s881 + $0x68] sm:$0xff]
          %v8919 = vld [vmem:[%s881 + $0x70] sm:$0xff]
          %v8920 = vld [vmem:[%s881 + $0x78] sm:$0xff]
          %v8921 = vld [vmem:[%s881 + $0x80] sm:$0xff]
          %v8922 = vld [vmem:[%s881 + $0x88] sm:$0xff]
          %v8923 = vld [vmem:[%s881 + $0x90] sm:$0xff]
          %v8924 = vld [vmem:[%s881 + $0x98] sm:$0xff]
          %v8925 = vld [vmem:[%s881 + $0xa0] sm:$0xff]
          %v8926 = vld [vmem:[%s881 + $0xa8] sm:$0xff]
          %v8927 = vld [vmem:[%s881 + $0xb0] sm:$0xff]
          %v8928 = vld [vmem:[%s881 + $0xb8] sm:$0xff]
          %v8929 = vld [vmem:[%s881 + $0xc0] sm:$0xff]
          %v8930 = vld [vmem:[%s881 + $0xc8] sm:$0xff]
          %v8931 = vld [vmem:[%s881 + $0xd0] sm:$0xff]
          %v8932 = vld [vmem:[%s881 + $0xd8] sm:$0xff]
          %v8933 = vld [vmem:[%s881 + $0xe0] sm:$0xff]
          %v8934 = vld [vmem:[%s881 + $0xe8] sm:$0xff]
          %v8935 = vld [vmem:[%s881 + $0xf0] sm:$0xff]
          %v8936 = vld [vmem:[%s881 + $0xf8] sm:$0xff]
          %v8937 = vld [vmem:[%s881 + $0x100] sm:$0xff]
          %v8938 = vld [vmem:[%s881 + $0x108] sm:$0xff]
          %v8939 = vld [vmem:[%s881 + $0x110] sm:$0xff]
          %v8940 = vld [vmem:[%s881 + $0x118] sm:$0xff]
          %v8941 = vld [vmem:[%s881 + $0x120] sm:$0xff]
          %v8942 = vld [vmem:[%s881 + $0x128] sm:$0xff]
          %v8943 = vld [vmem:[%s881 + $0x130] sm:$0xff]
          %v8944 = vld [vmem:[%s881 + $0x138] sm:$0xff]
          %v8945 = vld [vmem:[%s881 + $0x140] sm:$0xff]
          %v8946 = vld [vmem:[%s881 + $0x148] sm:$0xff]
          %v8947 = vld [vmem:[%s881 + $0x150] sm:$0xff]
          %v8948 = vld [vmem:[%s881 + $0x158] sm:$0xff]
          %v8949 = vld [vmem:[%s881 + $0x160] sm:$0xff]
          %v8950 = vld [vmem:[%s881 + $0x168] sm:$0xff]
          %v8951 = vld [vmem:[%s881 + $0x170] sm:$0xff]
          %v8952 = vld [vmem:[%s881 + $0x178] sm:$0xff]
          %v8953 = vld [vmem:[%s881 + $0x180] sm:$0xff]
          %v8954 = vld [vmem:[%s881 + $0x188] sm:$0xff]
          %v8955 = vld [vmem:[%s881 + $0x190] sm:$0xff]
          %v8956 = vld [vmem:[%s881 + $0x198] sm:$0xff]
          %v8957 = vld [vmem:[%s881 + $0x1a0] sm:$0xff]
          %v8958 = vld [vmem:[%s881 + $0x1a8] sm:$0xff]
          %v8959 = vld [vmem:[%s881 + $0x1b0] sm:$0xff]
          %v8960 = vld [vmem:[%s881 + $0x1b8] sm:$0xff]
          %v8961 = vld [vmem:[%s881 + $0x1c0] sm:$0xff]
          %v8962 = vld [vmem:[%s881 + $0x1c8] sm:$0xff]
          %v8963 = vld [vmem:[%s881 + $0x1d0] sm:$0xff]
          %v8964 = vld [vmem:[%s881 + $0x1d8] sm:$0xff]
          %v8965 = vld [vmem:[%s881 + $0x1e0] sm:$0xff]
          %v8966 = vld [vmem:[%s881 + $0x1e8] sm:$0xff]
          %v8967 = vld [vmem:[%s881 + $0x1f0] sm:$0xff]
          %v8968 = vld [vmem:[%s881 + $0x1f8] sm:$0xff]
          %v8969 = vld [vmem:[%s890] sm:$0x3]
          %v8971 = vlaneseq
          %v8972 = vshrl.u32 %v8971, 7
          %v8973 = vsub.s32 0, %v8972
          %v8974 = vrot.slane %v8969, %v8973
          %v8975 = vlaneseq
          %v8976 = vshrl.u32 %v8975, 7
          %v8977 = vsub.s32 1, %v8976
          %v8978 = vrot.slane %v8969, %v8977
          %v9045 = vunpack.c.l.b16 %v8905
          %v9046 = vunpack.c.h.b16 %v8905
          %v9047 = vunpack.c.l.b16 %v8906
          %v9048 = vunpack.c.h.b16 %v8906
          %v9049 = vunpack.c.l.b16 %v8907
          %v9050 = vunpack.c.h.b16 %v8907
          %v9051 = vunpack.c.l.b16 %v8908
          %v9052 = vunpack.c.h.b16 %v8908
          %v9053 = vunpack.c.l.b16 %v8909
          %v9054 = vunpack.c.h.b16 %v8909
          %v9055 = vunpack.c.l.b16 %v8910
          %v9056 = vunpack.c.h.b16 %v8910
          %v9057 = vunpack.c.l.b16 %v8911
          %v9058 = vunpack.c.h.b16 %v8911
          %v9059 = vunpack.c.l.b16 %v8912
          %v9060 = vunpack.c.h.b16 %v8912
          %v9061 = vunpack.c.l.b16 %v8913
          %v9062 = vunpack.c.h.b16 %v8913
          %v9063 = vunpack.c.l.b16 %v8914
          %v9064 = vunpack.c.h.b16 %v8914
          %v9065 = vunpack.c.l.b16 %v8915
          %v9066 = vunpack.c.h.b16 %v8915
          %v9067 = vunpack.c.l.b16 %v8916
          %v9068 = vunpack.c.h.b16 %v8916
          %v9069 = vunpack.c.l.b16 %v8917
          %v9070 = vunpack.c.h.b16 %v8917
          %v9071 = vunpack.c.l.b16 %v8918
          %v9072 = vunpack.c.h.b16 %v8918
          %v9073 = vunpack.c.l.b16 %v8919
          %v9074 = vunpack.c.h.b16 %v8919
          %v9075 = vunpack.c.l.b16 %v8920
          %v9076 = vunpack.c.h.b16 %v8920
          %v9077 = vunpack.c.l.b16 %v8921
          %v9078 = vunpack.c.h.b16 %v8921
          %v9079 = vunpack.c.l.b16 %v8922
          %v9080 = vunpack.c.h.b16 %v8922
          %v9081 = vunpack.c.l.b16 %v8923
          %v9082 = vunpack.c.h.b16 %v8923
          %v9083 = vunpack.c.l.b16 %v8924
          %v9084 = vunpack.c.h.b16 %v8924
          %v9085 = vunpack.c.l.b16 %v8925
          %v9086 = vunpack.c.h.b16 %v8925
          %v9087 = vunpack.c.l.b16 %v8926
          %v9088 = vunpack.c.h.b16 %v8926
          %v9089 = vunpack.c.l.b16 %v8927
          %v9090 = vunpack.c.h.b16 %v8927
          %v9091 = vunpack.c.l.b16 %v8928
          %v9092 = vunpack.c.h.b16 %v8928
          %v9093 = vunpack.c.l.b16 %v8929
          %v9094 = vunpack.c.h.b16 %v8929
          %v9095 = vunpack.c.l.b16 %v8930
          %v9096 = vunpack.c.h.b16 %v8930
          %v9097 = vunpack.c.l.b16 %v8931
          %v9098 = vunpack.c.h.b16 %v8931
          %v9099 = vunpack.c.l.b16 %v8932
          %v9100 = vunpack.c.h.b16 %v8932
          %v9101 = vunpack.c.l.b16 %v8933
          %v9102 = vunpack.c.h.b16 %v8933
          %v9103 = vunpack.c.l.b16 %v8934
          %v9104 = vunpack.c.h.b16 %v8934
          %v9105 = vunpack.c.l.b16 %v8935
          %v9106 = vunpack.c.h.b16 %v8935
          %v9107 = vunpack.c.l.b16 %v8936
          %v9108 = vunpack.c.h.b16 %v8936
          %v9109 = vunpack.c.l.b16 %v8937
          %v9110 = vunpack.c.h.b16 %v8937
          %v9111 = vunpack.c.l.b16 %v8938
          %v9112 = vunpack.c.h.b16 %v8938
          %v9113 = vunpack.c.l.b16 %v8939
          %v9114 = vunpack.c.h.b16 %v8939
          %v9115 = vunpack.c.l.b16 %v8940
          %v9116 = vunpack.c.h.b16 %v8940
          %v9117 = vunpack.c.l.b16 %v8941
          %v9118 = vunpack.c.h.b16 %v8941
          %v9119 = vunpack.c.l.b16 %v8942
          %v9120 = vunpack.c.h.b16 %v8942
          %v9121 = vunpack.c.l.b16 %v8943
          %v9122 = vunpack.c.h.b16 %v8943
          %v9123 = vunpack.c.l.b16 %v8944
          %v9124 = vunpack.c.h.b16 %v8944
          %v9125 = vunpack.c.l.b16 %v8945
          %v9126 = vunpack.c.h.b16 %v8945
          %v9127 = vunpack.c.l.b16 %v8946
          %v9128 = vunpack.c.h.b16 %v8946
          %v9129 = vunpack.c.l.b16 %v8947
          %v9130 = vunpack.c.h.b16 %v8947
          %v9131 = vunpack.c.l.b16 %v8948
          %v9132 = vunpack.c.h.b16 %v8948
          %v9133 = vunpack.c.l.b16 %v8949
          %v9134 = vunpack.c.h.b16 %v8949
          %v9135 = vunpack.c.l.b16 %v8950
          %v9136 = vunpack.c.h.b16 %v8950
          %v9137 = vunpack.c.l.b16 %v8951
          %v9138 = vunpack.c.h.b16 %v8951
          %v9139 = vunpack.c.l.b16 %v8952
          %v9140 = vunpack.c.h.b16 %v8952
          %v9141 = vunpack.c.l.b16 %v8953
          %v9142 = vunpack.c.h.b16 %v8953
          %v9143 = vunpack.c.l.b16 %v8954
          %v9144 = vunpack.c.h.b16 %v8954
          %v9145 = vunpack.c.l.b16 %v8955
          %v9146 = vunpack.c.h.b16 %v8955
          %v9147 = vunpack.c.l.b16 %v8956
          %v9148 = vunpack.c.h.b16 %v8956
          %v9149 = vunpack.c.l.b16 %v8957
          %v9150 = vunpack.c.h.b16 %v8957
          %v9151 = vunpack.c.l.b16 %v8958
          %v9152 = vunpack.c.h.b16 %v8958
          %v9153 = vunpack.c.l.b16 %v8959
          %v9154 = vunpack.c.h.b16 %v8959
          %v9155 = vunpack.c.l.b16 %v8960
          %v9156 = vunpack.c.h.b16 %v8960
          %v9157 = vunpack.c.l.b16 %v8961
          %v9158 = vunpack.c.h.b16 %v8961
          %v9159 = vunpack.c.l.b16 %v8962
          %v9160 = vunpack.c.h.b16 %v8962
          %v9161 = vunpack.c.l.b16 %v8963
          %v9162 = vunpack.c.h.b16 %v8963
          %v9163 = vunpack.c.l.b16 %v8964
          %v9164 = vunpack.c.h.b16 %v8964
          %v9165 = vunpack.c.l.b16 %v8965
          %v9166 = vunpack.c.h.b16 %v8965
          %v9167 = vunpack.c.l.b16 %v8966
          %v9168 = vunpack.c.h.b16 %v8966
          %v9169 = vunpack.c.l.b16 %v8967
          %v9170 = vunpack.c.h.b16 %v8967
          %v9171 = vunpack.c.l.b16 %v8968
          %v9172 = vunpack.c.h.b16 %v8968
          %v9173 = vpack.c.b16 %v9047, %v9045
          %v9174 = vpack.c.b16 %v9048, %v9046
          %v9175 = vpack.c.b16 %v9051, %v9049
          %v9176 = vpack.c.b16 %v9052, %v9050
          %v9177 = vpack.c.b16 %v9055, %v9053
          %v9178 = vpack.c.b16 %v9056, %v9054
          %v9179 = vpack.c.b16 %v9059, %v9057
          %v9180 = vpack.c.b16 %v9060, %v9058
          %v9181 = vpack.c.b16 %v9063, %v9061
          %v9182 = vpack.c.b16 %v9064, %v9062
          %v9183 = vpack.c.b16 %v9067, %v9065
          %v9184 = vpack.c.b16 %v9068, %v9066
          %v9185 = vpack.c.b16 %v9071, %v9069
          %v9186 = vpack.c.b16 %v9072, %v9070
          %v9187 = vpack.c.b16 %v9075, %v9073
          %v9188 = vpack.c.b16 %v9076, %v9074
          %v9189 = vpack.c.b16 %v9079, %v9077
          %v9190 = vpack.c.b16 %v9080, %v9078
          %v9191 = vpack.c.b16 %v9083, %v9081
          %v9192 = vpack.c.b16 %v9084, %v9082
          %v9193 = vpack.c.b16 %v9087, %v9085
          %v9194 = vpack.c.b16 %v9088, %v9086
          %v9195 = vpack.c.b16 %v9091, %v9089
          %v9196 = vpack.c.b16 %v9092, %v9090
          %v9197 = vpack.c.b16 %v9095, %v9093
          %v9198 = vpack.c.b16 %v9096, %v9094
          %v9199 = vpack.c.b16 %v9099, %v9097
          %v9200 = vpack.c.b16 %v9100, %v9098
          %v9201 = vpack.c.b16 %v9103, %v9101
          %v9202 = vpack.c.b16 %v9104, %v9102
          %v9203 = vpack.c.b16 %v9107, %v9105
          %v9204 = vpack.c.b16 %v9108, %v9106
          %v9205 = vpack.c.b16 %v9111, %v9109
          %v9206 = vpack.c.b16 %v9112, %v9110
          %v9207 = vpack.c.b16 %v9115, %v9113
          %v9208 = vpack.c.b16 %v9116, %v9114
          %v9209 = vpack.c.b16 %v9119, %v9117
          %v9210 = vpack.c.b16 %v9120, %v9118
          %v9211 = vpack.c.b16 %v9123, %v9121
          %v9212 = vpack.c.b16 %v9124, %v9122
          %v9213 = vpack.c.b16 %v9127, %v9125
          %v9214 = vpack.c.b16 %v9128, %v9126
          %v9215 = vpack.c.b16 %v9131, %v9129
          %v9216 = vpack.c.b16 %v9132, %v9130
          %v9217 = vpack.c.b16 %v9135, %v9133
          %v9218 = vpack.c.b16 %v9136, %v9134
          %v9219 = vpack.c.b16 %v9139, %v9137
          %v9220 = vpack.c.b16 %v9140, %v9138
          %v9221 = vpack.c.b16 %v9143, %v9141
          %v9222 = vpack.c.b16 %v9144, %v9142
          %v9223 = vpack.c.b16 %v9147, %v9145
          %v9224 = vpack.c.b16 %v9148, %v9146
          %v9225 = vpack.c.b16 %v9151, %v9149
          %v9226 = vpack.c.b16 %v9152, %v9150
          %v9227 = vpack.c.b16 %v9155, %v9153
          %v9228 = vpack.c.b16 %v9156, %v9154
          %v9229 = vpack.c.b16 %v9159, %v9157
          %v9230 = vpack.c.b16 %v9160, %v9158
          %v9231 = vpack.c.b16 %v9163, %v9161
          %v9232 = vpack.c.b16 %v9164, %v9162
          %v9233 = vpack.c.b16 %v9167, %v9165
          %v9234 = vpack.c.b16 %v9168, %v9166
          %v9235 = vpack.c.b16 %v9171, %v9169
          %v9236 = vpack.c.b16 %v9172, %v9170
          %9301 = vmatprep.subr.bf16.mxu0 %v9174
          %9302 = vmatpush1.bf16.msra.mxu0 %v9173
          %9303 = vmatprep.subr.bf16.mxu0 %v9176
          %9304 = vmatpush1.bf16.msra.mxu0 %v9175
          %9305 = vmatprep.subr.bf16.mxu0 %v9178
          %9306 = vmatpush1.bf16.msra.mxu0 %v9177
          %9307 = vmatprep.subr.bf16.mxu0 %v9180
          %9308 = vmatpush1.bf16.msra.mxu0 %v9179
          %9309 = vmatprep.subr.bf16.mxu0 %v9182
          %9310 = vmatpush1.bf16.msra.mxu0 %v9181
          %9311 = vmatprep.subr.bf16.mxu0 %v9184
          %9312 = vmatpush1.bf16.msra.mxu0 %v9183
          %9313 = vmatprep.subr.bf16.mxu0 %v9186
          %9314 = vmatpush1.bf16.msra.mxu0 %v9185
          %9315 = vmatprep.subr.bf16.mxu0 %v9188
          %9316 = vmatpush1.bf16.msra.mxu0 %v9187
          %9317 = vmatprep.subr.bf16.mxu0 %v9190
          %9318 = vmatpush1.bf16.msra.mxu0 %v9189
          %9319 = vmatprep.subr.bf16.mxu0 %v9192
          %9320 = vmatpush1.bf16.msra.mxu0 %v9191
          %9321 = vmatprep.subr.bf16.mxu0 %v9194
          %9322 = vmatpush1.bf16.msra.mxu0 %v9193
          %9323 = vmatprep.subr.bf16.mxu0 %v9196
          %9324 = vmatpush1.bf16.msra.mxu0 %v9195
          %9325 = vmatprep.subr.bf16.mxu0 %v9198
          %9326 = vmatpush1.bf16.msra.mxu0 %v9197
          %9327 = vmatprep.subr.bf16.mxu0 %v9200
          %9328 = vmatpush1.bf16.msra.mxu0 %v9199
          %9329 = vmatprep.subr.bf16.mxu0 %v9202
          %9330 = vmatpush1.bf16.msra.mxu0 %v9201
          %9331 = vmatprep.subr.bf16.mxu0 %v9204
          %9332 = vmatpush1.bf16.msra.mxu0 %v9203
          %9333 = vmatprep.mubr.bf16.mxu0 %v8902
          %9334 = vmatmul.mubr.bf16.gmra.mrb[0].mxu0 %v8901
          %v9335 = vpop.f32.mrb[0].mxu0
          %v9336 = vadd.f32 %v8974, %v9335
          %v9337 = vpop.f32.mrb[0].mxu0
          %v9338 = vadd.f32 %v8978, %v9337
          %v9339 = vpop.f32.mrb[0].mxu0
          %v9340 = vpop.f32.mrb[0].mxu0
          %9341 = vdwg.mxu0
          %9342 = vmatprep.subr.bf16.mxu0 %v9206
          %9343 = vmatpush1.bf16.msra.mxu0 %v9205
          %9344 = vmatprep.subr.bf16.mxu0 %v9208
          %9345 = vmatpush1.bf16.msra.mxu0 %v9207
          %9346 = vmatprep.subr.bf16.mxu0 %v9210
          %9347 = vmatpush1.bf16.msra.mxu0 %v9209
          %9348 = vmatprep.subr.bf16.mxu0 %v9212
          %9349 = vmatpush1.bf16.msra.mxu0 %v9211
          %9350 = vmatprep.subr.bf16.mxu0 %v9214
          %9351 = vmatpush1.bf16.msra.mxu0 %v9213
          %9352 = vmatprep.subr.bf16.mxu0 %v9216
          %9353 = vmatpush1.bf16.msra.mxu0 %v9215
          %9354 = vmatprep.subr.bf16.mxu0 %v9218
          %9355 = vmatpush1.bf16.msra.mxu0 %v9217
          %9356 = vmatprep.subr.bf16.mxu0 %v9220
          %9357 = vmatpush1.bf16.msra.mxu0 %v9219
          %9358 = vmatprep.subr.bf16.mxu0 %v9222
          %9359 = vmatpush1.bf16.msra.mxu0 %v9221
          %9360 = vmatprep.subr.bf16.mxu0 %v9224
          %9361 = vmatpush1.bf16.msra.mxu0 %v9223
          %9362 = vmatprep.subr.bf16.mxu0 %v9226
          %9363 = vmatpush1.bf16.msra.mxu0 %v9225
          %9364 = vmatprep.subr.bf16.mxu0 %v9228
          %9365 = vmatpush1.bf16.msra.mxu0 %v9227
          %9366 = vmatprep.subr.bf16.mxu0 %v9230
          %9367 = vmatpush1.bf16.msra.mxu0 %v9229
          %9368 = vmatprep.subr.bf16.mxu0 %v9232
          %9369 = vmatpush1.bf16.msra.mxu0 %v9231
          %9370 = vmatprep.subr.bf16.mxu0 %v9234
          %9371 = vmatpush1.bf16.msra.mxu0 %v9233
          %9372 = vmatprep.subr.bf16.mxu0 %v9236
          %9373 = vmatpush1.bf16.msra.mxu0 %v9235
          %9374 = vmatprep.mubr.bf16.mxu0 %v8904
          %9375 = vmatmul.mubr.bf16.gmra.mrb[0].mxu0 %v8903
          %v9376 = vpop.f32.mrb[0].mxu0
          %v9377 = vadd.f32 %v9336, %v9376
          %v9378 = vpop.f32.mrb[0].mxu0
          %v9379 = vadd.f32 %v9338, %v9378
          %v9380 = vpop.f32.mrb[0].mxu0
          %v9381 = vpop.f32.mrb[0].mxu0
          %9382 = vdwg.mxu0
          %v9383 = vld [vmem:[%s899] sm:$0x3]
          %v9384 = vld [vmem:[%s908] sm:$0x3]
          %v9385 = vsel %vm6650, %v9377, 0.0
          %v9386 = vrot.slane %v9385, 4
          %v9387 = vadd.f32 %v9385, %v9386
          %v9388 = vrot.slane %v9387, 2
          %v9389 = vadd.f32 %v9387, %v9388
          %v9390 = vrot.slane %v9389, 1
          %v9391 = vadd.f32 %v9389, %v9390
          %v9392 = vsel %vm6650, %v9379, 0.0
          %v9393 = vrot.slane %v9392, 4
          %v9394 = vadd.f32 %v9392, %v9393
          %v9395 = vrot.slane %v9394, 2
          %v9396 = vadd.f32 %v9394, %v9395
          %v9397 = vrot.slane %v9396, 1
          %v9398 = vadd.f32 %v9396, %v9397
          %v9399 = vmul.f32 %v9391, %v6679
          %v9400 = vmul.f32 %v9398, %v6679
          %v9401 = vsub.f32 %v9377, %v9399
          %v9402 = vsub.f32 %v9379, %v9400
          %v9403 = vmul.f32 %v9401, %v9401
          %v9404 = vmul.f32 %v9402, %v9402
          %v9405 = vsel %vm6650, %v9403, 0.0
          %v9406 = vrot.slane %v9405, 4
          %v9407 = vadd.f32 %v9405, %v9406
          %v9408 = vrot.slane %v9407, 2
          %v9409 = vadd.f32 %v9407, %v9408
          %v9410 = vrot.slane %v9409, 1
          %v9411 = vadd.f32 %v9409, %v9410
          %v9412 = vsel %vm6650, %v9404, 0.0
          %v9413 = vrot.slane %v9412, 4
          %v9414 = vadd.f32 %v9412, %v9413
          %v9415 = vrot.slane %v9414, 2
          %v9416 = vadd.f32 %v9414, %v9415
          %v9417 = vrot.slane %v9416, 1
          %v9418 = vadd.f32 %v9416, %v9417
          %v9419 = vmul.f32 %v9411, %v6679
          %v9420 = vmul.f32 %v9418, %v6679
          %v9421 = vadd.f32 %v9419, 1e-05
          %v9422 = vadd.f32 %v9420, 1e-05
          %v9423 = vrsqrt.pop %v9421
          %v9424 = vrsqrt.pop %v9422
          %v9425 = vmul.f32 %v9401, %v9423
          %v9426 = vmul.f32 %v9402, %v9424
          %v9428 = vlaneseq
          %v9429 = vshrl.u32 %v9428, 7
          %v9430 = vsub.s32 0, %v9429
          %v9431 = vrot.slane %v9383, %v9430
          %v9432 = vlaneseq
          %v9433 = vshrl.u32 %v9432, 7
          %v9434 = vsub.s32 1, %v9433
          %v9435 = vrot.slane %v9383, %v9434
          %v9438 = vmul.f32 %v9425, %v9431
          %v9439 = vmul.f32 %v9426, %v9435
          %v9441 = vlaneseq
          %v9442 = vshrl.u32 %v9441, 7
          %v9443 = vsub.s32 0, %v9442
          %v9444 = vrot.slane %v9384, %v9443
          %v9445 = vlaneseq
          %v9446 = vshrl.u32 %v9445, 7
          %v9447 = vsub.s32 1, %v9446
          %v9448 = vrot.slane %v9384, %v9447
          %v9451 = vadd.f32 %v9438, %v9444
          %v9452 = vadd.f32 %v9439, %v9448
          %v9453 = vmax.f32 %v9451, 0.0
          %v9454 = vmax.f32 %v9452, 0.0
          %v9457 = vcombine.low %v9453, %v9454
          %v9459 = vunpack.c.l.s4 1983009808
          %v9460 = vunpack.c.0.s8 %v9459
          %v9461 = vlaneseq
          %v9462 = vshrl.u32 %v9461, 7
          %v9463 = vsub.s32 %v9460, %v9462
          %v9464 = vrot.slane %v9457, %v9463
          %9466 = vst [vmem:[%s1028] sm:$0xf] %v9464
        $region144: #{advanced_contrastive_forward.1} parent=79 // pred_fallthru
          _
        %p9467 = scmp.lt.s32.totalorder %s54, 1
        %s9468 = scalar_select %p9467, %s54, 1
        %s9469 = smul.addr %s9468, 2
        %s9470 = smul.addr %s9469, 2
        %s9471 = scalar_lea.vmem %s15, %s9470
        // Predicated region
        $region145: #{advanced_contrastive_forward.1} parent=79 // pred_check
          %p9472 = pneg %p473
        $region146: #{advanced_contrastive_forward.1} parent=79 // pred_check_branch
          %9474 = sbr.rel (%p9472) target = $region148
        $region147: #{advanced_contrastive_forward.1} parent=79 // pred_region
          _
        $region148: #{advanced_contrastive_forward.1} parent=79 // pred_fallthru
          _
      $region80: #{advanced_contrastive_forward.1} parent=5 // pred_fallthru
        _
      %p9475 = scmp.le.s32.totalorder 2, %s45
      // Predicated region
      $region149: #{advanced_contrastive_forward.1} parent=5 // pred_check
        %p9476 = pneg %p9475
      $region150: #{advanced_contrastive_forward.1} parent=5 // pred_check_branch
        %9478 = sbr.rel (%p9476) target = $region152
      $region151: #{advanced_contrastive_forward.1} parent=5 // pred_region
        %s9479 = ssub.s32 %s45, 2
        // Predicated region
        $region153: #{advanced_contrastive_forward.1} parent=151 // pred_check
          %p9480 = pneg %p479
        $region154: #{advanced_contrastive_forward.1} parent=151 // pred_check_branch
          %9482 = sbr.rel (%p9480) target = $region156
        $region155: #{advanced_contrastive_forward.1} parent=151 // pred_region
          %p9483 = scmp.lt.s32.totalorder %s56, 1
          %s9484 = scalar_select %p9483, %s56, 1
          %s9485 = smul.addr %s9484, 2
          %s9486 = smul.addr %s9485, 2
          %s9487 = scalar_lea.vmem %s15, %s9486
        $region156: #{advanced_contrastive_forward.1} parent=151 // pred_fallthru
          _
      $region152: #{advanced_contrastive_forward.1} parent=5 // pred_fallthru
        _
    $region6: #{advanced_contrastive_forward.1} parent=1 // loop_footer
      %s49 = sadd.s32 1, %s45
    $region7: #{advanced_contrastive_forward.1} parent=1 // loop_footer_branch
      %44 = sbr.rel target = $region3
    $region8: #{advanced_contrastive_forward.1} parent=1 // loop_exit
      _
    %9488 = vsyncpa [#allocation5], 1
    %s9489 = scalar_lea.sflag [#allocation5], 1
    %9490 = vsyncpa %s9489, 1
    %9491 = vsyncpa [#allocation7], 1
    %s9492 = scalar_lea.sflag [#allocation7], 1
    %9493 = vsyncpa %s9492, 1
    %9494 = vsyncpa [#allocation10], 1
    %s9495 = scalar_lea.sflag [#allocation10], 1
    %9496 = vsyncpa %s9495, 1
    %9497 = vsyncpa [#allocation13], 1
    %s9498 = scalar_lea.sflag [#allocation13], 1
    %9499 = vsyncpa %s9498, 1
    %9500 = vsyncpa [#allocation16], 1
    %s9501 = scalar_lea.sflag [#allocation16], 1
    %9502 = vsyncpa %s9501, 1
    %9503 = vsyncpa [#allocation19], 1
    %s9504 = scalar_lea.sflag [#allocation19], 1
    %9505 = vsyncpa %s9504, 1
    %9506 = vsyncpa [#allocation22], 1
    %s9507 = scalar_lea.sflag [#allocation22], 1
    %9508 = vsyncpa %s9507, 1
    %9509 = vsyncpa [#allocation25], 1
    %s9510 = scalar_lea.sflag [#allocation25], 1
    %9511 = vsyncpa %s9510, 1

</llo_original>
